<compile_context>
chip_gen: v5e
topology: v5e:2x2
jax: 0.10.0
libtpu: 0.0.40
codegen_flags: <defaults>
</compile_context>

<pallas_src>
import functools

import jax
import jax.numpy as jnp
from jax import lax
from jax.experimental import pallas as pl
from jax.experimental.pallas import tpu as pltpu


def _round_up(x, m):
    return ((x + m - 1) // m) * m


# ----------------------------------------------------------------------------
# Static packing layout shared by prepare_params() and the wrapper
# ----------------------------------------------------------------------------
def _layer_layout(channels=(16, 32, 64), kernel_size=10):
    c0, c1, c2 = channels
    K = kernel_size
    # (cin_eff, cout) per layer; the single input channel is padded to 2 so the
    # bf16 im2col row blocks are packed-sublane-pair aligned.
    chans = [(2, c0), (c0, c1), (c1, c2), (c2, c1), (c1, c0), (c0, 1)]
    layers = []
    woff = 0
    for cin, cout in chans:
        rows = K * cin                       # used contraction rows (K*Cin)
        rows_pad = _round_up(rows, 16)       # bf16 sublane-pair / MXU friendly
        cout_pad = _round_up(cout, 16)
        layers.append(dict(cin=cin, cout=cout, rows=rows, rows_pad=rows_pad,
                           cout_pad=cout_pad, woff=woff))
        woff += cout_pad
    w_rows = woff                                            # 176
    w_lanes = _round_up(max(l["rows_pad"] for l in layers), 128)   # 640
    b_rows = _round_up(max(l["cout"] for l in layers), 8)          # 64
    return layers, w_rows, w_lanes, b_rows


# ----------------------------------------------------------------------------
# Fused kernel: conv1 -> conv2 -> conv3 -> tconv1 -> tconv2 -> tconv3
# ----------------------------------------------------------------------------
def _fused_autoencoder_kernel(x_ref, w_ref, b_ref, o_ref, act_ref, xwin_ref,
                              *, cfgs, K, N, lane_w):
    """x_ref: (2, N*L) f32 input (channel padded to 2, batch folded on lanes).
    w_ref:  (w_rows, w_lanes) bf16 packed im2col weights.
    b_ref:  (b_rows, 8)       f32  packed biases (one lane column per layer).
    o_ref:  (1, N*L)          f32  reconstruction.
    act_ref:(64, lane_w) f32 running activation; xwin_ref:(max_rows, lane_w) bf16 slab.
    cfgs: static tuple of (cin, cout, cout_pad, Lin, Lout, pad, relu, rows,
    rows_pad, woff) per layer."""
    NL = x_ref.shape[1]
    sdt = xwin_ref.dtype                     # bf16 im2col slab

    # Input -> activation scratch (row 1 is the zero padding channel).
    act_ref[0:x_ref.shape[0], 0:NL] = x_ref[...]

    num_layers = len(cfgs)
    for li, (cin, cout, cout_pad, Lin, Lout, pad, relu,
             rows, rows_pad, woff) in enumerate(cfgs):
        # Rows rows..rows_pad-1 pair with zero weight columns; they must hold
        # zeros (not stale VMEM garbage, which could be NaN) -> zero once.
        if rows_pad > rows:
            r0 = (rows // 16) * 16
            xwin_ref[r0:rows_pad, :] = jnp.zeros((rows_pad - r0, lane_w), sdt)

        # im2col: xwin[k*cin + ci, n*Lout + j] = x_padded[ci, n, j + k]
        for k in range(K):
            j0 = max(0, pad - k)
            j1 = min(Lout, pad - k + Lin)
            s0 = j0 + k - pad
            s1 = j1 + k - pad
            r0, r1 = k * cin, (k + 1) * cin
            for n in range(N):
                base = n * Lout
                if pad > 0:
                    # Zero only the border columns that stay padding.
                    if j0 > 0:
                        xwin_ref[r0:r1, base:base + j0] = jnp.zeros((cin, j0), sdt)
                    if j1 < Lout:
                        xwin_ref[r0:r1, base + j1:base + Lout] = (
                            jnp.zeros((cin, Lout - j1), sdt))
                xwin_ref[r0:r1, base + j0:base + j1] = (
                    act_ref[0:cin, n * Lin + s0:n * Lin + s1].astype(sdt))

        # One lane-dense bf16 MXU matmul per layer, f32 accumulation:
        # (cout_pad, rows_pad) @ (rows_pad, lane_w)
        acc = jnp.dot(w_ref[woff:woff + cout_pad, 0:rows_pad],
                      xwin_ref[0:rows_pad, :],
                      preferred_element_type=jnp.float32)
        acc = acc[0:cout, :] + b_ref[0:cout, li:li + 1]      # f32 bias
        if relu:
            acc = jnp.maximum(acc, 0.0)
        if li + 1 < num_layers:
            act_ref[0:cout, :] = acc                         # full-width store
        else:
            o_ref[...] = acc[:, 0:o_ref.shape[1]].astype(o_ref.dtype)


# ----------------------------------------------------------------------------
# Wrapper: one grid-less pallas_call for the whole network
# ----------------------------------------------------------------------------
@functools.partial(jax.jit, static_argnames=("channels", "kernel_size"))
def conv_autoencoder_forward(x_ncl, wpack, bpack, *, channels=(16, 32, 64),
                             kernel_size=10):
    """x_ncl: (N, 1, L) like the PyTorch module.  Returns (N, 1, L) f32."""
    N, cin0, L = x_ncl.shape
    assert cin0 == 1, "ConvAutoencoder expects a single input channel"
    K = kernel_size
    layers, _, _, _ = _layer_layout(channels, kernel_size)

    # Static per-layer shape configuration (encoder: pad=0, decoder: pad=K-1).
    cfgs = []
    Lin = L
    for li, lay in enumerate(layers):
        pad = 0 if li < 3 else K - 1
        relu = li < 5
        Lout = Lin + 2 * pad - K + 1
        cfgs.append((lay["cin"], lay["cout"], lay["cout_pad"], Lin, Lout, pad,
                     relu, lay["rows"], lay["rows_pad"], lay["woff"]))
        Lin = Lout
    assert Lin == L and layers[-1]["cout"] == 1
    cfgs = tuple(cfgs)

    max_rows = max(c[8] for c in cfgs)                        # 640
    lane_w = _round_up(max(N * c[4] for c in cfgs), 128)      # 128 at N=2,L=64
    act_rows = _round_up(max(max(c[0], c[1]) for c in cfgs), 8)

    flops = 2 * sum(c[2] * c[8] * lane_w for c in cfgs)
    bytes_accessed = (4 * (x_ncl.size * 2 + bpack.size + N * L)
                      + 2 * wpack.size)

    # (N, 1, L) -> (2, N*L): batch folded onto lanes, channel padded with zeros.
    x2d = x_ncl.reshape(1, N * L).astype(jnp.float32)
    x2d = jnp.concatenate([x2d, jnp.zeros_like(x2d)], axis=0)

    kernel = functools.partial(_fused_autoencoder_kernel, cfgs=cfgs, K=K, N=N,
                               lane_w=lane_w)
    out2d = pl.pallas_call(
        kernel,
        out_shape=jax.ShapeDtypeStruct((1, N * L), jnp.float32),
        in_specs=[pl.BlockSpec(memory_space=pltpu.MemorySpace.VMEM)] * 3,
        out_specs=pl.BlockSpec(memory_space=pltpu.MemorySpace.VMEM),
        scratch_shapes=[pltpu.VMEM((act_rows, lane_w), jnp.float32),
                        pltpu.VMEM((max_rows, lane_w), jnp.bfloat16)],
        cost_estimate=pl.CostEstimate(flops=flops, transcendentals=0,
                                      bytes_accessed=bytes_accessed),
    )(x2d, wpack, bpack)
    return out2d.reshape(N, 1, L)


# ----------------------------------------------------------------------------
# Parameters (PyTorch layout) + one-time packing into kernel-ready buffers
# ----------------------------------------------------------------------------
def init_params(key, channels=(16, 32, 64), kernel_size=10):
    c0, c1, c2 = channels
    K = kernel_size

    def uinit(key, shape, fan_in):
        bound = 1.0 / jnp.sqrt(jnp.float32(fan_in))
        return jax.random.uniform(key, shape, jnp.float32, -bound, bound)

    keys = jax.random.split(key, 12)
    return {
        # Conv1d weights: (Cout, Cin, K)
        "conv1_w": uinit(keys[0], (c0, 1, K), 1 * K),
        "conv1_b": uinit(keys[1], (c0,), 1 * K),
        "conv2_w": uinit(keys[2], (c1, c0, K), c0 * K),
        "conv2_b": uinit(keys[3], (c1,), c0 * K),
        "conv3_w": uinit(keys[4], (c2, c1, K), c1 * K),
        "conv3_b": uinit(keys[5], (c2,), c1 * K),
        # ConvTranspose1d weights: (Cin, Cout, K)
        "tconv1_w": uinit(keys[6], (c2, c1, K), c1 * K),
        "tconv1_b": uinit(keys[7], (c1,), c1 * K),
        "tconv2_w": uinit(keys[8], (c1, c0, K), c0 * K),
        "tconv2_b": uinit(keys[9], (c0,), c0 * K),
        "tconv3_w": uinit(keys[10], (c0, 1, K), 1 * K),
        "tconv3_b": uinit(keys[11], (1,), 1 * K),
    }


def prepare_params(params, channels=(16, 32, 64), kernel_size=10):
    """One-time prep: flip/transpose tconv weights, flatten to the im2col form
    (Cout, K*Cin_eff) (row index k*Cin + ci, zero-padded rows), pack all six
    weights into one bf16 (w_rows, w_lanes) buffer and all biases into one f32
    (b_rows, 8) buffer."""
    layers, w_rows, w_lanes, b_rows = _layer_layout(channels, kernel_size)

    def flat_conv(w, cin_eff):                 # (Cout, Cin, K) -> (Cout, K*cin_eff)
        cout, cin, k = w.shape
        w = jnp.transpose(w, (0, 2, 1))        # (Cout, K, Cin)
        if cin_eff > cin:
            w = jnp.pad(w, ((0, 0), (0, 0), (0, cin_eff - cin)))
        return w.reshape(cout, k * cin_eff)

    def flat_tconv(w, cin_eff):                # PyTorch tconv weight (Cin, Cout, K)
        w_eff = jnp.transpose(jnp.flip(w, axis=2), (1, 0, 2))   # (Cout, Cin, K)
        return flat_conv(w_eff, cin_eff)

    flats = [flat_conv(params["conv1_w"], layers[0]["cin"]),
             flat_conv(params["conv2_w"], layers[1]["cin"]),
             flat_conv(params["conv3_w"], layers[2]["cin"]),
             flat_tconv(params["tconv1_w"], layers[3]["cin"]),
             flat_tconv(params["tconv2_w"], layers[4]["cin"]),
             flat_tconv(params["tconv3_w"], layers[5]["cin"])]
    biases = [params["conv1_b"], params["conv2_b"], params["conv3_b"],
              params["tconv1_b"], params["tconv2_b"], params["tconv3_b"]]

    wpack = jnp.zeros((w_rows, w_lanes), jnp.float32)
    bpack = jnp.zeros((b_rows, 8), jnp.float32)
    for li, (lay, wf, b) in enumerate(zip(layers, flats, biases)):
        wpack = wpack.at[lay["woff"]:lay["woff"] + wf.shape[0],
                         0:wf.shape[1]].set(wf)
        bpack = bpack.at[0:b.shape[0], li].set(b)
    return wpack.astype(jnp.bfloat16), bpack


# ----------------------------------------------------------------------------
# Pure-JAX f32 reference (XLA convs) for the correctness check
# ----------------------------------------------------------------------------
def _ref_conv(x_ncl, w, b, relu):
    y = lax.conv_general_dilated(
        x_ncl, w, window_strides=(1,), padding="VALID",
        dimension_numbers=("NCH", "OIH", "NCH"))
    y = y + b[None, :, None]
    return jnp.maximum(y, 0.0) if relu else y


def _ref_tconv(x_ncl, w, b, relu):
    K = w.shape[-1]
    x_pad = jnp.pad(x_ncl, ((0, 0), (0, 0), (K - 1, K - 1)))
    w_eff = jnp.transpose(jnp.flip(w, axis=2), (1, 0, 2))
    return _ref_conv(x_pad, w_eff, b, relu)


def reference_forward(x_ncl, p):
    x = _ref_conv(x_ncl, p["conv1_w"], p["conv1_b"], True)
    x = _ref_conv(x, p["conv2_w"], p["conv2_b"], True)
    x = _ref_conv(x, p["conv3_w"], p["conv3_b"], True)
    x = _ref_tconv(x, p["tconv1_w"], p["tconv1_b"], True)
    x = _ref_tconv(x, p["tconv2_w"], p["tconv2_b"], True)
    x = _ref_tconv(x, p["tconv3_w"], p["tconv3_b"], False)
    return x


if __name__ == "__main__":
    key = jax.random.PRNGKey(0)
    k_param, k_x = jax.random.split(key)

    channels, K = (16, 32, 64), 10
    params = init_params(k_param, channels=channels, kernel_size=K)
    wpack, bpack = prepare_params(params, channels=channels, kernel_size=K)

    # Input like the PyTorch module: (batch, 1 channel, length)
    N, Cin, L = 2, 1, 64
    x = jax.random.normal(k_x, (N, Cin, L), dtype=jnp.float32)

    out = jax.block_until_ready(
        conv_autoencoder_forward(x, wpack, bpack, channels=channels,
                                 kernel_size=K))
    assert out.shape == (N, Cin, L), out.shape

    ref = jax.block_until_ready(reference_forward(x, params))
    # bf16 MXU operands (f32 accumulate) across 6 chained layers -> 2e-2 tol.
    assert jnp.allclose(out, ref, rtol=2e-2, atol=2e-2), \
        float(jnp.max(jnp.abs(out - ref)))

    print("KERNEL_OK")
</pallas_src>

<mosaic_0001>
module attributes {stable_mosaic.version = 11 : i64} {
  func.func @_fused_autoencoder_kernel(%arg0: memref<2x128xf32, #tpu.memory_space<vmem>>, %arg1: memref<176x640xbf16, #tpu.memory_space<vmem>>, %arg2: memref<64x8xf32, #tpu.memory_space<vmem>>, %arg3: memref<1x128xf32, #tpu.memory_space<vmem>>, %arg4: memref<64x128xf32, #tpu.memory_space<vmem>>, %arg5: memref<640x128xbf16, #tpu.memory_space<vmem>>) attributes {dimension_semantics = [], scalar_prefetch = 0 : i64, scratch_operands = 2 : i64, tpu.core_type = #tpu.core_type<tc>} {
    %c0 = arith.constant 0 : index
    %c0_0 = arith.constant 0 : index
    %0 = vector.load %arg0[%c0, %c0_0] : memref<2x128xf32, #tpu.memory_space<vmem>>, vector<2x128xf32>
    %c0_1 = arith.constant 0 : index
    %c0_2 = arith.constant 0 : index
    %1 = vector.load %arg4[%c0_1, %c0_2] : memref<64x128xf32, #tpu.memory_space<vmem>>, vector<2x128xf32>
    tpu.vector_store %arg4[%c0_1, %c0_2], %0 {strides = array<i32>} : memref<64x128xf32, #tpu.memory_space<vmem>>, vector<2x128xf32>,
    %cst = arith.constant 0.000000e+00 : bf16
    %2 = vector.broadcast %cst : bf16 to vector<16x128xbf16>
    %c16 = arith.constant 16 : index
    %c0_3 = arith.constant 0 : index
    %3 = vector.load %arg5[%c16, %c0_3] : memref<640x128xbf16, #tpu.memory_space<vmem>>, vector<16x128xbf16>
    tpu.vector_store %arg5[%c16, %c0_3], %2 {strides = array<i32>} : memref<640x128xbf16, #tpu.memory_space<vmem>>, vector<16x128xbf16>,
    %c0_4 = arith.constant 0 : index
    %c0_5 = arith.constant 0 : index
    %4 = vector.load %arg4[%c0_4, %c0_5] : memref<64x128xf32, #tpu.memory_space<vmem>>, vector<2x55xf32>
    %5 = arith.truncf %4 : vector<2x55xf32> to vector<2x55xbf16>
    %c0_6 = arith.constant 0 : index
    %c0_7 = arith.constant 0 : index
    %6 = vector.load %arg5[%c0_6, %c0_7] : memref<640x128xbf16, #tpu.memory_space<vmem>>, vector<2x55xbf16>
    tpu.vector_store %arg5[%c0_6, %c0_7], %5 {strides = array<i32>} : memref<640x128xbf16, #tpu.memory_space<vmem>>, vector<2x55xbf16>,
    %c0_8 = arith.constant 0 : index
    %c64 = arith.constant 64 : index
    %7 = vector.load %arg4[%c0_8, %c64] : memref<64x128xf32, #tpu.memory_space<vmem>>, vector<2x55xf32>
    %8 = arith.truncf %7 : vector<2x55xf32> to vector<2x55xbf16>
    %c0_9 = arith.constant 0 : index
    %c55 = arith.constant 55 : index
    %9 = vector.load %arg5[%c0_9, %c55] : memref<640x128xbf16, #tpu.memory_space<vmem>>, vector<2x55xbf16>
    tpu.vector_store %arg5[%c0_9, %c55], %8 {strides = array<i32>} : memref<640x128xbf16, #tpu.memory_space<vmem>>, vector<2x55xbf16>,
    %c0_10 = arith.constant 0 : index
    %c1 = arith.constant 1 : index
    %10 = vector.load %arg4[%c0_10, %c1] : memref<64x128xf32, #tpu.memory_space<vmem>>, vector<2x55xf32>
    %11 = arith.truncf %10 : vector<2x55xf32> to vector<2x55xbf16>
    %c2 = arith.constant 2 : index
    %c0_11 = arith.constant 0 : index
    %12 = vector.load %arg5[%c2, %c0_11] : memref<640x128xbf16, #tpu.memory_space<vmem>>, vector<2x55xbf16>
    tpu.vector_store %arg5[%c2, %c0_11], %11 {strides = array<i32>} : memref<640x128xbf16, #tpu.memory_space<vmem>>, vector<2x55xbf16>,
    %c0_12 = arith.constant 0 : index
    %c65 = arith.constant 65 : index
    %13 = vector.load %arg4[%c0_12, %c65] : memref<64x128xf32, #tpu.memory_space<vmem>>, vector<2x55xf32>
    %14 = arith.truncf %13 : vector<2x55xf32> to vector<2x55xbf16>
    %c2_13 = arith.constant 2 : index
    %c55_14 = arith.constant 55 : index
    %15 = vector.load %arg5[%c2_13, %c55_14] : memref<640x128xbf16, #tpu.memory_space<vmem>>, vector<2x55xbf16>
    tpu.vector_store %arg5[%c2_13, %c55_14], %14 {strides = array<i32>} : memref<640x128xbf16, #tpu.memory_space<vmem>>, vector<2x55xbf16>,
    %c0_15 = arith.constant 0 : index
    %c2_16 = arith.constant 2 : index
    %16 = vector.load %arg4[%c0_15, %c2_16] : memref<64x128xf32, #tpu.memory_space<vmem>>, vector<2x55xf32>
    %17 = arith.truncf %16 : vector<2x55xf32> to vector<2x55xbf16>
    %c4 = arith.constant 4 : index
    %c0_17 = arith.constant 0 : index
    %18 = vector.load %arg5[%c4, %c0_17] : memref<640x128xbf16, #tpu.memory_space<vmem>>, vector<2x55xbf16>
    tpu.vector_store %arg5[%c4, %c0_17], %17 {strides = array<i32>} : memref<640x128xbf16, #tpu.memory_space<vmem>>, vector<2x55xbf16>,
    %c0_18 = arith.constant 0 : index
    %c66 = arith.constant 66 : index
    %19 = vector.load %arg4[%c0_18, %c66] : memref<64x128xf32, #tpu.memory_space<vmem>>, vector<2x55xf32>
    %20 = arith.truncf %19 : vector<2x55xf32> to vector<2x55xbf16>
    %c4_19 = arith.constant 4 : index
    %c55_20 = arith.constant 55 : index
    %21 = vector.load %arg5[%c4_19, %c55_20] : memref<640x128xbf16, #tpu.memory_space<vmem>>, vector<2x55xbf16>
    tpu.vector_store %arg5[%c4_19, %c55_20], %20 {strides = array<i32>} : memref<640x128xbf16, #tpu.memory_space<vmem>>, vector<2x55xbf16>,
    %c0_21 = arith.constant 0 : index
    %c3 = arith.constant 3 : index
    %22 = vector.load %arg4[%c0_21, %c3] : memref<64x128xf32, #tpu.memory_space<vmem>>, vector<2x55xf32>
    %23 = arith.truncf %22 : vector<2x55xf32> to vector<2x55xbf16>
    %c6 = arith.constant 6 : index
    %c0_22 = arith.constant 0 : index
    %24 = vector.load %arg5[%c6, %c0_22] : memref<640x128xbf16, #tpu.memory_space<vmem>>, vector<2x55xbf16>
    tpu.vector_store %arg5[%c6, %c0_22], %23 {strides = array<i32>} : memref<640x128xbf16, #tpu.memory_space<vmem>>, vector<2x55xbf16>,
    %c0_23 = arith.constant 0 : index
    %c67 = arith.constant 67 : index
    %25 = vector.load %arg4[%c0_23, %c67] : memref<64x128xf32, #tpu.memory_space<vmem>>, vector<2x55xf32>
    %26 = arith.truncf %25 : vector<2x55xf32> to vector<2x55xbf16>
    %c6_24 = arith.constant 6 : index
    %c55_25 = arith.constant 55 : index
    %27 = vector.load %arg5[%c6_24, %c55_25] : memref<640x128xbf16, #tpu.memory_space<vmem>>, vector<2x55xbf16>
    tpu.vector_store %arg5[%c6_24, %c55_25], %26 {strides = array<i32>} : memref<640x128xbf16, #tpu.memory_space<vmem>>, vector<2x55xbf16>,
    %c0_26 = arith.constant 0 : index
    %c4_27 = arith.constant 4 : index
    %28 = vector.load %arg4[%c0_26, %c4_27] : memref<64x128xf32, #tpu.memory_space<vmem>>, vector<2x55xf32>
    %29 = arith.truncf %28 : vector<2x55xf32> to vector<2x55xbf16>
    %c8 = arith.constant 8 : index
    %c0_28 = arith.constant 0 : index
    %30 = vector.load %arg5[%c8, %c0_28] : memref<640x128xbf16, #tpu.memory_space<vmem>>, vector<2x55xbf16>
    tpu.vector_store %arg5[%c8, %c0_28], %29 {strides = array<i32>} : memref<640x128xbf16, #tpu.memory_space<vmem>>, vector<2x55xbf16>,
    %c0_29 = arith.constant 0 : index
    %c68 = arith.constant 68 : index
    %31 = vector.load %arg4[%c0_29, %c68] : memref<64x128xf32, #tpu.memory_space<vmem>>, vector<2x55xf32>
    %32 = arith.truncf %31 : vector<2x55xf32> to vector<2x55xbf16>
    %c8_30 = arith.constant 8 : index
    %c55_31 = arith.constant 55 : index
    %33 = vector.load %arg5[%c8_30, %c55_31] : memref<640x128xbf16, #tpu.memory_space<vmem>>, vector<2x55xbf16>
    tpu.vector_store %arg5[%c8_30, %c55_31], %32 {strides = array<i32>} : memref<640x128xbf16, #tpu.memory_space<vmem>>, vector<2x55xbf16>,
    %c0_32 = arith.constant 0 : index
    %c5 = arith.constant 5 : index
    %34 = vector.load %arg4[%c0_32, %c5] : memref<64x128xf32, #tpu.memory_space<vmem>>, vector<2x55xf32>
    %35 = arith.truncf %34 : vector<2x55xf32> to vector<2x55xbf16>
    %c10 = arith.constant 10 : index
    %c0_33 = arith.constant 0 : index
    %36 = vector.load %arg5[%c10, %c0_33] : memref<640x128xbf16, #tpu.memory_space<vmem>>, vector<2x55xbf16>
    tpu.vector_store %arg5[%c10, %c0_33], %35 {strides = array<i32>} : memref<640x128xbf16, #tpu.memory_space<vmem>>, vector<2x55xbf16>,
    %c0_34 = arith.constant 0 : index
    %c69 = arith.constant 69 : index
    %37 = vector.load %arg4[%c0_34, %c69] : memref<64x128xf32, #tpu.memory_space<vmem>>, vector<2x55xf32>
    %38 = arith.truncf %37 : vector<2x55xf32> to vector<2x55xbf16>
    %c10_35 = arith.constant 10 : index
    %c55_36 = arith.constant 55 : index
    %39 = vector.load %arg5[%c10_35, %c55_36] : memref<640x128xbf16, #tpu.memory_space<vmem>>, vector<2x55xbf16>
    tpu.vector_store %arg5[%c10_35, %c55_36], %38 {strides = array<i32>} : memref<640x128xbf16, #tpu.memory_space<vmem>>, vector<2x55xbf16>,
    %c0_37 = arith.constant 0 : index
    %c6_38 = arith.constant 6 : index
    %40 = vector.load %arg4[%c0_37, %c6_38] : memref<64x128xf32, #tpu.memory_space<vmem>>, vector<2x55xf32>
    %41 = arith.truncf %40 : vector<2x55xf32> to vector<2x55xbf16>
    %c12 = arith.constant 12 : index
    %c0_39 = arith.constant 0 : index
    %42 = vector.load %arg5[%c12, %c0_39] : memref<640x128xbf16, #tpu.memory_space<vmem>>, vector<2x55xbf16>
    tpu.vector_store %arg5[%c12, %c0_39], %41 {strides = array<i32>} : memref<640x128xbf16, #tpu.memory_space<vmem>>, vector<2x55xbf16>,
    %c0_40 = arith.constant 0 : index
    %c70 = arith.constant 70 : index
    %43 = vector.load %arg4[%c0_40, %c70] : memref<64x128xf32, #tpu.memory_space<vmem>>, vector<2x55xf32>
    %44 = arith.truncf %43 : vector<2x55xf32> to vector<2x55xbf16>
    %c12_41 = arith.constant 12 : index
    %c55_42 = arith.constant 55 : index
    %45 = vector.load %arg5[%c12_41, %c55_42] : memref<640x128xbf16, #tpu.memory_space<vmem>>, vector<2x55xbf16>
    tpu.vector_store %arg5[%c12_41, %c55_42], %44 {strides = array<i32>} : memref<640x128xbf16, #tpu.memory_space<vmem>>, vector<2x55xbf16>,
    %c0_43 = arith.constant 0 : index
    %c7 = arith.constant 7 : index
    %46 = vector.load %arg4[%c0_43, %c7] : memref<64x128xf32, #tpu.memory_space<vmem>>, vector<2x55xf32>
    %47 = arith.truncf %46 : vector<2x55xf32> to vector<2x55xbf16>
    %c14 = arith.constant 14 : index
    %c0_44 = arith.constant 0 : index
    %48 = vector.load %arg5[%c14, %c0_44] : memref<640x128xbf16, #tpu.memory_space<vmem>>, vector<2x55xbf16>
    tpu.vector_store %arg5[%c14, %c0_44], %47 {strides = array<i32>} : memref<640x128xbf16, #tpu.memory_space<vmem>>, vector<2x55xbf16>,
    %c0_45 = arith.constant 0 : index
    %c71 = arith.constant 71 : index
    %49 = vector.load %arg4[%c0_45, %c71] : memref<64x128xf32, #tpu.memory_space<vmem>>, vector<2x55xf32>
    %50 = arith.truncf %49 : vector<2x55xf32> to vector<2x55xbf16>
    %c14_46 = arith.constant 14 : index
    %c55_47 = arith.constant 55 : index
    %51 = vector.load %arg5[%c14_46, %c55_47] : memref<640x128xbf16, #tpu.memory_space<vmem>>, vector<2x55xbf16>
    tpu.vector_store %arg5[%c14_46, %c55_47], %50 {strides = array<i32>} : memref<640x128xbf16, #tpu.memory_space<vmem>>, vector<2x55xbf16>,
    %c0_48 = arith.constant 0 : index
    %c8_49 = arith.constant 8 : index
    %52 = vector.load %arg4[%c0_48, %c8_49] : memref<64x128xf32, #tpu.memory_space<vmem>>, vector<2x55xf32>
    %53 = arith.truncf %52 : vector<2x55xf32> to vector<2x55xbf16>
    %c16_50 = arith.constant 16 : index
    %c0_51 = arith.constant 0 : index
    %54 = vector.load %arg5[%c16_50, %c0_51] : memref<640x128xbf16, #tpu.memory_space<vmem>>, vector<2x55xbf16>
    tpu.vector_store %arg5[%c16_50, %c0_51], %53 {strides = array<i32>} : memref<640x128xbf16, #tpu.memory_space<vmem>>, vector<2x55xbf16>,
    %c0_52 = arith.constant 0 : index
    %c72 = arith.constant 72 : index
    %55 = vector.load %arg4[%c0_52, %c72] : memref<64x128xf32, #tpu.memory_space<vmem>>, vector<2x55xf32>
    %56 = arith.truncf %55 : vector<2x55xf32> to vector<2x55xbf16>
    %c16_53 = arith.constant 16 : index
    %c55_54 = arith.constant 55 : index
    %57 = vector.load %arg5[%c16_53, %c55_54] : memref<640x128xbf16, #tpu.memory_space<vmem>>, vector<2x55xbf16>
    tpu.vector_store %arg5[%c16_53, %c55_54], %56 {strides = array<i32>} : memref<640x128xbf16, #tpu.memory_space<vmem>>, vector<2x55xbf16>,
    %c0_55 = arith.constant 0 : index
    %c9 = arith.constant 9 : index
    %58 = vector.load %arg4[%c0_55, %c9] : memref<64x128xf32, #tpu.memory_space<vmem>>, vector<2x55xf32>
    %59 = arith.truncf %58 : vector<2x55xf32> to vector<2x55xbf16>
    %c18 = arith.constant 18 : index
    %c0_56 = arith.constant 0 : index
    %60 = vector.load %arg5[%c18, %c0_56] : memref<640x128xbf16, #tpu.memory_space<vmem>>, vector<2x55xbf16>
    tpu.vector_store %arg5[%c18, %c0_56], %59 {strides = array<i32>} : memref<640x128xbf16, #tpu.memory_space<vmem>>, vector<2x55xbf16>,
    %c0_57 = arith.constant 0 : index
    %c73 = arith.constant 73 : index
    %61 = vector.load %arg4[%c0_57, %c73] : memref<64x128xf32, #tpu.memory_space<vmem>>, vector<2x55xf32>
    %62 = arith.truncf %61 : vector<2x55xf32> to vector<2x55xbf16>
    %c18_58 = arith.constant 18 : index
    %c55_59 = arith.constant 55 : index
    %63 = vector.load %arg5[%c18_58, %c55_59] : memref<640x128xbf16, #tpu.memory_space<vmem>>, vector<2x55xbf16>
    tpu.vector_store %arg5[%c18_58, %c55_59], %62 {strides = array<i32>} : memref<640x128xbf16, #tpu.memory_space<vmem>>, vector<2x55xbf16>,
    %c0_60 = arith.constant 0 : index
    %c0_61 = arith.constant 0 : index
    %64 = vector.load %arg1[%c0_60, %c0_61] : memref<176x640xbf16, #tpu.memory_space<vmem>>, vector<16x32xbf16>
    %c0_62 = arith.constant 0 : index
    %c0_63 = arith.constant 0 : index
    %65 = vector.load %arg5[%c0_62, %c0_63] : memref<640x128xbf16, #tpu.memory_space<vmem>>, vector<32x128xbf16>
    %cst_64 = arith.constant dense<0.000000e+00> : vector<16x128xf32>
    %66 = tpu.matmul %64, %65, %cst_64 {dimension_numbers = #tpu.dot_dimension_numbers<[1], [0], [0], [1], [0, 0, 1, 1], [], []>} : vector<16x32xbf16>, vector<32x128xbf16>, vector<16x128xf32> -> vector<16x128xf32>
    %c0_65 = arith.constant 0 : index
    %c0_66 = arith.constant 0 : index
    %67 = vector.load %arg2[%c0_65, %c0_66] : memref<64x8xf32, #tpu.memory_space<vmem>>, vector<16x1xf32>
    %68 = vector.broadcast %67 : vector<16x1xf32> to vector<16x128xf32>
    %69 = arith.addf %66, %68 : vector<16x128xf32>
    %cst_67 = arith.constant 0.000000e+00 : f32
    %70 = vector.broadcast %cst_67 : f32 to vector<16x128xf32>
    %71 = arith.maximumf %69, %70 : vector<16x128xf32>
    %c0_68 = arith.constant 0 : index
    %c0_69 = arith.constant 0 : index
    %72 = vector.load %arg4[%c0_68, %c0_69] : memref<64x128xf32, #tpu.memory_space<vmem>>, vector<16x128xf32>
    tpu.vector_store %arg4[%c0_68, %c0_69], %71 {strides = array<i32>} : memref<64x128xf32, #tpu.memory_space<vmem>>, vector<16x128xf32>,
    %c0_70 = arith.constant 0 : index
    %c0_71 = arith.constant 0 : index
    %73 = vector.load %arg4[%c0_70, %c0_71] : memref<64x128xf32, #tpu.memory_space<vmem>>, vector<16x46xf32>
    %74 = arith.truncf %73 : vector<16x46xf32> to vector<16x46xbf16>
    %c0_72 = arith.constant 0 : index
    %c0_73 = arith.constant 0 : index
    %75 = vector.load %arg5[%c0_72, %c0_73] : memref<640x128xbf16, #tpu.memory_space<vmem>>, vector<16x46xbf16>
    tpu.vector_store %arg5[%c0_72, %c0_73], %74 {strides = array<i32>} : memref<640x128xbf16, #tpu.memory_space<vmem>>, vector<16x46xbf16>,
    %c0_74 = arith.constant 0 : index
    %c55_75 = arith.constant 55 : index
    %76 = vector.load %arg4[%c0_74, %c55_75] : memref<64x128xf32, #tpu.memory_space<vmem>>, vector<16x46xf32>
    %77 = arith.truncf %76 : vector<16x46xf32> to vector<16x46xbf16>
    %c0_76 = arith.constant 0 : index
    %c46 = arith.constant 46 : index
    %78 = vector.load %arg5[%c0_76, %c46] : memref<640x128xbf16, #tpu.memory_space<vmem>>, vector<16x46xbf16>
    tpu.vector_store %arg5[%c0_76, %c46], %77 {strides = array<i32>} : memref<640x128xbf16, #tpu.memory_space<vmem>>, vector<16x46xbf16>,
    %c0_77 = arith.constant 0 : index
    %c1_78 = arith.constant 1 : index
    %79 = vector.load %arg4[%c0_77, %c1_78] : memref<64x128xf32, #tpu.memory_space<vmem>>, vector<16x46xf32>
    %80 = arith.truncf %79 : vector<16x46xf32> to vector<16x46xbf16>
    %c16_79 = arith.constant 16 : index
    %c0_80 = arith.constant 0 : index
    %81 = vector.load %arg5[%c16_79, %c0_80] : memref<640x128xbf16, #tpu.memory_space<vmem>>, vector<16x46xbf16>
    tpu.vector_store %arg5[%c16_79, %c0_80], %80 {strides = array<i32>} : memref<640x128xbf16, #tpu.memory_space<vmem>>, vector<16x46xbf16>,
    %c0_81 = arith.constant 0 : index
    %c56 = arith.constant 56 : index
    %82 = vector.load %arg4[%c0_81, %c56] : memref<64x128xf32, #tpu.memory_space<vmem>>, vector<16x46xf32>
    %83 = arith.truncf %82 : vector<16x46xf32> to vector<16x46xbf16>
    %c16_82 = arith.constant 16 : index
    %c46_83 = arith.constant 46 : index
    %84 = vector.load %arg5[%c16_82, %c46_83] : memref<640x128xbf16, #tpu.memory_space<vmem>>, vector<16x46xbf16>
    tpu.vector_store %arg5[%c16_82, %c46_83], %83 {strides = array<i32>} : memref<640x128xbf16, #tpu.memory_space<vmem>>, vector<16x46xbf16>,
    %c0_84 = arith.constant 0 : index
    %c2_85 = arith.constant 2 : index
    %85 = vector.load %arg4[%c0_84, %c2_85] : memref<64x128xf32, #tpu.memory_space<vmem>>, vector<16x46xf32>
    %86 = arith.truncf %85 : vector<16x46xf32> to vector<16x46xbf16>
    %c32 = arith.constant 32 : index
    %c0_86 = arith.constant 0 : index
    %87 = vector.load %arg5[%c32, %c0_86] : memref<640x128xbf16, #tpu.memory_space<vmem>>, vector<16x46xbf16>
    tpu.vector_store %arg5[%c32, %c0_86], %86 {strides = array<i32>} : memref<640x128xbf16, #tpu.memory_space<vmem>>, vector<16x46xbf16>,
    %c0_87 = arith.constant 0 : index
    %c57 = arith.constant 57 : index
    %88 = vector.load %arg4[%c0_87, %c57] : memref<64x128xf32, #tpu.memory_space<vmem>>, vector<16x46xf32>
    %89 = arith.truncf %88 : vector<16x46xf32> to vector<16x46xbf16>
    %c32_88 = arith.constant 32 : index
    %c46_89 = arith.constant 46 : index
    %90 = vector.load %arg5[%c32_88, %c46_89] : memref<640x128xbf16, #tpu.memory_space<vmem>>, vector<16x46xbf16>
    tpu.vector_store %arg5[%c32_88, %c46_89], %89 {strides = array<i32>} : memref<640x128xbf16, #tpu.memory_space<vmem>>, vector<16x46xbf16>,
    %c0_90 = arith.constant 0 : index
    %c3_91 = arith.constant 3 : index
    %91 = vector.load %arg4[%c0_90, %c3_91] : memref<64x128xf32, #tpu.memory_space<vmem>>, vector<16x46xf32>
    %92 = arith.truncf %91 : vector<16x46xf32> to vector<16x46xbf16>
    %c48 = arith.constant 48 : index
    %c0_92 = arith.constant 0 : index
    %93 = vector.load %arg5[%c48, %c0_92] : memref<640x128xbf16, #tpu.memory_space<vmem>>, vector<16x46xbf16>
    tpu.vector_store %arg5[%c48, %c0_92], %92 {strides = array<i32>} : memref<640x128xbf16, #tpu.memory_space<vmem>>, vector<16x46xbf16>,
    %c0_93 = arith.constant 0 : index
    %c58 = arith.constant 58 : index
    %94 = vector.load %arg4[%c0_93, %c58] : memref<64x128xf32, #tpu.memory_space<vmem>>, vector<16x46xf32>
    %95 = arith.truncf %94 : vector<16x46xf32> to vector<16x46xbf16>
    %c48_94 = arith.constant 48 : index
    %c46_95 = arith.constant 46 : index
    %96 = vector.load %arg5[%c48_94, %c46_95] : memref<640x128xbf16, #tpu.memory_space<vmem>>, vector<16x46xbf16>
    tpu.vector_store %arg5[%c48_94, %c46_95], %95 {strides = array<i32>} : memref<640x128xbf16, #tpu.memory_space<vmem>>, vector<16x46xbf16>,
    %c0_96 = arith.constant 0 : index
    %c4_97 = arith.constant 4 : index
    %97 = vector.load %arg4[%c0_96, %c4_97] : memref<64x128xf32, #tpu.memory_space<vmem>>, vector<16x46xf32>
    %98 = arith.truncf %97 : vector<16x46xf32> to vector<16x46xbf16>
    %c64_98 = arith.constant 64 : index
    %c0_99 = arith.constant 0 : index
    %99 = vector.load %arg5[%c64_98, %c0_99] : memref<640x128xbf16, #tpu.memory_space<vmem>>, vector<16x46xbf16>
    tpu.vector_store %arg5[%c64_98, %c0_99], %98 {strides = array<i32>} : memref<640x128xbf16, #tpu.memory_space<vmem>>, vector<16x46xbf16>,
    %c0_100 = arith.constant 0 : index
    %c59 = arith.constant 59 : index
    %100 = vector.load %arg4[%c0_100, %c59] : memref<64x128xf32, #tpu.memory_space<vmem>>, vector<16x46xf32>
    %101 = arith.truncf %100 : vector<16x46xf32> to vector<16x46xbf16>
    %c64_101 = arith.constant 64 : index
    %c46_102 = arith.constant 46 : index
    %102 = vector.load %arg5[%c64_101, %c46_102] : memref<640x128xbf16, #tpu.memory_space<vmem>>, vector<16x46xbf16>
    tpu.vector_store %arg5[%c64_101, %c46_102], %101 {strides = array<i32>} : memref<640x128xbf16, #tpu.memory_space<vmem>>, vector<16x46xbf16>,
    %c0_103 = arith.constant 0 : index
    %c5_104 = arith.constant 5 : index
    %103 = vector.load %arg4[%c0_103, %c5_104] : memref<64x128xf32, #tpu.memory_space<vmem>>, vector<16x46xf32>
    %104 = arith.truncf %103 : vector<16x46xf32> to vector<16x46xbf16>
    %c80 = arith.constant 80 : index
    %c0_105 = arith.constant 0 : index
    %105 = vector.load %arg5[%c80, %c0_105] : memref<640x128xbf16, #tpu.memory_space<vmem>>, vector<16x46xbf16>
    tpu.vector_store %arg5[%c80, %c0_105], %104 {strides = array<i32>} : memref<640x128xbf16, #tpu.memory_space<vmem>>, vector<16x46xbf16>,
    %c0_106 = arith.constant 0 : index
    %c60 = arith.constant 60 : index
    %106 = vector.load %arg4[%c0_106, %c60] : memref<64x128xf32, #tpu.memory_space<vmem>>, vector<16x46xf32>
    %107 = arith.truncf %106 : vector<16x46xf32> to vector<16x46xbf16>
    %c80_107 = arith.constant 80 : index
    %c46_108 = arith.constant 46 : index
    %108 = vector.load %arg5[%c80_107, %c46_108] : memref<640x128xbf16, #tpu.memory_space<vmem>>, vector<16x46xbf16>
    tpu.vector_store %arg5[%c80_107, %c46_108], %107 {strides = array<i32>} : memref<640x128xbf16, #tpu.memory_space<vmem>>, vector<16x46xbf16>,
    %c0_109 = arith.constant 0 : index
    %c6_110 = arith.constant 6 : index
    %109 = vector.load %arg4[%c0_109, %c6_110] : memref<64x128xf32, #tpu.memory_space<vmem>>, vector<16x46xf32>
    %110 = arith.truncf %109 : vector<16x46xf32> to vector<16x46xbf16>
    %c96 = arith.constant 96 : index
    %c0_111 = arith.constant 0 : index
    %111 = vector.load %arg5[%c96, %c0_111] : memref<640x128xbf16, #tpu.memory_space<vmem>>, vector<16x46xbf16>
    tpu.vector_store %arg5[%c96, %c0_111], %110 {strides = array<i32>} : memref<640x128xbf16, #tpu.memory_space<vmem>>, vector<16x46xbf16>,
    %c0_112 = arith.constant 0 : index
    %c61 = arith.constant 61 : index
    %112 = vector.load %arg4[%c0_112, %c61] : memref<64x128xf32, #tpu.memory_space<vmem>>, vector<16x46xf32>
    %113 = arith.truncf %112 : vector<16x46xf32> to vector<16x46xbf16>
    %c96_113 = arith.constant 96 : index
    %c46_114 = arith.constant 46 : index
    %114 = vector.load %arg5[%c96_113, %c46_114] : memref<640x128xbf16, #tpu.memory_space<vmem>>, vector<16x46xbf16>
    tpu.vector_store %arg5[%c96_113, %c46_114], %113 {strides = array<i32>} : memref<640x128xbf16, #tpu.memory_space<vmem>>, vector<16x46xbf16>,
    %c0_115 = arith.constant 0 : index
    %c7_116 = arith.constant 7 : index
    %115 = vector.load %arg4[%c0_115, %c7_116] : memref<64x128xf32, #tpu.memory_space<vmem>>, vector<16x46xf32>
    %116 = arith.truncf %115 : vector<16x46xf32> to vector<16x46xbf16>
    %c112 = arith.constant 112 : index
    %c0_117 = arith.constant 0 : index
    %117 = vector.load %arg5[%c112, %c0_117] : memref<640x128xbf16, #tpu.memory_space<vmem>>, vector<16x46xbf16>
    tpu.vector_store %arg5[%c112, %c0_117], %116 {strides = array<i32>} : memref<640x128xbf16, #tpu.memory_space<vmem>>, vector<16x46xbf16>,
    %c0_118 = arith.constant 0 : index
    %c62 = arith.constant 62 : index
    %118 = vector.load %arg4[%c0_118, %c62] : memref<64x128xf32, #tpu.memory_space<vmem>>, vector<16x46xf32>
    %119 = arith.truncf %118 : vector<16x46xf32> to vector<16x46xbf16>
    %c112_119 = arith.constant 112 : index
    %c46_120 = arith.constant 46 : index
    %120 = vector.load %arg5[%c112_119, %c46_120] : memref<640x128xbf16, #tpu.memory_space<vmem>>, vector<16x46xbf16>
    tpu.vector_store %arg5[%c112_119, %c46_120], %119 {strides = array<i32>} : memref<640x128xbf16, #tpu.memory_space<vmem>>, vector<16x46xbf16>,
    %c0_121 = arith.constant 0 : index
    %c8_122 = arith.constant 8 : index
    %121 = vector.load %arg4[%c0_121, %c8_122] : memref<64x128xf32, #tpu.memory_space<vmem>>, vector<16x46xf32>
    %122 = arith.truncf %121 : vector<16x46xf32> to vector<16x46xbf16>
    %c128 = arith.constant 128 : index
    %c0_123 = arith.constant 0 : index
    %123 = vector.load %arg5[%c128, %c0_123] : memref<640x128xbf16, #tpu.memory_space<vmem>>, vector<16x46xbf16>
    tpu.vector_store %arg5[%c128, %c0_123], %122 {strides = array<i32>} : memref<640x128xbf16, #tpu.memory_space<vmem>>, vector<16x46xbf16>,
    %c0_124 = arith.constant 0 : index
    %c63 = arith.constant 63 : index
    %124 = vector.load %arg4[%c0_124, %c63] : memref<64x128xf32, #tpu.memory_space<vmem>>, vector<16x46xf32>
    %125 = arith.truncf %124 : vector<16x46xf32> to vector<16x46xbf16>
    %c128_125 = arith.constant 128 : index
    %c46_126 = arith.constant 46 : index
    %126 = vector.load %arg5[%c128_125, %c46_126] : memref<640x128xbf16, #tpu.memory_space<vmem>>, vector<16x46xbf16>
    tpu.vector_store %arg5[%c128_125, %c46_126], %125 {strides = array<i32>} : memref<640x128xbf16, #tpu.memory_space<vmem>>, vector<16x46xbf16>,
    %c0_127 = arith.constant 0 : index
    %c9_128 = arith.constant 9 : index
    %127 = vector.load %arg4[%c0_127, %c9_128] : memref<64x128xf32, #tpu.memory_space<vmem>>, vector<16x46xf32>
    %128 = arith.truncf %127 : vector<16x46xf32> to vector<16x46xbf16>
    %c144 = arith.constant 144 : index
    %c0_129 = arith.constant 0 : index
    %129 = vector.load %arg5[%c144, %c0_129] : memref<640x128xbf16, #tpu.memory_space<vmem>>, vector<16x46xbf16>
    tpu.vector_store %arg5[%c144, %c0_129], %128 {strides = array<i32>} : memref<640x128xbf16, #tpu.memory_space<vmem>>, vector<16x46xbf16>,
    %c0_130 = arith.constant 0 : index
    %c64_131 = arith.constant 64 : index
    %130 = vector.load %arg4[%c0_130, %c64_131] : memref<64x128xf32, #tpu.memory_space<vmem>>, vector<16x46xf32>
    %131 = arith.truncf %130 : vector<16x46xf32> to vector<16x46xbf16>
    %c144_132 = arith.constant 144 : index
    %c46_133 = arith.constant 46 : index
    %132 = vector.load %arg5[%c144_132, %c46_133] : memref<640x128xbf16, #tpu.memory_space<vmem>>, vector<16x46xbf16>
    tpu.vector_store %arg5[%c144_132, %c46_133], %131 {strides = array<i32>} : memref<640x128xbf16, #tpu.memory_space<vmem>>, vector<16x46xbf16>,
    %c16_134 = arith.constant 16 : index
    %c0_135 = arith.constant 0 : index
    %133 = vector.load %arg1[%c16_134, %c0_135] : memref<176x640xbf16, #tpu.memory_space<vmem>>, vector<32x160xbf16>
    %c0_136 = arith.constant 0 : index
    %c0_137 = arith.constant 0 : index
    %134 = vector.load %arg5[%c0_136, %c0_137] : memref<640x128xbf16, #tpu.memory_space<vmem>>, vector<160x128xbf16>
    %cst_138 = arith.constant dense<0.000000e+00> : vector<32x128xf32>
    %135 = tpu.matmul %133, %134, %cst_138 {dimension_numbers = #tpu.dot_dimension_numbers<[1], [0], [0], [1], [0, 0, 1, 1], [], []>} : vector<32x160xbf16>, vector<160x128xbf16>, vector<32x128xf32> -> vector<32x128xf32>
    %c0_139 = arith.constant 0 : index
    %c1_140 = arith.constant 1 : index
    %136 = vector.load %arg2[%c0_139, %c1_140] : memref<64x8xf32, #tpu.memory_space<vmem>>, vector<32x1xf32>
    %137 = vector.broadcast %136 : vector<32x1xf32> to vector<32x128xf32>
    %138 = arith.addf %135, %137 : vector<32x128xf32>
    %cst_141 = arith.constant 0.000000e+00 : f32
    %139 = vector.broadcast %cst_141 : f32 to vector<32x128xf32>
    %140 = arith.maximumf %138, %139 : vector<32x128xf32>
    %c0_142 = arith.constant 0 : index
    %c0_143 = arith.constant 0 : index
    %141 = vector.load %arg4[%c0_142, %c0_143] : memref<64x128xf32, #tpu.memory_space<vmem>>, vector<32x128xf32>
    tpu.vector_store %arg4[%c0_142, %c0_143], %140 {strides = array<i32>} : memref<64x128xf32, #tpu.memory_space<vmem>>, vector<32x128xf32>,
    %c0_144 = arith.constant 0 : index
    %c0_145 = arith.constant 0 : index
    %142 = vector.load %arg4[%c0_144, %c0_145] : memref<64x128xf32, #tpu.memory_space<vmem>>, vector<32x37xf32>
    %143 = arith.truncf %142 : vector<32x37xf32> to vector<32x37xbf16>
    %c0_146 = arith.constant 0 : index
    %c0_147 = arith.constant 0 : index
    %144 = vector.load %arg5[%c0_146, %c0_147] : memref<640x128xbf16, #tpu.memory_space<vmem>>, vector<32x37xbf16>
    tpu.vector_store %arg5[%c0_146, %c0_147], %143 {strides = array<i32>} : memref<640x128xbf16, #tpu.memory_space<vmem>>, vector<32x37xbf16>,
    %c0_148 = arith.constant 0 : index
    %c46_149 = arith.constant 46 : index
    %145 = vector.load %arg4[%c0_148, %c46_149] : memref<64x128xf32, #tpu.memory_space<vmem>>, vector<32x37xf32>
    %146 = arith.truncf %145 : vector<32x37xf32> to vector<32x37xbf16>
    %c0_150 = arith.constant 0 : index
    %c37 = arith.constant 37 : index
    %147 = vector.load %arg5[%c0_150, %c37] : memref<640x128xbf16, #tpu.memory_space<vmem>>, vector<32x37xbf16>
    tpu.vector_store %arg5[%c0_150, %c37], %146 {strides = array<i32>} : memref<640x128xbf16, #tpu.memory_space<vmem>>, vector<32x37xbf16>,
    %c0_151 = arith.constant 0 : index
    %c1_152 = arith.constant 1 : index
    %148 = vector.load %arg4[%c0_151, %c1_152] : memref<64x128xf32, #tpu.memory_space<vmem>>, vector<32x37xf32>
    %149 = arith.truncf %148 : vector<32x37xf32> to vector<32x37xbf16>
    %c32_153 = arith.constant 32 : index
    %c0_154 = arith.constant 0 : index
    %150 = vector.load %arg5[%c32_153, %c0_154] : memref<640x128xbf16, #tpu.memory_space<vmem>>, vector<32x37xbf16>
    tpu.vector_store %arg5[%c32_153, %c0_154], %149 {strides = array<i32>} : memref<640x128xbf16, #tpu.memory_space<vmem>>, vector<32x37xbf16>,
    %c0_155 = arith.constant 0 : index
    %c47 = arith.constant 47 : index
    %151 = vector.load %arg4[%c0_155, %c47] : memref<64x128xf32, #tpu.memory_space<vmem>>, vector<32x37xf32>
    %152 = arith.truncf %151 : vector<32x37xf32> to vector<32x37xbf16>
    %c32_156 = arith.constant 32 : index
    %c37_157 = arith.constant 37 : index
    %153 = vector.load %arg5[%c32_156, %c37_157] : memref<640x128xbf16, #tpu.memory_space<vmem>>, vector<32x37xbf16>
    tpu.vector_store %arg5[%c32_156, %c37_157], %152 {strides = array<i32>} : memref<640x128xbf16, #tpu.memory_space<vmem>>, vector<32x37xbf16>,
    %c0_158 = arith.constant 0 : index
    %c2_159 = arith.constant 2 : index
    %154 = vector.load %arg4[%c0_158, %c2_159] : memref<64x128xf32, #tpu.memory_space<vmem>>, vector<32x37xf32>
    %155 = arith.truncf %154 : vector<32x37xf32> to vector<32x37xbf16>
    %c64_160 = arith.constant 64 : index
    %c0_161 = arith.constant 0 : index
    %156 = vector.load %arg5[%c64_160, %c0_161] : memref<640x128xbf16, #tpu.memory_space<vmem>>, vector<32x37xbf16>
    tpu.vector_store %arg5[%c64_160, %c0_161], %155 {strides = array<i32>} : memref<640x128xbf16, #tpu.memory_space<vmem>>, vector<32x37xbf16>,
    %c0_162 = arith.constant 0 : index
    %c48_163 = arith.constant 48 : index
    %157 = vector.load %arg4[%c0_162, %c48_163] : memref<64x128xf32, #tpu.memory_space<vmem>>, vector<32x37xf32>
    %158 = arith.truncf %157 : vector<32x37xf32> to vector<32x37xbf16>
    %c64_164 = arith.constant 64 : index
    %c37_165 = arith.constant 37 : index
    %159 = vector.load %arg5[%c64_164, %c37_165] : memref<640x128xbf16, #tpu.memory_space<vmem>>, vector<32x37xbf16>
    tpu.vector_store %arg5[%c64_164, %c37_165], %158 {strides = array<i32>} : memref<640x128xbf16, #tpu.memory_space<vmem>>, vector<32x37xbf16>,
    %c0_166 = arith.constant 0 : index
    %c3_167 = arith.constant 3 : index
    %160 = vector.load %arg4[%c0_166, %c3_167] : memref<64x128xf32, #tpu.memory_space<vmem>>, vector<32x37xf32>
    %161 = arith.truncf %160 : vector<32x37xf32> to vector<32x37xbf16>
    %c96_168 = arith.constant 96 : index
    %c0_169 = arith.constant 0 : index
    %162 = vector.load %arg5[%c96_168, %c0_169] : memref<640x128xbf16, #tpu.memory_space<vmem>>, vector<32x37xbf16>
    tpu.vector_store %arg5[%c96_168, %c0_169], %161 {strides = array<i32>} : memref<640x128xbf16, #tpu.memory_space<vmem>>, vector<32x37xbf16>,
    %c0_170 = arith.constant 0 : index
    %c49 = arith.constant 49 : index
    %163 = vector.load %arg4[%c0_170, %c49] : memref<64x128xf32, #tpu.memory_space<vmem>>, vector<32x37xf32>
    %164 = arith.truncf %163 : vector<32x37xf32> to vector<32x37xbf16>
    %c96_171 = arith.constant 96 : index
    %c37_172 = arith.constant 37 : index
    %165 = vector.load %arg5[%c96_171, %c37_172] : memref<640x128xbf16, #tpu.memory_space<vmem>>, vector<32x37xbf16>
    tpu.vector_store %arg5[%c96_171, %c37_172], %164 {strides = array<i32>} : memref<640x128xbf16, #tpu.memory_space<vmem>>, vector<32x37xbf16>,
    %c0_173 = arith.constant 0 : index
    %c4_174 = arith.constant 4 : index
    %166 = vector.load %arg4[%c0_173, %c4_174] : memref<64x128xf32, #tpu.memory_space<vmem>>, vector<32x37xf32>
    %167 = arith.truncf %166 : vector<32x37xf32> to vector<32x37xbf16>
    %c128_175 = arith.constant 128 : index
    %c0_176 = arith.constant 0 : index
    %168 = vector.load %arg5[%c128_175, %c0_176] : memref<640x128xbf16, #tpu.memory_space<vmem>>, vector<32x37xbf16>
    tpu.vector_store %arg5[%c128_175, %c0_176], %167 {strides = array<i32>} : memref<640x128xbf16, #tpu.memory_space<vmem>>, vector<32x37xbf16>,
    %c0_177 = arith.constant 0 : index
    %c50 = arith.constant 50 : index
    %169 = vector.load %arg4[%c0_177, %c50] : memref<64x128xf32, #tpu.memory_space<vmem>>, vector<32x37xf32>
    %170 = arith.truncf %169 : vector<32x37xf32> to vector<32x37xbf16>
    %c128_178 = arith.constant 128 : index
    %c37_179 = arith.constant 37 : index
    %171 = vector.load %arg5[%c128_178, %c37_179] : memref<640x128xbf16, #tpu.memory_space<vmem>>, vector<32x37xbf16>
    tpu.vector_store %arg5[%c128_178, %c37_179], %170 {strides = array<i32>} : memref<640x128xbf16, #tpu.memory_space<vmem>>, vector<32x37xbf16>,
    %c0_180 = arith.constant 0 : index
    %c5_181 = arith.constant 5 : index
    %172 = vector.load %arg4[%c0_180, %c5_181] : memref<64x128xf32, #tpu.memory_space<vmem>>, vector<32x37xf32>
    %173 = arith.truncf %172 : vector<32x37xf32> to vector<32x37xbf16>
    %c160 = arith.constant 160 : index
    %c0_182 = arith.constant 0 : index
    %174 = vector.load %arg5[%c160, %c0_182] : memref<640x128xbf16, #tpu.memory_space<vmem>>, vector<32x37xbf16>
    tpu.vector_store %arg5[%c160, %c0_182], %173 {strides = array<i32>} : memref<640x128xbf16, #tpu.memory_space<vmem>>, vector<32x37xbf16>,
    %c0_183 = arith.constant 0 : index
    %c51 = arith.constant 51 : index
    %175 = vector.load %arg4[%c0_183, %c51] : memref<64x128xf32, #tpu.memory_space<vmem>>, vector<32x37xf32>
    %176 = arith.truncf %175 : vector<32x37xf32> to vector<32x37xbf16>
    %c160_184 = arith.constant 160 : index
    %c37_185 = arith.constant 37 : index
    %177 = vector.load %arg5[%c160_184, %c37_185] : memref<640x128xbf16, #tpu.memory_space<vmem>>, vector<32x37xbf16>
    tpu.vector_store %arg5[%c160_184, %c37_185], %176 {strides = array<i32>} : memref<640x128xbf16, #tpu.memory_space<vmem>>, vector<32x37xbf16>,
    %c0_186 = arith.constant 0 : index
    %c6_187 = arith.constant 6 : index
    %178 = vector.load %arg4[%c0_186, %c6_187] : memref<64x128xf32, #tpu.memory_space<vmem>>, vector<32x37xf32>
    %179 = arith.truncf %178 : vector<32x37xf32> to vector<32x37xbf16>
    %c192 = arith.constant 192 : index
    %c0_188 = arith.constant 0 : index
    %180 = vector.load %arg5[%c192, %c0_188] : memref<640x128xbf16, #tpu.memory_space<vmem>>, vector<32x37xbf16>
    tpu.vector_store %arg5[%c192, %c0_188], %179 {strides = array<i32>} : memref<640x128xbf16, #tpu.memory_space<vmem>>, vector<32x37xbf16>,
    %c0_189 = arith.constant 0 : index
    %c52 = arith.constant 52 : index
    %181 = vector.load %arg4[%c0_189, %c52] : memref<64x128xf32, #tpu.memory_space<vmem>>, vector<32x37xf32>
    %182 = arith.truncf %181 : vector<32x37xf32> to vector<32x37xbf16>
    %c192_190 = arith.constant 192 : index
    %c37_191 = arith.constant 37 : index
    %183 = vector.load %arg5[%c192_190, %c37_191] : memref<640x128xbf16, #tpu.memory_space<vmem>>, vector<32x37xbf16>
    tpu.vector_store %arg5[%c192_190, %c37_191], %182 {strides = array<i32>} : memref<640x128xbf16, #tpu.memory_space<vmem>>, vector<32x37xbf16>,
    %c0_192 = arith.constant 0 : index
    %c7_193 = arith.constant 7 : index
    %184 = vector.load %arg4[%c0_192, %c7_193] : memref<64x128xf32, #tpu.memory_space<vmem>>, vector<32x37xf32>
    %185 = arith.truncf %184 : vector<32x37xf32> to vector<32x37xbf16>
    %c224 = arith.constant 224 : index
    %c0_194 = arith.constant 0 : index
    %186 = vector.load %arg5[%c224, %c0_194] : memref<640x128xbf16, #tpu.memory_space<vmem>>, vector<32x37xbf16>
    tpu.vector_store %arg5[%c224, %c0_194], %185 {strides = array<i32>} : memref<640x128xbf16, #tpu.memory_space<vmem>>, vector<32x37xbf16>,
    %c0_195 = arith.constant 0 : index
    %c53 = arith.constant 53 : index
    %187 = vector.load %arg4[%c0_195, %c53] : memref<64x128xf32, #tpu.memory_space<vmem>>, vector<32x37xf32>
    %188 = arith.truncf %187 : vector<32x37xf32> to vector<32x37xbf16>
    %c224_196 = arith.constant 224 : index
    %c37_197 = arith.constant 37 : index
    %189 = vector.load %arg5[%c224_196, %c37_197] : memref<640x128xbf16, #tpu.memory_space<vmem>>, vector<32x37xbf16>
    tpu.vector_store %arg5[%c224_196, %c37_197], %188 {strides = array<i32>} : memref<640x128xbf16, #tpu.memory_space<vmem>>, vector<32x37xbf16>,
    %c0_198 = arith.constant 0 : index
    %c8_199 = arith.constant 8 : index
    %190 = vector.load %arg4[%c0_198, %c8_199] : memref<64x128xf32, #tpu.memory_space<vmem>>, vector<32x37xf32>
    %191 = arith.truncf %190 : vector<32x37xf32> to vector<32x37xbf16>
    %c256 = arith.constant 256 : index
    %c0_200 = arith.constant 0 : index
    %192 = vector.load %arg5[%c256, %c0_200] : memref<640x128xbf16, #tpu.memory_space<vmem>>, vector<32x37xbf16>
    tpu.vector_store %arg5[%c256, %c0_200], %191 {strides = array<i32>} : memref<640x128xbf16, #tpu.memory_space<vmem>>, vector<32x37xbf16>,
    %c0_201 = arith.constant 0 : index
    %c54 = arith.constant 54 : index
    %193 = vector.load %arg4[%c0_201, %c54] : memref<64x128xf32, #tpu.memory_space<vmem>>, vector<32x37xf32>
    %194 = arith.truncf %193 : vector<32x37xf32> to vector<32x37xbf16>
    %c256_202 = arith.constant 256 : index
    %c37_203 = arith.constant 37 : index
    %195 = vector.load %arg5[%c256_202, %c37_203] : memref<640x128xbf16, #tpu.memory_space<vmem>>, vector<32x37xbf16>
    tpu.vector_store %arg5[%c256_202, %c37_203], %194 {strides = array<i32>} : memref<640x128xbf16, #tpu.memory_space<vmem>>, vector<32x37xbf16>,
    %c0_204 = arith.constant 0 : index
    %c9_205 = arith.constant 9 : index
    %196 = vector.load %arg4[%c0_204, %c9_205] : memref<64x128xf32, #tpu.memory_space<vmem>>, vector<32x37xf32>
    %197 = arith.truncf %196 : vector<32x37xf32> to vector<32x37xbf16>
    %c288 = arith.constant 288 : index
    %c0_206 = arith.constant 0 : index
    %198 = vector.load %arg5[%c288, %c0_206] : memref<640x128xbf16, #tpu.memory_space<vmem>>, vector<32x37xbf16>
    tpu.vector_store %arg5[%c288, %c0_206], %197 {strides = array<i32>} : memref<640x128xbf16, #tpu.memory_space<vmem>>, vector<32x37xbf16>,
    %c0_207 = arith.constant 0 : index
    %c55_208 = arith.constant 55 : index
    %199 = vector.load %arg4[%c0_207, %c55_208] : memref<64x128xf32, #tpu.memory_space<vmem>>, vector<32x37xf32>
    %200 = arith.truncf %199 : vector<32x37xf32> to vector<32x37xbf16>
    %c288_209 = arith.constant 288 : index
    %c37_210 = arith.constant 37 : index
    %201 = vector.load %arg5[%c288_209, %c37_210] : memref<640x128xbf16, #tpu.memory_space<vmem>>, vector<32x37xbf16>
    tpu.vector_store %arg5[%c288_209, %c37_210], %200 {strides = array<i32>} : memref<640x128xbf16, #tpu.memory_space<vmem>>, vector<32x37xbf16>,
    %c48_211 = arith.constant 48 : index
    %c0_212 = arith.constant 0 : index
    %202 = vector.load %arg1[%c48_211, %c0_212] : memref<176x640xbf16, #tpu.memory_space<vmem>>, vector<64x320xbf16>
    %c0_213 = arith.constant 0 : index
    %c0_214 = arith.constant 0 : index
    %203 = vector.load %arg5[%c0_213, %c0_214] : memref<640x128xbf16, #tpu.memory_space<vmem>>, vector<320x128xbf16>
    %cst_215 = arith.constant dense<0.000000e+00> : vector<64x128xf32>
    %204 = tpu.matmul %202, %203, %cst_215 {dimension_numbers = #tpu.dot_dimension_numbers<[1], [0], [0], [1], [0, 0, 1, 1], [], []>} : vector<64x320xbf16>, vector<320x128xbf16>, vector<64x128xf32> -> vector<64x128xf32>
    %c0_216 = arith.constant 0 : index
    %c2_217 = arith.constant 2 : index
    %205 = vector.load %arg2[%c0_216, %c2_217] : memref<64x8xf32, #tpu.memory_space<vmem>>, vector<64x1xf32>
    %206 = vector.broadcast %205 : vector<64x1xf32> to vector<64x128xf32>
    %207 = arith.addf %204, %206 : vector<64x128xf32>
    %cst_218 = arith.constant 0.000000e+00 : f32
    %208 = vector.broadcast %cst_218 : f32 to vector<64x128xf32>
    %209 = arith.maximumf %207, %208 : vector<64x128xf32>
    %c0_219 = arith.constant 0 : index
    %c0_220 = arith.constant 0 : index
    %210 = vector.load %arg4[%c0_219, %c0_220] : memref<64x128xf32, #tpu.memory_space<vmem>>, vector<64x128xf32>
    tpu.vector_store %arg4[%c0_219, %c0_220], %209 {strides = array<i32>} : memref<64x128xf32, #tpu.memory_space<vmem>>, vector<64x128xf32>,
    %cst_221 = arith.constant 0.000000e+00 : bf16
    %211 = vector.broadcast %cst_221 : bf16 to vector<64x9xbf16>
    %c0_222 = arith.constant 0 : index
    %c0_223 = arith.constant 0 : index
    %212 = vector.load %arg5[%c0_222, %c0_223] : memref<640x128xbf16, #tpu.memory_space<vmem>>, vector<64x9xbf16>
    tpu.vector_store %arg5[%c0_222, %c0_223], %211 {strides = array<i32>} : memref<640x128xbf16, #tpu.memory_space<vmem>>, vector<64x9xbf16>,
    %c0_224 = arith.constant 0 : index
    %c0_225 = arith.constant 0 : index
    %213 = vector.load %arg4[%c0_224, %c0_225] : memref<64x128xf32, #tpu.memory_space<vmem>>, vector<64x37xf32>
    %214 = arith.truncf %213 : vector<64x37xf32> to vector<64x37xbf16>
    %c0_226 = arith.constant 0 : index
    %c9_227 = arith.constant 9 : index
    %215 = vector.load %arg5[%c0_226, %c9_227] : memref<640x128xbf16, #tpu.memory_space<vmem>>, vector<64x37xbf16>
    tpu.vector_store %arg5[%c0_226, %c9_227], %214 {strides = array<i32>} : memref<640x128xbf16, #tpu.memory_space<vmem>>, vector<64x37xbf16>,
    %cst_228 = arith.constant 0.000000e+00 : bf16
    %216 = vector.broadcast %cst_228 : bf16 to vector<64x9xbf16>
    %c0_229 = arith.constant 0 : index
    %c46_230 = arith.constant 46 : index
    %217 = vector.load %arg5[%c0_229, %c46_230] : memref<640x128xbf16, #tpu.memory_space<vmem>>, vector<64x9xbf16>
    tpu.vector_store %arg5[%c0_229, %c46_230], %216 {strides = array<i32>} : memref<640x128xbf16, #tpu.memory_space<vmem>>, vector<64x9xbf16>,
    %c0_231 = arith.constant 0 : index
    %c37_232 = arith.constant 37 : index
    %218 = vector.load %arg4[%c0_231, %c37_232] : memref<64x128xf32, #tpu.memory_space<vmem>>, vector<64x37xf32>
    %219 = arith.truncf %218 : vector<64x37xf32> to vector<64x37xbf16>
    %c0_233 = arith.constant 0 : index
    %c55_234 = arith.constant 55 : index
    %220 = vector.load %arg5[%c0_233, %c55_234] : memref<640x128xbf16, #tpu.memory_space<vmem>>, vector<64x37xbf16>
    tpu.vector_store %arg5[%c0_233, %c55_234], %219 {strides = array<i32>} : memref<640x128xbf16, #tpu.memory_space<vmem>>, vector<64x37xbf16>,
    %cst_235 = arith.constant 0.000000e+00 : bf16
    %221 = vector.broadcast %cst_235 : bf16 to vector<64x8xbf16>
    %c64_236 = arith.constant 64 : index
    %c0_237 = arith.constant 0 : index
    %222 = vector.load %arg5[%c64_236, %c0_237] : memref<640x128xbf16, #tpu.memory_space<vmem>>, vector<64x8xbf16>
    tpu.vector_store %arg5[%c64_236, %c0_237], %221 {strides = array<i32>} : memref<640x128xbf16, #tpu.memory_space<vmem>>, vector<64x8xbf16>,
    %cst_238 = arith.constant 0.000000e+00 : bf16
    %223 = vector.broadcast %cst_238 : bf16 to vector<64x1xbf16>
    %c64_239 = arith.constant 64 : index
    %c45 = arith.constant 45 : index
    %224 = vector.load %arg5[%c64_239, %c45] : memref<640x128xbf16, #tpu.memory_space<vmem>>, vector<64x1xbf16>
    tpu.vector_store %arg5[%c64_239, %c45], %223 {strides = array<i32>} : memref<640x128xbf16, #tpu.memory_space<vmem>>, vector<64x1xbf16>,
    %c0_240 = arith.constant 0 : index
    %c0_241 = arith.constant 0 : index
    %225 = vector.load %arg4[%c0_240, %c0_241] : memref<64x128xf32, #tpu.memory_space<vmem>>, vector<64x37xf32>
    %226 = arith.truncf %225 : vector<64x37xf32> to vector<64x37xbf16>
    %c64_242 = arith.constant 64 : index
    %c8_243 = arith.constant 8 : index
    %227 = vector.load %arg5[%c64_242, %c8_243] : memref<640x128xbf16, #tpu.memory_space<vmem>>, vector<64x37xbf16>
    tpu.vector_store %arg5[%c64_242, %c8_243], %226 {strides = array<i32>} : memref<640x128xbf16, #tpu.memory_space<vmem>>, vector<64x37xbf16>,
    %cst_244 = arith.constant 0.000000e+00 : bf16
    %228 = vector.broadcast %cst_244 : bf16 to vector<64x8xbf16>
    %c64_245 = arith.constant 64 : index
    %c46_246 = arith.constant 46 : index
    %229 = vector.load %arg5[%c64_245, %c46_246] : memref<640x128xbf16, #tpu.memory_space<vmem>>, vector<64x8xbf16>
    tpu.vector_store %arg5[%c64_245, %c46_246], %228 {strides = array<i32>} : memref<640x128xbf16, #tpu.memory_space<vmem>>, vector<64x8xbf16>,
    %cst_247 = arith.constant 0.000000e+00 : bf16
    %230 = vector.broadcast %cst_247 : bf16 to vector<64x1xbf16>
    %c64_248 = arith.constant 64 : index
    %c91 = arith.constant 91 : index
    %231 = vector.load %arg5[%c64_248, %c91] : memref<640x128xbf16, #tpu.memory_space<vmem>>, vector<64x1xbf16>
    tpu.vector_store %arg5[%c64_248, %c91], %230 {strides = array<i32>} : memref<640x128xbf16, #tpu.memory_space<vmem>>, vector<64x1xbf16>,
    %c0_249 = arith.constant 0 : index
    %c37_250 = arith.constant 37 : index
    %232 = vector.load %arg4[%c0_249, %c37_250] : memref<64x128xf32, #tpu.memory_space<vmem>>, vector<64x37xf32>
    %233 = arith.truncf %232 : vector<64x37xf32> to vector<64x37xbf16>
    %c64_251 = arith.constant 64 : index
    %c54_252 = arith.constant 54 : index
    %234 = vector.load %arg5[%c64_251, %c54_252] : memref<640x128xbf16, #tpu.memory_space<vmem>>, vector<64x37xbf16>
    tpu.vector_store %arg5[%c64_251, %c54_252], %233 {strides = array<i32>} : memref<640x128xbf16, #tpu.memory_space<vmem>>, vector<64x37xbf16>,
    %cst_253 = arith.constant 0.000000e+00 : bf16
    %235 = vector.broadcast %cst_253 : bf16 to vector<64x7xbf16>
    %c128_254 = arith.constant 128 : index
    %c0_255 = arith.constant 0 : index
    %236 = vector.load %arg5[%c128_254, %c0_255] : memref<640x128xbf16, #tpu.memory_space<vmem>>, vector<64x7xbf16>
    tpu.vector_store %arg5[%c128_254, %c0_255], %235 {strides = array<i32>} : memref<640x128xbf16, #tpu.memory_space<vmem>>, vector<64x7xbf16>,
    %cst_256 = arith.constant 0.000000e+00 : bf16
    %237 = vector.broadcast %cst_256 : bf16 to vector<64x2xbf16>
    %c128_257 = arith.constant 128 : index
    %c44 = arith.constant 44 : index
    %238 = vector.load %arg5[%c128_257, %c44] : memref<640x128xbf16, #tpu.memory_space<vmem>>, vector<64x2xbf16>
    tpu.vector_store %arg5[%c128_257, %c44], %237 {strides = array<i32>} : memref<640x128xbf16, #tpu.memory_space<vmem>>, vector<64x2xbf16>,
    %c0_258 = arith.constant 0 : index
    %c0_259 = arith.constant 0 : index
    %239 = vector.load %arg4[%c0_258, %c0_259] : memref<64x128xf32, #tpu.memory_space<vmem>>, vector<64x37xf32>
    %240 = arith.truncf %239 : vector<64x37xf32> to vector<64x37xbf16>
    %c128_260 = arith.constant 128 : index
    %c7_261 = arith.constant 7 : index
    %241 = vector.load %arg5[%c128_260, %c7_261] : memref<640x128xbf16, #tpu.memory_space<vmem>>, vector<64x37xbf16>
    tpu.vector_store %arg5[%c128_260, %c7_261], %240 {strides = array<i32>} : memref<640x128xbf16, #tpu.memory_space<vmem>>, vector<64x37xbf16>,
    %cst_262 = arith.constant 0.000000e+00 : bf16
    %242 = vector.broadcast %cst_262 : bf16 to vector<64x7xbf16>
    %c128_263 = arith.constant 128 : index
    %c46_264 = arith.constant 46 : index
    %243 = vector.load %arg5[%c128_263, %c46_264] : memref<640x128xbf16, #tpu.memory_space<vmem>>, vector<64x7xbf16>
    tpu.vector_store %arg5[%c128_263, %c46_264], %242 {strides = array<i32>} : memref<640x128xbf16, #tpu.memory_space<vmem>>, vector<64x7xbf16>,
    %cst_265 = arith.constant 0.000000e+00 : bf16
    %244 = vector.broadcast %cst_265 : bf16 to vector<64x2xbf16>
    %c128_266 = arith.constant 128 : index
    %c90 = arith.constant 90 : index
    %245 = vector.load %arg5[%c128_266, %c90] : memref<640x128xbf16, #tpu.memory_space<vmem>>, vector<64x2xbf16>
    tpu.vector_store %arg5[%c128_266, %c90], %244 {strides = array<i32>} : memref<640x128xbf16, #tpu.memory_space<vmem>>, vector<64x2xbf16>,
    %c0_267 = arith.constant 0 : index
    %c37_268 = arith.constant 37 : index
    %246 = vector.load %arg4[%c0_267, %c37_268] : memref<64x128xf32, #tpu.memory_space<vmem>>, vector<64x37xf32>
    %247 = arith.truncf %246 : vector<64x37xf32> to vector<64x37xbf16>
    %c128_269 = arith.constant 128 : index
    %c53_270 = arith.constant 53 : index
    %248 = vector.load %arg5[%c128_269, %c53_270] : memref<640x128xbf16, #tpu.memory_space<vmem>>, vector<64x37xbf16>
    tpu.vector_store %arg5[%c128_269, %c53_270], %247 {strides = array<i32>} : memref<640x128xbf16, #tpu.memory_space<vmem>>, vector<64x37xbf16>,
    %cst_271 = arith.constant 0.000000e+00 : bf16
    %249 = vector.broadcast %cst_271 : bf16 to vector<64x6xbf16>
    %c192_272 = arith.constant 192 : index
    %c0_273 = arith.constant 0 : index
    %250 = vector.load %arg5[%c192_272, %c0_273] : memref<640x128xbf16, #tpu.memory_space<vmem>>, vector<64x6xbf16>
    tpu.vector_store %arg5[%c192_272, %c0_273], %249 {strides = array<i32>} : memref<640x128xbf16, #tpu.memory_space<vmem>>, vector<64x6xbf16>,
    %cst_274 = arith.constant 0.000000e+00 : bf16
    %251 = vector.broadcast %cst_274 : bf16 to vector<64x3xbf16>
    %c192_275 = arith.constant 192 : index
    %c43 = arith.constant 43 : index
    %252 = vector.load %arg5[%c192_275, %c43] : memref<640x128xbf16, #tpu.memory_space<vmem>>, vector<64x3xbf16>
    tpu.vector_store %arg5[%c192_275, %c43], %251 {strides = array<i32>} : memref<640x128xbf16, #tpu.memory_space<vmem>>, vector<64x3xbf16>,
    %c0_276 = arith.constant 0 : index
    %c0_277 = arith.constant 0 : index
    %253 = vector.load %arg4[%c0_276, %c0_277] : memref<64x128xf32, #tpu.memory_space<vmem>>, vector<64x37xf32>
    %254 = arith.truncf %253 : vector<64x37xf32> to vector<64x37xbf16>
    %c192_278 = arith.constant 192 : index
    %c6_279 = arith.constant 6 : index
    %255 = vector.load %arg5[%c192_278, %c6_279] : memref<640x128xbf16, #tpu.memory_space<vmem>>, vector<64x37xbf16>
    tpu.vector_store %arg5[%c192_278, %c6_279], %254 {strides = array<i32>} : memref<640x128xbf16, #tpu.memory_space<vmem>>, vector<64x37xbf16>,
    %cst_280 = arith.constant 0.000000e+00 : bf16
    %256 = vector.broadcast %cst_280 : bf16 to vector<64x6xbf16>
    %c192_281 = arith.constant 192 : index
    %c46_282 = arith.constant 46 : index
    %257 = vector.load %arg5[%c192_281, %c46_282] : memref<640x128xbf16, #tpu.memory_space<vmem>>, vector<64x6xbf16>
    tpu.vector_store %arg5[%c192_281, %c46_282], %256 {strides = array<i32>} : memref<640x128xbf16, #tpu.memory_space<vmem>>, vector<64x6xbf16>,
    %cst_283 = arith.constant 0.000000e+00 : bf16
    %258 = vector.broadcast %cst_283 : bf16 to vector<64x3xbf16>
    %c192_284 = arith.constant 192 : index
    %c89 = arith.constant 89 : index
    %259 = vector.load %arg5[%c192_284, %c89] : memref<640x128xbf16, #tpu.memory_space<vmem>>, vector<64x3xbf16>
    tpu.vector_store %arg5[%c192_284, %c89], %258 {strides = array<i32>} : memref<640x128xbf16, #tpu.memory_space<vmem>>, vector<64x3xbf16>,
    %c0_285 = arith.constant 0 : index
    %c37_286 = arith.constant 37 : index
    %260 = vector.load %arg4[%c0_285, %c37_286] : memref<64x128xf32, #tpu.memory_space<vmem>>, vector<64x37xf32>
    %261 = arith.truncf %260 : vector<64x37xf32> to vector<64x37xbf16>
    %c192_287 = arith.constant 192 : index
    %c52_288 = arith.constant 52 : index
    %262 = vector.load %arg5[%c192_287, %c52_288] : memref<640x128xbf16, #tpu.memory_space<vmem>>, vector<64x37xbf16>
    tpu.vector_store %arg5[%c192_287, %c52_288], %261 {strides = array<i32>} : memref<640x128xbf16, #tpu.memory_space<vmem>>, vector<64x37xbf16>,
    %cst_289 = arith.constant 0.000000e+00 : bf16
    %263 = vector.broadcast %cst_289 : bf16 to vector<64x5xbf16>
    %c256_290 = arith.constant 256 : index
    %c0_291 = arith.constant 0 : index
    %264 = vector.load %arg5[%c256_290, %c0_291] : memref<640x128xbf16, #tpu.memory_space<vmem>>, vector<64x5xbf16>
    tpu.vector_store %arg5[%c256_290, %c0_291], %263 {strides = array<i32>} : memref<640x128xbf16, #tpu.memory_space<vmem>>, vector<64x5xbf16>,
    %cst_292 = arith.constant 0.000000e+00 : bf16
    %265 = vector.broadcast %cst_292 : bf16 to vector<64x4xbf16>
    %c256_293 = arith.constant 256 : index
    %c42 = arith.constant 42 : index
    %266 = vector.load %arg5[%c256_293, %c42] : memref<640x128xbf16, #tpu.memory_space<vmem>>, vector<64x4xbf16>
    tpu.vector_store %arg5[%c256_293, %c42], %265 {strides = array<i32>} : memref<640x128xbf16, #tpu.memory_space<vmem>>, vector<64x4xbf16>,
    %c0_294 = arith.constant 0 : index
    %c0_295 = arith.constant 0 : index
    %267 = vector.load %arg4[%c0_294, %c0_295] : memref<64x128xf32, #tpu.memory_space<vmem>>, vector<64x37xf32>
    %268 = arith.truncf %267 : vector<64x37xf32> to vector<64x37xbf16>
    %c256_296 = arith.constant 256 : index
    %c5_297 = arith.constant 5 : index
    %269 = vector.load %arg5[%c256_296, %c5_297] : memref<640x128xbf16, #tpu.memory_space<vmem>>, vector<64x37xbf16>
    tpu.vector_store %arg5[%c256_296, %c5_297], %268 {strides = array<i32>} : memref<640x128xbf16, #tpu.memory_space<vmem>>, vector<64x37xbf16>,
    %cst_298 = arith.constant 0.000000e+00 : bf16
    %270 = vector.broadcast %cst_298 : bf16 to vector<64x5xbf16>
    %c256_299 = arith.constant 256 : index
    %c46_300 = arith.constant 46 : index
    %271 = vector.load %arg5[%c256_299, %c46_300] : memref<640x128xbf16, #tpu.memory_space<vmem>>, vector<64x5xbf16>
    tpu.vector_store %arg5[%c256_299, %c46_300], %270 {strides = array<i32>} : memref<640x128xbf16, #tpu.memory_space<vmem>>, vector<64x5xbf16>,
    %cst_301 = arith.constant 0.000000e+00 : bf16
    %272 = vector.broadcast %cst_301 : bf16 to vector<64x4xbf16>
    %c256_302 = arith.constant 256 : index
    %c88 = arith.constant 88 : index
    %273 = vector.load %arg5[%c256_302, %c88] : memref<640x128xbf16, #tpu.memory_space<vmem>>, vector<64x4xbf16>
    tpu.vector_store %arg5[%c256_302, %c88], %272 {strides = array<i32>} : memref<640x128xbf16, #tpu.memory_space<vmem>>, vector<64x4xbf16>,
    %c0_303 = arith.constant 0 : index
    %c37_304 = arith.constant 37 : index
    %274 = vector.load %arg4[%c0_303, %c37_304] : memref<64x128xf32, #tpu.memory_space<vmem>>, vector<64x37xf32>
    %275 = arith.truncf %274 : vector<64x37xf32> to vector<64x37xbf16>
    %c256_305 = arith.constant 256 : index
    %c51_306 = arith.constant 51 : index
    %276 = vector.load %arg5[%c256_305, %c51_306] : memref<640x128xbf16, #tpu.memory_space<vmem>>, vector<64x37xbf16>
    tpu.vector_store %arg5[%c256_305, %c51_306], %275 {strides = array<i32>} : memref<640x128xbf16, #tpu.memory_space<vmem>>, vector<64x37xbf16>,
    %cst_307 = arith.constant 0.000000e+00 : bf16
    %277 = vector.broadcast %cst_307 : bf16 to vector<64x4xbf16>
    %c320 = arith.constant 320 : index
    %c0_308 = arith.constant 0 : index
    %278 = vector.load %arg5[%c320, %c0_308] : memref<640x128xbf16, #tpu.memory_space<vmem>>, vector<64x4xbf16>
    tpu.vector_store %arg5[%c320, %c0_308], %277 {strides = array<i32>} : memref<640x128xbf16, #tpu.memory_space<vmem>>, vector<64x4xbf16>,
    %cst_309 = arith.constant 0.000000e+00 : bf16
    %279 = vector.broadcast %cst_309 : bf16 to vector<64x5xbf16>
    %c320_310 = arith.constant 320 : index
    %c41 = arith.constant 41 : index
    %280 = vector.load %arg5[%c320_310, %c41] : memref<640x128xbf16, #tpu.memory_space<vmem>>, vector<64x5xbf16>
    tpu.vector_store %arg5[%c320_310, %c41], %279 {strides = array<i32>} : memref<640x128xbf16, #tpu.memory_space<vmem>>, vector<64x5xbf16>,
    %c0_311 = arith.constant 0 : index
    %c0_312 = arith.constant 0 : index
    %281 = vector.load %arg4[%c0_311, %c0_312] : memref<64x128xf32, #tpu.memory_space<vmem>>, vector<64x37xf32>
    %282 = arith.truncf %281 : vector<64x37xf32> to vector<64x37xbf16>
    %c320_313 = arith.constant 320 : index
    %c4_314 = arith.constant 4 : index
    %283 = vector.load %arg5[%c320_313, %c4_314] : memref<640x128xbf16, #tpu.memory_space<vmem>>, vector<64x37xbf16>
    tpu.vector_store %arg5[%c320_313, %c4_314], %282 {strides = array<i32>} : memref<640x128xbf16, #tpu.memory_space<vmem>>, vector<64x37xbf16>,
    %cst_315 = arith.constant 0.000000e+00 : bf16
    %284 = vector.broadcast %cst_315 : bf16 to vector<64x4xbf16>
    %c320_316 = arith.constant 320 : index
    %c46_317 = arith.constant 46 : index
    %285 = vector.load %arg5[%c320_316, %c46_317] : memref<640x128xbf16, #tpu.memory_space<vmem>>, vector<64x4xbf16>
    tpu.vector_store %arg5[%c320_316, %c46_317], %284 {strides = array<i32>} : memref<640x128xbf16, #tpu.memory_space<vmem>>, vector<64x4xbf16>,
    %cst_318 = arith.constant 0.000000e+00 : bf16
    %286 = vector.broadcast %cst_318 : bf16 to vector<64x5xbf16>
    %c320_319 = arith.constant 320 : index
    %c87 = arith.constant 87 : index
    %287 = vector.load %arg5[%c320_319, %c87] : memref<640x128xbf16, #tpu.memory_space<vmem>>, vector<64x5xbf16>
    tpu.vector_store %arg5[%c320_319, %c87], %286 {strides = array<i32>} : memref<640x128xbf16, #tpu.memory_space<vmem>>, vector<64x5xbf16>,
    %c0_320 = arith.constant 0 : index
    %c37_321 = arith.constant 37 : index
    %288 = vector.load %arg4[%c0_320, %c37_321] : memref<64x128xf32, #tpu.memory_space<vmem>>, vector<64x37xf32>
    %289 = arith.truncf %288 : vector<64x37xf32> to vector<64x37xbf16>
    %c320_322 = arith.constant 320 : index
    %c50_323 = arith.constant 50 : index
    %290 = vector.load %arg5[%c320_322, %c50_323] : memref<640x128xbf16, #tpu.memory_space<vmem>>, vector<64x37xbf16>
    tpu.vector_store %arg5[%c320_322, %c50_323], %289 {strides = array<i32>} : memref<640x128xbf16, #tpu.memory_space<vmem>>, vector<64x37xbf16>,
    %cst_324 = arith.constant 0.000000e+00 : bf16
    %291 = vector.broadcast %cst_324 : bf16 to vector<64x3xbf16>
    %c384 = arith.constant 384 : index
    %c0_325 = arith.constant 0 : index
    %292 = vector.load %arg5[%c384, %c0_325] : memref<640x128xbf16, #tpu.memory_space<vmem>>, vector<64x3xbf16>
    tpu.vector_store %arg5[%c384, %c0_325], %291 {strides = array<i32>} : memref<640x128xbf16, #tpu.memory_space<vmem>>, vector<64x3xbf16>,
    %cst_326 = arith.constant 0.000000e+00 : bf16
    %293 = vector.broadcast %cst_326 : bf16 to vector<64x6xbf16>
    %c384_327 = arith.constant 384 : index
    %c40 = arith.constant 40 : index
    %294 = vector.load %arg5[%c384_327, %c40] : memref<640x128xbf16, #tpu.memory_space<vmem>>, vector<64x6xbf16>
    tpu.vector_store %arg5[%c384_327, %c40], %293 {strides = array<i32>} : memref<640x128xbf16, #tpu.memory_space<vmem>>, vector<64x6xbf16>,
    %c0_328 = arith.constant 0 : index
    %c0_329 = arith.constant 0 : index
    %295 = vector.load %arg4[%c0_328, %c0_329] : memref<64x128xf32, #tpu.memory_space<vmem>>, vector<64x37xf32>
    %296 = arith.truncf %295 : vector<64x37xf32> to vector<64x37xbf16>
    %c384_330 = arith.constant 384 : index
    %c3_331 = arith.constant 3 : index
    %297 = vector.load %arg5[%c384_330, %c3_331] : memref<640x128xbf16, #tpu.memory_space<vmem>>, vector<64x37xbf16>
    tpu.vector_store %arg5[%c384_330, %c3_331], %296 {strides = array<i32>} : memref<640x128xbf16, #tpu.memory_space<vmem>>, vector<64x37xbf16>,
    %cst_332 = arith.constant 0.000000e+00 : bf16
    %298 = vector.broadcast %cst_332 : bf16 to vector<64x3xbf16>
    %c384_333 = arith.constant 384 : index
    %c46_334 = arith.constant 46 : index
    %299 = vector.load %arg5[%c384_333, %c46_334] : memref<640x128xbf16, #tpu.memory_space<vmem>>, vector<64x3xbf16>
    tpu.vector_store %arg5[%c384_333, %c46_334], %298 {strides = array<i32>} : memref<640x128xbf16, #tpu.memory_space<vmem>>, vector<64x3xbf16>,
    %cst_335 = arith.constant 0.000000e+00 : bf16
    %300 = vector.broadcast %cst_335 : bf16 to vector<64x6xbf16>
    %c384_336 = arith.constant 384 : index
    %c86 = arith.constant 86 : index
    %301 = vector.load %arg5[%c384_336, %c86] : memref<640x128xbf16, #tpu.memory_space<vmem>>, vector<64x6xbf16>
    tpu.vector_store %arg5[%c384_336, %c86], %300 {strides = array<i32>} : memref<640x128xbf16, #tpu.memory_space<vmem>>, vector<64x6xbf16>,
    %c0_337 = arith.constant 0 : index
    %c37_338 = arith.constant 37 : index
    %302 = vector.load %arg4[%c0_337, %c37_338] : memref<64x128xf32, #tpu.memory_space<vmem>>, vector<64x37xf32>
    %303 = arith.truncf %302 : vector<64x37xf32> to vector<64x37xbf16>
    %c384_339 = arith.constant 384 : index
    %c49_340 = arith.constant 49 : index
    %304 = vector.load %arg5[%c384_339, %c49_340] : memref<640x128xbf16, #tpu.memory_space<vmem>>, vector<64x37xbf16>
    tpu.vector_store %arg5[%c384_339, %c49_340], %303 {strides = array<i32>} : memref<640x128xbf16, #tpu.memory_space<vmem>>, vector<64x37xbf16>,
    %cst_341 = arith.constant 0.000000e+00 : bf16
    %305 = vector.broadcast %cst_341 : bf16 to vector<64x2xbf16>
    %c448 = arith.constant 448 : index
    %c0_342 = arith.constant 0 : index
    %306 = vector.load %arg5[%c448, %c0_342] : memref<640x128xbf16, #tpu.memory_space<vmem>>, vector<64x2xbf16>
    tpu.vector_store %arg5[%c448, %c0_342], %305 {strides = array<i32>} : memref<640x128xbf16, #tpu.memory_space<vmem>>, vector<64x2xbf16>,
    %cst_343 = arith.constant 0.000000e+00 : bf16
    %307 = vector.broadcast %cst_343 : bf16 to vector<64x7xbf16>
    %c448_344 = arith.constant 448 : index
    %c39 = arith.constant 39 : index
    %308 = vector.load %arg5[%c448_344, %c39] : memref<640x128xbf16, #tpu.memory_space<vmem>>, vector<64x7xbf16>
    tpu.vector_store %arg5[%c448_344, %c39], %307 {strides = array<i32>} : memref<640x128xbf16, #tpu.memory_space<vmem>>, vector<64x7xbf16>,
    %c0_345 = arith.constant 0 : index
    %c0_346 = arith.constant 0 : index
    %309 = vector.load %arg4[%c0_345, %c0_346] : memref<64x128xf32, #tpu.memory_space<vmem>>, vector<64x37xf32>
    %310 = arith.truncf %309 : vector<64x37xf32> to vector<64x37xbf16>
    %c448_347 = arith.constant 448 : index
    %c2_348 = arith.constant 2 : index
    %311 = vector.load %arg5[%c448_347, %c2_348] : memref<640x128xbf16, #tpu.memory_space<vmem>>, vector<64x37xbf16>
    tpu.vector_store %arg5[%c448_347, %c2_348], %310 {strides = array<i32>} : memref<640x128xbf16, #tpu.memory_space<vmem>>, vector<64x37xbf16>,
    %cst_349 = arith.constant 0.000000e+00 : bf16
    %312 = vector.broadcast %cst_349 : bf16 to vector<64x2xbf16>
    %c448_350 = arith.constant 448 : index
    %c46_351 = arith.constant 46 : index
    %313 = vector.load %arg5[%c448_350, %c46_351] : memref<640x128xbf16, #tpu.memory_space<vmem>>, vector<64x2xbf16>
    tpu.vector_store %arg5[%c448_350, %c46_351], %312 {strides = array<i32>} : memref<640x128xbf16, #tpu.memory_space<vmem>>, vector<64x2xbf16>,
    %cst_352 = arith.constant 0.000000e+00 : bf16
    %314 = vector.broadcast %cst_352 : bf16 to vector<64x7xbf16>
    %c448_353 = arith.constant 448 : index
    %c85 = arith.constant 85 : index
    %315 = vector.load %arg5[%c448_353, %c85] : memref<640x128xbf16, #tpu.memory_space<vmem>>, vector<64x7xbf16>
    tpu.vector_store %arg5[%c448_353, %c85], %314 {strides = array<i32>} : memref<640x128xbf16, #tpu.memory_space<vmem>>, vector<64x7xbf16>,
    %c0_354 = arith.constant 0 : index
    %c37_355 = arith.constant 37 : index
    %316 = vector.load %arg4[%c0_354, %c37_355] : memref<64x128xf32, #tpu.memory_space<vmem>>, vector<64x37xf32>
    %317 = arith.truncf %316 : vector<64x37xf32> to vector<64x37xbf16>
    %c448_356 = arith.constant 448 : index
    %c48_357 = arith.constant 48 : index
    %318 = vector.load %arg5[%c448_356, %c48_357] : memref<640x128xbf16, #tpu.memory_space<vmem>>, vector<64x37xbf16>
    tpu.vector_store %arg5[%c448_356, %c48_357], %317 {strides = array<i32>} : memref<640x128xbf16, #tpu.memory_space<vmem>>, vector<64x37xbf16>,
    %cst_358 = arith.constant 0.000000e+00 : bf16
    %319 = vector.broadcast %cst_358 : bf16 to vector<64x1xbf16>
    %c512 = arith.constant 512 : index
    %c0_359 = arith.constant 0 : index
    %320 = vector.load %arg5[%c512, %c0_359] : memref<640x128xbf16, #tpu.memory_space<vmem>>, vector<64x1xbf16>
    tpu.vector_store %arg5[%c512, %c0_359], %319 {strides = array<i32>} : memref<640x128xbf16, #tpu.memory_space<vmem>>, vector<64x1xbf16>,
    %cst_360 = arith.constant 0.000000e+00 : bf16
    %321 = vector.broadcast %cst_360 : bf16 to vector<64x8xbf16>
    %c512_361 = arith.constant 512 : index
    %c38 = arith.constant 38 : index
    %322 = vector.load %arg5[%c512_361, %c38] : memref<640x128xbf16, #tpu.memory_space<vmem>>, vector<64x8xbf16>
    tpu.vector_store %arg5[%c512_361, %c38], %321 {strides = array<i32>} : memref<640x128xbf16, #tpu.memory_space<vmem>>, vector<64x8xbf16>,
    %c0_362 = arith.constant 0 : index
    %c0_363 = arith.constant 0 : index
    %323 = vector.load %arg4[%c0_362, %c0_363] : memref<64x128xf32, #tpu.memory_space<vmem>>, vector<64x37xf32>
    %324 = arith.truncf %323 : vector<64x37xf32> to vector<64x37xbf16>
    %c512_364 = arith.constant 512 : index
    %c1_365 = arith.constant 1 : index
    %325 = vector.load %arg5[%c512_364, %c1_365] : memref<640x128xbf16, #tpu.memory_space<vmem>>, vector<64x37xbf16>
    tpu.vector_store %arg5[%c512_364, %c1_365], %324 {strides = array<i32>} : memref<640x128xbf16, #tpu.memory_space<vmem>>, vector<64x37xbf16>,
    %cst_366 = arith.constant 0.000000e+00 : bf16
    %326 = vector.broadcast %cst_366 : bf16 to vector<64x1xbf16>
    %c512_367 = arith.constant 512 : index
    %c46_368 = arith.constant 46 : index
    %327 = vector.load %arg5[%c512_367, %c46_368] : memref<640x128xbf16, #tpu.memory_space<vmem>>, vector<64x1xbf16>
    tpu.vector_store %arg5[%c512_367, %c46_368], %326 {strides = array<i32>} : memref<640x128xbf16, #tpu.memory_space<vmem>>, vector<64x1xbf16>,
    %cst_369 = arith.constant 0.000000e+00 : bf16
    %328 = vector.broadcast %cst_369 : bf16 to vector<64x8xbf16>
    %c512_370 = arith.constant 512 : index
    %c84 = arith.constant 84 : index
    %329 = vector.load %arg5[%c512_370, %c84] : memref<640x128xbf16, #tpu.memory_space<vmem>>, vector<64x8xbf16>
    tpu.vector_store %arg5[%c512_370, %c84], %328 {strides = array<i32>} : memref<640x128xbf16, #tpu.memory_space<vmem>>, vector<64x8xbf16>,
    %c0_371 = arith.constant 0 : index
    %c37_372 = arith.constant 37 : index
    %330 = vector.load %arg4[%c0_371, %c37_372] : memref<64x128xf32, #tpu.memory_space<vmem>>, vector<64x37xf32>
    %331 = arith.truncf %330 : vector<64x37xf32> to vector<64x37xbf16>
    %c512_373 = arith.constant 512 : index
    %c47_374 = arith.constant 47 : index
    %332 = vector.load %arg5[%c512_373, %c47_374] : memref<640x128xbf16, #tpu.memory_space<vmem>>, vector<64x37xbf16>
    tpu.vector_store %arg5[%c512_373, %c47_374], %331 {strides = array<i32>} : memref<640x128xbf16, #tpu.memory_space<vmem>>, vector<64x37xbf16>,
    %cst_375 = arith.constant 0.000000e+00 : bf16
    %333 = vector.broadcast %cst_375 : bf16 to vector<64x9xbf16>
    %c576 = arith.constant 576 : index
    %c37_376 = arith.constant 37 : index
    %334 = vector.load %arg5[%c576, %c37_376] : memref<640x128xbf16, #tpu.memory_space<vmem>>, vector<64x9xbf16>
    tpu.vector_store %arg5[%c576, %c37_376], %333 {strides = array<i32>} : memref<640x128xbf16, #tpu.memory_space<vmem>>, vector<64x9xbf16>,
    %c0_377 = arith.constant 0 : index
    %c0_378 = arith.constant 0 : index
    %335 = vector.load %arg4[%c0_377, %c0_378] : memref<64x128xf32, #tpu.memory_space<vmem>>, vector<64x37xf32>
    %336 = arith.truncf %335 : vector<64x37xf32> to vector<64x37xbf16>
    %c576_379 = arith.constant 576 : index
    %c0_380 = arith.constant 0 : index
    %337 = vector.load %arg5[%c576_379, %c0_380] : memref<640x128xbf16, #tpu.memory_space<vmem>>, vector<64x37xbf16>
    tpu.vector_store %arg5[%c576_379, %c0_380], %336 {strides = array<i32>} : memref<640x128xbf16, #tpu.memory_space<vmem>>, vector<64x37xbf16>,
    %cst_381 = arith.constant 0.000000e+00 : bf16
    %338 = vector.broadcast %cst_381 : bf16 to vector<64x9xbf16>
    %c576_382 = arith.constant 576 : index
    %c83 = arith.constant 83 : index
    %339 = vector.load %arg5[%c576_382, %c83] : memref<640x128xbf16, #tpu.memory_space<vmem>>, vector<64x9xbf16>
    tpu.vector_store %arg5[%c576_382, %c83], %338 {strides = array<i32>} : memref<640x128xbf16, #tpu.memory_space<vmem>>, vector<64x9xbf16>,
    %c0_383 = arith.constant 0 : index
    %c37_384 = arith.constant 37 : index
    %340 = vector.load %arg4[%c0_383, %c37_384] : memref<64x128xf32, #tpu.memory_space<vmem>>, vector<64x37xf32>
    %341 = arith.truncf %340 : vector<64x37xf32> to vector<64x37xbf16>
    %c576_385 = arith.constant 576 : index
    %c46_386 = arith.constant 46 : index
    %342 = vector.load %arg5[%c576_385, %c46_386] : memref<640x128xbf16, #tpu.memory_space<vmem>>, vector<64x37xbf16>
    tpu.vector_store %arg5[%c576_385, %c46_386], %341 {strides = array<i32>} : memref<640x128xbf16, #tpu.memory_space<vmem>>, vector<64x37xbf16>,
    %c112_387 = arith.constant 112 : index
    %c0_388 = arith.constant 0 : index
    %343 = vector.load %arg1[%c112_387, %c0_388] : memref<176x640xbf16, #tpu.memory_space<vmem>>, vector<32x640xbf16>
    %c0_389 = arith.constant 0 : index
    %c0_390 = arith.constant 0 : index
    %344 = vector.load %arg5[%c0_389, %c0_390] : memref<640x128xbf16, #tpu.memory_space<vmem>>, vector<640x128xbf16>
    %cst_391 = arith.constant dense<0.000000e+00> : vector<32x128xf32>
    %345 = tpu.matmul %343, %344, %cst_391 {dimension_numbers = #tpu.dot_dimension_numbers<[1], [0], [0], [1], [0, 0, 1, 1], [], []>} : vector<32x640xbf16>, vector<640x128xbf16>, vector<32x128xf32> -> vector<32x128xf32>
    %c0_392 = arith.constant 0 : index
    %c3_393 = arith.constant 3 : index
    %346 = vector.load %arg2[%c0_392, %c3_393] : memref<64x8xf32, #tpu.memory_space<vmem>>, vector<32x1xf32>
    %347 = vector.broadcast %346 : vector<32x1xf32> to vector<32x128xf32>
    %348 = arith.addf %345, %347 : vector<32x128xf32>
    %cst_394 = arith.constant 0.000000e+00 : f32
    %349 = vector.broadcast %cst_394 : f32 to vector<32x128xf32>
    %350 = arith.maximumf %348, %349 : vector<32x128xf32>
    %c0_395 = arith.constant 0 : index
    %c0_396 = arith.constant 0 : index
    %351 = vector.load %arg4[%c0_395, %c0_396] : memref<64x128xf32, #tpu.memory_space<vmem>>, vector<32x128xf32>
    tpu.vector_store %arg4[%c0_395, %c0_396], %350 {strides = array<i32>} : memref<64x128xf32, #tpu.memory_space<vmem>>, vector<32x128xf32>,
    %cst_397 = arith.constant 0.000000e+00 : bf16
    %352 = vector.broadcast %cst_397 : bf16 to vector<32x9xbf16>
    %c0_398 = arith.constant 0 : index
    %c0_399 = arith.constant 0 : index
    %353 = vector.load %arg5[%c0_398, %c0_399] : memref<640x128xbf16, #tpu.memory_space<vmem>>, vector<32x9xbf16>
    tpu.vector_store %arg5[%c0_398, %c0_399], %352 {strides = array<i32>} : memref<640x128xbf16, #tpu.memory_space<vmem>>, vector<32x9xbf16>,
    %c0_400 = arith.constant 0 : index
    %c0_401 = arith.constant 0 : index
    %354 = vector.load %arg4[%c0_400, %c0_401] : memref<64x128xf32, #tpu.memory_space<vmem>>, vector<32x46xf32>
    %355 = arith.truncf %354 : vector<32x46xf32> to vector<32x46xbf16>
    %c0_402 = arith.constant 0 : index
    %c9_403 = arith.constant 9 : index
    %356 = vector.load %arg5[%c0_402, %c9_403] : memref<640x128xbf16, #tpu.memory_space<vmem>>, vector<32x46xbf16>
    tpu.vector_store %arg5[%c0_402, %c9_403], %355 {strides = array<i32>} : memref<640x128xbf16, #tpu.memory_space<vmem>>, vector<32x46xbf16>,
    %cst_404 = arith.constant 0.000000e+00 : bf16
    %357 = vector.broadcast %cst_404 : bf16 to vector<32x9xbf16>
    %c0_405 = arith.constant 0 : index
    %c55_406 = arith.constant 55 : index
    %358 = vector.load %arg5[%c0_405, %c55_406] : memref<640x128xbf16, #tpu.memory_space<vmem>>, vector<32x9xbf16>
    tpu.vector_store %arg5[%c0_405, %c55_406], %357 {strides = array<i32>} : memref<640x128xbf16, #tpu.memory_space<vmem>>, vector<32x9xbf16>,
    %c0_407 = arith.constant 0 : index
    %c46_408 = arith.constant 46 : index
    %359 = vector.load %arg4[%c0_407, %c46_408] : memref<64x128xf32, #tpu.memory_space<vmem>>, vector<32x46xf32>
    %360 = arith.truncf %359 : vector<32x46xf32> to vector<32x46xbf16>
    %c0_409 = arith.constant 0 : index
    %c64_410 = arith.constant 64 : index
    %361 = vector.load %arg5[%c0_409, %c64_410] : memref<640x128xbf16, #tpu.memory_space<vmem>>, vector<32x46xbf16>
    tpu.vector_store %arg5[%c0_409, %c64_410], %360 {strides = array<i32>} : memref<640x128xbf16, #tpu.memory_space<vmem>>, vector<32x46xbf16>,
    %cst_411 = arith.constant 0.000000e+00 : bf16
    %362 = vector.broadcast %cst_411 : bf16 to vector<32x8xbf16>
    %c32_412 = arith.constant 32 : index
    %c0_413 = arith.constant 0 : index
    %363 = vector.load %arg5[%c32_412, %c0_413] : memref<640x128xbf16, #tpu.memory_space<vmem>>, vector<32x8xbf16>
    tpu.vector_store %arg5[%c32_412, %c0_413], %362 {strides = array<i32>} : memref<640x128xbf16, #tpu.memory_space<vmem>>, vector<32x8xbf16>,
    %cst_414 = arith.constant 0.000000e+00 : bf16
    %364 = vector.broadcast %cst_414 : bf16 to vector<32x1xbf16>
    %c32_415 = arith.constant 32 : index
    %c54_416 = arith.constant 54 : index
    %365 = vector.load %arg5[%c32_415, %c54_416] : memref<640x128xbf16, #tpu.memory_space<vmem>>, vector<32x1xbf16>
    tpu.vector_store %arg5[%c32_415, %c54_416], %364 {strides = array<i32>} : memref<640x128xbf16, #tpu.memory_space<vmem>>, vector<32x1xbf16>,
    %c0_417 = arith.constant 0 : index
    %c0_418 = arith.constant 0 : index
    %366 = vector.load %arg4[%c0_417, %c0_418] : memref<64x128xf32, #tpu.memory_space<vmem>>, vector<32x46xf32>
    %367 = arith.truncf %366 : vector<32x46xf32> to vector<32x46xbf16>
    %c32_419 = arith.constant 32 : index
    %c8_420 = arith.constant 8 : index
    %368 = vector.load %arg5[%c32_419, %c8_420] : memref<640x128xbf16, #tpu.memory_space<vmem>>, vector<32x46xbf16>
    tpu.vector_store %arg5[%c32_419, %c8_420], %367 {strides = array<i32>} : memref<640x128xbf16, #tpu.memory_space<vmem>>, vector<32x46xbf16>,
    %cst_421 = arith.constant 0.000000e+00 : bf16
    %369 = vector.broadcast %cst_421 : bf16 to vector<32x8xbf16>
    %c32_422 = arith.constant 32 : index
    %c55_423 = arith.constant 55 : index
    %370 = vector.load %arg5[%c32_422, %c55_423] : memref<640x128xbf16, #tpu.memory_space<vmem>>, vector<32x8xbf16>
    tpu.vector_store %arg5[%c32_422, %c55_423], %369 {strides = array<i32>} : memref<640x128xbf16, #tpu.memory_space<vmem>>, vector<32x8xbf16>,
    %cst_424 = arith.constant 0.000000e+00 : bf16
    %371 = vector.broadcast %cst_424 : bf16 to vector<32x1xbf16>
    %c32_425 = arith.constant 32 : index
    %c109 = arith.constant 109 : index
    %372 = vector.load %arg5[%c32_425, %c109] : memref<640x128xbf16, #tpu.memory_space<vmem>>, vector<32x1xbf16>
    tpu.vector_store %arg5[%c32_425, %c109], %371 {strides = array<i32>} : memref<640x128xbf16, #tpu.memory_space<vmem>>, vector<32x1xbf16>,
    %c0_426 = arith.constant 0 : index
    %c46_427 = arith.constant 46 : index
    %373 = vector.load %arg4[%c0_426, %c46_427] : memref<64x128xf32, #tpu.memory_space<vmem>>, vector<32x46xf32>
    %374 = arith.truncf %373 : vector<32x46xf32> to vector<32x46xbf16>
    %c32_428 = arith.constant 32 : index
    %c63_429 = arith.constant 63 : index
    %375 = vector.load %arg5[%c32_428, %c63_429] : memref<640x128xbf16, #tpu.memory_space<vmem>>, vector<32x46xbf16>
    tpu.vector_store %arg5[%c32_428, %c63_429], %374 {strides = array<i32>} : memref<640x128xbf16, #tpu.memory_space<vmem>>, vector<32x46xbf16>,
    %cst_430 = arith.constant 0.000000e+00 : bf16
    %376 = vector.broadcast %cst_430 : bf16 to vector<32x7xbf16>
    %c64_431 = arith.constant 64 : index
    %c0_432 = arith.constant 0 : index
    %377 = vector.load %arg5[%c64_431, %c0_432] : memref<640x128xbf16, #tpu.memory_space<vmem>>, vector<32x7xbf16>
    tpu.vector_store %arg5[%c64_431, %c0_432], %376 {strides = array<i32>} : memref<640x128xbf16, #tpu.memory_space<vmem>>, vector<32x7xbf16>,
    %cst_433 = arith.constant 0.000000e+00 : bf16
    %378 = vector.broadcast %cst_433 : bf16 to vector<32x2xbf16>
    %c64_434 = arith.constant 64 : index
    %c53_435 = arith.constant 53 : index
    %379 = vector.load %arg5[%c64_434, %c53_435] : memref<640x128xbf16, #tpu.memory_space<vmem>>, vector<32x2xbf16>
    tpu.vector_store %arg5[%c64_434, %c53_435], %378 {strides = array<i32>} : memref<640x128xbf16, #tpu.memory_space<vmem>>, vector<32x2xbf16>,
    %c0_436 = arith.constant 0 : index
    %c0_437 = arith.constant 0 : index
    %380 = vector.load %arg4[%c0_436, %c0_437] : memref<64x128xf32, #tpu.memory_space<vmem>>, vector<32x46xf32>
    %381 = arith.truncf %380 : vector<32x46xf32> to vector<32x46xbf16>
    %c64_438 = arith.constant 64 : index
    %c7_439 = arith.constant 7 : index
    %382 = vector.load %arg5[%c64_438, %c7_439] : memref<640x128xbf16, #tpu.memory_space<vmem>>, vector<32x46xbf16>
    tpu.vector_store %arg5[%c64_438, %c7_439], %381 {strides = array<i32>} : memref<640x128xbf16, #tpu.memory_space<vmem>>, vector<32x46xbf16>,
    %cst_440 = arith.constant 0.000000e+00 : bf16
    %383 = vector.broadcast %cst_440 : bf16 to vector<32x7xbf16>
    %c64_441 = arith.constant 64 : index
    %c55_442 = arith.constant 55 : index
    %384 = vector.load %arg5[%c64_441, %c55_442] : memref<640x128xbf16, #tpu.memory_space<vmem>>, vector<32x7xbf16>
    tpu.vector_store %arg5[%c64_441, %c55_442], %383 {strides = array<i32>} : memref<640x128xbf16, #tpu.memory_space<vmem>>, vector<32x7xbf16>,
    %cst_443 = arith.constant 0.000000e+00 : bf16
    %385 = vector.broadcast %cst_443 : bf16 to vector<32x2xbf16>
    %c64_444 = arith.constant 64 : index
    %c108 = arith.constant 108 : index
    %386 = vector.load %arg5[%c64_444, %c108] : memref<640x128xbf16, #tpu.memory_space<vmem>>, vector<32x2xbf16>
    tpu.vector_store %arg5[%c64_444, %c108], %385 {strides = array<i32>} : memref<640x128xbf16, #tpu.memory_space<vmem>>, vector<32x2xbf16>,
    %c0_445 = arith.constant 0 : index
    %c46_446 = arith.constant 46 : index
    %387 = vector.load %arg4[%c0_445, %c46_446] : memref<64x128xf32, #tpu.memory_space<vmem>>, vector<32x46xf32>
    %388 = arith.truncf %387 : vector<32x46xf32> to vector<32x46xbf16>
    %c64_447 = arith.constant 64 : index
    %c62_448 = arith.constant 62 : index
    %389 = vector.load %arg5[%c64_447, %c62_448] : memref<640x128xbf16, #tpu.memory_space<vmem>>, vector<32x46xbf16>
    tpu.vector_store %arg5[%c64_447, %c62_448], %388 {strides = array<i32>} : memref<640x128xbf16, #tpu.memory_space<vmem>>, vector<32x46xbf16>,
    %cst_449 = arith.constant 0.000000e+00 : bf16
    %390 = vector.broadcast %cst_449 : bf16 to vector<32x6xbf16>
    %c96_450 = arith.constant 96 : index
    %c0_451 = arith.constant 0 : index
    %391 = vector.load %arg5[%c96_450, %c0_451] : memref<640x128xbf16, #tpu.memory_space<vmem>>, vector<32x6xbf16>
    tpu.vector_store %arg5[%c96_450, %c0_451], %390 {strides = array<i32>} : memref<640x128xbf16, #tpu.memory_space<vmem>>, vector<32x6xbf16>,
    %cst_452 = arith.constant 0.000000e+00 : bf16
    %392 = vector.broadcast %cst_452 : bf16 to vector<32x3xbf16>
    %c96_453 = arith.constant 96 : index
    %c52_454 = arith.constant 52 : index
    %393 = vector.load %arg5[%c96_453, %c52_454] : memref<640x128xbf16, #tpu.memory_space<vmem>>, vector<32x3xbf16>
    tpu.vector_store %arg5[%c96_453, %c52_454], %392 {strides = array<i32>} : memref<640x128xbf16, #tpu.memory_space<vmem>>, vector<32x3xbf16>,
    %c0_455 = arith.constant 0 : index
    %c0_456 = arith.constant 0 : index
    %394 = vector.load %arg4[%c0_455, %c0_456] : memref<64x128xf32, #tpu.memory_space<vmem>>, vector<32x46xf32>
    %395 = arith.truncf %394 : vector<32x46xf32> to vector<32x46xbf16>
    %c96_457 = arith.constant 96 : index
    %c6_458 = arith.constant 6 : index
    %396 = vector.load %arg5[%c96_457, %c6_458] : memref<640x128xbf16, #tpu.memory_space<vmem>>, vector<32x46xbf16>
    tpu.vector_store %arg5[%c96_457, %c6_458], %395 {strides = array<i32>} : memref<640x128xbf16, #tpu.memory_space<vmem>>, vector<32x46xbf16>,
    %cst_459 = arith.constant 0.000000e+00 : bf16
    %397 = vector.broadcast %cst_459 : bf16 to vector<32x6xbf16>
    %c96_460 = arith.constant 96 : index
    %c55_461 = arith.constant 55 : index
    %398 = vector.load %arg5[%c96_460, %c55_461] : memref<640x128xbf16, #tpu.memory_space<vmem>>, vector<32x6xbf16>
    tpu.vector_store %arg5[%c96_460, %c55_461], %397 {strides = array<i32>} : memref<640x128xbf16, #tpu.memory_space<vmem>>, vector<32x6xbf16>,
    %cst_462 = arith.constant 0.000000e+00 : bf16
    %399 = vector.broadcast %cst_462 : bf16 to vector<32x3xbf16>
    %c96_463 = arith.constant 96 : index
    %c107 = arith.constant 107 : index
    %400 = vector.load %arg5[%c96_463, %c107] : memref<640x128xbf16, #tpu.memory_space<vmem>>, vector<32x3xbf16>
    tpu.vector_store %arg5[%c96_463, %c107], %399 {strides = array<i32>} : memref<640x128xbf16, #tpu.memory_space<vmem>>, vector<32x3xbf16>,
    %c0_464 = arith.constant 0 : index
    %c46_465 = arith.constant 46 : index
    %401 = vector.load %arg4[%c0_464, %c46_465] : memref<64x128xf32, #tpu.memory_space<vmem>>, vector<32x46xf32>
    %402 = arith.truncf %401 : vector<32x46xf32> to vector<32x46xbf16>
    %c96_466 = arith.constant 96 : index
    %c61_467 = arith.constant 61 : index
    %403 = vector.load %arg5[%c96_466, %c61_467] : memref<640x128xbf16, #tpu.memory_space<vmem>>, vector<32x46xbf16>
    tpu.vector_store %arg5[%c96_466, %c61_467], %402 {strides = array<i32>} : memref<640x128xbf16, #tpu.memory_space<vmem>>, vector<32x46xbf16>,
    %cst_468 = arith.constant 0.000000e+00 : bf16
    %404 = vector.broadcast %cst_468 : bf16 to vector<32x5xbf16>
    %c128_469 = arith.constant 128 : index
    %c0_470 = arith.constant 0 : index
    %405 = vector.load %arg5[%c128_469, %c0_470] : memref<640x128xbf16, #tpu.memory_space<vmem>>, vector<32x5xbf16>
    tpu.vector_store %arg5[%c128_469, %c0_470], %404 {strides = array<i32>} : memref<640x128xbf16, #tpu.memory_space<vmem>>, vector<32x5xbf16>,
    %cst_471 = arith.constant 0.000000e+00 : bf16
    %406 = vector.broadcast %cst_471 : bf16 to vector<32x4xbf16>
    %c128_472 = arith.constant 128 : index
    %c51_473 = arith.constant 51 : index
    %407 = vector.load %arg5[%c128_472, %c51_473] : memref<640x128xbf16, #tpu.memory_space<vmem>>, vector<32x4xbf16>
    tpu.vector_store %arg5[%c128_472, %c51_473], %406 {strides = array<i32>} : memref<640x128xbf16, #tpu.memory_space<vmem>>, vector<32x4xbf16>,
    %c0_474 = arith.constant 0 : index
    %c0_475 = arith.constant 0 : index
    %408 = vector.load %arg4[%c0_474, %c0_475] : memref<64x128xf32, #tpu.memory_space<vmem>>, vector<32x46xf32>
    %409 = arith.truncf %408 : vector<32x46xf32> to vector<32x46xbf16>
    %c128_476 = arith.constant 128 : index
    %c5_477 = arith.constant 5 : index
    %410 = vector.load %arg5[%c128_476, %c5_477] : memref<640x128xbf16, #tpu.memory_space<vmem>>, vector<32x46xbf16>
    tpu.vector_store %arg5[%c128_476, %c5_477], %409 {strides = array<i32>} : memref<640x128xbf16, #tpu.memory_space<vmem>>, vector<32x46xbf16>,
    %cst_478 = arith.constant 0.000000e+00 : bf16
    %411 = vector.broadcast %cst_478 : bf16 to vector<32x5xbf16>
    %c128_479 = arith.constant 128 : index
    %c55_480 = arith.constant 55 : index
    %412 = vector.load %arg5[%c128_479, %c55_480] : memref<640x128xbf16, #tpu.memory_space<vmem>>, vector<32x5xbf16>
    tpu.vector_store %arg5[%c128_479, %c55_480], %411 {strides = array<i32>} : memref<640x128xbf16, #tpu.memory_space<vmem>>, vector<32x5xbf16>,
    %cst_481 = arith.constant 0.000000e+00 : bf16
    %413 = vector.broadcast %cst_481 : bf16 to vector<32x4xbf16>
    %c128_482 = arith.constant 128 : index
    %c106 = arith.constant 106 : index
    %414 = vector.load %arg5[%c128_482, %c106] : memref<640x128xbf16, #tpu.memory_space<vmem>>, vector<32x4xbf16>
    tpu.vector_store %arg5[%c128_482, %c106], %413 {strides = array<i32>} : memref<640x128xbf16, #tpu.memory_space<vmem>>, vector<32x4xbf16>,
    %c0_483 = arith.constant 0 : index
    %c46_484 = arith.constant 46 : index
    %415 = vector.load %arg4[%c0_483, %c46_484] : memref<64x128xf32, #tpu.memory_space<vmem>>, vector<32x46xf32>
    %416 = arith.truncf %415 : vector<32x46xf32> to vector<32x46xbf16>
    %c128_485 = arith.constant 128 : index
    %c60_486 = arith.constant 60 : index
    %417 = vector.load %arg5[%c128_485, %c60_486] : memref<640x128xbf16, #tpu.memory_space<vmem>>, vector<32x46xbf16>
    tpu.vector_store %arg5[%c128_485, %c60_486], %416 {strides = array<i32>} : memref<640x128xbf16, #tpu.memory_space<vmem>>, vector<32x46xbf16>,
    %cst_487 = arith.constant 0.000000e+00 : bf16
    %418 = vector.broadcast %cst_487 : bf16 to vector<32x4xbf16>
    %c160_488 = arith.constant 160 : index
    %c0_489 = arith.constant 0 : index
    %419 = vector.load %arg5[%c160_488, %c0_489] : memref<640x128xbf16, #tpu.memory_space<vmem>>, vector<32x4xbf16>
    tpu.vector_store %arg5[%c160_488, %c0_489], %418 {strides = array<i32>} : memref<640x128xbf16, #tpu.memory_space<vmem>>, vector<32x4xbf16>,
    %cst_490 = arith.constant 0.000000e+00 : bf16
    %420 = vector.broadcast %cst_490 : bf16 to vector<32x5xbf16>
    %c160_491 = arith.constant 160 : index
    %c50_492 = arith.constant 50 : index
    %421 = vector.load %arg5[%c160_491, %c50_492] : memref<640x128xbf16, #tpu.memory_space<vmem>>, vector<32x5xbf16>
    tpu.vector_store %arg5[%c160_491, %c50_492], %420 {strides = array<i32>} : memref<640x128xbf16, #tpu.memory_space<vmem>>, vector<32x5xbf16>,
    %c0_493 = arith.constant 0 : index
    %c0_494 = arith.constant 0 : index
    %422 = vector.load %arg4[%c0_493, %c0_494] : memref<64x128xf32, #tpu.memory_space<vmem>>, vector<32x46xf32>
    %423 = arith.truncf %422 : vector<32x46xf32> to vector<32x46xbf16>
    %c160_495 = arith.constant 160 : index
    %c4_496 = arith.constant 4 : index
    %424 = vector.load %arg5[%c160_495, %c4_496] : memref<640x128xbf16, #tpu.memory_space<vmem>>, vector<32x46xbf16>
    tpu.vector_store %arg5[%c160_495, %c4_496], %423 {strides = array<i32>} : memref<640x128xbf16, #tpu.memory_space<vmem>>, vector<32x46xbf16>,
    %cst_497 = arith.constant 0.000000e+00 : bf16
    %425 = vector.broadcast %cst_497 : bf16 to vector<32x4xbf16>
    %c160_498 = arith.constant 160 : index
    %c55_499 = arith.constant 55 : index
    %426 = vector.load %arg5[%c160_498, %c55_499] : memref<640x128xbf16, #tpu.memory_space<vmem>>, vector<32x4xbf16>
    tpu.vector_store %arg5[%c160_498, %c55_499], %425 {strides = array<i32>} : memref<640x128xbf16, #tpu.memory_space<vmem>>, vector<32x4xbf16>,
    %cst_500 = arith.constant 0.000000e+00 : bf16
    %427 = vector.broadcast %cst_500 : bf16 to vector<32x5xbf16>
    %c160_501 = arith.constant 160 : index
    %c105 = arith.constant 105 : index
    %428 = vector.load %arg5[%c160_501, %c105] : memref<640x128xbf16, #tpu.memory_space<vmem>>, vector<32x5xbf16>
    tpu.vector_store %arg5[%c160_501, %c105], %427 {strides = array<i32>} : memref<640x128xbf16, #tpu.memory_space<vmem>>, vector<32x5xbf16>,
    %c0_502 = arith.constant 0 : index
    %c46_503 = arith.constant 46 : index
    %429 = vector.load %arg4[%c0_502, %c46_503] : memref<64x128xf32, #tpu.memory_space<vmem>>, vector<32x46xf32>
    %430 = arith.truncf %429 : vector<32x46xf32> to vector<32x46xbf16>
    %c160_504 = arith.constant 160 : index
    %c59_505 = arith.constant 59 : index
    %431 = vector.load %arg5[%c160_504, %c59_505] : memref<640x128xbf16, #tpu.memory_space<vmem>>, vector<32x46xbf16>
    tpu.vector_store %arg5[%c160_504, %c59_505], %430 {strides = array<i32>} : memref<640x128xbf16, #tpu.memory_space<vmem>>, vector<32x46xbf16>,
    %cst_506 = arith.constant 0.000000e+00 : bf16
    %432 = vector.broadcast %cst_506 : bf16 to vector<32x3xbf16>
    %c192_507 = arith.constant 192 : index
    %c0_508 = arith.constant 0 : index
    %433 = vector.load %arg5[%c192_507, %c0_508] : memref<640x128xbf16, #tpu.memory_space<vmem>>, vector<32x3xbf16>
    tpu.vector_store %arg5[%c192_507, %c0_508], %432 {strides = array<i32>} : memref<640x128xbf16, #tpu.memory_space<vmem>>, vector<32x3xbf16>,
    %cst_509 = arith.constant 0.000000e+00 : bf16
    %434 = vector.broadcast %cst_509 : bf16 to vector<32x6xbf16>
    %c192_510 = arith.constant 192 : index
    %c49_511 = arith.constant 49 : index
    %435 = vector.load %arg5[%c192_510, %c49_511] : memref<640x128xbf16, #tpu.memory_space<vmem>>, vector<32x6xbf16>
    tpu.vector_store %arg5[%c192_510, %c49_511], %434 {strides = array<i32>} : memref<640x128xbf16, #tpu.memory_space<vmem>>, vector<32x6xbf16>,
    %c0_512 = arith.constant 0 : index
    %c0_513 = arith.constant 0 : index
    %436 = vector.load %arg4[%c0_512, %c0_513] : memref<64x128xf32, #tpu.memory_space<vmem>>, vector<32x46xf32>
    %437 = arith.truncf %436 : vector<32x46xf32> to vector<32x46xbf16>
    %c192_514 = arith.constant 192 : index
    %c3_515 = arith.constant 3 : index
    %438 = vector.load %arg5[%c192_514, %c3_515] : memref<640x128xbf16, #tpu.memory_space<vmem>>, vector<32x46xbf16>
    tpu.vector_store %arg5[%c192_514, %c3_515], %437 {strides = array<i32>} : memref<640x128xbf16, #tpu.memory_space<vmem>>, vector<32x46xbf16>,
    %cst_516 = arith.constant 0.000000e+00 : bf16
    %439 = vector.broadcast %cst_516 : bf16 to vector<32x3xbf16>
    %c192_517 = arith.constant 192 : index
    %c55_518 = arith.constant 55 : index
    %440 = vector.load %arg5[%c192_517, %c55_518] : memref<640x128xbf16, #tpu.memory_space<vmem>>, vector<32x3xbf16>
    tpu.vector_store %arg5[%c192_517, %c55_518], %439 {strides = array<i32>} : memref<640x128xbf16, #tpu.memory_space<vmem>>, vector<32x3xbf16>,
    %cst_519 = arith.constant 0.000000e+00 : bf16
    %441 = vector.broadcast %cst_519 : bf16 to vector<32x6xbf16>
    %c192_520 = arith.constant 192 : index
    %c104 = arith.constant 104 : index
    %442 = vector.load %arg5[%c192_520, %c104] : memref<640x128xbf16, #tpu.memory_space<vmem>>, vector<32x6xbf16>
    tpu.vector_store %arg5[%c192_520, %c104], %441 {strides = array<i32>} : memref<640x128xbf16, #tpu.memory_space<vmem>>, vector<32x6xbf16>,
    %c0_521 = arith.constant 0 : index
    %c46_522 = arith.constant 46 : index
    %443 = vector.load %arg4[%c0_521, %c46_522] : memref<64x128xf32, #tpu.memory_space<vmem>>, vector<32x46xf32>
    %444 = arith.truncf %443 : vector<32x46xf32> to vector<32x46xbf16>
    %c192_523 = arith.constant 192 : index
    %c58_524 = arith.constant 58 : index
    %445 = vector.load %arg5[%c192_523, %c58_524] : memref<640x128xbf16, #tpu.memory_space<vmem>>, vector<32x46xbf16>
    tpu.vector_store %arg5[%c192_523, %c58_524], %444 {strides = array<i32>} : memref<640x128xbf16, #tpu.memory_space<vmem>>, vector<32x46xbf16>,
    %cst_525 = arith.constant 0.000000e+00 : bf16
    %446 = vector.broadcast %cst_525 : bf16 to vector<32x2xbf16>
    %c224_526 = arith.constant 224 : index
    %c0_527 = arith.constant 0 : index
    %447 = vector.load %arg5[%c224_526, %c0_527] : memref<640x128xbf16, #tpu.memory_space<vmem>>, vector<32x2xbf16>
    tpu.vector_store %arg5[%c224_526, %c0_527], %446 {strides = array<i32>} : memref<640x128xbf16, #tpu.memory_space<vmem>>, vector<32x2xbf16>,
    %cst_528 = arith.constant 0.000000e+00 : bf16
    %448 = vector.broadcast %cst_528 : bf16 to vector<32x7xbf16>
    %c224_529 = arith.constant 224 : index
    %c48_530 = arith.constant 48 : index
    %449 = vector.load %arg5[%c224_529, %c48_530] : memref<640x128xbf16, #tpu.memory_space<vmem>>, vector<32x7xbf16>
    tpu.vector_store %arg5[%c224_529, %c48_530], %448 {strides = array<i32>} : memref<640x128xbf16, #tpu.memory_space<vmem>>, vector<32x7xbf16>,
    %c0_531 = arith.constant 0 : index
    %c0_532 = arith.constant 0 : index
    %450 = vector.load %arg4[%c0_531, %c0_532] : memref<64x128xf32, #tpu.memory_space<vmem>>, vector<32x46xf32>
    %451 = arith.truncf %450 : vector<32x46xf32> to vector<32x46xbf16>
    %c224_533 = arith.constant 224 : index
    %c2_534 = arith.constant 2 : index
    %452 = vector.load %arg5[%c224_533, %c2_534] : memref<640x128xbf16, #tpu.memory_space<vmem>>, vector<32x46xbf16>
    tpu.vector_store %arg5[%c224_533, %c2_534], %451 {strides = array<i32>} : memref<640x128xbf16, #tpu.memory_space<vmem>>, vector<32x46xbf16>,
    %cst_535 = arith.constant 0.000000e+00 : bf16
    %453 = vector.broadcast %cst_535 : bf16 to vector<32x2xbf16>
    %c224_536 = arith.constant 224 : index
    %c55_537 = arith.constant 55 : index
    %454 = vector.load %arg5[%c224_536, %c55_537] : memref<640x128xbf16, #tpu.memory_space<vmem>>, vector<32x2xbf16>
    tpu.vector_store %arg5[%c224_536, %c55_537], %453 {strides = array<i32>} : memref<640x128xbf16, #tpu.memory_space<vmem>>, vector<32x2xbf16>,
    %cst_538 = arith.constant 0.000000e+00 : bf16
    %455 = vector.broadcast %cst_538 : bf16 to vector<32x7xbf16>
    %c224_539 = arith.constant 224 : index
    %c103 = arith.constant 103 : index
    %456 = vector.load %arg5[%c224_539, %c103] : memref<640x128xbf16, #tpu.memory_space<vmem>>, vector<32x7xbf16>
    tpu.vector_store %arg5[%c224_539, %c103], %455 {strides = array<i32>} : memref<640x128xbf16, #tpu.memory_space<vmem>>, vector<32x7xbf16>,
    %c0_540 = arith.constant 0 : index
    %c46_541 = arith.constant 46 : index
    %457 = vector.load %arg4[%c0_540, %c46_541] : memref<64x128xf32, #tpu.memory_space<vmem>>, vector<32x46xf32>
    %458 = arith.truncf %457 : vector<32x46xf32> to vector<32x46xbf16>
    %c224_542 = arith.constant 224 : index
    %c57_543 = arith.constant 57 : index
    %459 = vector.load %arg5[%c224_542, %c57_543] : memref<640x128xbf16, #tpu.memory_space<vmem>>, vector<32x46xbf16>
    tpu.vector_store %arg5[%c224_542, %c57_543], %458 {strides = array<i32>} : memref<640x128xbf16, #tpu.memory_space<vmem>>, vector<32x46xbf16>,
    %cst_544 = arith.constant 0.000000e+00 : bf16
    %460 = vector.broadcast %cst_544 : bf16 to vector<32x1xbf16>
    %c256_545 = arith.constant 256 : index
    %c0_546 = arith.constant 0 : index
    %461 = vector.load %arg5[%c256_545, %c0_546] : memref<640x128xbf16, #tpu.memory_space<vmem>>, vector<32x1xbf16>
    tpu.vector_store %arg5[%c256_545, %c0_546], %460 {strides = array<i32>} : memref<640x128xbf16, #tpu.memory_space<vmem>>, vector<32x1xbf16>,
    %cst_547 = arith.constant 0.000000e+00 : bf16
    %462 = vector.broadcast %cst_547 : bf16 to vector<32x8xbf16>
    %c256_548 = arith.constant 256 : index
    %c47_549 = arith.constant 47 : index
    %463 = vector.load %arg5[%c256_548, %c47_549] : memref<640x128xbf16, #tpu.memory_space<vmem>>, vector<32x8xbf16>
    tpu.vector_store %arg5[%c256_548, %c47_549], %462 {strides = array<i32>} : memref<640x128xbf16, #tpu.memory_space<vmem>>, vector<32x8xbf16>,
    %c0_550 = arith.constant 0 : index
    %c0_551 = arith.constant 0 : index
    %464 = vector.load %arg4[%c0_550, %c0_551] : memref<64x128xf32, #tpu.memory_space<vmem>>, vector<32x46xf32>
    %465 = arith.truncf %464 : vector<32x46xf32> to vector<32x46xbf16>
    %c256_552 = arith.constant 256 : index
    %c1_553 = arith.constant 1 : index
    %466 = vector.load %arg5[%c256_552, %c1_553] : memref<640x128xbf16, #tpu.memory_space<vmem>>, vector<32x46xbf16>
    tpu.vector_store %arg5[%c256_552, %c1_553], %465 {strides = array<i32>} : memref<640x128xbf16, #tpu.memory_space<vmem>>, vector<32x46xbf16>,
    %cst_554 = arith.constant 0.000000e+00 : bf16
    %467 = vector.broadcast %cst_554 : bf16 to vector<32x1xbf16>
    %c256_555 = arith.constant 256 : index
    %c55_556 = arith.constant 55 : index
    %468 = vector.load %arg5[%c256_555, %c55_556] : memref<640x128xbf16, #tpu.memory_space<vmem>>, vector<32x1xbf16>
    tpu.vector_store %arg5[%c256_555, %c55_556], %467 {strides = array<i32>} : memref<640x128xbf16, #tpu.memory_space<vmem>>, vector<32x1xbf16>,
    %cst_557 = arith.constant 0.000000e+00 : bf16
    %469 = vector.broadcast %cst_557 : bf16 to vector<32x8xbf16>
    %c256_558 = arith.constant 256 : index
    %c102 = arith.constant 102 : index
    %470 = vector.load %arg5[%c256_558, %c102] : memref<640x128xbf16, #tpu.memory_space<vmem>>, vector<32x8xbf16>
    tpu.vector_store %arg5[%c256_558, %c102], %469 {strides = array<i32>} : memref<640x128xbf16, #tpu.memory_space<vmem>>, vector<32x8xbf16>,
    %c0_559 = arith.constant 0 : index
    %c46_560 = arith.constant 46 : index
    %471 = vector.load %arg4[%c0_559, %c46_560] : memref<64x128xf32, #tpu.memory_space<vmem>>, vector<32x46xf32>
    %472 = arith.truncf %471 : vector<32x46xf32> to vector<32x46xbf16>
    %c256_561 = arith.constant 256 : index
    %c56_562 = arith.constant 56 : index
    %473 = vector.load %arg5[%c256_561, %c56_562] : memref<640x128xbf16, #tpu.memory_space<vmem>>, vector<32x46xbf16>
    tpu.vector_store %arg5[%c256_561, %c56_562], %472 {strides = array<i32>} : memref<640x128xbf16, #tpu.memory_space<vmem>>, vector<32x46xbf16>,
    %cst_563 = arith.constant 0.000000e+00 : bf16
    %474 = vector.broadcast %cst_563 : bf16 to vector<32x9xbf16>
    %c288_564 = arith.constant 288 : index
    %c46_565 = arith.constant 46 : index
    %475 = vector.load %arg5[%c288_564, %c46_565] : memref<640x128xbf16, #tpu.memory_space<vmem>>, vector<32x9xbf16>
    tpu.vector_store %arg5[%c288_564, %c46_565], %474 {strides = array<i32>} : memref<640x128xbf16, #tpu.memory_space<vmem>>, vector<32x9xbf16>,
    %c0_566 = arith.constant 0 : index
    %c0_567 = arith.constant 0 : index
    %476 = vector.load %arg4[%c0_566, %c0_567] : memref<64x128xf32, #tpu.memory_space<vmem>>, vector<32x46xf32>
    %477 = arith.truncf %476 : vector<32x46xf32> to vector<32x46xbf16>
    %c288_568 = arith.constant 288 : index
    %c0_569 = arith.constant 0 : index
    %478 = vector.load %arg5[%c288_568, %c0_569] : memref<640x128xbf16, #tpu.memory_space<vmem>>, vector<32x46xbf16>
    tpu.vector_store %arg5[%c288_568, %c0_569], %477 {strides = array<i32>} : memref<640x128xbf16, #tpu.memory_space<vmem>>, vector<32x46xbf16>,
    %cst_570 = arith.constant 0.000000e+00 : bf16
    %479 = vector.broadcast %cst_570 : bf16 to vector<32x9xbf16>
    %c288_571 = arith.constant 288 : index
    %c101 = arith.constant 101 : index
    %480 = vector.load %arg5[%c288_571, %c101] : memref<640x128xbf16, #tpu.memory_space<vmem>>, vector<32x9xbf16>
    tpu.vector_store %arg5[%c288_571, %c101], %479 {strides = array<i32>} : memref<640x128xbf16, #tpu.memory_space<vmem>>, vector<32x9xbf16>,
    %c0_572 = arith.constant 0 : index
    %c46_573 = arith.constant 46 : index
    %481 = vector.load %arg4[%c0_572, %c46_573] : memref<64x128xf32, #tpu.memory_space<vmem>>, vector<32x46xf32>
    %482 = arith.truncf %481 : vector<32x46xf32> to vector<32x46xbf16>
    %c288_574 = arith.constant 288 : index
    %c55_575 = arith.constant 55 : index
    %483 = vector.load %arg5[%c288_574, %c55_575] : memref<640x128xbf16, #tpu.memory_space<vmem>>, vector<32x46xbf16>
    tpu.vector_store %arg5[%c288_574, %c55_575], %482 {strides = array<i32>} : memref<640x128xbf16, #tpu.memory_space<vmem>>, vector<32x46xbf16>,
    %c144_576 = arith.constant 144 : index
    %c0_577 = arith.constant 0 : index
    %484 = vector.load %arg1[%c144_576, %c0_577] : memref<176x640xbf16, #tpu.memory_space<vmem>>, vector<16x320xbf16>
    %c0_578 = arith.constant 0 : index
    %c0_579 = arith.constant 0 : index
    %485 = vector.load %arg5[%c0_578, %c0_579] : memref<640x128xbf16, #tpu.memory_space<vmem>>, vector<320x128xbf16>
    %cst_580 = arith.constant dense<0.000000e+00> : vector<16x128xf32>
    %486 = tpu.matmul %484, %485, %cst_580 {dimension_numbers = #tpu.dot_dimension_numbers<[1], [0], [0], [1], [0, 0, 1, 1], [], []>} : vector<16x320xbf16>, vector<320x128xbf16>, vector<16x128xf32> -> vector<16x128xf32>
    %c0_581 = arith.constant 0 : index
    %c4_582 = arith.constant 4 : index
    %487 = vector.load %arg2[%c0_581, %c4_582] : memref<64x8xf32, #tpu.memory_space<vmem>>, vector<16x1xf32>
    %488 = vector.broadcast %487 : vector<16x1xf32> to vector<16x128xf32>
    %489 = arith.addf %486, %488 : vector<16x128xf32>
    %cst_583 = arith.constant 0.000000e+00 : f32
    %490 = vector.broadcast %cst_583 : f32 to vector<16x128xf32>
    %491 = arith.maximumf %489, %490 : vector<16x128xf32>
    %c0_584 = arith.constant 0 : index
    %c0_585 = arith.constant 0 : index
    %492 = vector.load %arg4[%c0_584, %c0_585] : memref<64x128xf32, #tpu.memory_space<vmem>>, vector<16x128xf32>
    tpu.vector_store %arg4[%c0_584, %c0_585], %491 {strides = array<i32>} : memref<64x128xf32, #tpu.memory_space<vmem>>, vector<16x128xf32>,
    %cst_586 = arith.constant 0.000000e+00 : bf16
    %493 = vector.broadcast %cst_586 : bf16 to vector<16x9xbf16>
    %c0_587 = arith.constant 0 : index
    %c0_588 = arith.constant 0 : index
    %494 = vector.load %arg5[%c0_587, %c0_588] : memref<640x128xbf16, #tpu.memory_space<vmem>>, vector<16x9xbf16>
    tpu.vector_store %arg5[%c0_587, %c0_588], %493 {strides = array<i32>} : memref<640x128xbf16, #tpu.memory_space<vmem>>, vector<16x9xbf16>,
    %c0_589 = arith.constant 0 : index
    %c0_590 = arith.constant 0 : index
    %495 = vector.load %arg4[%c0_589, %c0_590] : memref<64x128xf32, #tpu.memory_space<vmem>>, vector<16x55xf32>
    %496 = arith.truncf %495 : vector<16x55xf32> to vector<16x55xbf16>
    %c0_591 = arith.constant 0 : index
    %c9_592 = arith.constant 9 : index
    %497 = vector.load %arg5[%c0_591, %c9_592] : memref<640x128xbf16, #tpu.memory_space<vmem>>, vector<16x55xbf16>
    tpu.vector_store %arg5[%c0_591, %c9_592], %496 {strides = array<i32>} : memref<640x128xbf16, #tpu.memory_space<vmem>>, vector<16x55xbf16>,
    %cst_593 = arith.constant 0.000000e+00 : bf16
    %498 = vector.broadcast %cst_593 : bf16 to vector<16x9xbf16>
    %c0_594 = arith.constant 0 : index
    %c64_595 = arith.constant 64 : index
    %499 = vector.load %arg5[%c0_594, %c64_595] : memref<640x128xbf16, #tpu.memory_space<vmem>>, vector<16x9xbf16>
    tpu.vector_store %arg5[%c0_594, %c64_595], %498 {strides = array<i32>} : memref<640x128xbf16, #tpu.memory_space<vmem>>, vector<16x9xbf16>,
    %c0_596 = arith.constant 0 : index
    %c55_597 = arith.constant 55 : index
    %500 = vector.load %arg4[%c0_596, %c55_597] : memref<64x128xf32, #tpu.memory_space<vmem>>, vector<16x55xf32>
    %501 = arith.truncf %500 : vector<16x55xf32> to vector<16x55xbf16>
    %c0_598 = arith.constant 0 : index
    %c73_599 = arith.constant 73 : index
    %502 = vector.load %arg5[%c0_598, %c73_599] : memref<640x128xbf16, #tpu.memory_space<vmem>>, vector<16x55xbf16>
    tpu.vector_store %arg5[%c0_598, %c73_599], %501 {strides = array<i32>} : memref<640x128xbf16, #tpu.memory_space<vmem>>, vector<16x55xbf16>,
    %cst_600 = arith.constant 0.000000e+00 : bf16
    %503 = vector.broadcast %cst_600 : bf16 to vector<16x8xbf16>
    %c16_601 = arith.constant 16 : index
    %c0_602 = arith.constant 0 : index
    %504 = vector.load %arg5[%c16_601, %c0_602] : memref<640x128xbf16, #tpu.memory_space<vmem>>, vector<16x8xbf16>
    tpu.vector_store %arg5[%c16_601, %c0_602], %503 {strides = array<i32>} : memref<640x128xbf16, #tpu.memory_space<vmem>>, vector<16x8xbf16>,
    %cst_603 = arith.constant 0.000000e+00 : bf16
    %505 = vector.broadcast %cst_603 : bf16 to vector<16x1xbf16>
    %c16_604 = arith.constant 16 : index
    %c63_605 = arith.constant 63 : index
    %506 = vector.load %arg5[%c16_604, %c63_605] : memref<640x128xbf16, #tpu.memory_space<vmem>>, vector<16x1xbf16>
    tpu.vector_store %arg5[%c16_604, %c63_605], %505 {strides = array<i32>} : memref<640x128xbf16, #tpu.memory_space<vmem>>, vector<16x1xbf16>,
    %c0_606 = arith.constant 0 : index
    %c0_607 = arith.constant 0 : index
    %507 = vector.load %arg4[%c0_606, %c0_607] : memref<64x128xf32, #tpu.memory_space<vmem>>, vector<16x55xf32>
    %508 = arith.truncf %507 : vector<16x55xf32> to vector<16x55xbf16>
    %c16_608 = arith.constant 16 : index
    %c8_609 = arith.constant 8 : index
    %509 = vector.load %arg5[%c16_608, %c8_609] : memref<640x128xbf16, #tpu.memory_space<vmem>>, vector<16x55xbf16>
    tpu.vector_store %arg5[%c16_608, %c8_609], %508 {strides = array<i32>} : memref<640x128xbf16, #tpu.memory_space<vmem>>, vector<16x55xbf16>,
    %cst_610 = arith.constant 0.000000e+00 : bf16
    %510 = vector.broadcast %cst_610 : bf16 to vector<16x8xbf16>
    %c16_611 = arith.constant 16 : index
    %c64_612 = arith.constant 64 : index
    %511 = vector.load %arg5[%c16_611, %c64_612] : memref<640x128xbf16, #tpu.memory_space<vmem>>, vector<16x8xbf16>
    tpu.vector_store %arg5[%c16_611, %c64_612], %510 {strides = array<i32>} : memref<640x128xbf16, #tpu.memory_space<vmem>>, vector<16x8xbf16>,
    %cst_613 = arith.constant 0.000000e+00 : bf16
    %512 = vector.broadcast %cst_613 : bf16 to vector<16x1xbf16>
    %c16_614 = arith.constant 16 : index
    %c127 = arith.constant 127 : index
    %513 = vector.load %arg5[%c16_614, %c127] : memref<640x128xbf16, #tpu.memory_space<vmem>>, vector<16x1xbf16>
    tpu.vector_store %arg5[%c16_614, %c127], %512 {strides = array<i32>} : memref<640x128xbf16, #tpu.memory_space<vmem>>, vector<16x1xbf16>,
    %c0_615 = arith.constant 0 : index
    %c55_616 = arith.constant 55 : index
    %514 = vector.load %arg4[%c0_615, %c55_616] : memref<64x128xf32, #tpu.memory_space<vmem>>, vector<16x55xf32>
    %515 = arith.truncf %514 : vector<16x55xf32> to vector<16x55xbf16>
    %c16_617 = arith.constant 16 : index
    %c72_618 = arith.constant 72 : index
    %516 = vector.load %arg5[%c16_617, %c72_618] : memref<640x128xbf16, #tpu.memory_space<vmem>>, vector<16x55xbf16>
    tpu.vector_store %arg5[%c16_617, %c72_618], %515 {strides = array<i32>} : memref<640x128xbf16, #tpu.memory_space<vmem>>, vector<16x55xbf16>,
    %cst_619 = arith.constant 0.000000e+00 : bf16
    %517 = vector.broadcast %cst_619 : bf16 to vector<16x7xbf16>
    %c32_620 = arith.constant 32 : index
    %c0_621 = arith.constant 0 : index
    %518 = vector.load %arg5[%c32_620, %c0_621] : memref<640x128xbf16, #tpu.memory_space<vmem>>, vector<16x7xbf16>
    tpu.vector_store %arg5[%c32_620, %c0_621], %517 {strides = array<i32>} : memref<640x128xbf16, #tpu.memory_space<vmem>>, vector<16x7xbf16>,
    %cst_622 = arith.constant 0.000000e+00 : bf16
    %519 = vector.broadcast %cst_622 : bf16 to vector<16x2xbf16>
    %c32_623 = arith.constant 32 : index
    %c62_624 = arith.constant 62 : index
    %520 = vector.load %arg5[%c32_623, %c62_624] : memref<640x128xbf16, #tpu.memory_space<vmem>>, vector<16x2xbf16>
    tpu.vector_store %arg5[%c32_623, %c62_624], %519 {strides = array<i32>} : memref<640x128xbf16, #tpu.memory_space<vmem>>, vector<16x2xbf16>,
    %c0_625 = arith.constant 0 : index
    %c0_626 = arith.constant 0 : index
    %521 = vector.load %arg4[%c0_625, %c0_626] : memref<64x128xf32, #tpu.memory_space<vmem>>, vector<16x55xf32>
    %522 = arith.truncf %521 : vector<16x55xf32> to vector<16x55xbf16>
    %c32_627 = arith.constant 32 : index
    %c7_628 = arith.constant 7 : index
    %523 = vector.load %arg5[%c32_627, %c7_628] : memref<640x128xbf16, #tpu.memory_space<vmem>>, vector<16x55xbf16>
    tpu.vector_store %arg5[%c32_627, %c7_628], %522 {strides = array<i32>} : memref<640x128xbf16, #tpu.memory_space<vmem>>, vector<16x55xbf16>,
    %cst_629 = arith.constant 0.000000e+00 : bf16
    %524 = vector.broadcast %cst_629 : bf16 to vector<16x7xbf16>
    %c32_630 = arith.constant 32 : index
    %c64_631 = arith.constant 64 : index
    %525 = vector.load %arg5[%c32_630, %c64_631] : memref<640x128xbf16, #tpu.memory_space<vmem>>, vector<16x7xbf16>
    tpu.vector_store %arg5[%c32_630, %c64_631], %524 {strides = array<i32>} : memref<640x128xbf16, #tpu.memory_space<vmem>>, vector<16x7xbf16>,
    %cst_632 = arith.constant 0.000000e+00 : bf16
    %526 = vector.broadcast %cst_632 : bf16 to vector<16x2xbf16>
    %c32_633 = arith.constant 32 : index
    %c126 = arith.constant 126 : index
    %527 = vector.load %arg5[%c32_633, %c126] : memref<640x128xbf16, #tpu.memory_space<vmem>>, vector<16x2xbf16>
    tpu.vector_store %arg5[%c32_633, %c126], %526 {strides = array<i32>} : memref<640x128xbf16, #tpu.memory_space<vmem>>, vector<16x2xbf16>,
    %c0_634 = arith.constant 0 : index
    %c55_635 = arith.constant 55 : index
    %528 = vector.load %arg4[%c0_634, %c55_635] : memref<64x128xf32, #tpu.memory_space<vmem>>, vector<16x55xf32>
    %529 = arith.truncf %528 : vector<16x55xf32> to vector<16x55xbf16>
    %c32_636 = arith.constant 32 : index
    %c71_637 = arith.constant 71 : index
    %530 = vector.load %arg5[%c32_636, %c71_637] : memref<640x128xbf16, #tpu.memory_space<vmem>>, vector<16x55xbf16>
    tpu.vector_store %arg5[%c32_636, %c71_637], %529 {strides = array<i32>} : memref<640x128xbf16, #tpu.memory_space<vmem>>, vector<16x55xbf16>,
    %cst_638 = arith.constant 0.000000e+00 : bf16
    %531 = vector.broadcast %cst_638 : bf16 to vector<16x6xbf16>
    %c48_639 = arith.constant 48 : index
    %c0_640 = arith.constant 0 : index
    %532 = vector.load %arg5[%c48_639, %c0_640] : memref<640x128xbf16, #tpu.memory_space<vmem>>, vector<16x6xbf16>
    tpu.vector_store %arg5[%c48_639, %c0_640], %531 {strides = array<i32>} : memref<640x128xbf16, #tpu.memory_space<vmem>>, vector<16x6xbf16>,
    %cst_641 = arith.constant 0.000000e+00 : bf16
    %533 = vector.broadcast %cst_641 : bf16 to vector<16x3xbf16>
    %c48_642 = arith.constant 48 : index
    %c61_643 = arith.constant 61 : index
    %534 = vector.load %arg5[%c48_642, %c61_643] : memref<640x128xbf16, #tpu.memory_space<vmem>>, vector<16x3xbf16>
    tpu.vector_store %arg5[%c48_642, %c61_643], %533 {strides = array<i32>} : memref<640x128xbf16, #tpu.memory_space<vmem>>, vector<16x3xbf16>,
    %c0_644 = arith.constant 0 : index
    %c0_645 = arith.constant 0 : index
    %535 = vector.load %arg4[%c0_644, %c0_645] : memref<64x128xf32, #tpu.memory_space<vmem>>, vector<16x55xf32>
    %536 = arith.truncf %535 : vector<16x55xf32> to vector<16x55xbf16>
    %c48_646 = arith.constant 48 : index
    %c6_647 = arith.constant 6 : index
    %537 = vector.load %arg5[%c48_646, %c6_647] : memref<640x128xbf16, #tpu.memory_space<vmem>>, vector<16x55xbf16>
    tpu.vector_store %arg5[%c48_646, %c6_647], %536 {strides = array<i32>} : memref<640x128xbf16, #tpu.memory_space<vmem>>, vector<16x55xbf16>,
    %cst_648 = arith.constant 0.000000e+00 : bf16
    %538 = vector.broadcast %cst_648 : bf16 to vector<16x6xbf16>
    %c48_649 = arith.constant 48 : index
    %c64_650 = arith.constant 64 : index
    %539 = vector.load %arg5[%c48_649, %c64_650] : memref<640x128xbf16, #tpu.memory_space<vmem>>, vector<16x6xbf16>
    tpu.vector_store %arg5[%c48_649, %c64_650], %538 {strides = array<i32>} : memref<640x128xbf16, #tpu.memory_space<vmem>>, vector<16x6xbf16>,
    %cst_651 = arith.constant 0.000000e+00 : bf16
    %540 = vector.broadcast %cst_651 : bf16 to vector<16x3xbf16>
    %c48_652 = arith.constant 48 : index
    %c125 = arith.constant 125 : index
    %541 = vector.load %arg5[%c48_652, %c125] : memref<640x128xbf16, #tpu.memory_space<vmem>>, vector<16x3xbf16>
    tpu.vector_store %arg5[%c48_652, %c125], %540 {strides = array<i32>} : memref<640x128xbf16, #tpu.memory_space<vmem>>, vector<16x3xbf16>,
    %c0_653 = arith.constant 0 : index
    %c55_654 = arith.constant 55 : index
    %542 = vector.load %arg4[%c0_653, %c55_654] : memref<64x128xf32, #tpu.memory_space<vmem>>, vector<16x55xf32>
    %543 = arith.truncf %542 : vector<16x55xf32> to vector<16x55xbf16>
    %c48_655 = arith.constant 48 : index
    %c70_656 = arith.constant 70 : index
    %544 = vector.load %arg5[%c48_655, %c70_656] : memref<640x128xbf16, #tpu.memory_space<vmem>>, vector<16x55xbf16>
    tpu.vector_store %arg5[%c48_655, %c70_656], %543 {strides = array<i32>} : memref<640x128xbf16, #tpu.memory_space<vmem>>, vector<16x55xbf16>,
    %cst_657 = arith.constant 0.000000e+00 : bf16
    %545 = vector.broadcast %cst_657 : bf16 to vector<16x5xbf16>
    %c64_658 = arith.constant 64 : index
    %c0_659 = arith.constant 0 : index
    %546 = vector.load %arg5[%c64_658, %c0_659] : memref<640x128xbf16, #tpu.memory_space<vmem>>, vector<16x5xbf16>
    tpu.vector_store %arg5[%c64_658, %c0_659], %545 {strides = array<i32>} : memref<640x128xbf16, #tpu.memory_space<vmem>>, vector<16x5xbf16>,
    %cst_660 = arith.constant 0.000000e+00 : bf16
    %547 = vector.broadcast %cst_660 : bf16 to vector<16x4xbf16>
    %c64_661 = arith.constant 64 : index
    %c60_662 = arith.constant 60 : index
    %548 = vector.load %arg5[%c64_661, %c60_662] : memref<640x128xbf16, #tpu.memory_space<vmem>>, vector<16x4xbf16>
    tpu.vector_store %arg5[%c64_661, %c60_662], %547 {strides = array<i32>} : memref<640x128xbf16, #tpu.memory_space<vmem>>, vector<16x4xbf16>,
    %c0_663 = arith.constant 0 : index
    %c0_664 = arith.constant 0 : index
    %549 = vector.load %arg4[%c0_663, %c0_664] : memref<64x128xf32, #tpu.memory_space<vmem>>, vector<16x55xf32>
    %550 = arith.truncf %549 : vector<16x55xf32> to vector<16x55xbf16>
    %c64_665 = arith.constant 64 : index
    %c5_666 = arith.constant 5 : index
    %551 = vector.load %arg5[%c64_665, %c5_666] : memref<640x128xbf16, #tpu.memory_space<vmem>>, vector<16x55xbf16>
    tpu.vector_store %arg5[%c64_665, %c5_666], %550 {strides = array<i32>} : memref<640x128xbf16, #tpu.memory_space<vmem>>, vector<16x55xbf16>,
    %cst_667 = arith.constant 0.000000e+00 : bf16
    %552 = vector.broadcast %cst_667 : bf16 to vector<16x5xbf16>
    %c64_668 = arith.constant 64 : index
    %c64_669 = arith.constant 64 : index
    %553 = vector.load %arg5[%c64_668, %c64_669] : memref<640x128xbf16, #tpu.memory_space<vmem>>, vector<16x5xbf16>
    tpu.vector_store %arg5[%c64_668, %c64_669], %552 {strides = array<i32>} : memref<640x128xbf16, #tpu.memory_space<vmem>>, vector<16x5xbf16>,
    %cst_670 = arith.constant 0.000000e+00 : bf16
    %554 = vector.broadcast %cst_670 : bf16 to vector<16x4xbf16>
    %c64_671 = arith.constant 64 : index
    %c124 = arith.constant 124 : index
    %555 = vector.load %arg5[%c64_671, %c124] : memref<640x128xbf16, #tpu.memory_space<vmem>>, vector<16x4xbf16>
    tpu.vector_store %arg5[%c64_671, %c124], %554 {strides = array<i32>} : memref<640x128xbf16, #tpu.memory_space<vmem>>, vector<16x4xbf16>,
    %c0_672 = arith.constant 0 : index
    %c55_673 = arith.constant 55 : index
    %556 = vector.load %arg4[%c0_672, %c55_673] : memref<64x128xf32, #tpu.memory_space<vmem>>, vector<16x55xf32>
    %557 = arith.truncf %556 : vector<16x55xf32> to vector<16x55xbf16>
    %c64_674 = arith.constant 64 : index
    %c69_675 = arith.constant 69 : index
    %558 = vector.load %arg5[%c64_674, %c69_675] : memref<640x128xbf16, #tpu.memory_space<vmem>>, vector<16x55xbf16>
    tpu.vector_store %arg5[%c64_674, %c69_675], %557 {strides = array<i32>} : memref<640x128xbf16, #tpu.memory_space<vmem>>, vector<16x55xbf16>,
    %cst_676 = arith.constant 0.000000e+00 : bf16
    %559 = vector.broadcast %cst_676 : bf16 to vector<16x4xbf16>
    %c80_677 = arith.constant 80 : index
    %c0_678 = arith.constant 0 : index
    %560 = vector.load %arg5[%c80_677, %c0_678] : memref<640x128xbf16, #tpu.memory_space<vmem>>, vector<16x4xbf16>
    tpu.vector_store %arg5[%c80_677, %c0_678], %559 {strides = array<i32>} : memref<640x128xbf16, #tpu.memory_space<vmem>>, vector<16x4xbf16>,
    %cst_679 = arith.constant 0.000000e+00 : bf16
    %561 = vector.broadcast %cst_679 : bf16 to vector<16x5xbf16>
    %c80_680 = arith.constant 80 : index
    %c59_681 = arith.constant 59 : index
    %562 = vector.load %arg5[%c80_680, %c59_681] : memref<640x128xbf16, #tpu.memory_space<vmem>>, vector<16x5xbf16>
    tpu.vector_store %arg5[%c80_680, %c59_681], %561 {strides = array<i32>} : memref<640x128xbf16, #tpu.memory_space<vmem>>, vector<16x5xbf16>,
    %c0_682 = arith.constant 0 : index
    %c0_683 = arith.constant 0 : index
    %563 = vector.load %arg4[%c0_682, %c0_683] : memref<64x128xf32, #tpu.memory_space<vmem>>, vector<16x55xf32>
    %564 = arith.truncf %563 : vector<16x55xf32> to vector<16x55xbf16>
    %c80_684 = arith.constant 80 : index
    %c4_685 = arith.constant 4 : index
    %565 = vector.load %arg5[%c80_684, %c4_685] : memref<640x128xbf16, #tpu.memory_space<vmem>>, vector<16x55xbf16>
    tpu.vector_store %arg5[%c80_684, %c4_685], %564 {strides = array<i32>} : memref<640x128xbf16, #tpu.memory_space<vmem>>, vector<16x55xbf16>,
    %cst_686 = arith.constant 0.000000e+00 : bf16
    %566 = vector.broadcast %cst_686 : bf16 to vector<16x4xbf16>
    %c80_687 = arith.constant 80 : index
    %c64_688 = arith.constant 64 : index
    %567 = vector.load %arg5[%c80_687, %c64_688] : memref<640x128xbf16, #tpu.memory_space<vmem>>, vector<16x4xbf16>
    tpu.vector_store %arg5[%c80_687, %c64_688], %566 {strides = array<i32>} : memref<640x128xbf16, #tpu.memory_space<vmem>>, vector<16x4xbf16>,
    %cst_689 = arith.constant 0.000000e+00 : bf16
    %568 = vector.broadcast %cst_689 : bf16 to vector<16x5xbf16>
    %c80_690 = arith.constant 80 : index
    %c123 = arith.constant 123 : index
    %569 = vector.load %arg5[%c80_690, %c123] : memref<640x128xbf16, #tpu.memory_space<vmem>>, vector<16x5xbf16>
    tpu.vector_store %arg5[%c80_690, %c123], %568 {strides = array<i32>} : memref<640x128xbf16, #tpu.memory_space<vmem>>, vector<16x5xbf16>,
    %c0_691 = arith.constant 0 : index
    %c55_692 = arith.constant 55 : index
    %570 = vector.load %arg4[%c0_691, %c55_692] : memref<64x128xf32, #tpu.memory_space<vmem>>, vector<16x55xf32>
    %571 = arith.truncf %570 : vector<16x55xf32> to vector<16x55xbf16>
    %c80_693 = arith.constant 80 : index
    %c68_694 = arith.constant 68 : index
    %572 = vector.load %arg5[%c80_693, %c68_694] : memref<640x128xbf16, #tpu.memory_space<vmem>>, vector<16x55xbf16>
    tpu.vector_store %arg5[%c80_693, %c68_694], %571 {strides = array<i32>} : memref<640x128xbf16, #tpu.memory_space<vmem>>, vector<16x55xbf16>,
    %cst_695 = arith.constant 0.000000e+00 : bf16
    %573 = vector.broadcast %cst_695 : bf16 to vector<16x3xbf16>
    %c96_696 = arith.constant 96 : index
    %c0_697 = arith.constant 0 : index
    %574 = vector.load %arg5[%c96_696, %c0_697] : memref<640x128xbf16, #tpu.memory_space<vmem>>, vector<16x3xbf16>
    tpu.vector_store %arg5[%c96_696, %c0_697], %573 {strides = array<i32>} : memref<640x128xbf16, #tpu.memory_space<vmem>>, vector<16x3xbf16>,
    %cst_698 = arith.constant 0.000000e+00 : bf16
    %575 = vector.broadcast %cst_698 : bf16 to vector<16x6xbf16>
    %c96_699 = arith.constant 96 : index
    %c58_700 = arith.constant 58 : index
    %576 = vector.load %arg5[%c96_699, %c58_700] : memref<640x128xbf16, #tpu.memory_space<vmem>>, vector<16x6xbf16>
    tpu.vector_store %arg5[%c96_699, %c58_700], %575 {strides = array<i32>} : memref<640x128xbf16, #tpu.memory_space<vmem>>, vector<16x6xbf16>,
    %c0_701 = arith.constant 0 : index
    %c0_702 = arith.constant 0 : index
    %577 = vector.load %arg4[%c0_701, %c0_702] : memref<64x128xf32, #tpu.memory_space<vmem>>, vector<16x55xf32>
    %578 = arith.truncf %577 : vector<16x55xf32> to vector<16x55xbf16>
    %c96_703 = arith.constant 96 : index
    %c3_704 = arith.constant 3 : index
    %579 = vector.load %arg5[%c96_703, %c3_704] : memref<640x128xbf16, #tpu.memory_space<vmem>>, vector<16x55xbf16>
    tpu.vector_store %arg5[%c96_703, %c3_704], %578 {strides = array<i32>} : memref<640x128xbf16, #tpu.memory_space<vmem>>, vector<16x55xbf16>,
    %cst_705 = arith.constant 0.000000e+00 : bf16
    %580 = vector.broadcast %cst_705 : bf16 to vector<16x3xbf16>
    %c96_706 = arith.constant 96 : index
    %c64_707 = arith.constant 64 : index
    %581 = vector.load %arg5[%c96_706, %c64_707] : memref<640x128xbf16, #tpu.memory_space<vmem>>, vector<16x3xbf16>
    tpu.vector_store %arg5[%c96_706, %c64_707], %580 {strides = array<i32>} : memref<640x128xbf16, #tpu.memory_space<vmem>>, vector<16x3xbf16>,
    %cst_708 = arith.constant 0.000000e+00 : bf16
    %582 = vector.broadcast %cst_708 : bf16 to vector<16x6xbf16>
    %c96_709 = arith.constant 96 : index
    %c122 = arith.constant 122 : index
    %583 = vector.load %arg5[%c96_709, %c122] : memref<640x128xbf16, #tpu.memory_space<vmem>>, vector<16x6xbf16>
    tpu.vector_store %arg5[%c96_709, %c122], %582 {strides = array<i32>} : memref<640x128xbf16, #tpu.memory_space<vmem>>, vector<16x6xbf16>,
    %c0_710 = arith.constant 0 : index
    %c55_711 = arith.constant 55 : index
    %584 = vector.load %arg4[%c0_710, %c55_711] : memref<64x128xf32, #tpu.memory_space<vmem>>, vector<16x55xf32>
    %585 = arith.truncf %584 : vector<16x55xf32> to vector<16x55xbf16>
    %c96_712 = arith.constant 96 : index
    %c67_713 = arith.constant 67 : index
    %586 = vector.load %arg5[%c96_712, %c67_713] : memref<640x128xbf16, #tpu.memory_space<vmem>>, vector<16x55xbf16>
    tpu.vector_store %arg5[%c96_712, %c67_713], %585 {strides = array<i32>} : memref<640x128xbf16, #tpu.memory_space<vmem>>, vector<16x55xbf16>,
    %cst_714 = arith.constant 0.000000e+00 : bf16
    %587 = vector.broadcast %cst_714 : bf16 to vector<16x2xbf16>
    %c112_715 = arith.constant 112 : index
    %c0_716 = arith.constant 0 : index
    %588 = vector.load %arg5[%c112_715, %c0_716] : memref<640x128xbf16, #tpu.memory_space<vmem>>, vector<16x2xbf16>
    tpu.vector_store %arg5[%c112_715, %c0_716], %587 {strides = array<i32>} : memref<640x128xbf16, #tpu.memory_space<vmem>>, vector<16x2xbf16>,
    %cst_717 = arith.constant 0.000000e+00 : bf16
    %589 = vector.broadcast %cst_717 : bf16 to vector<16x7xbf16>
    %c112_718 = arith.constant 112 : index
    %c57_719 = arith.constant 57 : index
    %590 = vector.load %arg5[%c112_718, %c57_719] : memref<640x128xbf16, #tpu.memory_space<vmem>>, vector<16x7xbf16>
    tpu.vector_store %arg5[%c112_718, %c57_719], %589 {strides = array<i32>} : memref<640x128xbf16, #tpu.memory_space<vmem>>, vector<16x7xbf16>,
    %c0_720 = arith.constant 0 : index
    %c0_721 = arith.constant 0 : index
    %591 = vector.load %arg4[%c0_720, %c0_721] : memref<64x128xf32, #tpu.memory_space<vmem>>, vector<16x55xf32>
    %592 = arith.truncf %591 : vector<16x55xf32> to vector<16x55xbf16>
    %c112_722 = arith.constant 112 : index
    %c2_723 = arith.constant 2 : index
    %593 = vector.load %arg5[%c112_722, %c2_723] : memref<640x128xbf16, #tpu.memory_space<vmem>>, vector<16x55xbf16>
    tpu.vector_store %arg5[%c112_722, %c2_723], %592 {strides = array<i32>} : memref<640x128xbf16, #tpu.memory_space<vmem>>, vector<16x55xbf16>,
    %cst_724 = arith.constant 0.000000e+00 : bf16
    %594 = vector.broadcast %cst_724 : bf16 to vector<16x2xbf16>
    %c112_725 = arith.constant 112 : index
    %c64_726 = arith.constant 64 : index
    %595 = vector.load %arg5[%c112_725, %c64_726] : memref<640x128xbf16, #tpu.memory_space<vmem>>, vector<16x2xbf16>
    tpu.vector_store %arg5[%c112_725, %c64_726], %594 {strides = array<i32>} : memref<640x128xbf16, #tpu.memory_space<vmem>>, vector<16x2xbf16>,
    %cst_727 = arith.constant 0.000000e+00 : bf16
    %596 = vector.broadcast %cst_727 : bf16 to vector<16x7xbf16>
    %c112_728 = arith.constant 112 : index
    %c121 = arith.constant 121 : index
    %597 = vector.load %arg5[%c112_728, %c121] : memref<640x128xbf16, #tpu.memory_space<vmem>>, vector<16x7xbf16>
    tpu.vector_store %arg5[%c112_728, %c121], %596 {strides = array<i32>} : memref<640x128xbf16, #tpu.memory_space<vmem>>, vector<16x7xbf16>,
    %c0_729 = arith.constant 0 : index
    %c55_730 = arith.constant 55 : index
    %598 = vector.load %arg4[%c0_729, %c55_730] : memref<64x128xf32, #tpu.memory_space<vmem>>, vector<16x55xf32>
    %599 = arith.truncf %598 : vector<16x55xf32> to vector<16x55xbf16>
    %c112_731 = arith.constant 112 : index
    %c66_732 = arith.constant 66 : index
    %600 = vector.load %arg5[%c112_731, %c66_732] : memref<640x128xbf16, #tpu.memory_space<vmem>>, vector<16x55xbf16>
    tpu.vector_store %arg5[%c112_731, %c66_732], %599 {strides = array<i32>} : memref<640x128xbf16, #tpu.memory_space<vmem>>, vector<16x55xbf16>,
    %cst_733 = arith.constant 0.000000e+00 : bf16
    %601 = vector.broadcast %cst_733 : bf16 to vector<16x1xbf16>
    %c128_734 = arith.constant 128 : index
    %c0_735 = arith.constant 0 : index
    %602 = vector.load %arg5[%c128_734, %c0_735] : memref<640x128xbf16, #tpu.memory_space<vmem>>, vector<16x1xbf16>
    tpu.vector_store %arg5[%c128_734, %c0_735], %601 {strides = array<i32>} : memref<640x128xbf16, #tpu.memory_space<vmem>>, vector<16x1xbf16>,
    %cst_736 = arith.constant 0.000000e+00 : bf16
    %603 = vector.broadcast %cst_736 : bf16 to vector<16x8xbf16>
    %c128_737 = arith.constant 128 : index
    %c56_738 = arith.constant 56 : index
    %604 = vector.load %arg5[%c128_737, %c56_738] : memref<640x128xbf16, #tpu.memory_space<vmem>>, vector<16x8xbf16>
    tpu.vector_store %arg5[%c128_737, %c56_738], %603 {strides = array<i32>} : memref<640x128xbf16, #tpu.memory_space<vmem>>, vector<16x8xbf16>,
    %c0_739 = arith.constant 0 : index
    %c0_740 = arith.constant 0 : index
    %605 = vector.load %arg4[%c0_739, %c0_740] : memref<64x128xf32, #tpu.memory_space<vmem>>, vector<16x55xf32>
    %606 = arith.truncf %605 : vector<16x55xf32> to vector<16x55xbf16>
    %c128_741 = arith.constant 128 : index
    %c1_742 = arith.constant 1 : index
    %607 = vector.load %arg5[%c128_741, %c1_742] : memref<640x128xbf16, #tpu.memory_space<vmem>>, vector<16x55xbf16>
    tpu.vector_store %arg5[%c128_741, %c1_742], %606 {strides = array<i32>} : memref<640x128xbf16, #tpu.memory_space<vmem>>, vector<16x55xbf16>,
    %cst_743 = arith.constant 0.000000e+00 : bf16
    %608 = vector.broadcast %cst_743 : bf16 to vector<16x1xbf16>
    %c128_744 = arith.constant 128 : index
    %c64_745 = arith.constant 64 : index
    %609 = vector.load %arg5[%c128_744, %c64_745] : memref<640x128xbf16, #tpu.memory_space<vmem>>, vector<16x1xbf16>
    tpu.vector_store %arg5[%c128_744, %c64_745], %608 {strides = array<i32>} : memref<640x128xbf16, #tpu.memory_space<vmem>>, vector<16x1xbf16>,
    %cst_746 = arith.constant 0.000000e+00 : bf16
    %610 = vector.broadcast %cst_746 : bf16 to vector<16x8xbf16>
    %c128_747 = arith.constant 128 : index
    %c120 = arith.constant 120 : index
    %611 = vector.load %arg5[%c128_747, %c120] : memref<640x128xbf16, #tpu.memory_space<vmem>>, vector<16x8xbf16>
    tpu.vector_store %arg5[%c128_747, %c120], %610 {strides = array<i32>} : memref<640x128xbf16, #tpu.memory_space<vmem>>, vector<16x8xbf16>,
    %c0_748 = arith.constant 0 : index
    %c55_749 = arith.constant 55 : index
    %612 = vector.load %arg4[%c0_748, %c55_749] : memref<64x128xf32, #tpu.memory_space<vmem>>, vector<16x55xf32>
    %613 = arith.truncf %612 : vector<16x55xf32> to vector<16x55xbf16>
    %c128_750 = arith.constant 128 : index
    %c65_751 = arith.constant 65 : index
    %614 = vector.load %arg5[%c128_750, %c65_751] : memref<640x128xbf16, #tpu.memory_space<vmem>>, vector<16x55xbf16>
    tpu.vector_store %arg5[%c128_750, %c65_751], %613 {strides = array<i32>} : memref<640x128xbf16, #tpu.memory_space<vmem>>, vector<16x55xbf16>,
    %cst_752 = arith.constant 0.000000e+00 : bf16
    %615 = vector.broadcast %cst_752 : bf16 to vector<16x9xbf16>
    %c144_753 = arith.constant 144 : index
    %c55_754 = arith.constant 55 : index
    %616 = vector.load %arg5[%c144_753, %c55_754] : memref<640x128xbf16, #tpu.memory_space<vmem>>, vector<16x9xbf16>
    tpu.vector_store %arg5[%c144_753, %c55_754], %615 {strides = array<i32>} : memref<640x128xbf16, #tpu.memory_space<vmem>>, vector<16x9xbf16>,
    %c0_755 = arith.constant 0 : index
    %c0_756 = arith.constant 0 : index
    %617 = vector.load %arg4[%c0_755, %c0_756] : memref<64x128xf32, #tpu.memory_space<vmem>>, vector<16x55xf32>
    %618 = arith.truncf %617 : vector<16x55xf32> to vector<16x55xbf16>
    %c144_757 = arith.constant 144 : index
    %c0_758 = arith.constant 0 : index
    %619 = vector.load %arg5[%c144_757, %c0_758] : memref<640x128xbf16, #tpu.memory_space<vmem>>, vector<16x55xbf16>
    tpu.vector_store %arg5[%c144_757, %c0_758], %618 {strides = array<i32>} : memref<640x128xbf16, #tpu.memory_space<vmem>>, vector<16x55xbf16>,
    %cst_759 = arith.constant 0.000000e+00 : bf16
    %620 = vector.broadcast %cst_759 : bf16 to vector<16x9xbf16>
    %c144_760 = arith.constant 144 : index
    %c119 = arith.constant 119 : index
    %621 = vector.load %arg5[%c144_760, %c119] : memref<640x128xbf16, #tpu.memory_space<vmem>>, vector<16x9xbf16>
    tpu.vector_store %arg5[%c144_760, %c119], %620 {strides = array<i32>} : memref<640x128xbf16, #tpu.memory_space<vmem>>, vector<16x9xbf16>,
    %c0_761 = arith.constant 0 : index
    %c55_762 = arith.constant 55 : index
    %622 = vector.load %arg4[%c0_761, %c55_762] : memref<64x128xf32, #tpu.memory_space<vmem>>, vector<16x55xf32>
    %623 = arith.truncf %622 : vector<16x55xf32> to vector<16x55xbf16>
    %c144_763 = arith.constant 144 : index
    %c64_764 = arith.constant 64 : index
    %624 = vector.load %arg5[%c144_763, %c64_764] : memref<640x128xbf16, #tpu.memory_space<vmem>>, vector<16x55xbf16>
    tpu.vector_store %arg5[%c144_763, %c64_764], %623 {strides = array<i32>} : memref<640x128xbf16, #tpu.memory_space<vmem>>, vector<16x55xbf16>,
    %c160_765 = arith.constant 160 : index
    %c0_766 = arith.constant 0 : index
    %625 = vector.load %arg1[%c160_765, %c0_766] : memref<176x640xbf16, #tpu.memory_space<vmem>>, vector<16x160xbf16>
    %c0_767 = arith.constant 0 : index
    %c0_768 = arith.constant 0 : index
    %626 = vector.load %arg5[%c0_767, %c0_768] : memref<640x128xbf16, #tpu.memory_space<vmem>>, vector<160x128xbf16>
    %cst_769 = arith.constant dense<0.000000e+00> : vector<16x128xf32>
    %627 = tpu.matmul %625, %626, %cst_769 {dimension_numbers = #tpu.dot_dimension_numbers<[1], [0], [0], [1], [0, 0, 1, 1], [], []>} : vector<16x160xbf16>, vector<160x128xbf16>, vector<16x128xf32> -> vector<16x128xf32>
    %628 = vector.extract_strided_slice %627 {offsets = [0, 0], sizes = [1, 128], strides = [1, 1]} : vector<16x128xf32> to vector<1x128xf32>
    %c0_770 = arith.constant 0 : index
    %c5_771 = arith.constant 5 : index
    %629 = vector.load %arg2[%c0_770, %c5_771] : memref<64x8xf32, #tpu.memory_space<vmem>>, vector<1x1xf32>
    %630 = vector.broadcast %629 : vector<1x1xf32> to vector<1x128xf32>
    %631 = arith.addf %628, %630 : vector<1x128xf32>
    %c0_772 = arith.constant 0 : index
    %c0_773 = arith.constant 0 : index
    %632 = vector.load %arg3[%c0_772, %c0_773] : memref<1x128xf32, #tpu.memory_space<vmem>>, vector<1x128xf32>
    tpu.vector_store %arg3[%c0_772, %c0_773], %631 {strides = array<i32>} : memref<1x128xf32, #tpu.memory_space<vmem>>, vector<1x128xf32>,
    return
  }
}

</mosaic_0001>

<llo_original>
// kernel: conv_autoencoder_forward.1
$region0: #{conv_autoencoder_forward.1}
  #allocation0 [shape = 'u32[]', space=smem, size = 0x4, offset = 0x4, fixed_abs, tag = 'smem constant byte address 0x4 - core index']
  #allocation1 [shape = 'u32[72,128]{1,0:T(1,128)}', space=vmem, size = 0x9000, scoped, tag = 'internal scratch']
  #allocation2 [shape = 'f32[64,128]{1,0:T(8,128)}', space=vmem, size = 0x8000, scoped, tag = 'scratch operand']
  #allocation3 [shape = 'bf16[640,128]{1,0:T(8,128)(2,1)}', space=vmem, size = 0x28000, scoped, tag = 'scratch operand']
  %s0 = inlined_call_operand.vmem [shape: f32[2,128], index: 0, kind: input, shape index: {}]
  %s1 = inlined_call_operand.hbm [shape: bf16[176,640], index: 1, kind: input, shape index: {}]
  %s2 = inlined_call_operand.vmem [shape: f32[64,8], index: 2, kind: input, shape index: {}]
  %s3 = inlined_call_operand.vmem [shape: f32[1,128], index: 3, kind: output, shape index: {}]
  %s4 = sld [smem:[#allocation0]]
  $region26: #{conv_autoencoder_forward.1} parent=0
    _
  %s6 = ssub.s32 1, %s4
  %s7 = scalar_select 0, %s6, %s4
  $region1: #{conv_autoencoder_forward.1} parent=0
    #allocation4 [shape = 'u8[225280]{0}', space=vmem, size = 0x37000, scoped, tag = 'input window, operand 1, single buffered']
    #allocation5 [shape = 's32[1]{0}', space=sflag, size = 0x4, scoped, tag = 'scoped memory for conv_autoencoder_forward.1']
    %8 = vsyncpa [#allocation5], 0
    // Predicated region
    $region2: #{conv_autoencoder_forward.1} parent=1 // pred_check
      _
    $region3: #{conv_autoencoder_forward.1} parent=1 // pred_check_branch
      %10 = sbr.rel (0) target = $region5
    $region4: #{conv_autoencoder_forward.1} parent=1 // pred_region
      _
    $region5: #{conv_autoencoder_forward.1} parent=1 // pred_fallthru
      _
    // Predicated region
    $region6: #{conv_autoencoder_forward.1} parent=1 // pred_check
      _
    $region7: #{conv_autoencoder_forward.1} parent=1 // pred_check_branch
      %12 = sbr.rel (0) target = $region9
    $region8: #{conv_autoencoder_forward.1} parent=1 // pred_region
      %14 = vsyncadd [#allocation5], 0
      %s15 = sshll.u32 %s1, 4
      %s16 = int_to_ptr.hbm [resolvable:$true] %s15
      %s17 = sshll.u32 [#allocation4], 4
      %s18 = int_to_ptr.vmem [resolvable:$true] %s17
      %23 = dma.hbm_to_vmem [thread:$0]  %s16, 7040, %s18, [#allocation5], 320, 320, 20
    $region9: #{conv_autoencoder_forward.1} parent=1 // pred_fallthru
      _
    // Predicated region
    $region10: #{conv_autoencoder_forward.1} parent=1 // pred_check
      _
    $region11: #{conv_autoencoder_forward.1} parent=1 // pred_check_branch
      %25 = sbr.rel (0) target = $region13
    $region12: #{conv_autoencoder_forward.1} parent=1 // pred_region
      _
    $region13: #{conv_autoencoder_forward.1} parent=1 // pred_fallthru
      _
    // Predicated region
    $region14: #{conv_autoencoder_forward.1} parent=1 // pred_check
      _
    $region15: #{conv_autoencoder_forward.1} parent=1 // pred_check_branch
      %27 = sbr.rel (0) target = $region17
    $region16: #{conv_autoencoder_forward.1} parent=1 // pred_region
      %29 = dma.done [#allocation5], 7040
    $region17: #{conv_autoencoder_forward.1} parent=1 // pred_fallthru
      _
    %v31 = vld [vmem:[%s0] sm:$0x3]
    %32 = vst [vmem:[#allocation2] sm:$0x3] %v31
    %33 = vst [vmem:[#allocation3 + $0x8] sm:$0xf] 0
    %34 = vst [vmem:[#allocation3 + $0xc] sm:$0xf] 0
    %v35 = vld [vmem:[#allocation2] sm:$0x3]
    %v36 = vpack.c.bf16 %v35, %v35
    %vm37 = vcmask 442368
    %38 = vst.msk [vmem:[#allocation3] sm:$0x1] %vm37, %v36
    %v39 = vld [vmem:[#allocation2] sm:$0x3]
    %v40 = vpack.c.bf16 %v39, %v39
    %42 = vrot.lane.b32.xlu0 %v40, 119
    %v43 = vpop.permute.xlu0 %42
    %vm45 = vcmask 893368
    %46 = vst.msk [vmem:[#allocation3] sm:$0x1] %vm45, %v43
    %v47 = vld [vmem:[#allocation2] sm:$0x3]
    %v48 = vpack.c.bf16 %v47, %v47
    %v50 = vrot.slane %v48, 7
    %51 = vrot.lane.b32.xlu0 %v50, 127
    %v52 = vpop.permute.xlu0 %51
    %vm54 = vcmask 443393
    %55 = vst.msk [vmem:[#allocation3] sm:$0x2] %vm54, %v52
    %v56 = vld [vmem:[#allocation2] sm:$0x3]
    %v57 = vpack.c.bf16 %v56, %v56
    %v59 = vrot.slane %v57, 7
    %60 = vrot.lane.b32.xlu0 %v59, 118
    %v61 = vpop.permute.xlu0 %60
    %vm63 = vcmask 894393
    %64 = vst.msk [vmem:[#allocation3] sm:$0x2] %vm63, %v61
    %v65 = vld [vmem:[#allocation2] sm:$0x3]
    %v66 = vpack.c.bf16 %v65, %v65
    %v68 = vrot.slane %v66, 6
    %69 = vrot.lane.b32.xlu0 %v68, 126
    %v70 = vpop.permute.xlu0 %69
    %vm72 = vcmask 444418
    %73 = vst.msk [vmem:[#allocation3] sm:$0x4] %vm72, %v70
    %v74 = vld [vmem:[#allocation2] sm:$0x3]
    %v75 = vpack.c.bf16 %v74, %v74
    %v77 = vrot.slane %v75, 6
    %78 = vrot.lane.b32.xlu0 %v77, 117
    %v79 = vpop.permute.xlu0 %78
    %vm81 = vcmask 895418
    %82 = vst.msk [vmem:[#allocation3] sm:$0x4] %vm81, %v79
    %v83 = vld [vmem:[#allocation2] sm:$0x3]
    %v84 = vpack.c.bf16 %v83, %v83
    %v86 = vrot.slane %v84, 5
    %87 = vrot.lane.b32.xlu0 %v86, 125
    %v88 = vpop.permute.xlu0 %87
    %vm90 = vcmask 445443
    %91 = vst.msk [vmem:[#allocation3] sm:$0x8] %vm90, %v88
    %v92 = vld [vmem:[#allocation2] sm:$0x3]
    %v93 = vpack.c.bf16 %v92, %v92
    %v95 = vrot.slane %v93, 5
    %96 = vrot.lane.b32.xlu0 %v95, 116
    %v97 = vpop.permute.xlu0 %96
    %vm99 = vcmask 896443
    %100 = vst.msk [vmem:[#allocation3] sm:$0x8] %vm99, %v97
    %v101 = vld [vmem:[#allocation2] sm:$0x3]
    %v102 = vpack.c.bf16 %v101, %v101
    %104 = vrot.lane.b32.xlu0 %v102, 124
    %v105 = vpop.permute.xlu0 %104
    %107 = vst.msk [vmem:[#allocation3 + $0x4] sm:$0x1] %vm37, %v105
    %v108 = vld [vmem:[#allocation2] sm:$0x3]
    %v109 = vpack.c.bf16 %v108, %v108
    %111 = vrot.lane.b32.xlu0 %v109, 115
    %v112 = vpop.permute.xlu0 %111
    %114 = vst.msk [vmem:[#allocation3 + $0x4] sm:$0x1] %vm45, %v112
    %v115 = vld [vmem:[#allocation2] sm:$0x3]
    %v116 = vpack.c.bf16 %v115, %v115
    %v118 = vrot.slane %v116, 7
    %119 = vrot.lane.b32.xlu0 %v118, 123
    %v120 = vpop.permute.xlu0 %119
    %122 = vst.msk [vmem:[#allocation3 + $0x4] sm:$0x2] %vm54, %v120
    %v123 = vld [vmem:[#allocation2] sm:$0x3]
    %v124 = vpack.c.bf16 %v123, %v123
    %v126 = vrot.slane %v124, 7
    %127 = vrot.lane.b32.xlu0 %v126, 114
    %v128 = vpop.permute.xlu0 %127
    %130 = vst.msk [vmem:[#allocation3 + $0x4] sm:$0x2] %vm63, %v128
    %v131 = vld [vmem:[#allocation2] sm:$0x3]
    %v132 = vpack.c.bf16 %v131, %v131
    %v134 = vrot.slane %v132, 6
    %135 = vrot.lane.b32.xlu0 %v134, 122
    %v136 = vpop.permute.xlu0 %135
    %138 = vst.msk [vmem:[#allocation3 + $0x4] sm:$0x4] %vm72, %v136
    %v139 = vld [vmem:[#allocation2] sm:$0x3]
    %v140 = vpack.c.bf16 %v139, %v139
    %v142 = vrot.slane %v140, 6
    %143 = vrot.lane.b32.xlu0 %v142, 113
    %v144 = vpop.permute.xlu0 %143
    %146 = vst.msk [vmem:[#allocation3 + $0x4] sm:$0x4] %vm81, %v144
    %v147 = vld [vmem:[#allocation2] sm:$0x3]
    %v148 = vpack.c.bf16 %v147, %v147
    %v150 = vrot.slane %v148, 5
    %151 = vrot.lane.b32.xlu0 %v150, 121
    %v152 = vpop.permute.xlu0 %151
    %154 = vst.msk [vmem:[#allocation3 + $0x4] sm:$0x8] %vm90, %v152
    %v155 = vld [vmem:[#allocation2] sm:$0x3]
    %v156 = vpack.c.bf16 %v155, %v155
    %v158 = vrot.slane %v156, 5
    %159 = vrot.lane.b32.xlu0 %v158, 112
    %v160 = vpop.permute.xlu0 %159
    %162 = vst.msk [vmem:[#allocation3 + $0x4] sm:$0x8] %vm99, %v160
    %v163 = vld [vmem:[#allocation2] sm:$0x3]
    %v164 = vpack.c.bf16 %v163, %v163
    %166 = vrot.lane.b32.xlu0 %v164, 120
    %v167 = vpop.permute.xlu0 %166
    %169 = vst.msk [vmem:[#allocation3 + $0x8] sm:$0x1] %vm37, %v167
    %v170 = vld [vmem:[#allocation2] sm:$0x3]
    %v171 = vpack.c.bf16 %v170, %v170
    %173 = vrot.lane.b32.xlu0 %v171, 111
    %v174 = vpop.permute.xlu0 %173
    %176 = vst.msk [vmem:[#allocation3 + $0x8] sm:$0x1] %vm45, %v174
    %v177 = vld [vmem:[#allocation2] sm:$0x3]
    %v178 = vpack.c.bf16 %v177, %v177
    %v180 = vrot.slane %v178, 7
    %181 = vrot.lane.b32.xlu0 %v180, 119
    %v182 = vpop.permute.xlu0 %181
    %184 = vst.msk [vmem:[#allocation3 + $0x8] sm:$0x2] %vm54, %v182
    %v185 = vld [vmem:[#allocation2] sm:$0x3]
    %v186 = vpack.c.bf16 %v185, %v185
    %v188 = vrot.slane %v186, 7
    %189 = vrot.lane.b32.xlu0 %v188, 110
    %v190 = vpop.permute.xlu0 %189
    %192 = vst.msk [vmem:[#allocation3 + $0x8] sm:$0x2] %vm63, %v190
    %v193 = vld [vmem:[#allocation4] sm:$0xf]
    %v194 = vld [vmem:[#allocation4 + $0x14] sm:$0xf]
    %v195 = vld [vmem:[#allocation3] sm:$0xf]
    %v196 = vld [vmem:[#allocation3 + $0x4] sm:$0xf]
    %v197 = vld [vmem:[#allocation3 + $0x8] sm:$0xf]
    %v198 = vld [vmem:[#allocation3 + $0xc] sm:$0xf]
    %v199 = vld [vmem:[%s2] sm:$0xff]
    %v200 = vld [vmem:[%s2 + $0x8] sm:$0xff]
    %202 = vset.pattern.permute.xlu0 0
    %203 = vperm.xlu0 %202, %v199
    %v204 = vpop.permute.xlu0 %203
    %207 = vset.pattern.permute.xlu0 0
    %208 = vperm.xlu0 %207, %v200
    %v209 = vpop.permute.xlu0 %208
    %v213 = vunpack.c.l.b16 %v193
    %v214 = vunpack.c.l.b16 %v194
    %v215 = vpack.c.b16 %v214, %v213
    %v220 = vunpack.c.l.b16 %v195
    %v221 = vunpack.c.l.b16 %v196
    %v222 = vunpack.c.l.b16 %v197
    %v223 = vunpack.c.l.b16 %v198
    %v224 = vpack.c.b16 %v221, %v220
    %v225 = vpack.c.b16 %v223, %v222
    %vm228 = vcmask 261120
    %v230 = vsel %vm228, %v215, 0
    %232 = vmatpush.bf16.msra.mxu0 0
    %233 = vmatpush.bf16.msra.mxu0 0
    %234 = vmatpush.bf16.msra.mxu0 0
    %235 = vmatpush.bf16.msra.mxu0 0
    %236 = vmatpush.bf16.msra.mxu0 0
    %237 = vmatpush.bf16.msra.mxu0 0
    %238 = vmatpush.bf16.msra.mxu0 %v225
    %239 = vmatpush.bf16.msra.mxu0 %v224
    %240 = vmatmul.bf16.gmra.mxu0 %v230
    %v241 = vpop.f32.mrf.mxu0
    %v242 = vadd.f32 %v204, %v241
    %v243 = vpop.f32.mrf.mxu0
    %v244 = vadd.f32 %v209, %v243
    %245 = vdwg.mxu0
    %v246 = vmax.f32 %v242, 0.0
    %v247 = vmax.f32 %v244, 0.0
    %248 = vst [vmem:[#allocation2] sm:$0xff] %v246
    %249 = vst [vmem:[#allocation2 + $0x8] sm:$0xff] %v247
    %v250 = vld [vmem:[#allocation2] sm:$0xff]
    %v251 = vld [vmem:[#allocation2 + $0x8] sm:$0xff]
    %v252 = vpack.c.bf16 %v250, %v250
    %v253 = vpack.c.bf16 %v251, %v251
    %vm254 = vcmask 371712
    %255 = vst.msk [vmem:[#allocation3] sm:$0xf] %vm254, %v252
    %256 = vst.msk [vmem:[#allocation3 + $0x4] sm:$0xf] %vm254, %v253
    %v257 = vld [vmem:[#allocation2] sm:$0xff]
    %v258 = vld [vmem:[#allocation2 + $0x8] sm:$0xff]
    %v259 = vpack.c.bf16 %v257, %v257
    %v260 = vpack.c.bf16 %v258, %v258
    %263 = vrot.lane.b32.xlu0 %v259, 119
    %v264 = vpop.permute.xlu0 %263
    %265 = vrot.lane.b32.xlu0 %v260, 119
    %v266 = vpop.permute.xlu0 %265
    %vm269 = vcmask 748912
    %270 = vst.msk [vmem:[#allocation3] sm:$0xf] %vm269, %v264
    %271 = vst.msk [vmem:[#allocation3 + $0x4] sm:$0xf] %vm269, %v266
    %v272 = vld [vmem:[#allocation2] sm:$0xff]
    %v273 = vld [vmem:[#allocation2 + $0x8] sm:$0xff]
    %v274 = vpack.c.bf16 %v272, %v272
    %v275 = vpack.c.bf16 %v273, %v273
    %278 = vrot.lane.b32.xlu0 %v274, 127
    %v279 = vpop.permute.xlu0 %278
    %280 = vrot.lane.b32.xlu0 %v275, 127
    %v281 = vpop.permute.xlu0 %280
    %284 = vst.msk [vmem:[#allocation3 + $0x8] sm:$0xf] %vm254, %v279
    %285 = vst.msk [vmem:[#allocation3 + $0xc] sm:$0xf] %vm254, %v281
    %v286 = vld [vmem:[#allocation2] sm:$0xff]
    %v287 = vld [vmem:[#allocation2 + $0x8] sm:$0xff]
    %v288 = vpack.c.bf16 %v286, %v286
    %v289 = vpack.c.bf16 %v287, %v287
    %292 = vrot.lane.b32.xlu0 %v288, 118
    %v293 = vpop.permute.xlu0 %292
    %294 = vrot.lane.b32.xlu0 %v289, 118
    %v295 = vpop.permute.xlu0 %294
    %298 = vst.msk [vmem:[#allocation3 + $0x8] sm:$0xf] %vm269, %v293
    %299 = vst.msk [vmem:[#allocation3 + $0xc] sm:$0xf] %vm269, %v295
    %v300 = vld [vmem:[#allocation2] sm:$0xff]
    %v301 = vld [vmem:[#allocation2 + $0x8] sm:$0xff]
    %v302 = vpack.c.bf16 %v300, %v300
    %v303 = vpack.c.bf16 %v301, %v301
    %306 = vrot.lane.b32.xlu0 %v302, 126
    %v307 = vpop.permute.xlu0 %306
    %308 = vrot.lane.b32.xlu0 %v303, 126
    %v309 = vpop.permute.xlu0 %308
    %312 = vst.msk [vmem:[#allocation3 + $0x10] sm:$0xf] %vm254, %v307
    %313 = vst.msk [vmem:[#allocation3 + $0x14] sm:$0xf] %vm254, %v309
    %v314 = vld [vmem:[#allocation2] sm:$0xff]
    %v315 = vld [vmem:[#allocation2 + $0x8] sm:$0xff]
    %v316 = vpack.c.bf16 %v314, %v314
    %v317 = vpack.c.bf16 %v315, %v315
    %320 = vrot.lane.b32.xlu0 %v316, 117
    %v321 = vpop.permute.xlu0 %320
    %322 = vrot.lane.b32.xlu0 %v317, 117
    %v323 = vpop.permute.xlu0 %322
    %326 = vst.msk [vmem:[#allocation3 + $0x10] sm:$0xf] %vm269, %v321
    %327 = vst.msk [vmem:[#allocation3 + $0x14] sm:$0xf] %vm269, %v323
    %v328 = vld [vmem:[#allocation2] sm:$0xff]
    %v329 = vld [vmem:[#allocation2 + $0x8] sm:$0xff]
    %v330 = vpack.c.bf16 %v328, %v328
    %v331 = vpack.c.bf16 %v329, %v329
    %334 = vrot.lane.b32.xlu0 %v330, 125
    %v335 = vpop.permute.xlu0 %334
    %336 = vrot.lane.b32.xlu0 %v331, 125
    %v337 = vpop.permute.xlu0 %336
    %340 = vst.msk [vmem:[#allocation3 + $0x18] sm:$0xf] %vm254, %v335
    %341 = vst.msk [vmem:[#allocation3 + $0x1c] sm:$0xf] %vm254, %v337
    %v342 = vld [vmem:[#allocation2] sm:$0xff]
    %v343 = vld [vmem:[#allocation2 + $0x8] sm:$0xff]
    %v344 = vpack.c.bf16 %v342, %v342
    %v345 = vpack.c.bf16 %v343, %v343
    %348 = vrot.lane.b32.xlu0 %v344, 116
    %v349 = vpop.permute.xlu0 %348
    %350 = vrot.lane.b32.xlu0 %v345, 116
    %v351 = vpop.permute.xlu0 %350
    %354 = vst.msk [vmem:[#allocation3 + $0x18] sm:$0xf] %vm269, %v349
    %355 = vst.msk [vmem:[#allocation3 + $0x1c] sm:$0xf] %vm269, %v351
    %v356 = vld [vmem:[#allocation2] sm:$0xff]
    %v357 = vld [vmem:[#allocation2 + $0x8] sm:$0xff]
    %v358 = vpack.c.bf16 %v356, %v356
    %v359 = vpack.c.bf16 %v357, %v357
    %362 = vrot.lane.b32.xlu0 %v358, 124
    %v363 = vpop.permute.xlu0 %362
    %364 = vrot.lane.b32.xlu0 %v359, 124
    %v365 = vpop.permute.xlu0 %364
    %368 = vst.msk [vmem:[#allocation3 + $0x20] sm:$0xf] %vm254, %v363
    %369 = vst.msk [vmem:[#allocation3 + $0x24] sm:$0xf] %vm254, %v365
    %v370 = vld [vmem:[#allocation2] sm:$0xff]
    %v371 = vld [vmem:[#allocation2 + $0x8] sm:$0xff]
    %v372 = vpack.c.bf16 %v370, %v370
    %v373 = vpack.c.bf16 %v371, %v371
    %376 = vrot.lane.b32.xlu0 %v372, 115
    %v377 = vpop.permute.xlu0 %376
    %378 = vrot.lane.b32.xlu0 %v373, 115
    %v379 = vpop.permute.xlu0 %378
    %382 = vst.msk [vmem:[#allocation3 + $0x20] sm:$0xf] %vm269, %v377
    %383 = vst.msk [vmem:[#allocation3 + $0x24] sm:$0xf] %vm269, %v379
    %v384 = vld [vmem:[#allocation2] sm:$0xff]
    %v385 = vld [vmem:[#allocation2 + $0x8] sm:$0xff]
    %v386 = vpack.c.bf16 %v384, %v384
    %v387 = vpack.c.bf16 %v385, %v385
    %390 = vrot.lane.b32.xlu0 %v386, 123
    %v391 = vpop.permute.xlu0 %390
    %392 = vrot.lane.b32.xlu0 %v387, 123
    %v393 = vpop.permute.xlu0 %392
    %396 = vst.msk [vmem:[#allocation3 + $0x28] sm:$0xf] %vm254, %v391
    %397 = vst.msk [vmem:[#allocation3 + $0x2c] sm:$0xf] %vm254, %v393
    %v398 = vld [vmem:[#allocation2] sm:$0xff]
    %v399 = vld [vmem:[#allocation2 + $0x8] sm:$0xff]
    %v400 = vpack.c.bf16 %v398, %v398
    %v401 = vpack.c.bf16 %v399, %v399
    %404 = vrot.lane.b32.xlu0 %v400, 114
    %v405 = vpop.permute.xlu0 %404
    %406 = vrot.lane.b32.xlu0 %v401, 114
    %v407 = vpop.permute.xlu0 %406
    %410 = vst.msk [vmem:[#allocation3 + $0x28] sm:$0xf] %vm269, %v405
    %411 = vst.msk [vmem:[#allocation3 + $0x2c] sm:$0xf] %vm269, %v407
    %v412 = vld [vmem:[#allocation2] sm:$0xff]
    %v413 = vld [vmem:[#allocation2 + $0x8] sm:$0xff]
    %v414 = vpack.c.bf16 %v412, %v412
    %v415 = vpack.c.bf16 %v413, %v413
    %418 = vrot.lane.b32.xlu0 %v414, 122
    %v419 = vpop.permute.xlu0 %418
    %420 = vrot.lane.b32.xlu0 %v415, 122
    %v421 = vpop.permute.xlu0 %420
    %424 = vst.msk [vmem:[#allocation3 + $0x30] sm:$0xf] %vm254, %v419
    %425 = vst.msk [vmem:[#allocation3 + $0x34] sm:$0xf] %vm254, %v421
    %v426 = vld [vmem:[#allocation2] sm:$0xff]
    %v427 = vld [vmem:[#allocation2 + $0x8] sm:$0xff]
    %v428 = vpack.c.bf16 %v426, %v426
    %v429 = vpack.c.bf16 %v427, %v427
    %432 = vrot.lane.b32.xlu0 %v428, 113
    %v433 = vpop.permute.xlu0 %432
    %434 = vrot.lane.b32.xlu0 %v429, 113
    %v435 = vpop.permute.xlu0 %434
    %438 = vst.msk [vmem:[#allocation3 + $0x30] sm:$0xf] %vm269, %v433
    %439 = vst.msk [vmem:[#allocation3 + $0x34] sm:$0xf] %vm269, %v435
    %v440 = vld [vmem:[#allocation2] sm:$0xff]
    %v441 = vld [vmem:[#allocation2 + $0x8] sm:$0xff]
    %v442 = vpack.c.bf16 %v440, %v440
    %v443 = vpack.c.bf16 %v441, %v441
    %446 = vrot.lane.b32.xlu0 %v442, 121
    %v447 = vpop.permute.xlu0 %446
    %448 = vrot.lane.b32.xlu0 %v443, 121
    %v449 = vpop.permute.xlu0 %448
    %452 = vst.msk [vmem:[#allocation3 + $0x38] sm:$0xf] %vm254, %v447
    %453 = vst.msk [vmem:[#allocation3 + $0x3c] sm:$0xf] %vm254, %v449
    %v454 = vld [vmem:[#allocation2] sm:$0xff]
    %v455 = vld [vmem:[#allocation2 + $0x8] sm:$0xff]
    %v456 = vpack.c.bf16 %v454, %v454
    %v457 = vpack.c.bf16 %v455, %v455
    %460 = vrot.lane.b32.xlu0 %v456, 112
    %v461 = vpop.permute.xlu0 %460
    %462 = vrot.lane.b32.xlu0 %v457, 112
    %v463 = vpop.permute.xlu0 %462
    %466 = vst.msk [vmem:[#allocation3 + $0x38] sm:$0xf] %vm269, %v461
    %467 = vst.msk [vmem:[#allocation3 + $0x3c] sm:$0xf] %vm269, %v463
    %v468 = vld [vmem:[#allocation2] sm:$0xff]
    %v469 = vld [vmem:[#allocation2 + $0x8] sm:$0xff]
    %v470 = vpack.c.bf16 %v468, %v468
    %v471 = vpack.c.bf16 %v469, %v469
    %474 = vrot.lane.b32.xlu0 %v470, 120
    %v475 = vpop.permute.xlu0 %474
    %476 = vrot.lane.b32.xlu0 %v471, 120
    %v477 = vpop.permute.xlu0 %476
    %480 = vst.msk [vmem:[#allocation3 + $0x40] sm:$0xf] %vm254, %v475
    %481 = vst.msk [vmem:[#allocation3 + $0x44] sm:$0xf] %vm254, %v477
    %v482 = vld [vmem:[#allocation2] sm:$0xff]
    %v483 = vld [vmem:[#allocation2 + $0x8] sm:$0xff]
    %v484 = vpack.c.bf16 %v482, %v482
    %v485 = vpack.c.bf16 %v483, %v483
    %488 = vrot.lane.b32.xlu0 %v484, 111
    %v489 = vpop.permute.xlu0 %488
    %490 = vrot.lane.b32.xlu0 %v485, 111
    %v491 = vpop.permute.xlu0 %490
    %494 = vst.msk [vmem:[#allocation3 + $0x40] sm:$0xf] %vm269, %v489
    %495 = vst.msk [vmem:[#allocation3 + $0x44] sm:$0xf] %vm269, %v491
    %v496 = vld [vmem:[#allocation2] sm:$0xff]
    %v497 = vld [vmem:[#allocation2 + $0x8] sm:$0xff]
    %v498 = vpack.c.bf16 %v496, %v496
    %v499 = vpack.c.bf16 %v497, %v497
    %502 = vrot.lane.b32.xlu0 %v498, 119
    %v503 = vpop.permute.xlu0 %502
    %504 = vrot.lane.b32.xlu0 %v499, 119
    %v505 = vpop.permute.xlu0 %504
    %508 = vst.msk [vmem:[#allocation3 + $0x48] sm:$0xf] %vm254, %v503
    %509 = vst.msk [vmem:[#allocation3 + $0x4c] sm:$0xf] %vm254, %v505
    %v510 = vld [vmem:[#allocation2] sm:$0xff]
    %v511 = vld [vmem:[#allocation2 + $0x8] sm:$0xff]
    %v512 = vpack.c.bf16 %v510, %v510
    %v513 = vpack.c.bf16 %v511, %v511
    %516 = vrot.lane.b32.xlu0 %v512, 110
    %v517 = vpop.permute.xlu0 %516
    %518 = vrot.lane.b32.xlu0 %v513, 110
    %v519 = vpop.permute.xlu0 %518
    %522 = vst.msk [vmem:[#allocation3 + $0x48] sm:$0xf] %vm269, %v517
    %523 = vst.msk [vmem:[#allocation3 + $0x4c] sm:$0xf] %vm269, %v519
    %v524 = vld [vmem:[#allocation4 + $0x28] sm:$0xff]
    %v525 = vld [vmem:[#allocation4 + $0x3c] sm:$0xff]
    %v526 = vld [vmem:[#allocation4 + $0x50] sm:$0xff]
    %v527 = vld [vmem:[#allocation4 + $0x64] sm:$0xff]
    %v528 = vld [vmem:[#allocation3] sm:$0xf]
    %v529 = vld [vmem:[#allocation3 + $0x4] sm:$0xf]
    %v530 = vld [vmem:[#allocation3 + $0x8] sm:$0xf]
    %v531 = vld [vmem:[#allocation3 + $0xc] sm:$0xf]
    %v532 = vld [vmem:[#allocation3 + $0x10] sm:$0xf]
    %v533 = vld [vmem:[#allocation3 + $0x14] sm:$0xf]
    %v534 = vld [vmem:[#allocation3 + $0x18] sm:$0xf]
    %v535 = vld [vmem:[#allocation3 + $0x1c] sm:$0xf]
    %v536 = vld [vmem:[#allocation3 + $0x20] sm:$0xf]
    %v537 = vld [vmem:[#allocation3 + $0x24] sm:$0xf]
    %v538 = vld [vmem:[#allocation3 + $0x28] sm:$0xf]
    %v539 = vld [vmem:[#allocation3 + $0x2c] sm:$0xf]
    %v540 = vld [vmem:[#allocation3 + $0x30] sm:$0xf]
    %v541 = vld [vmem:[#allocation3 + $0x34] sm:$0xf]
    %v542 = vld [vmem:[#allocation3 + $0x38] sm:$0xf]
    %v543 = vld [vmem:[#allocation3 + $0x3c] sm:$0xf]
    %v544 = vld [vmem:[#allocation3 + $0x40] sm:$0xf]
    %v545 = vld [vmem:[#allocation3 + $0x44] sm:$0xf]
    %v546 = vld [vmem:[#allocation3 + $0x48] sm:$0xf]
    %v547 = vld [vmem:[#allocation3 + $0x4c] sm:$0xf]
    %v548 = vld [vmem:[%s2] sm:$0xff]
    %v549 = vld [vmem:[%s2 + $0x8] sm:$0xff]
    %v550 = vld [vmem:[%s2 + $0x10] sm:$0xff]
    %v551 = vld [vmem:[%s2 + $0x18] sm:$0xff]
    %553 = vset.pattern.permute.xlu0 1
    %554 = vperm.xlu0 %553, %v548
    %v555 = vpop.permute.xlu0 %554
    %558 = vset.pattern.permute.xlu0 1
    %559 = vperm.xlu0 %558, %v549
    %v560 = vpop.permute.xlu0 %559
    %563 = vset.pattern.permute.xlu0 1
    %564 = vperm.xlu0 %563, %v550
    %v565 = vpop.permute.xlu0 %564
    %568 = vset.pattern.permute.xlu0 1
    %569 = vperm.xlu0 %568, %v551
    %v570 = vpop.permute.xlu0 %569
    %v576 = vunpack.c.l.b16 %v524
    %v577 = vunpack.c.h.b16 %v524
    %v578 = vunpack.c.l.b16 %v525
    %v579 = vunpack.c.h.b16 %v525
    %v580 = vunpack.c.l.b16 %v526
    %v581 = vunpack.c.h.b16 %v526
    %v582 = vunpack.c.l.b16 %v527
    %v583 = vunpack.c.h.b16 %v527
    %v584 = vpack.c.b16 %v578, %v576
    %v585 = vpack.c.b16 %v579, %v577
    %v586 = vpack.c.b16 %v582, %v580
    %v587 = vpack.c.b16 %v583, %v581
    %v610 = vunpack.c.l.b16 %v528
    %v611 = vunpack.c.l.b16 %v529
    %v612 = vunpack.c.l.b16 %v530
    %v613 = vunpack.c.l.b16 %v531
    %v614 = vunpack.c.l.b16 %v532
    %v615 = vunpack.c.l.b16 %v533
    %v616 = vunpack.c.l.b16 %v534
    %v617 = vunpack.c.l.b16 %v535
    %v618 = vunpack.c.l.b16 %v536
    %v619 = vunpack.c.l.b16 %v537
    %v620 = vunpack.c.l.b16 %v538
    %v621 = vunpack.c.l.b16 %v539
    %v622 = vunpack.c.l.b16 %v540
    %v623 = vunpack.c.l.b16 %v541
    %v624 = vunpack.c.l.b16 %v542
    %v625 = vunpack.c.l.b16 %v543
    %v626 = vunpack.c.l.b16 %v544
    %v627 = vunpack.c.l.b16 %v545
    %v628 = vunpack.c.l.b16 %v546
    %v629 = vunpack.c.l.b16 %v547
    %v630 = vpack.c.b16 %v611, %v610
    %v631 = vpack.c.b16 %v613, %v612
    %v632 = vpack.c.b16 %v615, %v614
    %v633 = vpack.c.b16 %v617, %v616
    %v634 = vpack.c.b16 %v619, %v618
    %v635 = vpack.c.b16 %v621, %v620
    %v636 = vpack.c.b16 %v623, %v622
    %v637 = vpack.c.b16 %v625, %v624
    %v638 = vpack.c.b16 %v627, %v626
    %v639 = vpack.c.b16 %v629, %v628
    %v651 = vsel %vm228, %v585, 0
    %v654 = vsel %vm228, %v587, 0
    %656 = vmatpush.bf16.msra.mxu0 %v637
    %657 = vmatpush.bf16.msra.mxu0 %v636
    %658 = vmatpush.bf16.msra.mxu0 %v635
    %659 = vmatpush.bf16.msra.mxu0 %v634
    %660 = vmatpush.bf16.msra.mxu0 %v633
    %661 = vmatpush.bf16.msra.mxu0 %v632
    %662 = vmatpush.bf16.msra.mxu0 %v631
    %663 = vmatpush.bf16.msra.mxu0 %v630
    %664 = vmatmul.bf16.gmra.mxu0 %v584
    %v665 = vpop.f32.mrf.mxu0
    %v666 = vadd.f32 %v555, %v665
    %v667 = vpop.f32.mrf.mxu0
    %v668 = vadd.f32 %v560, %v667
    %669 = vmatmul.bf16.gmra.mxu0 %v586
    %v670 = vpop.f32.mrf.mxu0
    %v671 = vadd.f32 %v565, %v670
    %v672 = vpop.f32.mrf.mxu0
    %v673 = vadd.f32 %v570, %v672
    %674 = vdwg.mxu0
    %675 = vmatpush.bf16.msra.mxu0 0
    %676 = vmatpush.bf16.msra.mxu0 0
    %677 = vmatpush.bf16.msra.mxu0 0
    %678 = vmatpush.bf16.msra.mxu0 0
    %679 = vmatpush.bf16.msra.mxu0 0
    %680 = vmatpush.bf16.msra.mxu0 0
    %681 = vmatpush.bf16.msra.mxu0 %v639
    %682 = vmatpush.bf16.msra.mxu0 %v638
    %683 = vmatmul.bf16.gmra.mxu0 %v651
    %v684 = vpop.f32.mrf.mxu0
    %v685 = vadd.f32 %v666, %v684
    %v686 = vpop.f32.mrf.mxu0
    %v687 = vadd.f32 %v668, %v686
    %688 = vmatmul.bf16.gmra.mxu0 %v654
    %v689 = vpop.f32.mrf.mxu0
    %v690 = vadd.f32 %v671, %v689
    %v691 = vpop.f32.mrf.mxu0
    %v692 = vadd.f32 %v673, %v691
    %693 = vdwg.mxu0
    %v694 = vmax.f32 %v685, 0.0
    %v695 = vmax.f32 %v687, 0.0
    %v696 = vmax.f32 %v690, 0.0
    %v697 = vmax.f32 %v692, 0.0
    %698 = vst [vmem:[#allocation2] sm:$0xff] %v694
    %699 = vst [vmem:[#allocation2 + $0x8] sm:$0xff] %v695
    %700 = vst [vmem:[#allocation2 + $0x10] sm:$0xff] %v696
    %701 = vst [vmem:[#allocation2 + $0x18] sm:$0xff] %v697
    %v702 = vld [vmem:[#allocation2] sm:$0xff]
    %v703 = vld [vmem:[#allocation2 + $0x8] sm:$0xff]
    %v704 = vld [vmem:[#allocation2 + $0x10] sm:$0xff]
    %v705 = vld [vmem:[#allocation2 + $0x18] sm:$0xff]
    %v706 = vpack.c.bf16 %v702, %v702
    %v707 = vpack.c.bf16 %v703, %v703
    %v708 = vpack.c.bf16 %v704, %v704
    %v709 = vpack.c.bf16 %v705, %v705
    %vm710 = vcmask 297984
    %711 = vst.msk [vmem:[#allocation3] sm:$0xf] %vm710, %v706
    %712 = vst.msk [vmem:[#allocation3 + $0x4] sm:$0xf] %vm710, %v707
    %713 = vst.msk [vmem:[#allocation3 + $0x8] sm:$0xf] %vm710, %v708
    %714 = vst.msk [vmem:[#allocation3 + $0xc] sm:$0xf] %vm710, %v709
    %v715 = vld [vmem:[#allocation2] sm:$0xff]
    %v716 = vld [vmem:[#allocation2 + $0x8] sm:$0xff]
    %v717 = vld [vmem:[#allocation2 + $0x10] sm:$0xff]
    %v718 = vld [vmem:[#allocation2 + $0x18] sm:$0xff]
    %v719 = vpack.c.bf16 %v715, %v715
    %v720 = vpack.c.bf16 %v716, %v716
    %v721 = vpack.c.bf16 %v717, %v717
    %v722 = vpack.c.bf16 %v718, %v718
    %727 = vrot.lane.b32.xlu0 %v719, 119
    %v728 = vpop.permute.xlu0 %727
    %729 = vrot.lane.b32.xlu0 %v720, 119
    %v730 = vpop.permute.xlu0 %729
    %731 = vrot.lane.b32.xlu0 %v721, 119
    %v732 = vpop.permute.xlu0 %731
    %733 = vrot.lane.b32.xlu0 %v722, 119
    %v734 = vpop.permute.xlu0 %733
    %vm739 = vcmask 601384
    %740 = vst.msk [vmem:[#allocation3] sm:$0xf] %vm739, %v728
    %741 = vst.msk [vmem:[#allocation3 + $0x4] sm:$0xf] %vm739, %v730
    %742 = vst.msk [vmem:[#allocation3 + $0x8] sm:$0xf] %vm739, %v732
    %743 = vst.msk [vmem:[#allocation3 + $0xc] sm:$0xf] %vm739, %v734
    %v744 = vld [vmem:[#allocation2] sm:$0xff]
    %v745 = vld [vmem:[#allocation2 + $0x8] sm:$0xff]
    %v746 = vld [vmem:[#allocation2 + $0x10] sm:$0xff]
    %v747 = vld [vmem:[#allocation2 + $0x18] sm:$0xff]
    %v748 = vpack.c.bf16 %v744, %v744
    %v749 = vpack.c.bf16 %v745, %v745
    %v750 = vpack.c.bf16 %v746, %v746
    %v751 = vpack.c.bf16 %v747, %v747
    %756 = vrot.lane.b32.xlu0 %v748, 127
    %v757 = vpop.permute.xlu0 %756
    %758 = vrot.lane.b32.xlu0 %v749, 127
    %v759 = vpop.permute.xlu0 %758
    %760 = vrot.lane.b32.xlu0 %v750, 127
    %v761 = vpop.permute.xlu0 %760
    %762 = vrot.lane.b32.xlu0 %v751, 127
    %v763 = vpop.permute.xlu0 %762
    %768 = vst.msk [vmem:[#allocation3 + $0x10] sm:$0xf] %vm710, %v757
    %769 = vst.msk [vmem:[#allocation3 + $0x14] sm:$0xf] %vm710, %v759
    %770 = vst.msk [vmem:[#allocation3 + $0x18] sm:$0xf] %vm710, %v761
    %771 = vst.msk [vmem:[#allocation3 + $0x1c] sm:$0xf] %vm710, %v763
    %v772 = vld [vmem:[#allocation2] sm:$0xff]
    %v773 = vld [vmem:[#allocation2 + $0x8] sm:$0xff]
    %v774 = vld [vmem:[#allocation2 + $0x10] sm:$0xff]
    %v775 = vld [vmem:[#allocation2 + $0x18] sm:$0xff]
    %v776 = vpack.c.bf16 %v772, %v772
    %v777 = vpack.c.bf16 %v773, %v773
    %v778 = vpack.c.bf16 %v774, %v774
    %v779 = vpack.c.bf16 %v775, %v775
    %784 = vrot.lane.b32.xlu0 %v776, 118
    %v785 = vpop.permute.xlu0 %784
    %786 = vrot.lane.b32.xlu0 %v777, 118
    %v787 = vpop.permute.xlu0 %786
    %788 = vrot.lane.b32.xlu0 %v778, 118
    %v789 = vpop.permute.xlu0 %788
    %790 = vrot.lane.b32.xlu0 %v779, 118
    %v791 = vpop.permute.xlu0 %790
    %796 = vst.msk [vmem:[#allocation3 + $0x10] sm:$0xf] %vm739, %v785
    %797 = vst.msk [vmem:[#allocation3 + $0x14] sm:$0xf] %vm739, %v787
    %798 = vst.msk [vmem:[#allocation3 + $0x18] sm:$0xf] %vm739, %v789
    %799 = vst.msk [vmem:[#allocation3 + $0x1c] sm:$0xf] %vm739, %v791
    %v800 = vld [vmem:[#allocation2] sm:$0xff]
    %v801 = vld [vmem:[#allocation2 + $0x8] sm:$0xff]
    %v802 = vld [vmem:[#allocation2 + $0x10] sm:$0xff]
    %v803 = vld [vmem:[#allocation2 + $0x18] sm:$0xff]
    %v804 = vpack.c.bf16 %v800, %v800
    %v805 = vpack.c.bf16 %v801, %v801
    %v806 = vpack.c.bf16 %v802, %v802
    %v807 = vpack.c.bf16 %v803, %v803
    %812 = vrot.lane.b32.xlu0 %v804, 126
    %v813 = vpop.permute.xlu0 %812
    %814 = vrot.lane.b32.xlu0 %v805, 126
    %v815 = vpop.permute.xlu0 %814
    %816 = vrot.lane.b32.xlu0 %v806, 126
    %v817 = vpop.permute.xlu0 %816
    %818 = vrot.lane.b32.xlu0 %v807, 126
    %v819 = vpop.permute.xlu0 %818
    %824 = vst.msk [vmem:[#allocation3 + $0x20] sm:$0xf] %vm710, %v813
    %825 = vst.msk [vmem:[#allocation3 + $0x24] sm:$0xf] %vm710, %v815
    %826 = vst.msk [vmem:[#allocation3 + $0x28] sm:$0xf] %vm710, %v817
    %827 = vst.msk [vmem:[#allocation3 + $0x2c] sm:$0xf] %vm710, %v819
    %v828 = vld [vmem:[#allocation2] sm:$0xff]
    %v829 = vld [vmem:[#allocation2 + $0x8] sm:$0xff]
    %v830 = vld [vmem:[#allocation2 + $0x10] sm:$0xff]
    %v831 = vld [vmem:[#allocation2 + $0x18] sm:$0xff]
    %v832 = vpack.c.bf16 %v828, %v828
    %v833 = vpack.c.bf16 %v829, %v829
    %v834 = vpack.c.bf16 %v830, %v830
    %v835 = vpack.c.bf16 %v831, %v831
    %840 = vrot.lane.b32.xlu0 %v832, 117
    %v841 = vpop.permute.xlu0 %840
    %842 = vrot.lane.b32.xlu0 %v833, 117
    %v843 = vpop.permute.xlu0 %842
    %844 = vrot.lane.b32.xlu0 %v834, 117
    %v845 = vpop.permute.xlu0 %844
    %846 = vrot.lane.b32.xlu0 %v835, 117
    %v847 = vpop.permute.xlu0 %846
    %852 = vst.msk [vmem:[#allocation3 + $0x20] sm:$0xf] %vm739, %v841
    %853 = vst.msk [vmem:[#allocation3 + $0x24] sm:$0xf] %vm739, %v843
    %854 = vst.msk [vmem:[#allocation3 + $0x28] sm:$0xf] %vm739, %v845
    %855 = vst.msk [vmem:[#allocation3 + $0x2c] sm:$0xf] %vm739, %v847
    %v856 = vld [vmem:[#allocation2] sm:$0xff]
    %v857 = vld [vmem:[#allocation2 + $0x8] sm:$0xff]
    %v858 = vld [vmem:[#allocation2 + $0x10] sm:$0xff]
    %v859 = vld [vmem:[#allocation2 + $0x18] sm:$0xff]
    %v860 = vpack.c.bf16 %v856, %v856
    %v861 = vpack.c.bf16 %v857, %v857
    %v862 = vpack.c.bf16 %v858, %v858
    %v863 = vpack.c.bf16 %v859, %v859
    %868 = vrot.lane.b32.xlu0 %v860, 125
    %v869 = vpop.permute.xlu0 %868
    %870 = vrot.lane.b32.xlu0 %v861, 125
    %v871 = vpop.permute.xlu0 %870
    %872 = vrot.lane.b32.xlu0 %v862, 125
    %v873 = vpop.permute.xlu0 %872
    %874 = vrot.lane.b32.xlu0 %v863, 125
    %v875 = vpop.permute.xlu0 %874
    %880 = vst.msk [vmem:[#allocation3 + $0x30] sm:$0xf] %vm710, %v869
    %881 = vst.msk [vmem:[#allocation3 + $0x34] sm:$0xf] %vm710, %v871
    %882 = vst.msk [vmem:[#allocation3 + $0x38] sm:$0xf] %vm710, %v873
    %883 = vst.msk [vmem:[#allocation3 + $0x3c] sm:$0xf] %vm710, %v875
    %v884 = vld [vmem:[#allocation2] sm:$0xff]
    %v885 = vld [vmem:[#allocation2 + $0x8] sm:$0xff]
    %v886 = vld [vmem:[#allocation2 + $0x10] sm:$0xff]
    %v887 = vld [vmem:[#allocation2 + $0x18] sm:$0xff]
    %v888 = vpack.c.bf16 %v884, %v884
    %v889 = vpack.c.bf16 %v885, %v885
    %v890 = vpack.c.bf16 %v886, %v886
    %v891 = vpack.c.bf16 %v887, %v887
    %896 = vrot.lane.b32.xlu0 %v888, 116
    %v897 = vpop.permute.xlu0 %896
    %898 = vrot.lane.b32.xlu0 %v889, 116
    %v899 = vpop.permute.xlu0 %898
    %900 = vrot.lane.b32.xlu0 %v890, 116
    %v901 = vpop.permute.xlu0 %900
    %902 = vrot.lane.b32.xlu0 %v891, 116
    %v903 = vpop.permute.xlu0 %902
    %908 = vst.msk [vmem:[#allocation3 + $0x30] sm:$0xf] %vm739, %v897
    %909 = vst.msk [vmem:[#allocation3 + $0x34] sm:$0xf] %vm739, %v899
    %910 = vst.msk [vmem:[#allocation3 + $0x38] sm:$0xf] %vm739, %v901
    %911 = vst.msk [vmem:[#allocation3 + $0x3c] sm:$0xf] %vm739, %v903
    %v912 = vld [vmem:[#allocation2] sm:$0xff]
    %v913 = vld [vmem:[#allocation2 + $0x8] sm:$0xff]
    %v914 = vld [vmem:[#allocation2 + $0x10] sm:$0xff]
    %v915 = vld [vmem:[#allocation2 + $0x18] sm:$0xff]
    %v916 = vpack.c.bf16 %v912, %v912
    %v917 = vpack.c.bf16 %v913, %v913
    %v918 = vpack.c.bf16 %v914, %v914
    %v919 = vpack.c.bf16 %v915, %v915
    %924 = vrot.lane.b32.xlu0 %v916, 124
    %v925 = vpop.permute.xlu0 %924
    %926 = vrot.lane.b32.xlu0 %v917, 124
    %v927 = vpop.permute.xlu0 %926
    %928 = vrot.lane.b32.xlu0 %v918, 124
    %v929 = vpop.permute.xlu0 %928
    %930 = vrot.lane.b32.xlu0 %v919, 124
    %v931 = vpop.permute.xlu0 %930
    %936 = vst.msk [vmem:[#allocation3 + $0x40] sm:$0xf] %vm710, %v925
    %937 = vst.msk [vmem:[#allocation3 + $0x44] sm:$0xf] %vm710, %v927
    %938 = vst.msk [vmem:[#allocation3 + $0x48] sm:$0xf] %vm710, %v929
    %939 = vst.msk [vmem:[#allocation3 + $0x4c] sm:$0xf] %vm710, %v931
    %v940 = vld [vmem:[#allocation2] sm:$0xff]
    %v941 = vld [vmem:[#allocation2 + $0x8] sm:$0xff]
    %v942 = vld [vmem:[#allocation2 + $0x10] sm:$0xff]
    %v943 = vld [vmem:[#allocation2 + $0x18] sm:$0xff]
    %v944 = vpack.c.bf16 %v940, %v940
    %v945 = vpack.c.bf16 %v941, %v941
    %v946 = vpack.c.bf16 %v942, %v942
    %v947 = vpack.c.bf16 %v943, %v943
    %952 = vrot.lane.b32.xlu0 %v944, 115
    %v953 = vpop.permute.xlu0 %952
    %954 = vrot.lane.b32.xlu0 %v945, 115
    %v955 = vpop.permute.xlu0 %954
    %956 = vrot.lane.b32.xlu0 %v946, 115
    %v957 = vpop.permute.xlu0 %956
    %958 = vrot.lane.b32.xlu0 %v947, 115
    %v959 = vpop.permute.xlu0 %958
    %964 = vst.msk [vmem:[#allocation3 + $0x40] sm:$0xf] %vm739, %v953
    %965 = vst.msk [vmem:[#allocation3 + $0x44] sm:$0xf] %vm739, %v955
    %966 = vst.msk [vmem:[#allocation3 + $0x48] sm:$0xf] %vm739, %v957
    %967 = vst.msk [vmem:[#allocation3 + $0x4c] sm:$0xf] %vm739, %v959
    %v968 = vld [vmem:[#allocation2] sm:$0xff]
    %v969 = vld [vmem:[#allocation2 + $0x8] sm:$0xff]
    %v970 = vld [vmem:[#allocation2 + $0x10] sm:$0xff]
    %v971 = vld [vmem:[#allocation2 + $0x18] sm:$0xff]
    %v972 = vpack.c.bf16 %v968, %v968
    %v973 = vpack.c.bf16 %v969, %v969
    %v974 = vpack.c.bf16 %v970, %v970
    %v975 = vpack.c.bf16 %v971, %v971
    %980 = vrot.lane.b32.xlu0 %v972, 123
    %v981 = vpop.permute.xlu0 %980
    %982 = vrot.lane.b32.xlu0 %v973, 123
    %v983 = vpop.permute.xlu0 %982
    %984 = vrot.lane.b32.xlu0 %v974, 123
    %v985 = vpop.permute.xlu0 %984
    %986 = vrot.lane.b32.xlu0 %v975, 123
    %v987 = vpop.permute.xlu0 %986
    %992 = vst.msk [vmem:[#allocation3 + $0x50] sm:$0xf] %vm710, %v981
    %993 = vst.msk [vmem:[#allocation3 + $0x54] sm:$0xf] %vm710, %v983
    %994 = vst.msk [vmem:[#allocation3 + $0x58] sm:$0xf] %vm710, %v985
    %995 = vst.msk [vmem:[#allocation3 + $0x5c] sm:$0xf] %vm710, %v987
    %v996 = vld [vmem:[#allocation2] sm:$0xff]
    %v997 = vld [vmem:[#allocation2 + $0x8] sm:$0xff]
    %v998 = vld [vmem:[#allocation2 + $0x10] sm:$0xff]
    %v999 = vld [vmem:[#allocation2 + $0x18] sm:$0xff]
    %v1000 = vpack.c.bf16 %v996, %v996
    %v1001 = vpack.c.bf16 %v997, %v997
    %v1002 = vpack.c.bf16 %v998, %v998
    %v1003 = vpack.c.bf16 %v999, %v999
    %1008 = vrot.lane.b32.xlu0 %v1000, 114
    %v1009 = vpop.permute.xlu0 %1008
    %1010 = vrot.lane.b32.xlu0 %v1001, 114
    %v1011 = vpop.permute.xlu0 %1010
    %1012 = vrot.lane.b32.xlu0 %v1002, 114
    %v1013 = vpop.permute.xlu0 %1012
    %1014 = vrot.lane.b32.xlu0 %v1003, 114
    %v1015 = vpop.permute.xlu0 %1014
    %1020 = vst.msk [vmem:[#allocation3 + $0x50] sm:$0xf] %vm739, %v1009
    %1021 = vst.msk [vmem:[#allocation3 + $0x54] sm:$0xf] %vm739, %v1011
    %1022 = vst.msk [vmem:[#allocation3 + $0x58] sm:$0xf] %vm739, %v1013
    %1023 = vst.msk [vmem:[#allocation3 + $0x5c] sm:$0xf] %vm739, %v1015
    %v1024 = vld [vmem:[#allocation2] sm:$0xff]
    %v1025 = vld [vmem:[#allocation2 + $0x8] sm:$0xff]
    %v1026 = vld [vmem:[#allocation2 + $0x10] sm:$0xff]
    %v1027 = vld [vmem:[#allocation2 + $0x18] sm:$0xff]
    %v1028 = vpack.c.bf16 %v1024, %v1024
    %v1029 = vpack.c.bf16 %v1025, %v1025
    %v1030 = vpack.c.bf16 %v1026, %v1026
    %v1031 = vpack.c.bf16 %v1027, %v1027
    %1036 = vrot.lane.b32.xlu0 %v1028, 122
    %v1037 = vpop.permute.xlu0 %1036
    %1038 = vrot.lane.b32.xlu0 %v1029, 122
    %v1039 = vpop.permute.xlu0 %1038
    %1040 = vrot.lane.b32.xlu0 %v1030, 122
    %v1041 = vpop.permute.xlu0 %1040
    %1042 = vrot.lane.b32.xlu0 %v1031, 122
    %v1043 = vpop.permute.xlu0 %1042
    %1048 = vst.msk [vmem:[#allocation3 + $0x60] sm:$0xf] %vm710, %v1037
    %1049 = vst.msk [vmem:[#allocation3 + $0x64] sm:$0xf] %vm710, %v1039
    %1050 = vst.msk [vmem:[#allocation3 + $0x68] sm:$0xf] %vm710, %v1041
    %1051 = vst.msk [vmem:[#allocation3 + $0x6c] sm:$0xf] %vm710, %v1043
    %v1052 = vld [vmem:[#allocation2] sm:$0xff]
    %v1053 = vld [vmem:[#allocation2 + $0x8] sm:$0xff]
    %v1054 = vld [vmem:[#allocation2 + $0x10] sm:$0xff]
    %v1055 = vld [vmem:[#allocation2 + $0x18] sm:$0xff]
    %v1056 = vpack.c.bf16 %v1052, %v1052
    %v1057 = vpack.c.bf16 %v1053, %v1053
    %v1058 = vpack.c.bf16 %v1054, %v1054
    %v1059 = vpack.c.bf16 %v1055, %v1055
    %1064 = vrot.lane.b32.xlu0 %v1056, 113
    %v1065 = vpop.permute.xlu0 %1064
    %1066 = vrot.lane.b32.xlu0 %v1057, 113
    %v1067 = vpop.permute.xlu0 %1066
    %1068 = vrot.lane.b32.xlu0 %v1058, 113
    %v1069 = vpop.permute.xlu0 %1068
    %1070 = vrot.lane.b32.xlu0 %v1059, 113
    %v1071 = vpop.permute.xlu0 %1070
    %1076 = vst.msk [vmem:[#allocation3 + $0x60] sm:$0xf] %vm739, %v1065
    %1077 = vst.msk [vmem:[#allocation3 + $0x64] sm:$0xf] %vm739, %v1067
    %1078 = vst.msk [vmem:[#allocation3 + $0x68] sm:$0xf] %vm739, %v1069
    %1079 = vst.msk [vmem:[#allocation3 + $0x6c] sm:$0xf] %vm739, %v1071
    %v1080 = vld [vmem:[#allocation2] sm:$0xff]
    %v1081 = vld [vmem:[#allocation2 + $0x8] sm:$0xff]
    %v1082 = vld [vmem:[#allocation2 + $0x10] sm:$0xff]
    %v1083 = vld [vmem:[#allocation2 + $0x18] sm:$0xff]
    %v1084 = vpack.c.bf16 %v1080, %v1080
    %v1085 = vpack.c.bf16 %v1081, %v1081
    %v1086 = vpack.c.bf16 %v1082, %v1082
    %v1087 = vpack.c.bf16 %v1083, %v1083
    %1092 = vrot.lane.b32.xlu0 %v1084, 121
    %v1093 = vpop.permute.xlu0 %1092
    %1094 = vrot.lane.b32.xlu0 %v1085, 121
    %v1095 = vpop.permute.xlu0 %1094
    %1096 = vrot.lane.b32.xlu0 %v1086, 121
    %v1097 = vpop.permute.xlu0 %1096
    %1098 = vrot.lane.b32.xlu0 %v1087, 121
    %v1099 = vpop.permute.xlu0 %1098
    %1104 = vst.msk [vmem:[#allocation3 + $0x70] sm:$0xf] %vm710, %v1093
    %1105 = vst.msk [vmem:[#allocation3 + $0x74] sm:$0xf] %vm710, %v1095
    %1106 = vst.msk [vmem:[#allocation3 + $0x78] sm:$0xf] %vm710, %v1097
    %1107 = vst.msk [vmem:[#allocation3 + $0x7c] sm:$0xf] %vm710, %v1099
    %v1108 = vld [vmem:[#allocation2] sm:$0xff]
    %v1109 = vld [vmem:[#allocation2 + $0x8] sm:$0xff]
    %v1110 = vld [vmem:[#allocation2 + $0x10] sm:$0xff]
    %v1111 = vld [vmem:[#allocation2 + $0x18] sm:$0xff]
    %v1112 = vpack.c.bf16 %v1108, %v1108
    %v1113 = vpack.c.bf16 %v1109, %v1109
    %v1114 = vpack.c.bf16 %v1110, %v1110
    %v1115 = vpack.c.bf16 %v1111, %v1111
    %1120 = vrot.lane.b32.xlu0 %v1112, 112
    %v1121 = vpop.permute.xlu0 %1120
    %1122 = vrot.lane.b32.xlu0 %v1113, 112
    %v1123 = vpop.permute.xlu0 %1122
    %1124 = vrot.lane.b32.xlu0 %v1114, 112
    %v1125 = vpop.permute.xlu0 %1124
    %1126 = vrot.lane.b32.xlu0 %v1115, 112
    %v1127 = vpop.permute.xlu0 %1126
    %1132 = vst.msk [vmem:[#allocation3 + $0x70] sm:$0xf] %vm739, %v1121
    %1133 = vst.msk [vmem:[#allocation3 + $0x74] sm:$0xf] %vm739, %v1123
    %1134 = vst.msk [vmem:[#allocation3 + $0x78] sm:$0xf] %vm739, %v1125
    %1135 = vst.msk [vmem:[#allocation3 + $0x7c] sm:$0xf] %vm739, %v1127
    %v1136 = vld [vmem:[#allocation2] sm:$0xff]
    %v1137 = vld [vmem:[#allocation2 + $0x8] sm:$0xff]
    %v1138 = vld [vmem:[#allocation2 + $0x10] sm:$0xff]
    %v1139 = vld [vmem:[#allocation2 + $0x18] sm:$0xff]
    %v1140 = vpack.c.bf16 %v1136, %v1136
    %v1141 = vpack.c.bf16 %v1137, %v1137
    %v1142 = vpack.c.bf16 %v1138, %v1138
    %v1143 = vpack.c.bf16 %v1139, %v1139
    %1148 = vrot.lane.b32.xlu0 %v1140, 120
    %v1149 = vpop.permute.xlu0 %1148
    %1150 = vrot.lane.b32.xlu0 %v1141, 120
    %v1151 = vpop.permute.xlu0 %1150
    %1152 = vrot.lane.b32.xlu0 %v1142, 120
    %v1153 = vpop.permute.xlu0 %1152
    %1154 = vrot.lane.b32.xlu0 %v1143, 120
    %v1155 = vpop.permute.xlu0 %1154
    %1160 = vst.msk [vmem:[#allocation3 + $0x80] sm:$0xf] %vm710, %v1149
    %1161 = vst.msk [vmem:[#allocation3 + $0x84] sm:$0xf] %vm710, %v1151
    %1162 = vst.msk [vmem:[#allocation3 + $0x88] sm:$0xf] %vm710, %v1153
    %1163 = vst.msk [vmem:[#allocation3 + $0x8c] sm:$0xf] %vm710, %v1155
    %v1164 = vld [vmem:[#allocation2] sm:$0xff]
    %v1165 = vld [vmem:[#allocation2 + $0x8] sm:$0xff]
    %v1166 = vld [vmem:[#allocation2 + $0x10] sm:$0xff]
    %v1167 = vld [vmem:[#allocation2 + $0x18] sm:$0xff]
    %v1168 = vpack.c.bf16 %v1164, %v1164
    %v1169 = vpack.c.bf16 %v1165, %v1165
    %v1170 = vpack.c.bf16 %v1166, %v1166
    %v1171 = vpack.c.bf16 %v1167, %v1167
    %1176 = vrot.lane.b32.xlu0 %v1168, 111
    %v1177 = vpop.permute.xlu0 %1176
    %1178 = vrot.lane.b32.xlu0 %v1169, 111
    %v1179 = vpop.permute.xlu0 %1178
    %1180 = vrot.lane.b32.xlu0 %v1170, 111
    %v1181 = vpop.permute.xlu0 %1180
    %1182 = vrot.lane.b32.xlu0 %v1171, 111
    %v1183 = vpop.permute.xlu0 %1182
    %1188 = vst.msk [vmem:[#allocation3 + $0x80] sm:$0xf] %vm739, %v1177
    %1189 = vst.msk [vmem:[#allocation3 + $0x84] sm:$0xf] %vm739, %v1179
    %1190 = vst.msk [vmem:[#allocation3 + $0x88] sm:$0xf] %vm739, %v1181
    %1191 = vst.msk [vmem:[#allocation3 + $0x8c] sm:$0xf] %vm739, %v1183
    %v1192 = vld [vmem:[#allocation2] sm:$0xff]
    %v1193 = vld [vmem:[#allocation2 + $0x8] sm:$0xff]
    %v1194 = vld [vmem:[#allocation2 + $0x10] sm:$0xff]
    %v1195 = vld [vmem:[#allocation2 + $0x18] sm:$0xff]
    %v1196 = vpack.c.bf16 %v1192, %v1192
    %v1197 = vpack.c.bf16 %v1193, %v1193
    %v1198 = vpack.c.bf16 %v1194, %v1194
    %v1199 = vpack.c.bf16 %v1195, %v1195
    %1204 = vrot.lane.b32.xlu0 %v1196, 119
    %v1205 = vpop.permute.xlu0 %1204
    %1206 = vrot.lane.b32.xlu0 %v1197, 119
    %v1207 = vpop.permute.xlu0 %1206
    %1208 = vrot.lane.b32.xlu0 %v1198, 119
    %v1209 = vpop.permute.xlu0 %1208
    %1210 = vrot.lane.b32.xlu0 %v1199, 119
    %v1211 = vpop.permute.xlu0 %1210
    %1216 = vst.msk [vmem:[#allocation3 + $0x90] sm:$0xf] %vm710, %v1205
    %1217 = vst.msk [vmem:[#allocation3 + $0x94] sm:$0xf] %vm710, %v1207
    %1218 = vst.msk [vmem:[#allocation3 + $0x98] sm:$0xf] %vm710, %v1209
    %1219 = vst.msk [vmem:[#allocation3 + $0x9c] sm:$0xf] %vm710, %v1211
    %v1220 = vld [vmem:[#allocation2] sm:$0xff]
    %v1221 = vld [vmem:[#allocation2 + $0x8] sm:$0xff]
    %v1222 = vld [vmem:[#allocation2 + $0x10] sm:$0xff]
    %v1223 = vld [vmem:[#allocation2 + $0x18] sm:$0xff]
    %v1224 = vpack.c.bf16 %v1220, %v1220
    %v1225 = vpack.c.bf16 %v1221, %v1221
    %v1226 = vpack.c.bf16 %v1222, %v1222
    %v1227 = vpack.c.bf16 %v1223, %v1223
    %1232 = vrot.lane.b32.xlu0 %v1224, 110
    %v1233 = vpop.permute.xlu0 %1232
    %1234 = vrot.lane.b32.xlu0 %v1225, 110
    %v1235 = vpop.permute.xlu0 %1234
    %1236 = vrot.lane.b32.xlu0 %v1226, 110
    %v1237 = vpop.permute.xlu0 %1236
    %1238 = vrot.lane.b32.xlu0 %v1227, 110
    %v1239 = vpop.permute.xlu0 %1238
    %1244 = vst.msk [vmem:[#allocation3 + $0x90] sm:$0xf] %vm739, %v1233
    %1245 = vst.msk [vmem:[#allocation3 + $0x94] sm:$0xf] %vm739, %v1235
    %1246 = vst.msk [vmem:[#allocation3 + $0x98] sm:$0xf] %vm739, %v1237
    %1247 = vst.msk [vmem:[#allocation3 + $0x9c] sm:$0xf] %vm739, %v1239
    %v1248 = vld [vmem:[#allocation4 + $0x78] sm:$0xff]
    %v1249 = vld [vmem:[#allocation4 + $0x80] sm:$0xf]
    %v1250 = vld [vmem:[#allocation4 + $0x8c] sm:$0xff]
    %v1251 = vld [vmem:[#allocation4 + $0x94] sm:$0xf]
    %v1252 = vld [vmem:[#allocation4 + $0xa0] sm:$0xff]
    %v1253 = vld [vmem:[#allocation4 + $0xa8] sm:$0xf]
    %v1254 = vld [vmem:[#allocation4 + $0xb4] sm:$0xff]
    %v1255 = vld [vmem:[#allocation4 + $0xbc] sm:$0xf]
    %v1256 = vld [vmem:[#allocation4 + $0xc8] sm:$0xff]
    %v1257 = vld [vmem:[#allocation4 + $0xd0] sm:$0xf]
    %v1258 = vld [vmem:[#allocation4 + $0xdc] sm:$0xff]
    %v1259 = vld [vmem:[#allocation4 + $0xe4] sm:$0xf]
    %v1260 = vld [vmem:[#allocation4 + $0xf0] sm:$0xff]
    %v1261 = vld [vmem:[#allocation4 + $0xf8] sm:$0xf]
    %v1262 = vld [vmem:[#allocation4 + $0x104] sm:$0xff]
    %v1263 = vld [vmem:[#allocation4 + $0x10c] sm:$0xf]
    %v1264 = vld [vmem:[#allocation3] sm:$0xf]
    %v1265 = vld [vmem:[#allocation3 + $0x4] sm:$0xf]
    %v1266 = vld [vmem:[#allocation3 + $0x8] sm:$0xf]
    %v1267 = vld [vmem:[#allocation3 + $0xc] sm:$0xf]
    %v1268 = vld [vmem:[#allocation3 + $0x10] sm:$0xf]
    %v1269 = vld [vmem:[#allocation3 + $0x14] sm:$0xf]
    %v1270 = vld [vmem:[#allocation3 + $0x18] sm:$0xf]
    %v1271 = vld [vmem:[#allocation3 + $0x1c] sm:$0xf]
    %v1272 = vld [vmem:[#allocation3 + $0x20] sm:$0xf]
    %v1273 = vld [vmem:[#allocation3 + $0x24] sm:$0xf]
    %v1274 = vld [vmem:[#allocation3 + $0x28] sm:$0xf]
    %v1275 = vld [vmem:[#allocation3 + $0x2c] sm:$0xf]
    %v1276 = vld [vmem:[#allocation3 + $0x30] sm:$0xf]
    %v1277 = vld [vmem:[#allocation3 + $0x34] sm:$0xf]
    %v1278 = vld [vmem:[#allocation3 + $0x38] sm:$0xf]
    %v1279 = vld [vmem:[#allocation3 + $0x3c] sm:$0xf]
    %v1280 = vld [vmem:[#allocation3 + $0x40] sm:$0xf]
    %v1281 = vld [vmem:[#allocation3 + $0x44] sm:$0xf]
    %v1282 = vld [vmem:[#allocation3 + $0x48] sm:$0xf]
    %v1283 = vld [vmem:[#allocation3 + $0x4c] sm:$0xf]
    %v1284 = vld [vmem:[#allocation3 + $0x50] sm:$0xf]
    %v1285 = vld [vmem:[#allocation3 + $0x54] sm:$0xf]
    %v1286 = vld [vmem:[#allocation3 + $0x58] sm:$0xf]
    %v1287 = vld [vmem:[#allocation3 + $0x5c] sm:$0xf]
    %v1288 = vld [vmem:[#allocation3 + $0x60] sm:$0xf]
    %v1289 = vld [vmem:[#allocation3 + $0x64] sm:$0xf]
    %v1290 = vld [vmem:[#allocation3 + $0x68] sm:$0xf]
    %v1291 = vld [vmem:[#allocation3 + $0x6c] sm:$0xf]
    %v1292 = vld [vmem:[#allocation3 + $0x70] sm:$0xf]
    %v1293 = vld [vmem:[#allocation3 + $0x74] sm:$0xf]
    %v1294 = vld [vmem:[#allocation3 + $0x78] sm:$0xf]
    %v1295 = vld [vmem:[#allocation3 + $0x7c] sm:$0xf]
    %v1296 = vld [vmem:[#allocation3 + $0x80] sm:$0xf]
    %v1297 = vld [vmem:[#allocation3 + $0x84] sm:$0xf]
    %v1298 = vld [vmem:[#allocation3 + $0x88] sm:$0xf]
    %v1299 = vld [vmem:[#allocation3 + $0x8c] sm:$0xf]
    %v1300 = vld [vmem:[#allocation3 + $0x90] sm:$0xf]
    %v1301 = vld [vmem:[#allocation3 + $0x94] sm:$0xf]
    %v1302 = vld [vmem:[#allocation3 + $0x98] sm:$0xf]
    %v1303 = vld [vmem:[#allocation3 + $0x9c] sm:$0xf]
    %v1304 = vld [vmem:[%s2] sm:$0xff]
    %v1305 = vld [vmem:[%s2 + $0x8] sm:$0xff]
    %v1306 = vld [vmem:[%s2 + $0x10] sm:$0xff]
    %v1307 = vld [vmem:[%s2 + $0x18] sm:$0xff]
    %v1308 = vld [vmem:[%s2 + $0x20] sm:$0xff]
    %v1309 = vld [vmem:[%s2 + $0x28] sm:$0xff]
    %v1310 = vld [vmem:[%s2 + $0x30] sm:$0xff]
    %v1311 = vld [vmem:[%s2 + $0x38] sm:$0xff]
    %1313 = vset.pattern.permute.xlu0 2
    %1314 = vperm.xlu0 %1313, %v1304
    %v1315 = vpop.permute.xlu0 %1314
    %1318 = vset.pattern.permute.xlu0 2
    %1319 = vperm.xlu0 %1318, %v1305
    %v1320 = vpop.permute.xlu0 %1319
    %1323 = vset.pattern.permute.xlu0 2
    %1324 = vperm.xlu0 %1323, %v1306
    %v1325 = vpop.permute.xlu0 %1324
    %1328 = vset.pattern.permute.xlu0 2
    %1329 = vperm.xlu0 %1328, %v1307
    %v1330 = vpop.permute.xlu0 %1329
    %1333 = vset.pattern.permute.xlu0 2
    %1334 = vperm.xlu0 %1333, %v1308
    %v1335 = vpop.permute.xlu0 %1334
    %1338 = vset.pattern.permute.xlu0 2
    %1339 = vperm.xlu0 %1338, %v1309
    %v1340 = vpop.permute.xlu0 %1339
    %1343 = vset.pattern.permute.xlu0 2
    %1344 = vperm.xlu0 %1343, %v1310
    %v1345 = vpop.permute.xlu0 %1344
    %1348 = vset.pattern.permute.xlu0 2
    %1349 = vperm.xlu0 %1348, %v1311
    %v1350 = vpop.permute.xlu0 %1349
    %v1368 = vunpack.c.l.b16 %v1248
    %v1369 = vunpack.c.h.b16 %v1248
    %v1370 = vunpack.c.l.b16 %v1249
    %v1371 = vunpack.c.l.b16 %v1250
    %v1372 = vunpack.c.h.b16 %v1250
    %v1373 = vunpack.c.l.b16 %v1251
    %v1374 = vunpack.c.l.b16 %v1252
    %v1375 = vunpack.c.h.b16 %v1252
    %v1376 = vunpack.c.l.b16 %v1253
    %v1377 = vunpack.c.l.b16 %v1254
    %v1378 = vunpack.c.h.b16 %v1254
    %v1379 = vunpack.c.l.b16 %v1255
    %v1380 = vunpack.c.l.b16 %v1256
    %v1381 = vunpack.c.h.b16 %v1256
    %v1382 = vunpack.c.l.b16 %v1257
    %v1383 = vunpack.c.l.b16 %v1258
    %v1384 = vunpack.c.h.b16 %v1258
    %v1385 = vunpack.c.l.b16 %v1259
    %v1386 = vunpack.c.l.b16 %v1260
    %v1387 = vunpack.c.h.b16 %v1260
    %v1388 = vunpack.c.l.b16 %v1261
    %v1389 = vunpack.c.l.b16 %v1262
    %v1390 = vunpack.c.h.b16 %v1262
    %v1391 = vunpack.c.l.b16 %v1263
    %v1392 = vpack.c.b16 %v1371, %v1368
    %v1393 = vpack.c.b16 %v1372, %v1369
    %v1394 = vpack.c.b16 %v1373, %v1370
    %v1395 = vpack.c.b16 %v1377, %v1374
    %v1396 = vpack.c.b16 %v1378, %v1375
    %v1397 = vpack.c.b16 %v1379, %v1376
    %v1398 = vpack.c.b16 %v1383, %v1380
    %v1399 = vpack.c.b16 %v1384, %v1381
    %v1400 = vpack.c.b16 %v1385, %v1382
    %v1401 = vpack.c.b16 %v1389, %v1386
    %v1402 = vpack.c.b16 %v1390, %v1387
    %v1403 = vpack.c.b16 %v1391, %v1388
    %v1452 = vunpack.c.l.b16 %v1264
    %v1453 = vunpack.c.l.b16 %v1265
    %v1454 = vunpack.c.l.b16 %v1266
    %v1455 = vunpack.c.l.b16 %v1267
    %v1456 = vunpack.c.l.b16 %v1268
    %v1457 = vunpack.c.l.b16 %v1269
    %v1458 = vunpack.c.l.b16 %v1270
    %v1459 = vunpack.c.l.b16 %v1271
    %v1460 = vunpack.c.l.b16 %v1272
    %v1461 = vunpack.c.l.b16 %v1273
    %v1462 = vunpack.c.l.b16 %v1274
    %v1463 = vunpack.c.l.b16 %v1275
    %v1464 = vunpack.c.l.b16 %v1276
    %v1465 = vunpack.c.l.b16 %v1277
    %v1466 = vunpack.c.l.b16 %v1278
    %v1467 = vunpack.c.l.b16 %v1279
    %v1468 = vunpack.c.l.b16 %v1280
    %v1469 = vunpack.c.l.b16 %v1281
    %v1470 = vunpack.c.l.b16 %v1282
    %v1471 = vunpack.c.l.b16 %v1283
    %v1472 = vunpack.c.l.b16 %v1284
    %v1473 = vunpack.c.l.b16 %v1285
    %v1474 = vunpack.c.l.b16 %v1286
    %v1475 = vunpack.c.l.b16 %v1287
    %v1476 = vunpack.c.l.b16 %v1288
    %v1477 = vunpack.c.l.b16 %v1289
    %v1478 = vunpack.c.l.b16 %v1290
    %v1479 = vunpack.c.l.b16 %v1291
    %v1480 = vunpack.c.l.b16 %v1292
    %v1481 = vunpack.c.l.b16 %v1293
    %v1482 = vunpack.c.l.b16 %v1294
    %v1483 = vunpack.c.l.b16 %v1295
    %v1484 = vunpack.c.l.b16 %v1296
    %v1485 = vunpack.c.l.b16 %v1297
    %v1486 = vunpack.c.l.b16 %v1298
    %v1487 = vunpack.c.l.b16 %v1299
    %v1488 = vunpack.c.l.b16 %v1300
    %v1489 = vunpack.c.l.b16 %v1301
    %v1490 = vunpack.c.l.b16 %v1302
    %v1491 = vunpack.c.l.b16 %v1303
    %v1492 = vpack.c.b16 %v1453, %v1452
    %v1493 = vpack.c.b16 %v1455, %v1454
    %v1494 = vpack.c.b16 %v1457, %v1456
    %v1495 = vpack.c.b16 %v1459, %v1458
    %v1496 = vpack.c.b16 %v1461, %v1460
    %v1497 = vpack.c.b16 %v1463, %v1462
    %v1498 = vpack.c.b16 %v1465, %v1464
    %v1499 = vpack.c.b16 %v1467, %v1466
    %v1500 = vpack.c.b16 %v1469, %v1468
    %v1501 = vpack.c.b16 %v1471, %v1470
    %v1502 = vpack.c.b16 %v1473, %v1472
    %v1503 = vpack.c.b16 %v1475, %v1474
    %v1504 = vpack.c.b16 %v1477, %v1476
    %v1505 = vpack.c.b16 %v1479, %v1478
    %v1506 = vpack.c.b16 %v1481, %v1480
    %v1507 = vpack.c.b16 %v1483, %v1482
    %v1508 = vpack.c.b16 %v1485, %v1484
    %v1509 = vpack.c.b16 %v1487, %v1486
    %v1510 = vpack.c.b16 %v1489, %v1488
    %v1511 = vpack.c.b16 %v1491, %v1490
    %vm1532 = vcmask 523264
    %v1534 = vsel %vm1532, %v1394, 0
    %v1537 = vsel %vm1532, %v1397, 0
    %v1540 = vsel %vm1532, %v1400, 0
    %v1543 = vsel %vm1532, %v1403, 0
    %1545 = vmatpush.bf16.msra.mxu0 %v1499
    %1546 = vmatpush.bf16.msra.mxu0 %v1498
    %1547 = vmatpush.bf16.msra.mxu0 %v1497
    %1548 = vmatpush.bf16.msra.mxu0 %v1496
    %1549 = vmatpush.bf16.msra.mxu0 %v1495
    %1550 = vmatpush.bf16.msra.mxu0 %v1494
    %1551 = vmatpush.bf16.msra.mxu0 %v1493
    %1552 = vmatpush.bf16.msra.mxu0 %v1492
    %1553 = vmatmul.bf16.gmra.mxu0 %v1392
    %v1554 = vpop.f32.mrf.mxu0
    %v1555 = vadd.f32 %v1315, %v1554
    %v1556 = vpop.f32.mrf.mxu0
    %v1557 = vadd.f32 %v1320, %v1556
    %1558 = vmatmul.bf16.gmra.mxu0 %v1395
    %v1559 = vpop.f32.mrf.mxu0
    %v1560 = vadd.f32 %v1325, %v1559
    %v1561 = vpop.f32.mrf.mxu0
    %v1562 = vadd.f32 %v1330, %v1561
    %1563 = vmatmul.bf16.gmra.mxu0 %v1398
    %v1564 = vpop.f32.mrf.mxu0
    %v1565 = vadd.f32 %v1335, %v1564
    %v1566 = vpop.f32.mrf.mxu0
    %v1567 = vadd.f32 %v1340, %v1566
    %1568 = vmatmul.bf16.gmra.mxu0 %v1401
    %v1569 = vpop.f32.mrf.mxu0
    %v1570 = vadd.f32 %v1345, %v1569
    %v1571 = vpop.f32.mrf.mxu0
    %v1572 = vadd.f32 %v1350, %v1571
    %1573 = vdwg.mxu0
    %1574 = vmatpush.bf16.msra.mxu0 %v1507
    %1575 = vmatpush.bf16.msra.mxu0 %v1506
    %1576 = vmatpush.bf16.msra.mxu0 %v1505
    %1577 = vmatpush.bf16.msra.mxu0 %v1504
    %1578 = vmatpush.bf16.msra.mxu0 %v1503
    %1579 = vmatpush.bf16.msra.mxu0 %v1502
    %1580 = vmatpush.bf16.msra.mxu0 %v1501
    %1581 = vmatpush.bf16.msra.mxu0 %v1500
    %1582 = vmatmul.bf16.gmra.mxu0 %v1393
    %v1583 = vpop.f32.mrf.mxu0
    %v1584 = vadd.f32 %v1555, %v1583
    %v1585 = vpop.f32.mrf.mxu0
    %v1586 = vadd.f32 %v1557, %v1585
    %1587 = vmatmul.bf16.gmra.mxu0 %v1396
    %v1588 = vpop.f32.mrf.mxu0
    %v1589 = vadd.f32 %v1560, %v1588
    %v1590 = vpop.f32.mrf.mxu0
    %v1591 = vadd.f32 %v1562, %v1590
    %1592 = vmatmul.bf16.gmra.mxu0 %v1399
    %v1593 = vpop.f32.mrf.mxu0
    %v1594 = vadd.f32 %v1565, %v1593
    %v1595 = vpop.f32.mrf.mxu0
    %v1596 = vadd.f32 %v1567, %v1595
    %1597 = vmatmul.bf16.gmra.mxu0 %v1402
    %v1598 = vpop.f32.mrf.mxu0
    %v1599 = vadd.f32 %v1570, %v1598
    %v1600 = vpop.f32.mrf.mxu0
    %v1601 = vadd.f32 %v1572, %v1600
    %1602 = vdwg.mxu0
    %1603 = vmatpush.bf16.msra.mxu0 0
    %1604 = vmatpush.bf16.msra.mxu0 0
    %1605 = vmatpush.bf16.msra.mxu0 0
    %1606 = vmatpush.bf16.msra.mxu0 0
    %1607 = vmatpush.bf16.msra.mxu0 %v1511
    %1608 = vmatpush.bf16.msra.mxu0 %v1510
    %1609 = vmatpush.bf16.msra.mxu0 %v1509
    %1610 = vmatpush.bf16.msra.mxu0 %v1508
    %1611 = vmatmul.bf16.gmra.mxu0 %v1534
    %v1612 = vpop.f32.mrf.mxu0
    %v1613 = vadd.f32 %v1584, %v1612
    %v1614 = vpop.f32.mrf.mxu0
    %v1615 = vadd.f32 %v1586, %v1614
    %1616 = vmatmul.bf16.gmra.mxu0 %v1537
    %v1617 = vpop.f32.mrf.mxu0
    %v1618 = vadd.f32 %v1589, %v1617
    %v1619 = vpop.f32.mrf.mxu0
    %v1620 = vadd.f32 %v1591, %v1619
    %1621 = vmatmul.bf16.gmra.mxu0 %v1540
    %v1622 = vpop.f32.mrf.mxu0
    %v1623 = vadd.f32 %v1594, %v1622
    %v1624 = vpop.f32.mrf.mxu0
    %v1625 = vadd.f32 %v1596, %v1624
    %1626 = vmatmul.bf16.gmra.mxu0 %v1543
    %v1627 = vpop.f32.mrf.mxu0
    %v1628 = vadd.f32 %v1599, %v1627
    %v1629 = vpop.f32.mrf.mxu0
    %v1630 = vadd.f32 %v1601, %v1629
    %1631 = vdwg.mxu0
    %v1632 = vmax.f32 %v1613, 0.0
    %v1633 = vmax.f32 %v1615, 0.0
    %v1634 = vmax.f32 %v1618, 0.0
    %v1635 = vmax.f32 %v1620, 0.0
    %v1636 = vmax.f32 %v1623, 0.0
    %v1637 = vmax.f32 %v1625, 0.0
    %v1638 = vmax.f32 %v1628, 0.0
    %v1639 = vmax.f32 %v1630, 0.0
    %1640 = vst [vmem:[#allocation2] sm:$0xff] %v1632
    %1641 = vst [vmem:[#allocation2 + $0x8] sm:$0xff] %v1633
    %1642 = vst [vmem:[#allocation2 + $0x10] sm:$0xff] %v1634
    %1643 = vst [vmem:[#allocation2 + $0x18] sm:$0xff] %v1635
    %1644 = vst [vmem:[#allocation2 + $0x20] sm:$0xff] %v1636
    %1645 = vst [vmem:[#allocation2 + $0x28] sm:$0xff] %v1637
    %1646 = vst [vmem:[#allocation2 + $0x30] sm:$0xff] %v1638
    %1647 = vst [vmem:[#allocation2 + $0x38] sm:$0xff] %v1639
    %vm1648 = vcmask 68608
    %1649 = vst.msk [vmem:[#allocation3] sm:$0xf] %vm1648, 0
    %1650 = vst.msk [vmem:[#allocation3 + $0x4] sm:$0xf] %vm1648, 0
    %1651 = vst.msk [vmem:[#allocation3 + $0x8] sm:$0xf] %vm1648, 0
    %1652 = vst.msk [vmem:[#allocation3 + $0xc] sm:$0xf] %vm1648, 0
    %1653 = vst.msk [vmem:[#allocation3 + $0x10] sm:$0xf] %vm1648, 0
    %1654 = vst.msk [vmem:[#allocation3 + $0x14] sm:$0xf] %vm1648, 0
    %1655 = vst.msk [vmem:[#allocation3 + $0x18] sm:$0xf] %vm1648, 0
    %1656 = vst.msk [vmem:[#allocation3 + $0x1c] sm:$0xf] %vm1648, 0
    %v1657 = vld [vmem:[#allocation2] sm:$0xff]
    %v1658 = vld [vmem:[#allocation2 + $0x8] sm:$0xff]
    %v1659 = vld [vmem:[#allocation2 + $0x10] sm:$0xff]
    %v1660 = vld [vmem:[#allocation2 + $0x18] sm:$0xff]
    %v1661 = vld [vmem:[#allocation2 + $0x20] sm:$0xff]
    %v1662 = vld [vmem:[#allocation2 + $0x28] sm:$0xff]
    %v1663 = vld [vmem:[#allocation2 + $0x30] sm:$0xff]
    %v1664 = vld [vmem:[#allocation2 + $0x38] sm:$0xff]
    %v1665 = vpack.c.bf16 %v1657, %v1657
    %v1666 = vpack.c.bf16 %v1658, %v1658
    %v1667 = vpack.c.bf16 %v1659, %v1659
    %v1668 = vpack.c.bf16 %v1660, %v1660
    %v1669 = vpack.c.bf16 %v1661, %v1661
    %v1670 = vpack.c.bf16 %v1662, %v1662
    %v1671 = vpack.c.bf16 %v1663, %v1663
    %v1672 = vpack.c.bf16 %v1664, %v1664
    %1681 = vrot.lane.b32.xlu0 %v1665, 9
    %v1682 = vpop.permute.xlu0 %1681
    %1683 = vrot.lane.b32.xlu0 %v1666, 9
    %v1684 = vpop.permute.xlu0 %1683
    %1685 = vrot.lane.b32.xlu0 %v1667, 9
    %v1686 = vpop.permute.xlu0 %1685
    %1687 = vrot.lane.b32.xlu0 %v1668, 9
    %v1688 = vpop.permute.xlu0 %1687
    %1689 = vrot.lane.b32.xlu0 %v1669, 9
    %v1690 = vpop.permute.xlu0 %1689
    %1691 = vrot.lane.b32.xlu0 %v1670, 9
    %v1692 = vpop.permute.xlu0 %1691
    %1693 = vrot.lane.b32.xlu0 %v1671, 9
    %v1694 = vpop.permute.xlu0 %1693
    %1695 = vrot.lane.b32.xlu0 %v1672, 9
    %v1696 = vpop.permute.xlu0 %1695
    %vm1705 = vcmask 371784
    %1706 = vst.msk [vmem:[#allocation3] sm:$0xf] %vm1705, %v1682
    %1707 = vst.msk [vmem:[#allocation3 + $0x4] sm:$0xf] %vm1705, %v1684
    %1708 = vst.msk [vmem:[#allocation3 + $0x8] sm:$0xf] %vm1705, %v1686
    %1709 = vst.msk [vmem:[#allocation3 + $0xc] sm:$0xf] %vm1705, %v1688
    %1710 = vst.msk [vmem:[#allocation3 + $0x10] sm:$0xf] %vm1705, %v1690
    %1711 = vst.msk [vmem:[#allocation3 + $0x14] sm:$0xf] %vm1705, %v1692
    %1712 = vst.msk [vmem:[#allocation3 + $0x18] sm:$0xf] %vm1705, %v1694
    %1713 = vst.msk [vmem:[#allocation3 + $0x1c] sm:$0xf] %vm1705, %v1696
    %vm1714 = vcmask 445808
    %1715 = vst.msk [vmem:[#allocation3] sm:$0xf] %vm1714, 0
    %1716 = vst.msk [vmem:[#allocation3 + $0x4] sm:$0xf] %vm1714, 0
    %1717 = vst.msk [vmem:[#allocation3 + $0x8] sm:$0xf] %vm1714, 0
    %1718 = vst.msk [vmem:[#allocation3 + $0xc] sm:$0xf] %vm1714, 0
    %1719 = vst.msk [vmem:[#allocation3 + $0x10] sm:$0xf] %vm1714, 0
    %1720 = vst.msk [vmem:[#allocation3 + $0x14] sm:$0xf] %vm1714, 0
    %1721 = vst.msk [vmem:[#allocation3 + $0x18] sm:$0xf] %vm1714, 0
    %1722 = vst.msk [vmem:[#allocation3 + $0x1c] sm:$0xf] %vm1714, 0
    %v1723 = vld [vmem:[#allocation2] sm:$0xff]
    %v1724 = vld [vmem:[#allocation2 + $0x8] sm:$0xff]
    %v1725 = vld [vmem:[#allocation2 + $0x10] sm:$0xff]
    %v1726 = vld [vmem:[#allocation2 + $0x18] sm:$0xff]
    %v1727 = vld [vmem:[#allocation2 + $0x20] sm:$0xff]
    %v1728 = vld [vmem:[#allocation2 + $0x28] sm:$0xff]
    %v1729 = vld [vmem:[#allocation2 + $0x30] sm:$0xff]
    %v1730 = vld [vmem:[#allocation2 + $0x38] sm:$0xff]
    %v1731 = vpack.c.bf16 %v1723, %v1723
    %v1732 = vpack.c.bf16 %v1724, %v1724
    %v1733 = vpack.c.bf16 %v1725, %v1725
    %v1734 = vpack.c.bf16 %v1726, %v1726
    %v1735 = vpack.c.bf16 %v1727, %v1727
    %v1736 = vpack.c.bf16 %v1728, %v1728
    %v1737 = vpack.c.bf16 %v1729, %v1729
    %v1738 = vpack.c.bf16 %v1730, %v1730
    %1747 = vrot.lane.b32.xlu0 %v1731, 18
    %v1748 = vpop.permute.xlu0 %1747
    %1749 = vrot.lane.b32.xlu0 %v1732, 18
    %v1750 = vpop.permute.xlu0 %1749
    %1751 = vrot.lane.b32.xlu0 %v1733, 18
    %v1752 = vpop.permute.xlu0 %1751
    %1753 = vrot.lane.b32.xlu0 %v1734, 18
    %v1754 = vpop.permute.xlu0 %1753
    %1755 = vrot.lane.b32.xlu0 %v1735, 18
    %v1756 = vpop.permute.xlu0 %1755
    %1757 = vrot.lane.b32.xlu0 %v1736, 18
    %v1758 = vpop.permute.xlu0 %1757
    %1759 = vrot.lane.b32.xlu0 %v1737, 18
    %v1760 = vpop.permute.xlu0 %1759
    %1761 = vrot.lane.b32.xlu0 %v1738, 18
    %v1762 = vpop.permute.xlu0 %1761
    %vm1771 = vcmask 748984
    %1772 = vst.msk [vmem:[#allocation3] sm:$0xf] %vm1771, %v1748
    %1773 = vst.msk [vmem:[#allocation3 + $0x4] sm:$0xf] %vm1771, %v1750
    %1774 = vst.msk [vmem:[#allocation3 + $0x8] sm:$0xf] %vm1771, %v1752
    %1775 = vst.msk [vmem:[#allocation3 + $0xc] sm:$0xf] %vm1771, %v1754
    %1776 = vst.msk [vmem:[#allocation3 + $0x10] sm:$0xf] %vm1771, %v1756
    %1777 = vst.msk [vmem:[#allocation3 + $0x14] sm:$0xf] %vm1771, %v1758
    %1778 = vst.msk [vmem:[#allocation3 + $0x18] sm:$0xf] %vm1771, %v1760
    %1779 = vst.msk [vmem:[#allocation3 + $0x1c] sm:$0xf] %vm1771, %v1762
    %vm1780 = vcmask 60416
    %1781 = vst.msk [vmem:[#allocation3 + $0x20] sm:$0xf] %vm1780, 0
    %1782 = vst.msk [vmem:[#allocation3 + $0x24] sm:$0xf] %vm1780, 0
    %1783 = vst.msk [vmem:[#allocation3 + $0x28] sm:$0xf] %vm1780, 0
    %1784 = vst.msk [vmem:[#allocation3 + $0x2c] sm:$0xf] %vm1780, 0
    %1785 = vst.msk [vmem:[#allocation3 + $0x30] sm:$0xf] %vm1780, 0
    %1786 = vst.msk [vmem:[#allocation3 + $0x34] sm:$0xf] %vm1780, 0
    %1787 = vst.msk [vmem:[#allocation3 + $0x38] sm:$0xf] %vm1780, 0
    %1788 = vst.msk [vmem:[#allocation3 + $0x3c] sm:$0xf] %vm1780, 0
    %vm1789 = vcmask 372072
    %1790 = vst.msk [vmem:[#allocation3 + $0x20] sm:$0xf] %vm1789, 0
    %1791 = vst.msk [vmem:[#allocation3 + $0x24] sm:$0xf] %vm1789, 0
    %1792 = vst.msk [vmem:[#allocation3 + $0x28] sm:$0xf] %vm1789, 0
    %1793 = vst.msk [vmem:[#allocation3 + $0x2c] sm:$0xf] %vm1789, 0
    %1794 = vst.msk [vmem:[#allocation3 + $0x30] sm:$0xf] %vm1789, 0
    %1795 = vst.msk [vmem:[#allocation3 + $0x34] sm:$0xf] %vm1789, 0
    %1796 = vst.msk [vmem:[#allocation3 + $0x38] sm:$0xf] %vm1789, 0
    %1797 = vst.msk [vmem:[#allocation3 + $0x3c] sm:$0xf] %vm1789, 0
    %v1798 = vld [vmem:[#allocation2] sm:$0xff]
    %v1799 = vld [vmem:[#allocation2 + $0x8] sm:$0xff]
    %v1800 = vld [vmem:[#allocation2 + $0x10] sm:$0xff]
    %v1801 = vld [vmem:[#allocation2 + $0x18] sm:$0xff]
    %v1802 = vld [vmem:[#allocation2 + $0x20] sm:$0xff]
    %v1803 = vld [vmem:[#allocation2 + $0x28] sm:$0xff]
    %v1804 = vld [vmem:[#allocation2 + $0x30] sm:$0xff]
    %v1805 = vld [vmem:[#allocation2 + $0x38] sm:$0xff]
    %v1806 = vpack.c.bf16 %v1798, %v1798
    %v1807 = vpack.c.bf16 %v1799, %v1799
    %v1808 = vpack.c.bf16 %v1800, %v1800
    %v1809 = vpack.c.bf16 %v1801, %v1801
    %v1810 = vpack.c.bf16 %v1802, %v1802
    %v1811 = vpack.c.bf16 %v1803, %v1803
    %v1812 = vpack.c.bf16 %v1804, %v1804
    %v1813 = vpack.c.bf16 %v1805, %v1805
    %1822 = vrot.lane.b32.xlu0 %v1806, 8
    %v1823 = vpop.permute.xlu0 %1822
    %1824 = vrot.lane.b32.xlu0 %v1807, 8
    %v1825 = vpop.permute.xlu0 %1824
    %1826 = vrot.lane.b32.xlu0 %v1808, 8
    %v1827 = vpop.permute.xlu0 %1826
    %1828 = vrot.lane.b32.xlu0 %v1809, 8
    %v1829 = vpop.permute.xlu0 %1828
    %1830 = vrot.lane.b32.xlu0 %v1810, 8
    %v1831 = vpop.permute.xlu0 %1830
    %1832 = vrot.lane.b32.xlu0 %v1811, 8
    %v1833 = vpop.permute.xlu0 %1832
    %1834 = vrot.lane.b32.xlu0 %v1812, 8
    %v1835 = vpop.permute.xlu0 %1834
    %1836 = vrot.lane.b32.xlu0 %v1813, 8
    %v1837 = vpop.permute.xlu0 %1836
    %vm1846 = vcmask 363584
    %1847 = vst.msk [vmem:[#allocation3 + $0x20] sm:$0xf] %vm1846, %v1823
    %1848 = vst.msk [vmem:[#allocation3 + $0x24] sm:$0xf] %vm1846, %v1825
    %1849 = vst.msk [vmem:[#allocation3 + $0x28] sm:$0xf] %vm1846, %v1827
    %1850 = vst.msk [vmem:[#allocation3 + $0x2c] sm:$0xf] %vm1846, %v1829
    %1851 = vst.msk [vmem:[#allocation3 + $0x30] sm:$0xf] %vm1846, %v1831
    %1852 = vst.msk [vmem:[#allocation3 + $0x34] sm:$0xf] %vm1846, %v1833
    %1853 = vst.msk [vmem:[#allocation3 + $0x38] sm:$0xf] %vm1846, %v1835
    %1854 = vst.msk [vmem:[#allocation3 + $0x3c] sm:$0xf] %vm1846, %v1837
    %vm1855 = vcmask 437616
    %1856 = vst.msk [vmem:[#allocation3 + $0x20] sm:$0xf] %vm1855, 0
    %1857 = vst.msk [vmem:[#allocation3 + $0x24] sm:$0xf] %vm1855, 0
    %1858 = vst.msk [vmem:[#allocation3 + $0x28] sm:$0xf] %vm1855, 0
    %1859 = vst.msk [vmem:[#allocation3 + $0x2c] sm:$0xf] %vm1855, 0
    %1860 = vst.msk [vmem:[#allocation3 + $0x30] sm:$0xf] %vm1855, 0
    %1861 = vst.msk [vmem:[#allocation3 + $0x34] sm:$0xf] %vm1855, 0
    %1862 = vst.msk [vmem:[#allocation3 + $0x38] sm:$0xf] %vm1855, 0
    %1863 = vst.msk [vmem:[#allocation3 + $0x3c] sm:$0xf] %vm1855, 0
    %vm1864 = vcmask 749272
    %1865 = vst.msk [vmem:[#allocation3 + $0x20] sm:$0xf] %vm1864, 0
    %1866 = vst.msk [vmem:[#allocation3 + $0x24] sm:$0xf] %vm1864, 0
    %1867 = vst.msk [vmem:[#allocation3 + $0x28] sm:$0xf] %vm1864, 0
    %1868 = vst.msk [vmem:[#allocation3 + $0x2c] sm:$0xf] %vm1864, 0
    %1869 = vst.msk [vmem:[#allocation3 + $0x30] sm:$0xf] %vm1864, 0
    %1870 = vst.msk [vmem:[#allocation3 + $0x34] sm:$0xf] %vm1864, 0
    %1871 = vst.msk [vmem:[#allocation3 + $0x38] sm:$0xf] %vm1864, 0
    %1872 = vst.msk [vmem:[#allocation3 + $0x3c] sm:$0xf] %vm1864, 0
    %v1873 = vld [vmem:[#allocation2] sm:$0xff]
    %v1874 = vld [vmem:[#allocation2 + $0x8] sm:$0xff]
    %v1875 = vld [vmem:[#allocation2 + $0x10] sm:$0xff]
    %v1876 = vld [vmem:[#allocation2 + $0x18] sm:$0xff]
    %v1877 = vld [vmem:[#allocation2 + $0x20] sm:$0xff]
    %v1878 = vld [vmem:[#allocation2 + $0x28] sm:$0xff]
    %v1879 = vld [vmem:[#allocation2 + $0x30] sm:$0xff]
    %v1880 = vld [vmem:[#allocation2 + $0x38] sm:$0xff]
    %v1881 = vpack.c.bf16 %v1873, %v1873
    %v1882 = vpack.c.bf16 %v1874, %v1874
    %v1883 = vpack.c.bf16 %v1875, %v1875
    %v1884 = vpack.c.bf16 %v1876, %v1876
    %v1885 = vpack.c.bf16 %v1877, %v1877
    %v1886 = vpack.c.bf16 %v1878, %v1878
    %v1887 = vpack.c.bf16 %v1879, %v1879
    %v1888 = vpack.c.bf16 %v1880, %v1880
    %1897 = vrot.lane.b32.xlu0 %v1881, 17
    %v1898 = vpop.permute.xlu0 %1897
    %1899 = vrot.lane.b32.xlu0 %v1882, 17
    %v1900 = vpop.permute.xlu0 %1899
    %1901 = vrot.lane.b32.xlu0 %v1883, 17
    %v1902 = vpop.permute.xlu0 %1901
    %1903 = vrot.lane.b32.xlu0 %v1884, 17
    %v1904 = vpop.permute.xlu0 %1903
    %1905 = vrot.lane.b32.xlu0 %v1885, 17
    %v1906 = vpop.permute.xlu0 %1905
    %1907 = vrot.lane.b32.xlu0 %v1886, 17
    %v1908 = vpop.permute.xlu0 %1907
    %1909 = vrot.lane.b32.xlu0 %v1887, 17
    %v1910 = vpop.permute.xlu0 %1909
    %1911 = vrot.lane.b32.xlu0 %v1888, 17
    %v1912 = vpop.permute.xlu0 %1911
    %vm1921 = vcmask 740784
    %1922 = vst.msk [vmem:[#allocation3 + $0x20] sm:$0xf] %vm1921, %v1898
    %1923 = vst.msk [vmem:[#allocation3 + $0x24] sm:$0xf] %vm1921, %v1900
    %1924 = vst.msk [vmem:[#allocation3 + $0x28] sm:$0xf] %vm1921, %v1902
    %1925 = vst.msk [vmem:[#allocation3 + $0x2c] sm:$0xf] %vm1921, %v1904
    %1926 = vst.msk [vmem:[#allocation3 + $0x30] sm:$0xf] %vm1921, %v1906
    %1927 = vst.msk [vmem:[#allocation3 + $0x34] sm:$0xf] %vm1921, %v1908
    %1928 = vst.msk [vmem:[#allocation3 + $0x38] sm:$0xf] %vm1921, %v1910
    %1929 = vst.msk [vmem:[#allocation3 + $0x3c] sm:$0xf] %vm1921, %v1912
    %vm1930 = vcmask 52224
    %1931 = vst.msk [vmem:[#allocation3 + $0x40] sm:$0xf] %vm1930, 0
    %1932 = vst.msk [vmem:[#allocation3 + $0x44] sm:$0xf] %vm1930, 0
    %1933 = vst.msk [vmem:[#allocation3 + $0x48] sm:$0xf] %vm1930, 0
    %1934 = vst.msk [vmem:[#allocation3 + $0x4c] sm:$0xf] %vm1930, 0
    %1935 = vst.msk [vmem:[#allocation3 + $0x50] sm:$0xf] %vm1930, 0
    %1936 = vst.msk [vmem:[#allocation3 + $0x54] sm:$0xf] %vm1930, 0
    %1937 = vst.msk [vmem:[#allocation3 + $0x58] sm:$0xf] %vm1930, 0
    %1938 = vst.msk [vmem:[#allocation3 + $0x5c] sm:$0xf] %vm1930, 0
    %vm1939 = vcmask 372064
    %1940 = vst.msk [vmem:[#allocation3 + $0x40] sm:$0xf] %vm1939, 0
    %1941 = vst.msk [vmem:[#allocation3 + $0x44] sm:$0xf] %vm1939, 0
    %1942 = vst.msk [vmem:[#allocation3 + $0x48] sm:$0xf] %vm1939, 0
    %1943 = vst.msk [vmem:[#allocation3 + $0x4c] sm:$0xf] %vm1939, 0
    %1944 = vst.msk [vmem:[#allocation3 + $0x50] sm:$0xf] %vm1939, 0
    %1945 = vst.msk [vmem:[#allocation3 + $0x54] sm:$0xf] %vm1939, 0
    %1946 = vst.msk [vmem:[#allocation3 + $0x58] sm:$0xf] %vm1939, 0
    %1947 = vst.msk [vmem:[#allocation3 + $0x5c] sm:$0xf] %vm1939, 0
    %v1948 = vld [vmem:[#allocation2] sm:$0xff]
    %v1949 = vld [vmem:[#allocation2 + $0x8] sm:$0xff]
    %v1950 = vld [vmem:[#allocation2 + $0x10] sm:$0xff]
    %v1951 = vld [vmem:[#allocation2 + $0x18] sm:$0xff]
    %v1952 = vld [vmem:[#allocation2 + $0x20] sm:$0xff]
    %v1953 = vld [vmem:[#allocation2 + $0x28] sm:$0xff]
    %v1954 = vld [vmem:[#allocation2 + $0x30] sm:$0xff]
    %v1955 = vld [vmem:[#allocation2 + $0x38] sm:$0xff]
    %v1956 = vpack.c.bf16 %v1948, %v1948
    %v1957 = vpack.c.bf16 %v1949, %v1949
    %v1958 = vpack.c.bf16 %v1950, %v1950
    %v1959 = vpack.c.bf16 %v1951, %v1951
    %v1960 = vpack.c.bf16 %v1952, %v1952
    %v1961 = vpack.c.bf16 %v1953, %v1953
    %v1962 = vpack.c.bf16 %v1954, %v1954
    %v1963 = vpack.c.bf16 %v1955, %v1955
    %1972 = vrot.lane.b32.xlu0 %v1956, 7
    %v1973 = vpop.permute.xlu0 %1972
    %1974 = vrot.lane.b32.xlu0 %v1957, 7
    %v1975 = vpop.permute.xlu0 %1974
    %1976 = vrot.lane.b32.xlu0 %v1958, 7
    %v1977 = vpop.permute.xlu0 %1976
    %1978 = vrot.lane.b32.xlu0 %v1959, 7
    %v1979 = vpop.permute.xlu0 %1978
    %1980 = vrot.lane.b32.xlu0 %v1960, 7
    %v1981 = vpop.permute.xlu0 %1980
    %1982 = vrot.lane.b32.xlu0 %v1961, 7
    %v1983 = vpop.permute.xlu0 %1982
    %1984 = vrot.lane.b32.xlu0 %v1962, 7
    %v1985 = vpop.permute.xlu0 %1984
    %1986 = vrot.lane.b32.xlu0 %v1963, 7
    %v1987 = vpop.permute.xlu0 %1986
    %vm1996 = vcmask 355384
    %1997 = vst.msk [vmem:[#allocation3 + $0x40] sm:$0xf] %vm1996, %v1973
    %1998 = vst.msk [vmem:[#allocation3 + $0x44] sm:$0xf] %vm1996, %v1975
    %1999 = vst.msk [vmem:[#allocation3 + $0x48] sm:$0xf] %vm1996, %v1977
    %2000 = vst.msk [vmem:[#allocation3 + $0x4c] sm:$0xf] %vm1996, %v1979
    %2001 = vst.msk [vmem:[#allocation3 + $0x50] sm:$0xf] %vm1996, %v1981
    %2002 = vst.msk [vmem:[#allocation3 + $0x54] sm:$0xf] %vm1996, %v1983
    %2003 = vst.msk [vmem:[#allocation3 + $0x58] sm:$0xf] %vm1996, %v1985
    %2004 = vst.msk [vmem:[#allocation3 + $0x5c] sm:$0xf] %vm1996, %v1987
    %vm2005 = vcmask 429424
    %2006 = vst.msk [vmem:[#allocation3 + $0x40] sm:$0xf] %vm2005, 0
    %2007 = vst.msk [vmem:[#allocation3 + $0x44] sm:$0xf] %vm2005, 0
    %2008 = vst.msk [vmem:[#allocation3 + $0x48] sm:$0xf] %vm2005, 0
    %2009 = vst.msk [vmem:[#allocation3 + $0x4c] sm:$0xf] %vm2005, 0
    %2010 = vst.msk [vmem:[#allocation3 + $0x50] sm:$0xf] %vm2005, 0
    %2011 = vst.msk [vmem:[#allocation3 + $0x54] sm:$0xf] %vm2005, 0
    %2012 = vst.msk [vmem:[#allocation3 + $0x58] sm:$0xf] %vm2005, 0
    %2013 = vst.msk [vmem:[#allocation3 + $0x5c] sm:$0xf] %vm2005, 0
    %vm2014 = vcmask 749264
    %2015 = vst.msk [vmem:[#allocation3 + $0x40] sm:$0xf] %vm2014, 0
    %2016 = vst.msk [vmem:[#allocation3 + $0x44] sm:$0xf] %vm2014, 0
    %2017 = vst.msk [vmem:[#allocation3 + $0x48] sm:$0xf] %vm2014, 0
    %2018 = vst.msk [vmem:[#allocation3 + $0x4c] sm:$0xf] %vm2014, 0
    %2019 = vst.msk [vmem:[#allocation3 + $0x50] sm:$0xf] %vm2014, 0
    %2020 = vst.msk [vmem:[#allocation3 + $0x54] sm:$0xf] %vm2014, 0
    %2021 = vst.msk [vmem:[#allocation3 + $0x58] sm:$0xf] %vm2014, 0
    %2022 = vst.msk [vmem:[#allocation3 + $0x5c] sm:$0xf] %vm2014, 0
    %v2023 = vld [vmem:[#allocation2] sm:$0xff]
    %v2024 = vld [vmem:[#allocation2 + $0x8] sm:$0xff]
    %v2025 = vld [vmem:[#allocation2 + $0x10] sm:$0xff]
    %v2026 = vld [vmem:[#allocation2 + $0x18] sm:$0xff]
    %v2027 = vld [vmem:[#allocation2 + $0x20] sm:$0xff]
    %v2028 = vld [vmem:[#allocation2 + $0x28] sm:$0xff]
    %v2029 = vld [vmem:[#allocation2 + $0x30] sm:$0xff]
    %v2030 = vld [vmem:[#allocation2 + $0x38] sm:$0xff]
    %v2031 = vpack.c.bf16 %v2023, %v2023
    %v2032 = vpack.c.bf16 %v2024, %v2024
    %v2033 = vpack.c.bf16 %v2025, %v2025
    %v2034 = vpack.c.bf16 %v2026, %v2026
    %v2035 = vpack.c.bf16 %v2027, %v2027
    %v2036 = vpack.c.bf16 %v2028, %v2028
    %v2037 = vpack.c.bf16 %v2029, %v2029
    %v2038 = vpack.c.bf16 %v2030, %v2030
    %2047 = vrot.lane.b32.xlu0 %v2031, 16
    %v2048 = vpop.permute.xlu0 %2047
    %2049 = vrot.lane.b32.xlu0 %v2032, 16
    %v2050 = vpop.permute.xlu0 %2049
    %2051 = vrot.lane.b32.xlu0 %v2033, 16
    %v2052 = vpop.permute.xlu0 %2051
    %2053 = vrot.lane.b32.xlu0 %v2034, 16
    %v2054 = vpop.permute.xlu0 %2053
    %2055 = vrot.lane.b32.xlu0 %v2035, 16
    %v2056 = vpop.permute.xlu0 %2055
    %2057 = vrot.lane.b32.xlu0 %v2036, 16
    %v2058 = vpop.permute.xlu0 %2057
    %2059 = vrot.lane.b32.xlu0 %v2037, 16
    %v2060 = vpop.permute.xlu0 %2059
    %2061 = vrot.lane.b32.xlu0 %v2038, 16
    %v2062 = vpop.permute.xlu0 %2061
    %vm2071 = vcmask 732584
    %2072 = vst.msk [vmem:[#allocation3 + $0x40] sm:$0xf] %vm2071, %v2048
    %2073 = vst.msk [vmem:[#allocation3 + $0x44] sm:$0xf] %vm2071, %v2050
    %2074 = vst.msk [vmem:[#allocation3 + $0x48] sm:$0xf] %vm2071, %v2052
    %2075 = vst.msk [vmem:[#allocation3 + $0x4c] sm:$0xf] %vm2071, %v2054
    %2076 = vst.msk [vmem:[#allocation3 + $0x50] sm:$0xf] %vm2071, %v2056
    %2077 = vst.msk [vmem:[#allocation3 + $0x54] sm:$0xf] %vm2071, %v2058
    %2078 = vst.msk [vmem:[#allocation3 + $0x58] sm:$0xf] %vm2071, %v2060
    %2079 = vst.msk [vmem:[#allocation3 + $0x5c] sm:$0xf] %vm2071, %v2062
    %vm2080 = vcmask 44032
    %2081 = vst.msk [vmem:[#allocation3 + $0x60] sm:$0xf] %vm2080, 0
    %2082 = vst.msk [vmem:[#allocation3 + $0x64] sm:$0xf] %vm2080, 0
    %2083 = vst.msk [vmem:[#allocation3 + $0x68] sm:$0xf] %vm2080, 0
    %2084 = vst.msk [vmem:[#allocation3 + $0x6c] sm:$0xf] %vm2080, 0
    %2085 = vst.msk [vmem:[#allocation3 + $0x70] sm:$0xf] %vm2080, 0
    %2086 = vst.msk [vmem:[#allocation3 + $0x74] sm:$0xf] %vm2080, 0
    %2087 = vst.msk [vmem:[#allocation3 + $0x78] sm:$0xf] %vm2080, 0
    %2088 = vst.msk [vmem:[#allocation3 + $0x7c] sm:$0xf] %vm2080, 0
    %vm2089 = vcmask 372056
    %2090 = vst.msk [vmem:[#allocation3 + $0x60] sm:$0xf] %vm2089, 0
    %2091 = vst.msk [vmem:[#allocation3 + $0x64] sm:$0xf] %vm2089, 0
    %2092 = vst.msk [vmem:[#allocation3 + $0x68] sm:$0xf] %vm2089, 0
    %2093 = vst.msk [vmem:[#allocation3 + $0x6c] sm:$0xf] %vm2089, 0
    %2094 = vst.msk [vmem:[#allocation3 + $0x70] sm:$0xf] %vm2089, 0
    %2095 = vst.msk [vmem:[#allocation3 + $0x74] sm:$0xf] %vm2089, 0
    %2096 = vst.msk [vmem:[#allocation3 + $0x78] sm:$0xf] %vm2089, 0
    %2097 = vst.msk [vmem:[#allocation3 + $0x7c] sm:$0xf] %vm2089, 0
    %v2098 = vld [vmem:[#allocation2] sm:$0xff]
    %v2099 = vld [vmem:[#allocation2 + $0x8] sm:$0xff]
    %v2100 = vld [vmem:[#allocation2 + $0x10] sm:$0xff]
    %v2101 = vld [vmem:[#allocation2 + $0x18] sm:$0xff]
    %v2102 = vld [vmem:[#allocation2 + $0x20] sm:$0xff]
    %v2103 = vld [vmem:[#allocation2 + $0x28] sm:$0xff]
    %v2104 = vld [vmem:[#allocation2 + $0x30] sm:$0xff]
    %v2105 = vld [vmem:[#allocation2 + $0x38] sm:$0xff]
    %v2106 = vpack.c.bf16 %v2098, %v2098
    %v2107 = vpack.c.bf16 %v2099, %v2099
    %v2108 = vpack.c.bf16 %v2100, %v2100
    %v2109 = vpack.c.bf16 %v2101, %v2101
    %v2110 = vpack.c.bf16 %v2102, %v2102
    %v2111 = vpack.c.bf16 %v2103, %v2103
    %v2112 = vpack.c.bf16 %v2104, %v2104
    %v2113 = vpack.c.bf16 %v2105, %v2105
    %2122 = vrot.lane.b32.xlu0 %v2106, 6
    %v2123 = vpop.permute.xlu0 %2122
    %2124 = vrot.lane.b32.xlu0 %v2107, 6
    %v2125 = vpop.permute.xlu0 %2124
    %2126 = vrot.lane.b32.xlu0 %v2108, 6
    %v2127 = vpop.permute.xlu0 %2126
    %2128 = vrot.lane.b32.xlu0 %v2109, 6
    %v2129 = vpop.permute.xlu0 %2128
    %2130 = vrot.lane.b32.xlu0 %v2110, 6
    %v2131 = vpop.permute.xlu0 %2130
    %2132 = vrot.lane.b32.xlu0 %v2111, 6
    %v2133 = vpop.permute.xlu0 %2132
    %2134 = vrot.lane.b32.xlu0 %v2112, 6
    %v2135 = vpop.permute.xlu0 %2134
    %2136 = vrot.lane.b32.xlu0 %v2113, 6
    %v2137 = vpop.permute.xlu0 %2136
    %vm2146 = vcmask 347184
    %2147 = vst.msk [vmem:[#allocation3 + $0x60] sm:$0xf] %vm2146, %v2123
    %2148 = vst.msk [vmem:[#allocation3 + $0x64] sm:$0xf] %vm2146, %v2125
    %2149 = vst.msk [vmem:[#allocation3 + $0x68] sm:$0xf] %vm2146, %v2127
    %2150 = vst.msk [vmem:[#allocation3 + $0x6c] sm:$0xf] %vm2146, %v2129
    %2151 = vst.msk [vmem:[#allocation3 + $0x70] sm:$0xf] %vm2146, %v2131
    %2152 = vst.msk [vmem:[#allocation3 + $0x74] sm:$0xf] %vm2146, %v2133
    %2153 = vst.msk [vmem:[#allocation3 + $0x78] sm:$0xf] %vm2146, %v2135
    %2154 = vst.msk [vmem:[#allocation3 + $0x7c] sm:$0xf] %vm2146, %v2137
    %vm2155 = vcmask 421232
    %2156 = vst.msk [vmem:[#allocation3 + $0x60] sm:$0xf] %vm2155, 0
    %2157 = vst.msk [vmem:[#allocation3 + $0x64] sm:$0xf] %vm2155, 0
    %2158 = vst.msk [vmem:[#allocation3 + $0x68] sm:$0xf] %vm2155, 0
    %2159 = vst.msk [vmem:[#allocation3 + $0x6c] sm:$0xf] %vm2155, 0
    %2160 = vst.msk [vmem:[#allocation3 + $0x70] sm:$0xf] %vm2155, 0
    %2161 = vst.msk [vmem:[#allocation3 + $0x74] sm:$0xf] %vm2155, 0
    %2162 = vst.msk [vmem:[#allocation3 + $0x78] sm:$0xf] %vm2155, 0
    %2163 = vst.msk [vmem:[#allocation3 + $0x7c] sm:$0xf] %vm2155, 0
    %vm2164 = vcmask 749256
    %2165 = vst.msk [vmem:[#allocation3 + $0x60] sm:$0xf] %vm2164, 0
    %2166 = vst.msk [vmem:[#allocation3 + $0x64] sm:$0xf] %vm2164, 0
    %2167 = vst.msk [vmem:[#allocation3 + $0x68] sm:$0xf] %vm2164, 0
    %2168 = vst.msk [vmem:[#allocation3 + $0x6c] sm:$0xf] %vm2164, 0
    %2169 = vst.msk [vmem:[#allocation3 + $0x70] sm:$0xf] %vm2164, 0
    %2170 = vst.msk [vmem:[#allocation3 + $0x74] sm:$0xf] %vm2164, 0
    %2171 = vst.msk [vmem:[#allocation3 + $0x78] sm:$0xf] %vm2164, 0
    %2172 = vst.msk [vmem:[#allocation3 + $0x7c] sm:$0xf] %vm2164, 0
    %v2173 = vld [vmem:[#allocation2] sm:$0xff]
    %v2174 = vld [vmem:[#allocation2 + $0x8] sm:$0xff]
    %v2175 = vld [vmem:[#allocation2 + $0x10] sm:$0xff]
    %v2176 = vld [vmem:[#allocation2 + $0x18] sm:$0xff]
    %v2177 = vld [vmem:[#allocation2 + $0x20] sm:$0xff]
    %v2178 = vld [vmem:[#allocation2 + $0x28] sm:$0xff]
    %v2179 = vld [vmem:[#allocation2 + $0x30] sm:$0xff]
    %v2180 = vld [vmem:[#allocation2 + $0x38] sm:$0xff]
    %v2181 = vpack.c.bf16 %v2173, %v2173
    %v2182 = vpack.c.bf16 %v2174, %v2174
    %v2183 = vpack.c.bf16 %v2175, %v2175
    %v2184 = vpack.c.bf16 %v2176, %v2176
    %v2185 = vpack.c.bf16 %v2177, %v2177
    %v2186 = vpack.c.bf16 %v2178, %v2178
    %v2187 = vpack.c.bf16 %v2179, %v2179
    %v2188 = vpack.c.bf16 %v2180, %v2180
    %2197 = vrot.lane.b32.xlu0 %v2181, 15
    %v2198 = vpop.permute.xlu0 %2197
    %2199 = vrot.lane.b32.xlu0 %v2182, 15
    %v2200 = vpop.permute.xlu0 %2199
    %2201 = vrot.lane.b32.xlu0 %v2183, 15
    %v2202 = vpop.permute.xlu0 %2201
    %2203 = vrot.lane.b32.xlu0 %v2184, 15
    %v2204 = vpop.permute.xlu0 %2203
    %2205 = vrot.lane.b32.xlu0 %v2185, 15
    %v2206 = vpop.permute.xlu0 %2205
    %2207 = vrot.lane.b32.xlu0 %v2186, 15
    %v2208 = vpop.permute.xlu0 %2207
    %2209 = vrot.lane.b32.xlu0 %v2187, 15
    %v2210 = vpop.permute.xlu0 %2209
    %2211 = vrot.lane.b32.xlu0 %v2188, 15
    %v2212 = vpop.permute.xlu0 %2211
    %vm2221 = vcmask 724384
    %2222 = vst.msk [vmem:[#allocation3 + $0x60] sm:$0xf] %vm2221, %v2198
    %2223 = vst.msk [vmem:[#allocation3 + $0x64] sm:$0xf] %vm2221, %v2200
    %2224 = vst.msk [vmem:[#allocation3 + $0x68] sm:$0xf] %vm2221, %v2202
    %2225 = vst.msk [vmem:[#allocation3 + $0x6c] sm:$0xf] %vm2221, %v2204
    %2226 = vst.msk [vmem:[#allocation3 + $0x70] sm:$0xf] %vm2221, %v2206
    %2227 = vst.msk [vmem:[#allocation3 + $0x74] sm:$0xf] %vm2221, %v2208
    %2228 = vst.msk [vmem:[#allocation3 + $0x78] sm:$0xf] %vm2221, %v2210
    %2229 = vst.msk [vmem:[#allocation3 + $0x7c] sm:$0xf] %vm2221, %v2212
    %vm2230 = vcmask 35840
    %2231 = vst.msk [vmem:[#allocation3 + $0x80] sm:$0xf] %vm2230, 0
    %2232 = vst.msk [vmem:[#allocation3 + $0x84] sm:$0xf] %vm2230, 0
    %2233 = vst.msk [vmem:[#allocation3 + $0x88] sm:$0xf] %vm2230, 0
    %2234 = vst.msk [vmem:[#allocation3 + $0x8c] sm:$0xf] %vm2230, 0
    %2235 = vst.msk [vmem:[#allocation3 + $0x90] sm:$0xf] %vm2230, 0
    %2236 = vst.msk [vmem:[#allocation3 + $0x94] sm:$0xf] %vm2230, 0
    %2237 = vst.msk [vmem:[#allocation3 + $0x98] sm:$0xf] %vm2230, 0
    %2238 = vst.msk [vmem:[#allocation3 + $0x9c] sm:$0xf] %vm2230, 0
    %vm2239 = vcmask 372048
    %2240 = vst.msk [vmem:[#allocation3 + $0x80] sm:$0xf] %vm2239, 0
    %2241 = vst.msk [vmem:[#allocation3 + $0x84] sm:$0xf] %vm2239, 0
    %2242 = vst.msk [vmem:[#allocation3 + $0x88] sm:$0xf] %vm2239, 0
    %2243 = vst.msk [vmem:[#allocation3 + $0x8c] sm:$0xf] %vm2239, 0
    %2244 = vst.msk [vmem:[#allocation3 + $0x90] sm:$0xf] %vm2239, 0
    %2245 = vst.msk [vmem:[#allocation3 + $0x94] sm:$0xf] %vm2239, 0
    %2246 = vst.msk [vmem:[#allocation3 + $0x98] sm:$0xf] %vm2239, 0
    %2247 = vst.msk [vmem:[#allocation3 + $0x9c] sm:$0xf] %vm2239, 0
    %v2248 = vld [vmem:[#allocation2] sm:$0xff]
    %v2249 = vld [vmem:[#allocation2 + $0x8] sm:$0xff]
    %v2250 = vld [vmem:[#allocation2 + $0x10] sm:$0xff]
    %v2251 = vld [vmem:[#allocation2 + $0x18] sm:$0xff]
    %v2252 = vld [vmem:[#allocation2 + $0x20] sm:$0xff]
    %v2253 = vld [vmem:[#allocation2 + $0x28] sm:$0xff]
    %v2254 = vld [vmem:[#allocation2 + $0x30] sm:$0xff]
    %v2255 = vld [vmem:[#allocation2 + $0x38] sm:$0xff]
    %v2256 = vpack.c.bf16 %v2248, %v2248
    %v2257 = vpack.c.bf16 %v2249, %v2249
    %v2258 = vpack.c.bf16 %v2250, %v2250
    %v2259 = vpack.c.bf16 %v2251, %v2251
    %v2260 = vpack.c.bf16 %v2252, %v2252
    %v2261 = vpack.c.bf16 %v2253, %v2253
    %v2262 = vpack.c.bf16 %v2254, %v2254
    %v2263 = vpack.c.bf16 %v2255, %v2255
    %2272 = vrot.lane.b32.xlu0 %v2256, 5
    %v2273 = vpop.permute.xlu0 %2272
    %2274 = vrot.lane.b32.xlu0 %v2257, 5
    %v2275 = vpop.permute.xlu0 %2274
    %2276 = vrot.lane.b32.xlu0 %v2258, 5
    %v2277 = vpop.permute.xlu0 %2276
    %2278 = vrot.lane.b32.xlu0 %v2259, 5
    %v2279 = vpop.permute.xlu0 %2278
    %2280 = vrot.lane.b32.xlu0 %v2260, 5
    %v2281 = vpop.permute.xlu0 %2280
    %2282 = vrot.lane.b32.xlu0 %v2261, 5
    %v2283 = vpop.permute.xlu0 %2282
    %2284 = vrot.lane.b32.xlu0 %v2262, 5
    %v2285 = vpop.permute.xlu0 %2284
    %2286 = vrot.lane.b32.xlu0 %v2263, 5
    %v2287 = vpop.permute.xlu0 %2286
    %vm2296 = vcmask 338984
    %2297 = vst.msk [vmem:[#allocation3 + $0x80] sm:$0xf] %vm2296, %v2273
    %2298 = vst.msk [vmem:[#allocation3 + $0x84] sm:$0xf] %vm2296, %v2275
    %2299 = vst.msk [vmem:[#allocation3 + $0x88] sm:$0xf] %vm2296, %v2277
    %2300 = vst.msk [vmem:[#allocation3 + $0x8c] sm:$0xf] %vm2296, %v2279
    %2301 = vst.msk [vmem:[#allocation3 + $0x90] sm:$0xf] %vm2296, %v2281
    %2302 = vst.msk [vmem:[#allocation3 + $0x94] sm:$0xf] %vm2296, %v2283
    %2303 = vst.msk [vmem:[#allocation3 + $0x98] sm:$0xf] %vm2296, %v2285
    %2304 = vst.msk [vmem:[#allocation3 + $0x9c] sm:$0xf] %vm2296, %v2287
    %vm2305 = vcmask 413040
    %2306 = vst.msk [vmem:[#allocation3 + $0x80] sm:$0xf] %vm2305, 0
    %2307 = vst.msk [vmem:[#allocation3 + $0x84] sm:$0xf] %vm2305, 0
    %2308 = vst.msk [vmem:[#allocation3 + $0x88] sm:$0xf] %vm2305, 0
    %2309 = vst.msk [vmem:[#allocation3 + $0x8c] sm:$0xf] %vm2305, 0
    %2310 = vst.msk [vmem:[#allocation3 + $0x90] sm:$0xf] %vm2305, 0
    %2311 = vst.msk [vmem:[#allocation3 + $0x94] sm:$0xf] %vm2305, 0
    %2312 = vst.msk [vmem:[#allocation3 + $0x98] sm:$0xf] %vm2305, 0
    %2313 = vst.msk [vmem:[#allocation3 + $0x9c] sm:$0xf] %vm2305, 0
    %vm2314 = vcmask 749248
    %2315 = vst.msk [vmem:[#allocation3 + $0x80] sm:$0xf] %vm2314, 0
    %2316 = vst.msk [vmem:[#allocation3 + $0x84] sm:$0xf] %vm2314, 0
    %2317 = vst.msk [vmem:[#allocation3 + $0x88] sm:$0xf] %vm2314, 0
    %2318 = vst.msk [vmem:[#allocation3 + $0x8c] sm:$0xf] %vm2314, 0
    %2319 = vst.msk [vmem:[#allocation3 + $0x90] sm:$0xf] %vm2314, 0
    %2320 = vst.msk [vmem:[#allocation3 + $0x94] sm:$0xf] %vm2314, 0
    %2321 = vst.msk [vmem:[#allocation3 + $0x98] sm:$0xf] %vm2314, 0
    %2322 = vst.msk [vmem:[#allocation3 + $0x9c] sm:$0xf] %vm2314, 0
    %v2323 = vld [vmem:[#allocation2] sm:$0xff]
    %v2324 = vld [vmem:[#allocation2 + $0x8] sm:$0xff]
    %v2325 = vld [vmem:[#allocation2 + $0x10] sm:$0xff]
    %v2326 = vld [vmem:[#allocation2 + $0x18] sm:$0xff]
    %v2327 = vld [vmem:[#allocation2 + $0x20] sm:$0xff]
    %v2328 = vld [vmem:[#allocation2 + $0x28] sm:$0xff]
    %v2329 = vld [vmem:[#allocation2 + $0x30] sm:$0xff]
    %v2330 = vld [vmem:[#allocation2 + $0x38] sm:$0xff]
    %v2331 = vpack.c.bf16 %v2323, %v2323
    %v2332 = vpack.c.bf16 %v2324, %v2324
    %v2333 = vpack.c.bf16 %v2325, %v2325
    %v2334 = vpack.c.bf16 %v2326, %v2326
    %v2335 = vpack.c.bf16 %v2327, %v2327
    %v2336 = vpack.c.bf16 %v2328, %v2328
    %v2337 = vpack.c.bf16 %v2329, %v2329
    %v2338 = vpack.c.bf16 %v2330, %v2330
    %2347 = vrot.lane.b32.xlu0 %v2331, 14
    %v2348 = vpop.permute.xlu0 %2347
    %2349 = vrot.lane.b32.xlu0 %v2332, 14
    %v2350 = vpop.permute.xlu0 %2349
    %2351 = vrot.lane.b32.xlu0 %v2333, 14
    %v2352 = vpop.permute.xlu0 %2351
    %2353 = vrot.lane.b32.xlu0 %v2334, 14
    %v2354 = vpop.permute.xlu0 %2353
    %2355 = vrot.lane.b32.xlu0 %v2335, 14
    %v2356 = vpop.permute.xlu0 %2355
    %2357 = vrot.lane.b32.xlu0 %v2336, 14
    %v2358 = vpop.permute.xlu0 %2357
    %2359 = vrot.lane.b32.xlu0 %v2337, 14
    %v2360 = vpop.permute.xlu0 %2359
    %2361 = vrot.lane.b32.xlu0 %v2338, 14
    %v2362 = vpop.permute.xlu0 %2361
    %vm2371 = vcmask 716184
    %2372 = vst.msk [vmem:[#allocation3 + $0x80] sm:$0xf] %vm2371, %v2348
    %2373 = vst.msk [vmem:[#allocation3 + $0x84] sm:$0xf] %vm2371, %v2350
    %2374 = vst.msk [vmem:[#allocation3 + $0x88] sm:$0xf] %vm2371, %v2352
    %2375 = vst.msk [vmem:[#allocation3 + $0x8c] sm:$0xf] %vm2371, %v2354
    %2376 = vst.msk [vmem:[#allocation3 + $0x90] sm:$0xf] %vm2371, %v2356
    %2377 = vst.msk [vmem:[#allocation3 + $0x94] sm:$0xf] %vm2371, %v2358
    %2378 = vst.msk [vmem:[#allocation3 + $0x98] sm:$0xf] %vm2371, %v2360
    %2379 = vst.msk [vmem:[#allocation3 + $0x9c] sm:$0xf] %vm2371, %v2362
    %vm2380 = vcmask 27648
    %2381 = vst.msk [vmem:[#allocation3 + $0xa0] sm:$0xf] %vm2380, 0
    %2382 = vst.msk [vmem:[#allocation3 + $0xa4] sm:$0xf] %vm2380, 0
    %2383 = vst.msk [vmem:[#allocation3 + $0xa8] sm:$0xf] %vm2380, 0
    %2384 = vst.msk [vmem:[#allocation3 + $0xac] sm:$0xf] %vm2380, 0
    %2385 = vst.msk [vmem:[#allocation3 + $0xb0] sm:$0xf] %vm2380, 0
    %2386 = vst.msk [vmem:[#allocation3 + $0xb4] sm:$0xf] %vm2380, 0
    %2387 = vst.msk [vmem:[#allocation3 + $0xb8] sm:$0xf] %vm2380, 0
    %2388 = vst.msk [vmem:[#allocation3 + $0xbc] sm:$0xf] %vm2380, 0
    %vm2389 = vcmask 372040
    %2390 = vst.msk [vmem:[#allocation3 + $0xa0] sm:$0xf] %vm2389, 0
    %2391 = vst.msk [vmem:[#allocation3 + $0xa4] sm:$0xf] %vm2389, 0
    %2392 = vst.msk [vmem:[#allocation3 + $0xa8] sm:$0xf] %vm2389, 0
    %2393 = vst.msk [vmem:[#allocation3 + $0xac] sm:$0xf] %vm2389, 0
    %2394 = vst.msk [vmem:[#allocation3 + $0xb0] sm:$0xf] %vm2389, 0
    %2395 = vst.msk [vmem:[#allocation3 + $0xb4] sm:$0xf] %vm2389, 0
    %2396 = vst.msk [vmem:[#allocation3 + $0xb8] sm:$0xf] %vm2389, 0
    %2397 = vst.msk [vmem:[#allocation3 + $0xbc] sm:$0xf] %vm2389, 0
    %v2398 = vld [vmem:[#allocation2] sm:$0xff]
    %v2399 = vld [vmem:[#allocation2 + $0x8] sm:$0xff]
    %v2400 = vld [vmem:[#allocation2 + $0x10] sm:$0xff]
    %v2401 = vld [vmem:[#allocation2 + $0x18] sm:$0xff]
    %v2402 = vld [vmem:[#allocation2 + $0x20] sm:$0xff]
    %v2403 = vld [vmem:[#allocation2 + $0x28] sm:$0xff]
    %v2404 = vld [vmem:[#allocation2 + $0x30] sm:$0xff]
    %v2405 = vld [vmem:[#allocation2 + $0x38] sm:$0xff]
    %v2406 = vpack.c.bf16 %v2398, %v2398
    %v2407 = vpack.c.bf16 %v2399, %v2399
    %v2408 = vpack.c.bf16 %v2400, %v2400
    %v2409 = vpack.c.bf16 %v2401, %v2401
    %v2410 = vpack.c.bf16 %v2402, %v2402
    %v2411 = vpack.c.bf16 %v2403, %v2403
    %v2412 = vpack.c.bf16 %v2404, %v2404
    %v2413 = vpack.c.bf16 %v2405, %v2405
    %2422 = vrot.lane.b32.xlu0 %v2406, 4
    %v2423 = vpop.permute.xlu0 %2422
    %2424 = vrot.lane.b32.xlu0 %v2407, 4
    %v2425 = vpop.permute.xlu0 %2424
    %2426 = vrot.lane.b32.xlu0 %v2408, 4
    %v2427 = vpop.permute.xlu0 %2426
    %2428 = vrot.lane.b32.xlu0 %v2409, 4
    %v2429 = vpop.permute.xlu0 %2428
    %2430 = vrot.lane.b32.xlu0 %v2410, 4
    %v2431 = vpop.permute.xlu0 %2430
    %2432 = vrot.lane.b32.xlu0 %v2411, 4
    %v2433 = vpop.permute.xlu0 %2432
    %2434 = vrot.lane.b32.xlu0 %v2412, 4
    %v2435 = vpop.permute.xlu0 %2434
    %2436 = vrot.lane.b32.xlu0 %v2413, 4
    %v2437 = vpop.permute.xlu0 %2436
    %vm2446 = vcmask 330784
    %2447 = vst.msk [vmem:[#allocation3 + $0xa0] sm:$0xf] %vm2446, %v2423
    %2448 = vst.msk [vmem:[#allocation3 + $0xa4] sm:$0xf] %vm2446, %v2425
    %2449 = vst.msk [vmem:[#allocation3 + $0xa8] sm:$0xf] %vm2446, %v2427
    %2450 = vst.msk [vmem:[#allocation3 + $0xac] sm:$0xf] %vm2446, %v2429
    %2451 = vst.msk [vmem:[#allocation3 + $0xb0] sm:$0xf] %vm2446, %v2431
    %2452 = vst.msk [vmem:[#allocation3 + $0xb4] sm:$0xf] %vm2446, %v2433
    %2453 = vst.msk [vmem:[#allocation3 + $0xb8] sm:$0xf] %vm2446, %v2435
    %2454 = vst.msk [vmem:[#allocation3 + $0xbc] sm:$0xf] %vm2446, %v2437
    %vm2455 = vcmask 404848
    %2456 = vst.msk [vmem:[#allocation3 + $0xa0] sm:$0xf] %vm2455, 0
    %2457 = vst.msk [vmem:[#allocation3 + $0xa4] sm:$0xf] %vm2455, 0
    %2458 = vst.msk [vmem:[#allocation3 + $0xa8] sm:$0xf] %vm2455, 0
    %2459 = vst.msk [vmem:[#allocation3 + $0xac] sm:$0xf] %vm2455, 0
    %2460 = vst.msk [vmem:[#allocation3 + $0xb0] sm:$0xf] %vm2455, 0
    %2461 = vst.msk [vmem:[#allocation3 + $0xb4] sm:$0xf] %vm2455, 0
    %2462 = vst.msk [vmem:[#allocation3 + $0xb8] sm:$0xf] %vm2455, 0
    %2463 = vst.msk [vmem:[#allocation3 + $0xbc] sm:$0xf] %vm2455, 0
    %vm2464 = vcmask 749240
    %2465 = vst.msk [vmem:[#allocation3 + $0xa0] sm:$0xf] %vm2464, 0
    %2466 = vst.msk [vmem:[#allocation3 + $0xa4] sm:$0xf] %vm2464, 0
    %2467 = vst.msk [vmem:[#allocation3 + $0xa8] sm:$0xf] %vm2464, 0
    %2468 = vst.msk [vmem:[#allocation3 + $0xac] sm:$0xf] %vm2464, 0
    %2469 = vst.msk [vmem:[#allocation3 + $0xb0] sm:$0xf] %vm2464, 0
    %2470 = vst.msk [vmem:[#allocation3 + $0xb4] sm:$0xf] %vm2464, 0
    %2471 = vst.msk [vmem:[#allocation3 + $0xb8] sm:$0xf] %vm2464, 0
    %2472 = vst.msk [vmem:[#allocation3 + $0xbc] sm:$0xf] %vm2464, 0
    %v2473 = vld [vmem:[#allocation2] sm:$0xff]
    %v2474 = vld [vmem:[#allocation2 + $0x8] sm:$0xff]
    %v2475 = vld [vmem:[#allocation2 + $0x10] sm:$0xff]
    %v2476 = vld [vmem:[#allocation2 + $0x18] sm:$0xff]
    %v2477 = vld [vmem:[#allocation2 + $0x20] sm:$0xff]
    %v2478 = vld [vmem:[#allocation2 + $0x28] sm:$0xff]
    %v2479 = vld [vmem:[#allocation2 + $0x30] sm:$0xff]
    %v2480 = vld [vmem:[#allocation2 + $0x38] sm:$0xff]
    %v2481 = vpack.c.bf16 %v2473, %v2473
    %v2482 = vpack.c.bf16 %v2474, %v2474
    %v2483 = vpack.c.bf16 %v2475, %v2475
    %v2484 = vpack.c.bf16 %v2476, %v2476
    %v2485 = vpack.c.bf16 %v2477, %v2477
    %v2486 = vpack.c.bf16 %v2478, %v2478
    %v2487 = vpack.c.bf16 %v2479, %v2479
    %v2488 = vpack.c.bf16 %v2480, %v2480
    %2497 = vrot.lane.b32.xlu0 %v2481, 13
    %v2498 = vpop.permute.xlu0 %2497
    %2499 = vrot.lane.b32.xlu0 %v2482, 13
    %v2500 = vpop.permute.xlu0 %2499
    %2501 = vrot.lane.b32.xlu0 %v2483, 13
    %v2502 = vpop.permute.xlu0 %2501
    %2503 = vrot.lane.b32.xlu0 %v2484, 13
    %v2504 = vpop.permute.xlu0 %2503
    %2505 = vrot.lane.b32.xlu0 %v2485, 13
    %v2506 = vpop.permute.xlu0 %2505
    %2507 = vrot.lane.b32.xlu0 %v2486, 13
    %v2508 = vpop.permute.xlu0 %2507
    %2509 = vrot.lane.b32.xlu0 %v2487, 13
    %v2510 = vpop.permute.xlu0 %2509
    %2511 = vrot.lane.b32.xlu0 %v2488, 13
    %v2512 = vpop.permute.xlu0 %2511
    %vm2521 = vcmask 707984
    %2522 = vst.msk [vmem:[#allocation3 + $0xa0] sm:$0xf] %vm2521, %v2498
    %2523 = vst.msk [vmem:[#allocation3 + $0xa4] sm:$0xf] %vm2521, %v2500
    %2524 = vst.msk [vmem:[#allocation3 + $0xa8] sm:$0xf] %vm2521, %v2502
    %2525 = vst.msk [vmem:[#allocation3 + $0xac] sm:$0xf] %vm2521, %v2504
    %2526 = vst.msk [vmem:[#allocation3 + $0xb0] sm:$0xf] %vm2521, %v2506
    %2527 = vst.msk [vmem:[#allocation3 + $0xb4] sm:$0xf] %vm2521, %v2508
    %2528 = vst.msk [vmem:[#allocation3 + $0xb8] sm:$0xf] %vm2521, %v2510
    %2529 = vst.msk [vmem:[#allocation3 + $0xbc] sm:$0xf] %vm2521, %v2512
    %vm2530 = vcmask 19456
    %2531 = vst.msk [vmem:[#allocation3 + $0xc0] sm:$0xf] %vm2530, 0
    %2532 = vst.msk [vmem:[#allocation3 + $0xc4] sm:$0xf] %vm2530, 0
    %2533 = vst.msk [vmem:[#allocation3 + $0xc8] sm:$0xf] %vm2530, 0
    %2534 = vst.msk [vmem:[#allocation3 + $0xcc] sm:$0xf] %vm2530, 0
    %2535 = vst.msk [vmem:[#allocation3 + $0xd0] sm:$0xf] %vm2530, 0
    %2536 = vst.msk [vmem:[#allocation3 + $0xd4] sm:$0xf] %vm2530, 0
    %2537 = vst.msk [vmem:[#allocation3 + $0xd8] sm:$0xf] %vm2530, 0
    %2538 = vst.msk [vmem:[#allocation3 + $0xdc] sm:$0xf] %vm2530, 0
    %vm2539 = vcmask 372032
    %2540 = vst.msk [vmem:[#allocation3 + $0xc0] sm:$0xf] %vm2539, 0
    %2541 = vst.msk [vmem:[#allocation3 + $0xc4] sm:$0xf] %vm2539, 0
    %2542 = vst.msk [vmem:[#allocation3 + $0xc8] sm:$0xf] %vm2539, 0
    %2543 = vst.msk [vmem:[#allocation3 + $0xcc] sm:$0xf] %vm2539, 0
    %2544 = vst.msk [vmem:[#allocation3 + $0xd0] sm:$0xf] %vm2539, 0
    %2545 = vst.msk [vmem:[#allocation3 + $0xd4] sm:$0xf] %vm2539, 0
    %2546 = vst.msk [vmem:[#allocation3 + $0xd8] sm:$0xf] %vm2539, 0
    %2547 = vst.msk [vmem:[#allocation3 + $0xdc] sm:$0xf] %vm2539, 0
    %v2548 = vld [vmem:[#allocation2] sm:$0xff]
    %v2549 = vld [vmem:[#allocation2 + $0x8] sm:$0xff]
    %v2550 = vld [vmem:[#allocation2 + $0x10] sm:$0xff]
    %v2551 = vld [vmem:[#allocation2 + $0x18] sm:$0xff]
    %v2552 = vld [vmem:[#allocation2 + $0x20] sm:$0xff]
    %v2553 = vld [vmem:[#allocation2 + $0x28] sm:$0xff]
    %v2554 = vld [vmem:[#allocation2 + $0x30] sm:$0xff]
    %v2555 = vld [vmem:[#allocation2 + $0x38] sm:$0xff]
    %v2556 = vpack.c.bf16 %v2548, %v2548
    %v2557 = vpack.c.bf16 %v2549, %v2549
    %v2558 = vpack.c.bf16 %v2550, %v2550
    %v2559 = vpack.c.bf16 %v2551, %v2551
    %v2560 = vpack.c.bf16 %v2552, %v2552
    %v2561 = vpack.c.bf16 %v2553, %v2553
    %v2562 = vpack.c.bf16 %v2554, %v2554
    %v2563 = vpack.c.bf16 %v2555, %v2555
    %2572 = vrot.lane.b32.xlu0 %v2556, 3
    %v2573 = vpop.permute.xlu0 %2572
    %2574 = vrot.lane.b32.xlu0 %v2557, 3
    %v2575 = vpop.permute.xlu0 %2574
    %2576 = vrot.lane.b32.xlu0 %v2558, 3
    %v2577 = vpop.permute.xlu0 %2576
    %2578 = vrot.lane.b32.xlu0 %v2559, 3
    %v2579 = vpop.permute.xlu0 %2578
    %2580 = vrot.lane.b32.xlu0 %v2560, 3
    %v2581 = vpop.permute.xlu0 %2580
    %2582 = vrot.lane.b32.xlu0 %v2561, 3
    %v2583 = vpop.permute.xlu0 %2582
    %2584 = vrot.lane.b32.xlu0 %v2562, 3
    %v2585 = vpop.permute.xlu0 %2584
    %2586 = vrot.lane.b32.xlu0 %v2563, 3
    %v2587 = vpop.permute.xlu0 %2586
    %vm2596 = vcmask 322584
    %2597 = vst.msk [vmem:[#allocation3 + $0xc0] sm:$0xf] %vm2596, %v2573
    %2598 = vst.msk [vmem:[#allocation3 + $0xc4] sm:$0xf] %vm2596, %v2575
    %2599 = vst.msk [vmem:[#allocation3 + $0xc8] sm:$0xf] %vm2596, %v2577
    %2600 = vst.msk [vmem:[#allocation3 + $0xcc] sm:$0xf] %vm2596, %v2579
    %2601 = vst.msk [vmem:[#allocation3 + $0xd0] sm:$0xf] %vm2596, %v2581
    %2602 = vst.msk [vmem:[#allocation3 + $0xd4] sm:$0xf] %vm2596, %v2583
    %2603 = vst.msk [vmem:[#allocation3 + $0xd8] sm:$0xf] %vm2596, %v2585
    %2604 = vst.msk [vmem:[#allocation3 + $0xdc] sm:$0xf] %vm2596, %v2587
    %vm2605 = vcmask 396656
    %2606 = vst.msk [vmem:[#allocation3 + $0xc0] sm:$0xf] %vm2605, 0
    %2607 = vst.msk [vmem:[#allocation3 + $0xc4] sm:$0xf] %vm2605, 0
    %2608 = vst.msk [vmem:[#allocation3 + $0xc8] sm:$0xf] %vm2605, 0
    %2609 = vst.msk [vmem:[#allocation3 + $0xcc] sm:$0xf] %vm2605, 0
    %2610 = vst.msk [vmem:[#allocation3 + $0xd0] sm:$0xf] %vm2605, 0
    %2611 = vst.msk [vmem:[#allocation3 + $0xd4] sm:$0xf] %vm2605, 0
    %2612 = vst.msk [vmem:[#allocation3 + $0xd8] sm:$0xf] %vm2605, 0
    %2613 = vst.msk [vmem:[#allocation3 + $0xdc] sm:$0xf] %vm2605, 0
    %vm2614 = vcmask 749232
    %2615 = vst.msk [vmem:[#allocation3 + $0xc0] sm:$0xf] %vm2614, 0
    %2616 = vst.msk [vmem:[#allocation3 + $0xc4] sm:$0xf] %vm2614, 0
    %2617 = vst.msk [vmem:[#allocation3 + $0xc8] sm:$0xf] %vm2614, 0
    %2618 = vst.msk [vmem:[#allocation3 + $0xcc] sm:$0xf] %vm2614, 0
    %2619 = vst.msk [vmem:[#allocation3 + $0xd0] sm:$0xf] %vm2614, 0
    %2620 = vst.msk [vmem:[#allocation3 + $0xd4] sm:$0xf] %vm2614, 0
    %2621 = vst.msk [vmem:[#allocation3 + $0xd8] sm:$0xf] %vm2614, 0
    %2622 = vst.msk [vmem:[#allocation3 + $0xdc] sm:$0xf] %vm2614, 0
    %v2623 = vld [vmem:[#allocation2] sm:$0xff]
    %v2624 = vld [vmem:[#allocation2 + $0x8] sm:$0xff]
    %v2625 = vld [vmem:[#allocation2 + $0x10] sm:$0xff]
    %v2626 = vld [vmem:[#allocation2 + $0x18] sm:$0xff]
    %v2627 = vld [vmem:[#allocation2 + $0x20] sm:$0xff]
    %v2628 = vld [vmem:[#allocation2 + $0x28] sm:$0xff]
    %v2629 = vld [vmem:[#allocation2 + $0x30] sm:$0xff]
    %v2630 = vld [vmem:[#allocation2 + $0x38] sm:$0xff]
    %v2631 = vpack.c.bf16 %v2623, %v2623
    %v2632 = vpack.c.bf16 %v2624, %v2624
    %v2633 = vpack.c.bf16 %v2625, %v2625
    %v2634 = vpack.c.bf16 %v2626, %v2626
    %v2635 = vpack.c.bf16 %v2627, %v2627
    %v2636 = vpack.c.bf16 %v2628, %v2628
    %v2637 = vpack.c.bf16 %v2629, %v2629
    %v2638 = vpack.c.bf16 %v2630, %v2630
    %2647 = vrot.lane.b32.xlu0 %v2631, 12
    %v2648 = vpop.permute.xlu0 %2647
    %2649 = vrot.lane.b32.xlu0 %v2632, 12
    %v2650 = vpop.permute.xlu0 %2649
    %2651 = vrot.lane.b32.xlu0 %v2633, 12
    %v2652 = vpop.permute.xlu0 %2651
    %2653 = vrot.lane.b32.xlu0 %v2634, 12
    %v2654 = vpop.permute.xlu0 %2653
    %2655 = vrot.lane.b32.xlu0 %v2635, 12
    %v2656 = vpop.permute.xlu0 %2655
    %2657 = vrot.lane.b32.xlu0 %v2636, 12
    %v2658 = vpop.permute.xlu0 %2657
    %2659 = vrot.lane.b32.xlu0 %v2637, 12
    %v2660 = vpop.permute.xlu0 %2659
    %2661 = vrot.lane.b32.xlu0 %v2638, 12
    %v2662 = vpop.permute.xlu0 %2661
    %vm2671 = vcmask 699784
    %2672 = vst.msk [vmem:[#allocation3 + $0xc0] sm:$0xf] %vm2671, %v2648
    %2673 = vst.msk [vmem:[#allocation3 + $0xc4] sm:$0xf] %vm2671, %v2650
    %2674 = vst.msk [vmem:[#allocation3 + $0xc8] sm:$0xf] %vm2671, %v2652
    %2675 = vst.msk [vmem:[#allocation3 + $0xcc] sm:$0xf] %vm2671, %v2654
    %2676 = vst.msk [vmem:[#allocation3 + $0xd0] sm:$0xf] %vm2671, %v2656
    %2677 = vst.msk [vmem:[#allocation3 + $0xd4] sm:$0xf] %vm2671, %v2658
    %2678 = vst.msk [vmem:[#allocation3 + $0xd8] sm:$0xf] %vm2671, %v2660
    %2679 = vst.msk [vmem:[#allocation3 + $0xdc] sm:$0xf] %vm2671, %v2662
    %vm2680 = vcmask 11264
    %2681 = vst.msk [vmem:[#allocation3 + $0xe0] sm:$0xf] %vm2680, 0
    %2682 = vst.msk [vmem:[#allocation3 + $0xe4] sm:$0xf] %vm2680, 0
    %2683 = vst.msk [vmem:[#allocation3 + $0xe8] sm:$0xf] %vm2680, 0
    %2684 = vst.msk [vmem:[#allocation3 + $0xec] sm:$0xf] %vm2680, 0
    %2685 = vst.msk [vmem:[#allocation3 + $0xf0] sm:$0xf] %vm2680, 0
    %2686 = vst.msk [vmem:[#allocation3 + $0xf4] sm:$0xf] %vm2680, 0
    %2687 = vst.msk [vmem:[#allocation3 + $0xf8] sm:$0xf] %vm2680, 0
    %2688 = vst.msk [vmem:[#allocation3 + $0xfc] sm:$0xf] %vm2680, 0
    %vm2689 = vcmask 372024
    %2690 = vst.msk [vmem:[#allocation3 + $0xe0] sm:$0xf] %vm2689, 0
    %2691 = vst.msk [vmem:[#allocation3 + $0xe4] sm:$0xf] %vm2689, 0
    %2692 = vst.msk [vmem:[#allocation3 + $0xe8] sm:$0xf] %vm2689, 0
    %2693 = vst.msk [vmem:[#allocation3 + $0xec] sm:$0xf] %vm2689, 0
    %2694 = vst.msk [vmem:[#allocation3 + $0xf0] sm:$0xf] %vm2689, 0
    %2695 = vst.msk [vmem:[#allocation3 + $0xf4] sm:$0xf] %vm2689, 0
    %2696 = vst.msk [vmem:[#allocation3 + $0xf8] sm:$0xf] %vm2689, 0
    %2697 = vst.msk [vmem:[#allocation3 + $0xfc] sm:$0xf] %vm2689, 0
    %v2698 = vld [vmem:[#allocation2] sm:$0xff]
    %v2699 = vld [vmem:[#allocation2 + $0x8] sm:$0xff]
    %v2700 = vld [vmem:[#allocation2 + $0x10] sm:$0xff]
    %v2701 = vld [vmem:[#allocation2 + $0x18] sm:$0xff]
    %v2702 = vld [vmem:[#allocation2 + $0x20] sm:$0xff]
    %v2703 = vld [vmem:[#allocation2 + $0x28] sm:$0xff]
    %v2704 = vld [vmem:[#allocation2 + $0x30] sm:$0xff]
    %v2705 = vld [vmem:[#allocation2 + $0x38] sm:$0xff]
    %v2706 = vpack.c.bf16 %v2698, %v2698
    %v2707 = vpack.c.bf16 %v2699, %v2699
    %v2708 = vpack.c.bf16 %v2700, %v2700
    %v2709 = vpack.c.bf16 %v2701, %v2701
    %v2710 = vpack.c.bf16 %v2702, %v2702
    %v2711 = vpack.c.bf16 %v2703, %v2703
    %v2712 = vpack.c.bf16 %v2704, %v2704
    %v2713 = vpack.c.bf16 %v2705, %v2705
    %2722 = vrot.lane.b32.xlu0 %v2706, 2
    %v2723 = vpop.permute.xlu0 %2722
    %2724 = vrot.lane.b32.xlu0 %v2707, 2
    %v2725 = vpop.permute.xlu0 %2724
    %2726 = vrot.lane.b32.xlu0 %v2708, 2
    %v2727 = vpop.permute.xlu0 %2726
    %2728 = vrot.lane.b32.xlu0 %v2709, 2
    %v2729 = vpop.permute.xlu0 %2728
    %2730 = vrot.lane.b32.xlu0 %v2710, 2
    %v2731 = vpop.permute.xlu0 %2730
    %2732 = vrot.lane.b32.xlu0 %v2711, 2
    %v2733 = vpop.permute.xlu0 %2732
    %2734 = vrot.lane.b32.xlu0 %v2712, 2
    %v2735 = vpop.permute.xlu0 %2734
    %2736 = vrot.lane.b32.xlu0 %v2713, 2
    %v2737 = vpop.permute.xlu0 %2736
    %vm2746 = vcmask 314384
    %2747 = vst.msk [vmem:[#allocation3 + $0xe0] sm:$0xf] %vm2746, %v2723
    %2748 = vst.msk [vmem:[#allocation3 + $0xe4] sm:$0xf] %vm2746, %v2725
    %2749 = vst.msk [vmem:[#allocation3 + $0xe8] sm:$0xf] %vm2746, %v2727
    %2750 = vst.msk [vmem:[#allocation3 + $0xec] sm:$0xf] %vm2746, %v2729
    %2751 = vst.msk [vmem:[#allocation3 + $0xf0] sm:$0xf] %vm2746, %v2731
    %2752 = vst.msk [vmem:[#allocation3 + $0xf4] sm:$0xf] %vm2746, %v2733
    %2753 = vst.msk [vmem:[#allocation3 + $0xf8] sm:$0xf] %vm2746, %v2735
    %2754 = vst.msk [vmem:[#allocation3 + $0xfc] sm:$0xf] %vm2746, %v2737
    %vm2755 = vcmask 388464
    %2756 = vst.msk [vmem:[#allocation3 + $0xe0] sm:$0xf] %vm2755, 0
    %2757 = vst.msk [vmem:[#allocation3 + $0xe4] sm:$0xf] %vm2755, 0
    %2758 = vst.msk [vmem:[#allocation3 + $0xe8] sm:$0xf] %vm2755, 0
    %2759 = vst.msk [vmem:[#allocation3 + $0xec] sm:$0xf] %vm2755, 0
    %2760 = vst.msk [vmem:[#allocation3 + $0xf0] sm:$0xf] %vm2755, 0
    %2761 = vst.msk [vmem:[#allocation3 + $0xf4] sm:$0xf] %vm2755, 0
    %2762 = vst.msk [vmem:[#allocation3 + $0xf8] sm:$0xf] %vm2755, 0
    %2763 = vst.msk [vmem:[#allocation3 + $0xfc] sm:$0xf] %vm2755, 0
    %vm2764 = vcmask 749224
    %2765 = vst.msk [vmem:[#allocation3 + $0xe0] sm:$0xf] %vm2764, 0
    %2766 = vst.msk [vmem:[#allocation3 + $0xe4] sm:$0xf] %vm2764, 0
    %2767 = vst.msk [vmem:[#allocation3 + $0xe8] sm:$0xf] %vm2764, 0
    %2768 = vst.msk [vmem:[#allocation3 + $0xec] sm:$0xf] %vm2764, 0
    %2769 = vst.msk [vmem:[#allocation3 + $0xf0] sm:$0xf] %vm2764, 0
    %2770 = vst.msk [vmem:[#allocation3 + $0xf4] sm:$0xf] %vm2764, 0
    %2771 = vst.msk [vmem:[#allocation3 + $0xf8] sm:$0xf] %vm2764, 0
    %2772 = vst.msk [vmem:[#allocation3 + $0xfc] sm:$0xf] %vm2764, 0
    %v2773 = vld [vmem:[#allocation2] sm:$0xff]
    %v2774 = vld [vmem:[#allocation2 + $0x8] sm:$0xff]
    %v2775 = vld [vmem:[#allocation2 + $0x10] sm:$0xff]
    %v2776 = vld [vmem:[#allocation2 + $0x18] sm:$0xff]
    %v2777 = vld [vmem:[#allocation2 + $0x20] sm:$0xff]
    %v2778 = vld [vmem:[#allocation2 + $0x28] sm:$0xff]
    %v2779 = vld [vmem:[#allocation2 + $0x30] sm:$0xff]
    %v2780 = vld [vmem:[#allocation2 + $0x38] sm:$0xff]
    %v2781 = vpack.c.bf16 %v2773, %v2773
    %v2782 = vpack.c.bf16 %v2774, %v2774
    %v2783 = vpack.c.bf16 %v2775, %v2775
    %v2784 = vpack.c.bf16 %v2776, %v2776
    %v2785 = vpack.c.bf16 %v2777, %v2777
    %v2786 = vpack.c.bf16 %v2778, %v2778
    %v2787 = vpack.c.bf16 %v2779, %v2779
    %v2788 = vpack.c.bf16 %v2780, %v2780
    %2797 = vrot.lane.b32.xlu0 %v2781, 11
    %v2798 = vpop.permute.xlu0 %2797
    %2799 = vrot.lane.b32.xlu0 %v2782, 11
    %v2800 = vpop.permute.xlu0 %2799
    %2801 = vrot.lane.b32.xlu0 %v2783, 11
    %v2802 = vpop.permute.xlu0 %2801
    %2803 = vrot.lane.b32.xlu0 %v2784, 11
    %v2804 = vpop.permute.xlu0 %2803
    %2805 = vrot.lane.b32.xlu0 %v2785, 11
    %v2806 = vpop.permute.xlu0 %2805
    %2807 = vrot.lane.b32.xlu0 %v2786, 11
    %v2808 = vpop.permute.xlu0 %2807
    %2809 = vrot.lane.b32.xlu0 %v2787, 11
    %v2810 = vpop.permute.xlu0 %2809
    %2811 = vrot.lane.b32.xlu0 %v2788, 11
    %v2812 = vpop.permute.xlu0 %2811
    %vm2821 = vcmask 691584
    %2822 = vst.msk [vmem:[#allocation3 + $0xe0] sm:$0xf] %vm2821, %v2798
    %2823 = vst.msk [vmem:[#allocation3 + $0xe4] sm:$0xf] %vm2821, %v2800
    %2824 = vst.msk [vmem:[#allocation3 + $0xe8] sm:$0xf] %vm2821, %v2802
    %2825 = vst.msk [vmem:[#allocation3 + $0xec] sm:$0xf] %vm2821, %v2804
    %2826 = vst.msk [vmem:[#allocation3 + $0xf0] sm:$0xf] %vm2821, %v2806
    %2827 = vst.msk [vmem:[#allocation3 + $0xf4] sm:$0xf] %vm2821, %v2808
    %2828 = vst.msk [vmem:[#allocation3 + $0xf8] sm:$0xf] %vm2821, %v2810
    %2829 = vst.msk [vmem:[#allocation3 + $0xfc] sm:$0xf] %vm2821, %v2812
    %vm2830 = vcmask 3072
    %2831 = vst.msk [vmem:[#allocation3 + $0x100] sm:$0xf] %vm2830, 0
    %2832 = vst.msk [vmem:[#allocation3 + $0x104] sm:$0xf] %vm2830, 0
    %2833 = vst.msk [vmem:[#allocation3 + $0x108] sm:$0xf] %vm2830, 0
    %2834 = vst.msk [vmem:[#allocation3 + $0x10c] sm:$0xf] %vm2830, 0
    %2835 = vst.msk [vmem:[#allocation3 + $0x110] sm:$0xf] %vm2830, 0
    %2836 = vst.msk [vmem:[#allocation3 + $0x114] sm:$0xf] %vm2830, 0
    %2837 = vst.msk [vmem:[#allocation3 + $0x118] sm:$0xf] %vm2830, 0
    %2838 = vst.msk [vmem:[#allocation3 + $0x11c] sm:$0xf] %vm2830, 0
    %vm2839 = vcmask 372016
    %2840 = vst.msk [vmem:[#allocation3 + $0x100] sm:$0xf] %vm2839, 0
    %2841 = vst.msk [vmem:[#allocation3 + $0x104] sm:$0xf] %vm2839, 0
    %2842 = vst.msk [vmem:[#allocation3 + $0x108] sm:$0xf] %vm2839, 0
    %2843 = vst.msk [vmem:[#allocation3 + $0x10c] sm:$0xf] %vm2839, 0
    %2844 = vst.msk [vmem:[#allocation3 + $0x110] sm:$0xf] %vm2839, 0
    %2845 = vst.msk [vmem:[#allocation3 + $0x114] sm:$0xf] %vm2839, 0
    %2846 = vst.msk [vmem:[#allocation3 + $0x118] sm:$0xf] %vm2839, 0
    %2847 = vst.msk [vmem:[#allocation3 + $0x11c] sm:$0xf] %vm2839, 0
    %v2848 = vld [vmem:[#allocation2] sm:$0xff]
    %v2849 = vld [vmem:[#allocation2 + $0x8] sm:$0xff]
    %v2850 = vld [vmem:[#allocation2 + $0x10] sm:$0xff]
    %v2851 = vld [vmem:[#allocation2 + $0x18] sm:$0xff]
    %v2852 = vld [vmem:[#allocation2 + $0x20] sm:$0xff]
    %v2853 = vld [vmem:[#allocation2 + $0x28] sm:$0xff]
    %v2854 = vld [vmem:[#allocation2 + $0x30] sm:$0xff]
    %v2855 = vld [vmem:[#allocation2 + $0x38] sm:$0xff]
    %v2856 = vpack.c.bf16 %v2848, %v2848
    %v2857 = vpack.c.bf16 %v2849, %v2849
    %v2858 = vpack.c.bf16 %v2850, %v2850
    %v2859 = vpack.c.bf16 %v2851, %v2851
    %v2860 = vpack.c.bf16 %v2852, %v2852
    %v2861 = vpack.c.bf16 %v2853, %v2853
    %v2862 = vpack.c.bf16 %v2854, %v2854
    %v2863 = vpack.c.bf16 %v2855, %v2855
    %2872 = vrot.lane.b32.xlu0 %v2856, 1
    %v2873 = vpop.permute.xlu0 %2872
    %2874 = vrot.lane.b32.xlu0 %v2857, 1
    %v2875 = vpop.permute.xlu0 %2874
    %2876 = vrot.lane.b32.xlu0 %v2858, 1
    %v2877 = vpop.permute.xlu0 %2876
    %2878 = vrot.lane.b32.xlu0 %v2859, 1
    %v2879 = vpop.permute.xlu0 %2878
    %2880 = vrot.lane.b32.xlu0 %v2860, 1
    %v2881 = vpop.permute.xlu0 %2880
    %2882 = vrot.lane.b32.xlu0 %v2861, 1
    %v2883 = vpop.permute.xlu0 %2882
    %2884 = vrot.lane.b32.xlu0 %v2862, 1
    %v2885 = vpop.permute.xlu0 %2884
    %2886 = vrot.lane.b32.xlu0 %v2863, 1
    %v2887 = vpop.permute.xlu0 %2886
    %vm2896 = vcmask 306184
    %2897 = vst.msk [vmem:[#allocation3 + $0x100] sm:$0xf] %vm2896, %v2873
    %2898 = vst.msk [vmem:[#allocation3 + $0x104] sm:$0xf] %vm2896, %v2875
    %2899 = vst.msk [vmem:[#allocation3 + $0x108] sm:$0xf] %vm2896, %v2877
    %2900 = vst.msk [vmem:[#allocation3 + $0x10c] sm:$0xf] %vm2896, %v2879
    %2901 = vst.msk [vmem:[#allocation3 + $0x110] sm:$0xf] %vm2896, %v2881
    %2902 = vst.msk [vmem:[#allocation3 + $0x114] sm:$0xf] %vm2896, %v2883
    %2903 = vst.msk [vmem:[#allocation3 + $0x118] sm:$0xf] %vm2896, %v2885
    %2904 = vst.msk [vmem:[#allocation3 + $0x11c] sm:$0xf] %vm2896, %v2887
    %vm2905 = vcmask 380272
    %2906 = vst.msk [vmem:[#allocation3 + $0x100] sm:$0xf] %vm2905, 0
    %2907 = vst.msk [vmem:[#allocation3 + $0x104] sm:$0xf] %vm2905, 0
    %2908 = vst.msk [vmem:[#allocation3 + $0x108] sm:$0xf] %vm2905, 0
    %2909 = vst.msk [vmem:[#allocation3 + $0x10c] sm:$0xf] %vm2905, 0
    %2910 = vst.msk [vmem:[#allocation3 + $0x110] sm:$0xf] %vm2905, 0
    %2911 = vst.msk [vmem:[#allocation3 + $0x114] sm:$0xf] %vm2905, 0
    %2912 = vst.msk [vmem:[#allocation3 + $0x118] sm:$0xf] %vm2905, 0
    %2913 = vst.msk [vmem:[#allocation3 + $0x11c] sm:$0xf] %vm2905, 0
    %vm2914 = vcmask 749216
    %2915 = vst.msk [vmem:[#allocation3 + $0x100] sm:$0xf] %vm2914, 0
    %2916 = vst.msk [vmem:[#allocation3 + $0x104] sm:$0xf] %vm2914, 0
    %2917 = vst.msk [vmem:[#allocation3 + $0x108] sm:$0xf] %vm2914, 0
    %2918 = vst.msk [vmem:[#allocation3 + $0x10c] sm:$0xf] %vm2914, 0
    %2919 = vst.msk [vmem:[#allocation3 + $0x110] sm:$0xf] %vm2914, 0
    %2920 = vst.msk [vmem:[#allocation3 + $0x114] sm:$0xf] %vm2914, 0
    %2921 = vst.msk [vmem:[#allocation3 + $0x118] sm:$0xf] %vm2914, 0
    %2922 = vst.msk [vmem:[#allocation3 + $0x11c] sm:$0xf] %vm2914, 0
    %v2923 = vld [vmem:[#allocation2] sm:$0xff]
    %v2924 = vld [vmem:[#allocation2 + $0x8] sm:$0xff]
    %v2925 = vld [vmem:[#allocation2 + $0x10] sm:$0xff]
    %v2926 = vld [vmem:[#allocation2 + $0x18] sm:$0xff]
    %v2927 = vld [vmem:[#allocation2 + $0x20] sm:$0xff]
    %v2928 = vld [vmem:[#allocation2 + $0x28] sm:$0xff]
    %v2929 = vld [vmem:[#allocation2 + $0x30] sm:$0xff]
    %v2930 = vld [vmem:[#allocation2 + $0x38] sm:$0xff]
    %v2931 = vpack.c.bf16 %v2923, %v2923
    %v2932 = vpack.c.bf16 %v2924, %v2924
    %v2933 = vpack.c.bf16 %v2925, %v2925
    %v2934 = vpack.c.bf16 %v2926, %v2926
    %v2935 = vpack.c.bf16 %v2927, %v2927
    %v2936 = vpack.c.bf16 %v2928, %v2928
    %v2937 = vpack.c.bf16 %v2929, %v2929
    %v2938 = vpack.c.bf16 %v2930, %v2930
    %2947 = vrot.lane.b32.xlu0 %v2931, 10
    %v2948 = vpop.permute.xlu0 %2947
    %2949 = vrot.lane.b32.xlu0 %v2932, 10
    %v2950 = vpop.permute.xlu0 %2949
    %2951 = vrot.lane.b32.xlu0 %v2933, 10
    %v2952 = vpop.permute.xlu0 %2951
    %2953 = vrot.lane.b32.xlu0 %v2934, 10
    %v2954 = vpop.permute.xlu0 %2953
    %2955 = vrot.lane.b32.xlu0 %v2935, 10
    %v2956 = vpop.permute.xlu0 %2955
    %2957 = vrot.lane.b32.xlu0 %v2936, 10
    %v2958 = vpop.permute.xlu0 %2957
    %2959 = vrot.lane.b32.xlu0 %v2937, 10
    %v2960 = vpop.permute.xlu0 %2959
    %2961 = vrot.lane.b32.xlu0 %v2938, 10
    %v2962 = vpop.permute.xlu0 %2961
    %vm2971 = vcmask 683384
    %2972 = vst.msk [vmem:[#allocation3 + $0x100] sm:$0xf] %vm2971, %v2948
    %2973 = vst.msk [vmem:[#allocation3 + $0x104] sm:$0xf] %vm2971, %v2950
    %2974 = vst.msk [vmem:[#allocation3 + $0x108] sm:$0xf] %vm2971, %v2952
    %2975 = vst.msk [vmem:[#allocation3 + $0x10c] sm:$0xf] %vm2971, %v2954
    %2976 = vst.msk [vmem:[#allocation3 + $0x110] sm:$0xf] %vm2971, %v2956
    %2977 = vst.msk [vmem:[#allocation3 + $0x114] sm:$0xf] %vm2971, %v2958
    %2978 = vst.msk [vmem:[#allocation3 + $0x118] sm:$0xf] %vm2971, %v2960
    %2979 = vst.msk [vmem:[#allocation3 + $0x11c] sm:$0xf] %vm2971, %v2962
    %vm2980 = vcmask 372008
    %2981 = vst.msk [vmem:[#allocation3 + $0x120] sm:$0xf] %vm2980, 0
    %2982 = vst.msk [vmem:[#allocation3 + $0x124] sm:$0xf] %vm2980, 0
    %2983 = vst.msk [vmem:[#allocation3 + $0x128] sm:$0xf] %vm2980, 0
    %2984 = vst.msk [vmem:[#allocation3 + $0x12c] sm:$0xf] %vm2980, 0
    %2985 = vst.msk [vmem:[#allocation3 + $0x130] sm:$0xf] %vm2980, 0
    %2986 = vst.msk [vmem:[#allocation3 + $0x134] sm:$0xf] %vm2980, 0
    %2987 = vst.msk [vmem:[#allocation3 + $0x138] sm:$0xf] %vm2980, 0
    %2988 = vst.msk [vmem:[#allocation3 + $0x13c] sm:$0xf] %vm2980, 0
    %v2989 = vld [vmem:[#allocation2] sm:$0xff]
    %v2990 = vld [vmem:[#allocation2 + $0x8] sm:$0xff]
    %v2991 = vld [vmem:[#allocation2 + $0x10] sm:$0xff]
    %v2992 = vld [vmem:[#allocation2 + $0x18] sm:$0xff]
    %v2993 = vld [vmem:[#allocation2 + $0x20] sm:$0xff]
    %v2994 = vld [vmem:[#allocation2 + $0x28] sm:$0xff]
    %v2995 = vld [vmem:[#allocation2 + $0x30] sm:$0xff]
    %v2996 = vld [vmem:[#allocation2 + $0x38] sm:$0xff]
    %v2997 = vpack.c.bf16 %v2989, %v2989
    %v2998 = vpack.c.bf16 %v2990, %v2990
    %v2999 = vpack.c.bf16 %v2991, %v2991
    %v3000 = vpack.c.bf16 %v2992, %v2992
    %v3001 = vpack.c.bf16 %v2993, %v2993
    %v3002 = vpack.c.bf16 %v2994, %v2994
    %v3003 = vpack.c.bf16 %v2995, %v2995
    %v3004 = vpack.c.bf16 %v2996, %v2996
    %3005 = vst.msk [vmem:[#allocation3 + $0x120] sm:$0xf] %vm710, %v2997
    %3006 = vst.msk [vmem:[#allocation3 + $0x124] sm:$0xf] %vm710, %v2998
    %3007 = vst.msk [vmem:[#allocation3 + $0x128] sm:$0xf] %vm710, %v2999
    %3008 = vst.msk [vmem:[#allocation3 + $0x12c] sm:$0xf] %vm710, %v3000
    %3009 = vst.msk [vmem:[#allocation3 + $0x130] sm:$0xf] %vm710, %v3001
    %3010 = vst.msk [vmem:[#allocation3 + $0x134] sm:$0xf] %vm710, %v3002
    %3011 = vst.msk [vmem:[#allocation3 + $0x138] sm:$0xf] %vm710, %v3003
    %3012 = vst.msk [vmem:[#allocation3 + $0x13c] sm:$0xf] %vm710, %v3004
    %vm3013 = vcmask 749208
    %3014 = vst.msk [vmem:[#allocation3 + $0x120] sm:$0xf] %vm3013, 0
    %3015 = vst.msk [vmem:[#allocation3 + $0x124] sm:$0xf] %vm3013, 0
    %3016 = vst.msk [vmem:[#allocation3 + $0x128] sm:$0xf] %vm3013, 0
    %3017 = vst.msk [vmem:[#allocation3 + $0x12c] sm:$0xf] %vm3013, 0
    %3018 = vst.msk [vmem:[#allocation3 + $0x130] sm:$0xf] %vm3013, 0
    %3019 = vst.msk [vmem:[#allocation3 + $0x134] sm:$0xf] %vm3013, 0
    %3020 = vst.msk [vmem:[#allocation3 + $0x138] sm:$0xf] %vm3013, 0
    %3021 = vst.msk [vmem:[#allocation3 + $0x13c] sm:$0xf] %vm3013, 0
    %v3022 = vld [vmem:[#allocation2] sm:$0xff]
    %v3023 = vld [vmem:[#allocation2 + $0x8] sm:$0xff]
    %v3024 = vld [vmem:[#allocation2 + $0x10] sm:$0xff]
    %v3025 = vld [vmem:[#allocation2 + $0x18] sm:$0xff]
    %v3026 = vld [vmem:[#allocation2 + $0x20] sm:$0xff]
    %v3027 = vld [vmem:[#allocation2 + $0x28] sm:$0xff]
    %v3028 = vld [vmem:[#allocation2 + $0x30] sm:$0xff]
    %v3029 = vld [vmem:[#allocation2 + $0x38] sm:$0xff]
    %v3030 = vpack.c.bf16 %v3022, %v3022
    %v3031 = vpack.c.bf16 %v3023, %v3023
    %v3032 = vpack.c.bf16 %v3024, %v3024
    %v3033 = vpack.c.bf16 %v3025, %v3025
    %v3034 = vpack.c.bf16 %v3026, %v3026
    %v3035 = vpack.c.bf16 %v3027, %v3027
    %v3036 = vpack.c.bf16 %v3028, %v3028
    %v3037 = vpack.c.bf16 %v3029, %v3029
    %3046 = vrot.lane.b32.xlu0 %v3030, 9
    %v3047 = vpop.permute.xlu0 %3046
    %3048 = vrot.lane.b32.xlu0 %v3031, 9
    %v3049 = vpop.permute.xlu0 %3048
    %3050 = vrot.lane.b32.xlu0 %v3032, 9
    %v3051 = vpop.permute.xlu0 %3050
    %3052 = vrot.lane.b32.xlu0 %v3033, 9
    %v3053 = vpop.permute.xlu0 %3052
    %3054 = vrot.lane.b32.xlu0 %v3034, 9
    %v3055 = vpop.permute.xlu0 %3054
    %3056 = vrot.lane.b32.xlu0 %v3035, 9
    %v3057 = vpop.permute.xlu0 %3056
    %3058 = vrot.lane.b32.xlu0 %v3036, 9
    %v3059 = vpop.permute.xlu0 %3058
    %3060 = vrot.lane.b32.xlu0 %v3037, 9
    %v3061 = vpop.permute.xlu0 %3060
    %vm3070 = vcmask 675184
    %3071 = vst.msk [vmem:[#allocation3 + $0x120] sm:$0xf] %vm3070, %v3047
    %3072 = vst.msk [vmem:[#allocation3 + $0x124] sm:$0xf] %vm3070, %v3049
    %3073 = vst.msk [vmem:[#allocation3 + $0x128] sm:$0xf] %vm3070, %v3051
    %3074 = vst.msk [vmem:[#allocation3 + $0x12c] sm:$0xf] %vm3070, %v3053
    %3075 = vst.msk [vmem:[#allocation3 + $0x130] sm:$0xf] %vm3070, %v3055
    %3076 = vst.msk [vmem:[#allocation3 + $0x134] sm:$0xf] %vm3070, %v3057
    %3077 = vst.msk [vmem:[#allocation3 + $0x138] sm:$0xf] %vm3070, %v3059
    %3078 = vst.msk [vmem:[#allocation3 + $0x13c] sm:$0xf] %vm3070, %v3061
    %v3079 = vld [vmem:[#allocation4 + $0x118] sm:$0xff]
    %v3080 = vld [vmem:[#allocation4 + $0x120] sm:$0xff]
    %v3081 = vld [vmem:[#allocation4 + $0x128] sm:$0xf]
    %v3082 = vld [vmem:[#allocation4 + $0x12c] sm:$0xff]
    %v3083 = vld [vmem:[#allocation4 + $0x134] sm:$0xff]
    %v3084 = vld [vmem:[#allocation4 + $0x13c] sm:$0xf]
    %v3085 = vld [vmem:[#allocation4 + $0x140] sm:$0xff]
    %v3086 = vld [vmem:[#allocation4 + $0x148] sm:$0xff]
    %v3087 = vld [vmem:[#allocation4 + $0x150] sm:$0xf]
    %v3088 = vld [vmem:[#allocation4 + $0x154] sm:$0xff]
    %v3089 = vld [vmem:[#allocation4 + $0x15c] sm:$0xff]
    %v3090 = vld [vmem:[#allocation4 + $0x164] sm:$0xf]
    %v3091 = vld [vmem:[#allocation3] sm:$0xf]
    %v3092 = vld [vmem:[#allocation3 + $0x4] sm:$0xf]
    %v3093 = vld [vmem:[#allocation3 + $0x8] sm:$0xf]
    %v3094 = vld [vmem:[#allocation3 + $0xc] sm:$0xf]
    %v3095 = vld [vmem:[#allocation3 + $0x10] sm:$0xf]
    %v3096 = vld [vmem:[#allocation3 + $0x14] sm:$0xf]
    %v3097 = vld [vmem:[#allocation3 + $0x18] sm:$0xf]
    %v3098 = vld [vmem:[#allocation3 + $0x1c] sm:$0xf]
    %v3099 = vld [vmem:[#allocation3 + $0x20] sm:$0xf]
    %v3100 = vld [vmem:[#allocation3 + $0x24] sm:$0xf]
    %v3101 = vld [vmem:[#allocation3 + $0x28] sm:$0xf]
    %v3102 = vld [vmem:[#allocation3 + $0x2c] sm:$0xf]
    %v3103 = vld [vmem:[#allocation3 + $0x30] sm:$0xf]
    %v3104 = vld [vmem:[#allocation3 + $0x34] sm:$0xf]
    %v3105 = vld [vmem:[#allocation3 + $0x38] sm:$0xf]
    %v3106 = vld [vmem:[#allocation3 + $0x3c] sm:$0xf]
    %v3107 = vld [vmem:[#allocation3 + $0x40] sm:$0xf]
    %v3108 = vld [vmem:[#allocation3 + $0x44] sm:$0xf]
    %v3109 = vld [vmem:[#allocation3 + $0x48] sm:$0xf]
    %v3110 = vld [vmem:[#allocation3 + $0x4c] sm:$0xf]
    %v3111 = vld [vmem:[#allocation3 + $0x50] sm:$0xf]
    %v3112 = vld [vmem:[#allocation3 + $0x54] sm:$0xf]
    %v3113 = vld [vmem:[#allocation3 + $0x58] sm:$0xf]
    %v3114 = vld [vmem:[#allocation3 + $0x5c] sm:$0xf]
    %v3115 = vld [vmem:[#allocation3 + $0x60] sm:$0xf]
    %v3116 = vld [vmem:[#allocation3 + $0x64] sm:$0xf]
    %v3117 = vld [vmem:[#allocation3 + $0x68] sm:$0xf]
    %v3118 = vld [vmem:[#allocation3 + $0x6c] sm:$0xf]
    %v3119 = vld [vmem:[#allocation3 + $0x70] sm:$0xf]
    %v3120 = vld [vmem:[#allocation3 + $0x74] sm:$0xf]
    %v3121 = vld [vmem:[#allocation3 + $0x78] sm:$0xf]
    %v3122 = vld [vmem:[#allocation3 + $0x7c] sm:$0xf]
    %v3123 = vld [vmem:[#allocation3 + $0x80] sm:$0xf]
    %v3124 = vld [vmem:[#allocation3 + $0x84] sm:$0xf]
    %v3125 = vld [vmem:[#allocation3 + $0x88] sm:$0xf]
    %v3126 = vld [vmem:[#allocation3 + $0x8c] sm:$0xf]
    %v3127 = vld [vmem:[#allocation3 + $0x90] sm:$0xf]
    %v3128 = vld [vmem:[#allocation3 + $0x94] sm:$0xf]
    %v3129 = vld [vmem:[#allocation3 + $0x98] sm:$0xf]
    %v3130 = vld [vmem:[#allocation3 + $0x9c] sm:$0xf]
    %v3131 = vld [vmem:[#allocation3 + $0xa0] sm:$0xf]
    %v3132 = vld [vmem:[#allocation3 + $0xa4] sm:$0xf]
    %v3133 = vld [vmem:[#allocation3 + $0xa8] sm:$0xf]
    %v3134 = vld [vmem:[#allocation3 + $0xac] sm:$0xf]
    %v3135 = vld [vmem:[#allocation3 + $0xb0] sm:$0xf]
    %v3136 = vld [vmem:[#allocation3 + $0xb4] sm:$0xf]
    %v3137 = vld [vmem:[#allocation3 + $0xb8] sm:$0xf]
    %v3138 = vld [vmem:[#allocation3 + $0xbc] sm:$0xf]
    %v3139 = vld [vmem:[#allocation3 + $0xc0] sm:$0xf]
    %v3140 = vld [vmem:[#allocation3 + $0xc4] sm:$0xf]
    %v3141 = vld [vmem:[#allocation3 + $0xc8] sm:$0xf]
    %v3142 = vld [vmem:[#allocation3 + $0xcc] sm:$0xf]
    %v3143 = vld [vmem:[#allocation3 + $0xd0] sm:$0xf]
    %v3144 = vld [vmem:[#allocation3 + $0xd4] sm:$0xf]
    %v3145 = vld [vmem:[#allocation3 + $0xd8] sm:$0xf]
    %v3146 = vld [vmem:[#allocation3 + $0xdc] sm:$0xf]
    %v3147 = vld [vmem:[#allocation3 + $0xe0] sm:$0xf]
    %v3148 = vld [vmem:[#allocation3 + $0xe4] sm:$0xf]
    %v3149 = vld [vmem:[#allocation3 + $0xe8] sm:$0xf]
    %v3150 = vld [vmem:[#allocation3 + $0xec] sm:$0xf]
    %v3151 = vld [vmem:[#allocation3 + $0xf0] sm:$0xf]
    %v3152 = vld [vmem:[#allocation3 + $0xf4] sm:$0xf]
    %v3153 = vld [vmem:[#allocation3 + $0xf8] sm:$0xf]
    %v3154 = vld [vmem:[#allocation3 + $0xfc] sm:$0xf]
    %v3155 = vld [vmem:[#allocation3 + $0x100] sm:$0xf]
    %v3156 = vld [vmem:[#allocation3 + $0x104] sm:$0xf]
    %v3157 = vld [vmem:[#allocation3 + $0x108] sm:$0xf]
    %v3158 = vld [vmem:[#allocation3 + $0x10c] sm:$0xf]
    %v3159 = vld [vmem:[#allocation3 + $0x110] sm:$0xf]
    %v3160 = vld [vmem:[#allocation3 + $0x114] sm:$0xf]
    %v3161 = vld [vmem:[#allocation3 + $0x118] sm:$0xf]
    %v3162 = vld [vmem:[#allocation3 + $0x11c] sm:$0xf]
    %v3163 = vld [vmem:[#allocation3 + $0x120] sm:$0xf]
    %v3164 = vld [vmem:[#allocation3 + $0x124] sm:$0xf]
    %v3165 = vld [vmem:[#allocation3 + $0x128] sm:$0xf]
    %v3166 = vld [vmem:[#allocation3 + $0x12c] sm:$0xf]
    %v3167 = vld [vmem:[#allocation3 + $0x130] sm:$0xf]
    %v3168 = vld [vmem:[#allocation3 + $0x134] sm:$0xf]
    %v3169 = vld [vmem:[#allocation3 + $0x138] sm:$0xf]
    %v3170 = vld [vmem:[#allocation3 + $0x13c] sm:$0xf]
    %v3171 = vld [vmem:[%s2] sm:$0xff]
    %v3172 = vld [vmem:[%s2 + $0x8] sm:$0xff]
    %v3173 = vld [vmem:[%s2 + $0x10] sm:$0xff]
    %v3174 = vld [vmem:[%s2 + $0x18] sm:$0xff]
    %3176 = vset.pattern.permute.xlu0 3
    %3177 = vperm.xlu0 %3176, %v3171
    %v3178 = vpop.permute.xlu0 %3177
    %3181 = vset.pattern.permute.xlu0 3
    %3182 = vperm.xlu0 %3181, %v3172
    %v3183 = vpop.permute.xlu0 %3182
    %3186 = vset.pattern.permute.xlu0 3
    %3187 = vperm.xlu0 %3186, %v3173
    %v3188 = vpop.permute.xlu0 %3187
    %3191 = vset.pattern.permute.xlu0 3
    %3192 = vperm.xlu0 %3191, %v3174
    %v3193 = vpop.permute.xlu0 %3192
    %v3207 = vunpack.c.l.b16 %v3079
    %v3208 = vunpack.c.h.b16 %v3079
    %v3209 = vunpack.c.l.b16 %v3080
    %v3210 = vunpack.c.h.b16 %v3080
    %v3211 = vunpack.c.l.b16 %v3081
    %v3212 = vunpack.c.l.b16 %v3082
    %v3213 = vunpack.c.h.b16 %v3082
    %v3214 = vunpack.c.l.b16 %v3083
    %v3215 = vunpack.c.h.b16 %v3083
    %v3216 = vunpack.c.l.b16 %v3084
    %v3217 = vunpack.c.l.b16 %v3085
    %v3218 = vunpack.c.h.b16 %v3085
    %v3219 = vunpack.c.l.b16 %v3086
    %v3220 = vunpack.c.h.b16 %v3086
    %v3221 = vunpack.c.l.b16 %v3087
    %v3222 = vunpack.c.l.b16 %v3088
    %v3223 = vunpack.c.h.b16 %v3088
    %v3224 = vunpack.c.l.b16 %v3089
    %v3225 = vunpack.c.h.b16 %v3089
    %v3226 = vunpack.c.l.b16 %v3090
    %v3227 = vpack.c.b16 %v3212, %v3207
    %v3228 = vpack.c.b16 %v3213, %v3208
    %v3229 = vpack.c.b16 %v3214, %v3209
    %v3230 = vpack.c.b16 %v3215, %v3210
    %v3231 = vpack.c.b16 %v3216, %v3211
    %v3232 = vpack.c.b16 %v3222, %v3217
    %v3233 = vpack.c.b16 %v3223, %v3218
    %v3234 = vpack.c.b16 %v3224, %v3219
    %v3235 = vpack.c.b16 %v3225, %v3220
    %v3236 = vpack.c.b16 %v3226, %v3221
    %v3327 = vunpack.c.l.b16 %v3091
    %v3328 = vunpack.c.l.b16 %v3092
    %v3329 = vunpack.c.l.b16 %v3093
    %v3330 = vunpack.c.l.b16 %v3094
    %v3331 = vunpack.c.l.b16 %v3095
    %v3332 = vunpack.c.l.b16 %v3096
    %v3333 = vunpack.c.l.b16 %v3097
    %v3334 = vunpack.c.l.b16 %v3098
    %v3335 = vunpack.c.l.b16 %v3099
    %v3336 = vunpack.c.l.b16 %v3100
    %v3337 = vunpack.c.l.b16 %v3101
    %v3338 = vunpack.c.l.b16 %v3102
    %v3339 = vunpack.c.l.b16 %v3103
    %v3340 = vunpack.c.l.b16 %v3104
    %v3341 = vunpack.c.l.b16 %v3105
    %v3342 = vunpack.c.l.b16 %v3106
    %v3343 = vunpack.c.l.b16 %v3107
    %v3344 = vunpack.c.l.b16 %v3108
    %v3345 = vunpack.c.l.b16 %v3109
    %v3346 = vunpack.c.l.b16 %v3110
    %v3347 = vunpack.c.l.b16 %v3111
    %v3348 = vunpack.c.l.b16 %v3112
    %v3349 = vunpack.c.l.b16 %v3113
    %v3350 = vunpack.c.l.b16 %v3114
    %v3351 = vunpack.c.l.b16 %v3115
    %v3352 = vunpack.c.l.b16 %v3116
    %v3353 = vunpack.c.l.b16 %v3117
    %v3354 = vunpack.c.l.b16 %v3118
    %v3355 = vunpack.c.l.b16 %v3119
    %v3356 = vunpack.c.l.b16 %v3120
    %v3357 = vunpack.c.l.b16 %v3121
    %v3358 = vunpack.c.l.b16 %v3122
    %v3359 = vunpack.c.l.b16 %v3123
    %v3360 = vunpack.c.l.b16 %v3124
    %v3361 = vunpack.c.l.b16 %v3125
    %v3362 = vunpack.c.l.b16 %v3126
    %v3363 = vunpack.c.l.b16 %v3127
    %v3364 = vunpack.c.l.b16 %v3128
    %v3365 = vunpack.c.l.b16 %v3129
    %v3366 = vunpack.c.l.b16 %v3130
    %v3367 = vunpack.c.l.b16 %v3131
    %v3368 = vunpack.c.l.b16 %v3132
    %v3369 = vunpack.c.l.b16 %v3133
    %v3370 = vunpack.c.l.b16 %v3134
    %v3371 = vunpack.c.l.b16 %v3135
    %v3372 = vunpack.c.l.b16 %v3136
    %v3373 = vunpack.c.l.b16 %v3137
    %v3374 = vunpack.c.l.b16 %v3138
    %v3375 = vunpack.c.l.b16 %v3139
    %v3376 = vunpack.c.l.b16 %v3140
    %v3377 = vunpack.c.l.b16 %v3141
    %v3378 = vunpack.c.l.b16 %v3142
    %v3379 = vunpack.c.l.b16 %v3143
    %v3380 = vunpack.c.l.b16 %v3144
    %v3381 = vunpack.c.l.b16 %v3145
    %v3382 = vunpack.c.l.b16 %v3146
    %v3383 = vunpack.c.l.b16 %v3147
    %v3384 = vunpack.c.l.b16 %v3148
    %v3385 = vunpack.c.l.b16 %v3149
    %v3386 = vunpack.c.l.b16 %v3150
    %v3387 = vunpack.c.l.b16 %v3151
    %v3388 = vunpack.c.l.b16 %v3152
    %v3389 = vunpack.c.l.b16 %v3153
    %v3390 = vunpack.c.l.b16 %v3154
    %v3391 = vunpack.c.l.b16 %v3155
    %v3392 = vunpack.c.l.b16 %v3156
    %v3393 = vunpack.c.l.b16 %v3157
    %v3394 = vunpack.c.l.b16 %v3158
    %v3395 = vunpack.c.l.b16 %v3159
    %v3396 = vunpack.c.l.b16 %v3160
    %v3397 = vunpack.c.l.b16 %v3161
    %v3398 = vunpack.c.l.b16 %v3162
    %v3399 = vunpack.c.l.b16 %v3163
    %v3400 = vunpack.c.l.b16 %v3164
    %v3401 = vunpack.c.l.b16 %v3165
    %v3402 = vunpack.c.l.b16 %v3166
    %v3403 = vunpack.c.l.b16 %v3167
    %v3404 = vunpack.c.l.b16 %v3168
    %v3405 = vunpack.c.l.b16 %v3169
    %v3406 = vunpack.c.l.b16 %v3170
    %v3407 = vpack.c.b16 %v3328, %v3327
    %v3408 = vpack.c.b16 %v3330, %v3329
    %v3409 = vpack.c.b16 %v3332, %v3331
    %v3410 = vpack.c.b16 %v3334, %v3333
    %v3411 = vpack.c.b16 %v3336, %v3335
    %v3412 = vpack.c.b16 %v3338, %v3337
    %v3413 = vpack.c.b16 %v3340, %v3339
    %v3414 = vpack.c.b16 %v3342, %v3341
    %v3415 = vpack.c.b16 %v3344, %v3343
    %v3416 = vpack.c.b16 %v3346, %v3345
    %v3417 = vpack.c.b16 %v3348, %v3347
    %v3418 = vpack.c.b16 %v3350, %v3349
    %v3419 = vpack.c.b16 %v3352, %v3351
    %v3420 = vpack.c.b16 %v3354, %v3353
    %v3421 = vpack.c.b16 %v3356, %v3355
    %v3422 = vpack.c.b16 %v3358, %v3357
    %v3423 = vpack.c.b16 %v3360, %v3359
    %v3424 = vpack.c.b16 %v3362, %v3361
    %v3425 = vpack.c.b16 %v3364, %v3363
    %v3426 = vpack.c.b16 %v3366, %v3365
    %v3427 = vpack.c.b16 %v3368, %v3367
    %v3428 = vpack.c.b16 %v3370, %v3369
    %v3429 = vpack.c.b16 %v3372, %v3371
    %v3430 = vpack.c.b16 %v3374, %v3373
    %v3431 = vpack.c.b16 %v3376, %v3375
    %v3432 = vpack.c.b16 %v3378, %v3377
    %v3433 = vpack.c.b16 %v3380, %v3379
    %v3434 = vpack.c.b16 %v3382, %v3381
    %v3435 = vpack.c.b16 %v3384, %v3383
    %v3436 = vpack.c.b16 %v3386, %v3385
    %v3437 = vpack.c.b16 %v3388, %v3387
    %v3438 = vpack.c.b16 %v3390, %v3389
    %v3439 = vpack.c.b16 %v3392, %v3391
    %v3440 = vpack.c.b16 %v3394, %v3393
    %v3441 = vpack.c.b16 %v3396, %v3395
    %v3442 = vpack.c.b16 %v3398, %v3397
    %v3443 = vpack.c.b16 %v3400, %v3399
    %v3444 = vpack.c.b16 %v3402, %v3401
    %v3445 = vpack.c.b16 %v3404, %v3403
    %v3446 = vpack.c.b16 %v3406, %v3405
    %3487 = vmatpush.bf16.msra.mxu0 %v3414
    %3488 = vmatpush.bf16.msra.mxu0 %v3413
    %3489 = vmatpush.bf16.msra.mxu0 %v3412
    %3490 = vmatpush.bf16.msra.mxu0 %v3411
    %3491 = vmatpush.bf16.msra.mxu0 %v3410
    %3492 = vmatpush.bf16.msra.mxu0 %v3409
    %3493 = vmatpush.bf16.msra.mxu0 %v3408
    %3494 = vmatpush.bf16.msra.mxu0 %v3407
    %3495 = vmatmul.bf16.gmra.mxu0 %v3227
    %v3496 = vpop.f32.mrf.mxu0
    %v3497 = vadd.f32 %v3178, %v3496
    %v3498 = vpop.f32.mrf.mxu0
    %v3499 = vadd.f32 %v3183, %v3498
    %3500 = vmatmul.bf16.gmra.mxu0 %v3232
    %v3501 = vpop.f32.mrf.mxu0
    %v3502 = vadd.f32 %v3188, %v3501
    %v3503 = vpop.f32.mrf.mxu0
    %v3504 = vadd.f32 %v3193, %v3503
    %3505 = vdwg.mxu0
    %3506 = vmatpush.bf16.msra.mxu0 %v3422
    %3507 = vmatpush.bf16.msra.mxu0 %v3421
    %3508 = vmatpush.bf16.msra.mxu0 %v3420
    %3509 = vmatpush.bf16.msra.mxu0 %v3419
    %3510 = vmatpush.bf16.msra.mxu0 %v3418
    %3511 = vmatpush.bf16.msra.mxu0 %v3417
    %3512 = vmatpush.bf16.msra.mxu0 %v3416
    %3513 = vmatpush.bf16.msra.mxu0 %v3415
    %3514 = vmatmul.bf16.gmra.mxu0 %v3228
    %v3515 = vpop.f32.mrf.mxu0
    %v3516 = vadd.f32 %v3497, %v3515
    %v3517 = vpop.f32.mrf.mxu0
    %v3518 = vadd.f32 %v3499, %v3517
    %3519 = vmatmul.bf16.gmra.mxu0 %v3233
    %v3520 = vpop.f32.mrf.mxu0
    %v3521 = vadd.f32 %v3502, %v3520
    %v3522 = vpop.f32.mrf.mxu0
    %v3523 = vadd.f32 %v3504, %v3522
    %3524 = vdwg.mxu0
    %3525 = vmatpush.bf16.msra.mxu0 %v3430
    %3526 = vmatpush.bf16.msra.mxu0 %v3429
    %3527 = vmatpush.bf16.msra.mxu0 %v3428
    %3528 = vmatpush.bf16.msra.mxu0 %v3427
    %3529 = vmatpush.bf16.msra.mxu0 %v3426
    %3530 = vmatpush.bf16.msra.mxu0 %v3425
    %3531 = vmatpush.bf16.msra.mxu0 %v3424
    %3532 = vmatpush.bf16.msra.mxu0 %v3423
    %3533 = vmatmul.bf16.gmra.mxu0 %v3229
    %v3534 = vpop.f32.mrf.mxu0
    %v3535 = vadd.f32 %v3516, %v3534
    %v3536 = vpop.f32.mrf.mxu0
    %v3537 = vadd.f32 %v3518, %v3536
    %3538 = vmatmul.bf16.gmra.mxu0 %v3234
    %v3539 = vpop.f32.mrf.mxu0
    %v3540 = vadd.f32 %v3521, %v3539
    %v3541 = vpop.f32.mrf.mxu0
    %v3542 = vadd.f32 %v3523, %v3541
    %3543 = vdwg.mxu0
    %3544 = vmatpush.bf16.msra.mxu0 %v3438
    %3545 = vmatpush.bf16.msra.mxu0 %v3437
    %3546 = vmatpush.bf16.msra.mxu0 %v3436
    %3547 = vmatpush.bf16.msra.mxu0 %v3435
    %3548 = vmatpush.bf16.msra.mxu0 %v3434
    %3549 = vmatpush.bf16.msra.mxu0 %v3433
    %3550 = vmatpush.bf16.msra.mxu0 %v3432
    %3551 = vmatpush.bf16.msra.mxu0 %v3431
    %3552 = vmatmul.bf16.gmra.mxu0 %v3230
    %v3553 = vpop.f32.mrf.mxu0
    %v3554 = vadd.f32 %v3535, %v3553
    %v3555 = vpop.f32.mrf.mxu0
    %v3556 = vadd.f32 %v3537, %v3555
    %3557 = vmatmul.bf16.gmra.mxu0 %v3235
    %v3558 = vpop.f32.mrf.mxu0
    %v3559 = vadd.f32 %v3540, %v3558
    %v3560 = vpop.f32.mrf.mxu0
    %v3561 = vadd.f32 %v3542, %v3560
    %3562 = vdwg.mxu0
    %3563 = vmatpush.bf16.msra.mxu0 %v3446
    %3564 = vmatpush.bf16.msra.mxu0 %v3445
    %3565 = vmatpush.bf16.msra.mxu0 %v3444
    %3566 = vmatpush.bf16.msra.mxu0 %v3443
    %3567 = vmatpush.bf16.msra.mxu0 %v3442
    %3568 = vmatpush.bf16.msra.mxu0 %v3441
    %3569 = vmatpush.bf16.msra.mxu0 %v3440
    %3570 = vmatpush.bf16.msra.mxu0 %v3439
    %3571 = vmatmul.bf16.gmra.mxu0 %v3231
    %v3572 = vpop.f32.mrf.mxu0
    %v3573 = vadd.f32 %v3554, %v3572
    %v3574 = vpop.f32.mrf.mxu0
    %v3575 = vadd.f32 %v3556, %v3574
    %3576 = vmatmul.bf16.gmra.mxu0 %v3236
    %v3577 = vpop.f32.mrf.mxu0
    %v3578 = vadd.f32 %v3559, %v3577
    %v3579 = vpop.f32.mrf.mxu0
    %v3580 = vadd.f32 %v3561, %v3579
    %3581 = vdwg.mxu0
    %v3582 = vmax.f32 %v3573, 0.0
    %v3583 = vmax.f32 %v3575, 0.0
    %v3584 = vmax.f32 %v3578, 0.0
    %v3585 = vmax.f32 %v3580, 0.0
    %3586 = vst [vmem:[#allocation2] sm:$0xff] %v3582
    %3587 = vst [vmem:[#allocation2 + $0x8] sm:$0xff] %v3583
    %3588 = vst [vmem:[#allocation2 + $0x10] sm:$0xff] %v3584
    %3589 = vst [vmem:[#allocation2 + $0x18] sm:$0xff] %v3585
    %3590 = vst.msk [vmem:[#allocation3] sm:$0xf] %vm1648, 0
    %3591 = vst.msk [vmem:[#allocation3 + $0x4] sm:$0xf] %vm1648, 0
    %3592 = vst.msk [vmem:[#allocation3 + $0x8] sm:$0xf] %vm1648, 0
    %3593 = vst.msk [vmem:[#allocation3 + $0xc] sm:$0xf] %vm1648, 0
    %v3594 = vld [vmem:[#allocation2] sm:$0xff]
    %v3595 = vld [vmem:[#allocation2 + $0x8] sm:$0xff]
    %v3596 = vld [vmem:[#allocation2 + $0x10] sm:$0xff]
    %v3597 = vld [vmem:[#allocation2 + $0x18] sm:$0xff]
    %v3598 = vpack.c.bf16 %v3594, %v3594
    %v3599 = vpack.c.bf16 %v3595, %v3595
    %v3600 = vpack.c.bf16 %v3596, %v3596
    %v3601 = vpack.c.bf16 %v3597, %v3597
    %3606 = vrot.lane.b32.xlu0 %v3598, 9
    %v3607 = vpop.permute.xlu0 %3606
    %3608 = vrot.lane.b32.xlu0 %v3599, 9
    %v3609 = vpop.permute.xlu0 %3608
    %3610 = vrot.lane.b32.xlu0 %v3600, 9
    %v3611 = vpop.permute.xlu0 %3610
    %3612 = vrot.lane.b32.xlu0 %v3601, 9
    %v3613 = vpop.permute.xlu0 %3612
    %vm3618 = vcmask 445512
    %3619 = vst.msk [vmem:[#allocation3] sm:$0xf] %vm3618, %v3607
    %3620 = vst.msk [vmem:[#allocation3 + $0x4] sm:$0xf] %vm3618, %v3609
    %3621 = vst.msk [vmem:[#allocation3 + $0x8] sm:$0xf] %vm3618, %v3611
    %3622 = vst.msk [vmem:[#allocation3 + $0xc] sm:$0xf] %vm3618, %v3613
    %vm3623 = vcmask 519608
    %3624 = vst.msk [vmem:[#allocation3] sm:$0xf] %vm3623, 0
    %3625 = vst.msk [vmem:[#allocation3 + $0x4] sm:$0xf] %vm3623, 0
    %3626 = vst.msk [vmem:[#allocation3 + $0x8] sm:$0xf] %vm3623, 0
    %3627 = vst.msk [vmem:[#allocation3 + $0xc] sm:$0xf] %vm3623, 0
    %v3628 = vld [vmem:[#allocation2] sm:$0xff]
    %v3629 = vld [vmem:[#allocation2 + $0x8] sm:$0xff]
    %v3630 = vld [vmem:[#allocation2 + $0x10] sm:$0xff]
    %v3631 = vld [vmem:[#allocation2 + $0x18] sm:$0xff]
    %v3632 = vpack.c.bf16 %v3628, %v3628
    %v3633 = vpack.c.bf16 %v3629, %v3629
    %v3634 = vpack.c.bf16 %v3630, %v3630
    %v3635 = vpack.c.bf16 %v3631, %v3631
    %3640 = vrot.lane.b32.xlu0 %v3632, 18
    %v3641 = vpop.permute.xlu0 %3640
    %3642 = vrot.lane.b32.xlu0 %v3633, 18
    %v3643 = vpop.permute.xlu0 %3642
    %3644 = vrot.lane.b32.xlu0 %v3634, 18
    %v3645 = vpop.permute.xlu0 %3644
    %3646 = vrot.lane.b32.xlu0 %v3635, 18
    %v3647 = vpop.permute.xlu0 %3646
    %vm3652 = vcmask 896512
    %3653 = vst.msk [vmem:[#allocation3] sm:$0xf] %vm3652, %v3641
    %3654 = vst.msk [vmem:[#allocation3 + $0x4] sm:$0xf] %vm3652, %v3643
    %3655 = vst.msk [vmem:[#allocation3 + $0x8] sm:$0xf] %vm3652, %v3645
    %3656 = vst.msk [vmem:[#allocation3 + $0xc] sm:$0xf] %vm3652, %v3647
    %3657 = vst.msk [vmem:[#allocation3 + $0x10] sm:$0xf] %vm1780, 0
    %3658 = vst.msk [vmem:[#allocation3 + $0x14] sm:$0xf] %vm1780, 0
    %3659 = vst.msk [vmem:[#allocation3 + $0x18] sm:$0xf] %vm1780, 0
    %3660 = vst.msk [vmem:[#allocation3 + $0x1c] sm:$0xf] %vm1780, 0
    %vm3661 = vcmask 445872
    %3662 = vst.msk [vmem:[#allocation3 + $0x10] sm:$0xf] %vm3661, 0
    %3663 = vst.msk [vmem:[#allocation3 + $0x14] sm:$0xf] %vm3661, 0
    %3664 = vst.msk [vmem:[#allocation3 + $0x18] sm:$0xf] %vm3661, 0
    %3665 = vst.msk [vmem:[#allocation3 + $0x1c] sm:$0xf] %vm3661, 0
    %v3666 = vld [vmem:[#allocation2] sm:$0xff]
    %v3667 = vld [vmem:[#allocation2 + $0x8] sm:$0xff]
    %v3668 = vld [vmem:[#allocation2 + $0x10] sm:$0xff]
    %v3669 = vld [vmem:[#allocation2 + $0x18] sm:$0xff]
    %v3670 = vpack.c.bf16 %v3666, %v3666
    %v3671 = vpack.c.bf16 %v3667, %v3667
    %v3672 = vpack.c.bf16 %v3668, %v3668
    %v3673 = vpack.c.bf16 %v3669, %v3669
    %3678 = vrot.lane.b32.xlu0 %v3670, 8
    %v3679 = vpop.permute.xlu0 %3678
    %3680 = vrot.lane.b32.xlu0 %v3671, 8
    %v3681 = vpop.permute.xlu0 %3680
    %3682 = vrot.lane.b32.xlu0 %v3672, 8
    %v3683 = vpop.permute.xlu0 %3682
    %3684 = vrot.lane.b32.xlu0 %v3673, 8
    %v3685 = vpop.permute.xlu0 %3684
    %vm3690 = vcmask 437312
    %3691 = vst.msk [vmem:[#allocation3 + $0x10] sm:$0xf] %vm3690, %v3679
    %3692 = vst.msk [vmem:[#allocation3 + $0x14] sm:$0xf] %vm3690, %v3681
    %3693 = vst.msk [vmem:[#allocation3 + $0x18] sm:$0xf] %vm3690, %v3683
    %3694 = vst.msk [vmem:[#allocation3 + $0x1c] sm:$0xf] %vm3690, %v3685
    %vm3695 = vcmask 511416
    %3696 = vst.msk [vmem:[#allocation3 + $0x10] sm:$0xf] %vm3695, 0
    %3697 = vst.msk [vmem:[#allocation3 + $0x14] sm:$0xf] %vm3695, 0
    %3698 = vst.msk [vmem:[#allocation3 + $0x18] sm:$0xf] %vm3695, 0
    %3699 = vst.msk [vmem:[#allocation3 + $0x1c] sm:$0xf] %vm3695, 0
    %vm3700 = vcmask 896872
    %3701 = vst.msk [vmem:[#allocation3 + $0x10] sm:$0xf] %vm3700, 0
    %3702 = vst.msk [vmem:[#allocation3 + $0x14] sm:$0xf] %vm3700, 0
    %3703 = vst.msk [vmem:[#allocation3 + $0x18] sm:$0xf] %vm3700, 0
    %3704 = vst.msk [vmem:[#allocation3 + $0x1c] sm:$0xf] %vm3700, 0
    %v3705 = vld [vmem:[#allocation2] sm:$0xff]
    %v3706 = vld [vmem:[#allocation2 + $0x8] sm:$0xff]
    %v3707 = vld [vmem:[#allocation2 + $0x10] sm:$0xff]
    %v3708 = vld [vmem:[#allocation2 + $0x18] sm:$0xff]
    %v3709 = vpack.c.bf16 %v3705, %v3705
    %v3710 = vpack.c.bf16 %v3706, %v3706
    %v3711 = vpack.c.bf16 %v3707, %v3707
    %v3712 = vpack.c.bf16 %v3708, %v3708
    %3717 = vrot.lane.b32.xlu0 %v3709, 17
    %v3718 = vpop.permute.xlu0 %3717
    %3719 = vrot.lane.b32.xlu0 %v3710, 17
    %v3720 = vpop.permute.xlu0 %3719
    %3721 = vrot.lane.b32.xlu0 %v3711, 17
    %v3722 = vpop.permute.xlu0 %3721
    %3723 = vrot.lane.b32.xlu0 %v3712, 17
    %v3724 = vpop.permute.xlu0 %3723
    %vm3729 = vcmask 888312
    %3730 = vst.msk [vmem:[#allocation3 + $0x10] sm:$0xf] %vm3729, %v3718
    %3731 = vst.msk [vmem:[#allocation3 + $0x14] sm:$0xf] %vm3729, %v3720
    %3732 = vst.msk [vmem:[#allocation3 + $0x18] sm:$0xf] %vm3729, %v3722
    %3733 = vst.msk [vmem:[#allocation3 + $0x1c] sm:$0xf] %vm3729, %v3724
    %3734 = vst.msk [vmem:[#allocation3 + $0x20] sm:$0xf] %vm1930, 0
    %3735 = vst.msk [vmem:[#allocation3 + $0x24] sm:$0xf] %vm1930, 0
    %3736 = vst.msk [vmem:[#allocation3 + $0x28] sm:$0xf] %vm1930, 0
    %3737 = vst.msk [vmem:[#allocation3 + $0x2c] sm:$0xf] %vm1930, 0
    %vm3738 = vcmask 445864
    %3739 = vst.msk [vmem:[#allocation3 + $0x20] sm:$0xf] %vm3738, 0
    %3740 = vst.msk [vmem:[#allocation3 + $0x24] sm:$0xf] %vm3738, 0
    %3741 = vst.msk [vmem:[#allocation3 + $0x28] sm:$0xf] %vm3738, 0
    %3742 = vst.msk [vmem:[#allocation3 + $0x2c] sm:$0xf] %vm3738, 0
    %v3743 = vld [vmem:[#allocation2] sm:$0xff]
    %v3744 = vld [vmem:[#allocation2 + $0x8] sm:$0xff]
    %v3745 = vld [vmem:[#allocation2 + $0x10] sm:$0xff]
    %v3746 = vld [vmem:[#allocation2 + $0x18] sm:$0xff]
    %v3747 = vpack.c.bf16 %v3743, %v3743
    %v3748 = vpack.c.bf16 %v3744, %v3744
    %v3749 = vpack.c.bf16 %v3745, %v3745
    %v3750 = vpack.c.bf16 %v3746, %v3746
    %3755 = vrot.lane.b32.xlu0 %v3747, 7
    %v3756 = vpop.permute.xlu0 %3755
    %3757 = vrot.lane.b32.xlu0 %v3748, 7
    %v3758 = vpop.permute.xlu0 %3757
    %3759 = vrot.lane.b32.xlu0 %v3749, 7
    %v3760 = vpop.permute.xlu0 %3759
    %3761 = vrot.lane.b32.xlu0 %v3750, 7
    %v3762 = vpop.permute.xlu0 %3761
    %vm3767 = vcmask 429112
    %3768 = vst.msk [vmem:[#allocation3 + $0x20] sm:$0xf] %vm3767, %v3756
    %3769 = vst.msk [vmem:[#allocation3 + $0x24] sm:$0xf] %vm3767, %v3758
    %3770 = vst.msk [vmem:[#allocation3 + $0x28] sm:$0xf] %vm3767, %v3760
    %3771 = vst.msk [vmem:[#allocation3 + $0x2c] sm:$0xf] %vm3767, %v3762
    %vm3772 = vcmask 503224
    %3773 = vst.msk [vmem:[#allocation3 + $0x20] sm:$0xf] %vm3772, 0
    %3774 = vst.msk [vmem:[#allocation3 + $0x24] sm:$0xf] %vm3772, 0
    %3775 = vst.msk [vmem:[#allocation3 + $0x28] sm:$0xf] %vm3772, 0
    %3776 = vst.msk [vmem:[#allocation3 + $0x2c] sm:$0xf] %vm3772, 0
    %vm3777 = vcmask 896864
    %3778 = vst.msk [vmem:[#allocation3 + $0x20] sm:$0xf] %vm3777, 0
    %3779 = vst.msk [vmem:[#allocation3 + $0x24] sm:$0xf] %vm3777, 0
    %3780 = vst.msk [vmem:[#allocation3 + $0x28] sm:$0xf] %vm3777, 0
    %3781 = vst.msk [vmem:[#allocation3 + $0x2c] sm:$0xf] %vm3777, 0
    %v3782 = vld [vmem:[#allocation2] sm:$0xff]
    %v3783 = vld [vmem:[#allocation2 + $0x8] sm:$0xff]
    %v3784 = vld [vmem:[#allocation2 + $0x10] sm:$0xff]
    %v3785 = vld [vmem:[#allocation2 + $0x18] sm:$0xff]
    %v3786 = vpack.c.bf16 %v3782, %v3782
    %v3787 = vpack.c.bf16 %v3783, %v3783
    %v3788 = vpack.c.bf16 %v3784, %v3784
    %v3789 = vpack.c.bf16 %v3785, %v3785
    %3794 = vrot.lane.b32.xlu0 %v3786, 16
    %v3795 = vpop.permute.xlu0 %3794
    %3796 = vrot.lane.b32.xlu0 %v3787, 16
    %v3797 = vpop.permute.xlu0 %3796
    %3798 = vrot.lane.b32.xlu0 %v3788, 16
    %v3799 = vpop.permute.xlu0 %3798
    %3800 = vrot.lane.b32.xlu0 %v3789, 16
    %v3801 = vpop.permute.xlu0 %3800
    %vm3806 = vcmask 880112
    %3807 = vst.msk [vmem:[#allocation3 + $0x20] sm:$0xf] %vm3806, %v3795
    %3808 = vst.msk [vmem:[#allocation3 + $0x24] sm:$0xf] %vm3806, %v3797
    %3809 = vst.msk [vmem:[#allocation3 + $0x28] sm:$0xf] %vm3806, %v3799
    %3810 = vst.msk [vmem:[#allocation3 + $0x2c] sm:$0xf] %vm3806, %v3801
    %3811 = vst.msk [vmem:[#allocation3 + $0x30] sm:$0xf] %vm2080, 0
    %3812 = vst.msk [vmem:[#allocation3 + $0x34] sm:$0xf] %vm2080, 0
    %3813 = vst.msk [vmem:[#allocation3 + $0x38] sm:$0xf] %vm2080, 0
    %3814 = vst.msk [vmem:[#allocation3 + $0x3c] sm:$0xf] %vm2080, 0
    %vm3815 = vcmask 445856
    %3816 = vst.msk [vmem:[#allocation3 + $0x30] sm:$0xf] %vm3815, 0
    %3817 = vst.msk [vmem:[#allocation3 + $0x34] sm:$0xf] %vm3815, 0
    %3818 = vst.msk [vmem:[#allocation3 + $0x38] sm:$0xf] %vm3815, 0
    %3819 = vst.msk [vmem:[#allocation3 + $0x3c] sm:$0xf] %vm3815, 0
    %v3820 = vld [vmem:[#allocation2] sm:$0xff]
    %v3821 = vld [vmem:[#allocation2 + $0x8] sm:$0xff]
    %v3822 = vld [vmem:[#allocation2 + $0x10] sm:$0xff]
    %v3823 = vld [vmem:[#allocation2 + $0x18] sm:$0xff]
    %v3824 = vpack.c.bf16 %v3820, %v3820
    %v3825 = vpack.c.bf16 %v3821, %v3821
    %v3826 = vpack.c.bf16 %v3822, %v3822
    %v3827 = vpack.c.bf16 %v3823, %v3823
    %3832 = vrot.lane.b32.xlu0 %v3824, 6
    %v3833 = vpop.permute.xlu0 %3832
    %3834 = vrot.lane.b32.xlu0 %v3825, 6
    %v3835 = vpop.permute.xlu0 %3834
    %3836 = vrot.lane.b32.xlu0 %v3826, 6
    %v3837 = vpop.permute.xlu0 %3836
    %3838 = vrot.lane.b32.xlu0 %v3827, 6
    %v3839 = vpop.permute.xlu0 %3838
    %vm3844 = vcmask 420912
    %3845 = vst.msk [vmem:[#allocation3 + $0x30] sm:$0xf] %vm3844, %v3833
    %3846 = vst.msk [vmem:[#allocation3 + $0x34] sm:$0xf] %vm3844, %v3835
    %3847 = vst.msk [vmem:[#allocation3 + $0x38] sm:$0xf] %vm3844, %v3837
    %3848 = vst.msk [vmem:[#allocation3 + $0x3c] sm:$0xf] %vm3844, %v3839
    %vm3849 = vcmask 495032
    %3850 = vst.msk [vmem:[#allocation3 + $0x30] sm:$0xf] %vm3849, 0
    %3851 = vst.msk [vmem:[#allocation3 + $0x34] sm:$0xf] %vm3849, 0
    %3852 = vst.msk [vmem:[#allocation3 + $0x38] sm:$0xf] %vm3849, 0
    %3853 = vst.msk [vmem:[#allocation3 + $0x3c] sm:$0xf] %vm3849, 0
    %vm3854 = vcmask 896856
    %3855 = vst.msk [vmem:[#allocation3 + $0x30] sm:$0xf] %vm3854, 0
    %3856 = vst.msk [vmem:[#allocation3 + $0x34] sm:$0xf] %vm3854, 0
    %3857 = vst.msk [vmem:[#allocation3 + $0x38] sm:$0xf] %vm3854, 0
    %3858 = vst.msk [vmem:[#allocation3 + $0x3c] sm:$0xf] %vm3854, 0
    %v3859 = vld [vmem:[#allocation2] sm:$0xff]
    %v3860 = vld [vmem:[#allocation2 + $0x8] sm:$0xff]
    %v3861 = vld [vmem:[#allocation2 + $0x10] sm:$0xff]
    %v3862 = vld [vmem:[#allocation2 + $0x18] sm:$0xff]
    %v3863 = vpack.c.bf16 %v3859, %v3859
    %v3864 = vpack.c.bf16 %v3860, %v3860
    %v3865 = vpack.c.bf16 %v3861, %v3861
    %v3866 = vpack.c.bf16 %v3862, %v3862
    %3871 = vrot.lane.b32.xlu0 %v3863, 15
    %v3872 = vpop.permute.xlu0 %3871
    %3873 = vrot.lane.b32.xlu0 %v3864, 15
    %v3874 = vpop.permute.xlu0 %3873
    %3875 = vrot.lane.b32.xlu0 %v3865, 15
    %v3876 = vpop.permute.xlu0 %3875
    %3877 = vrot.lane.b32.xlu0 %v3866, 15
    %v3878 = vpop.permute.xlu0 %3877
    %vm3883 = vcmask 871912
    %3884 = vst.msk [vmem:[#allocation3 + $0x30] sm:$0xf] %vm3883, %v3872
    %3885 = vst.msk [vmem:[#allocation3 + $0x34] sm:$0xf] %vm3883, %v3874
    %3886 = vst.msk [vmem:[#allocation3 + $0x38] sm:$0xf] %vm3883, %v3876
    %3887 = vst.msk [vmem:[#allocation3 + $0x3c] sm:$0xf] %vm3883, %v3878
    %3888 = vst.msk [vmem:[#allocation3 + $0x40] sm:$0xf] %vm2230, 0
    %3889 = vst.msk [vmem:[#allocation3 + $0x44] sm:$0xf] %vm2230, 0
    %3890 = vst.msk [vmem:[#allocation3 + $0x48] sm:$0xf] %vm2230, 0
    %3891 = vst.msk [vmem:[#allocation3 + $0x4c] sm:$0xf] %vm2230, 0
    %vm3892 = vcmask 445848
    %3893 = vst.msk [vmem:[#allocation3 + $0x40] sm:$0xf] %vm3892, 0
    %3894 = vst.msk [vmem:[#allocation3 + $0x44] sm:$0xf] %vm3892, 0
    %3895 = vst.msk [vmem:[#allocation3 + $0x48] sm:$0xf] %vm3892, 0
    %3896 = vst.msk [vmem:[#allocation3 + $0x4c] sm:$0xf] %vm3892, 0
    %v3897 = vld [vmem:[#allocation2] sm:$0xff]
    %v3898 = vld [vmem:[#allocation2 + $0x8] sm:$0xff]
    %v3899 = vld [vmem:[#allocation2 + $0x10] sm:$0xff]
    %v3900 = vld [vmem:[#allocation2 + $0x18] sm:$0xff]
    %v3901 = vpack.c.bf16 %v3897, %v3897
    %v3902 = vpack.c.bf16 %v3898, %v3898
    %v3903 = vpack.c.bf16 %v3899, %v3899
    %v3904 = vpack.c.bf16 %v3900, %v3900
    %3909 = vrot.lane.b32.xlu0 %v3901, 5
    %v3910 = vpop.permute.xlu0 %3909
    %3911 = vrot.lane.b32.xlu0 %v3902, 5
    %v3912 = vpop.permute.xlu0 %3911
    %3913 = vrot.lane.b32.xlu0 %v3903, 5
    %v3914 = vpop.permute.xlu0 %3913
    %3915 = vrot.lane.b32.xlu0 %v3904, 5
    %v3916 = vpop.permute.xlu0 %3915
    %vm3921 = vcmask 412712
    %3922 = vst.msk [vmem:[#allocation3 + $0x40] sm:$0xf] %vm3921, %v3910
    %3923 = vst.msk [vmem:[#allocation3 + $0x44] sm:$0xf] %vm3921, %v3912
    %3924 = vst.msk [vmem:[#allocation3 + $0x48] sm:$0xf] %vm3921, %v3914
    %3925 = vst.msk [vmem:[#allocation3 + $0x4c] sm:$0xf] %vm3921, %v3916
    %vm3926 = vcmask 486840
    %3927 = vst.msk [vmem:[#allocation3 + $0x40] sm:$0xf] %vm3926, 0
    %3928 = vst.msk [vmem:[#allocation3 + $0x44] sm:$0xf] %vm3926, 0
    %3929 = vst.msk [vmem:[#allocation3 + $0x48] sm:$0xf] %vm3926, 0
    %3930 = vst.msk [vmem:[#allocation3 + $0x4c] sm:$0xf] %vm3926, 0
    %vm3931 = vcmask 896848
    %3932 = vst.msk [vmem:[#allocation3 + $0x40] sm:$0xf] %vm3931, 0
    %3933 = vst.msk [vmem:[#allocation3 + $0x44] sm:$0xf] %vm3931, 0
    %3934 = vst.msk [vmem:[#allocation3 + $0x48] sm:$0xf] %vm3931, 0
    %3935 = vst.msk [vmem:[#allocation3 + $0x4c] sm:$0xf] %vm3931, 0
    %v3936 = vld [vmem:[#allocation2] sm:$0xff]
    %v3937 = vld [vmem:[#allocation2 + $0x8] sm:$0xff]
    %v3938 = vld [vmem:[#allocation2 + $0x10] sm:$0xff]
    %v3939 = vld [vmem:[#allocation2 + $0x18] sm:$0xff]
    %v3940 = vpack.c.bf16 %v3936, %v3936
    %v3941 = vpack.c.bf16 %v3937, %v3937
    %v3942 = vpack.c.bf16 %v3938, %v3938
    %v3943 = vpack.c.bf16 %v3939, %v3939
    %3948 = vrot.lane.b32.xlu0 %v3940, 14
    %v3949 = vpop.permute.xlu0 %3948
    %3950 = vrot.lane.b32.xlu0 %v3941, 14
    %v3951 = vpop.permute.xlu0 %3950
    %3952 = vrot.lane.b32.xlu0 %v3942, 14
    %v3953 = vpop.permute.xlu0 %3952
    %3954 = vrot.lane.b32.xlu0 %v3943, 14
    %v3955 = vpop.permute.xlu0 %3954
    %vm3960 = vcmask 863712
    %3961 = vst.msk [vmem:[#allocation3 + $0x40] sm:$0xf] %vm3960, %v3949
    %3962 = vst.msk [vmem:[#allocation3 + $0x44] sm:$0xf] %vm3960, %v3951
    %3963 = vst.msk [vmem:[#allocation3 + $0x48] sm:$0xf] %vm3960, %v3953
    %3964 = vst.msk [vmem:[#allocation3 + $0x4c] sm:$0xf] %vm3960, %v3955
    %3965 = vst.msk [vmem:[#allocation3 + $0x50] sm:$0xf] %vm2380, 0
    %3966 = vst.msk [vmem:[#allocation3 + $0x54] sm:$0xf] %vm2380, 0
    %3967 = vst.msk [vmem:[#allocation3 + $0x58] sm:$0xf] %vm2380, 0
    %3968 = vst.msk [vmem:[#allocation3 + $0x5c] sm:$0xf] %vm2380, 0
    %vm3969 = vcmask 445840
    %3970 = vst.msk [vmem:[#allocation3 + $0x50] sm:$0xf] %vm3969, 0
    %3971 = vst.msk [vmem:[#allocation3 + $0x54] sm:$0xf] %vm3969, 0
    %3972 = vst.msk [vmem:[#allocation3 + $0x58] sm:$0xf] %vm3969, 0
    %3973 = vst.msk [vmem:[#allocation3 + $0x5c] sm:$0xf] %vm3969, 0
    %v3974 = vld [vmem:[#allocation2] sm:$0xff]
    %v3975 = vld [vmem:[#allocation2 + $0x8] sm:$0xff]
    %v3976 = vld [vmem:[#allocation2 + $0x10] sm:$0xff]
    %v3977 = vld [vmem:[#allocation2 + $0x18] sm:$0xff]
    %v3978 = vpack.c.bf16 %v3974, %v3974
    %v3979 = vpack.c.bf16 %v3975, %v3975
    %v3980 = vpack.c.bf16 %v3976, %v3976
    %v3981 = vpack.c.bf16 %v3977, %v3977
    %3986 = vrot.lane.b32.xlu0 %v3978, 4
    %v3987 = vpop.permute.xlu0 %3986
    %3988 = vrot.lane.b32.xlu0 %v3979, 4
    %v3989 = vpop.permute.xlu0 %3988
    %3990 = vrot.lane.b32.xlu0 %v3980, 4
    %v3991 = vpop.permute.xlu0 %3990
    %3992 = vrot.lane.b32.xlu0 %v3981, 4
    %v3993 = vpop.permute.xlu0 %3992
    %vm3998 = vcmask 404512
    %3999 = vst.msk [vmem:[#allocation3 + $0x50] sm:$0xf] %vm3998, %v3987
    %4000 = vst.msk [vmem:[#allocation3 + $0x54] sm:$0xf] %vm3998, %v3989
    %4001 = vst.msk [vmem:[#allocation3 + $0x58] sm:$0xf] %vm3998, %v3991
    %4002 = vst.msk [vmem:[#allocation3 + $0x5c] sm:$0xf] %vm3998, %v3993
    %vm4003 = vcmask 478648
    %4004 = vst.msk [vmem:[#allocation3 + $0x50] sm:$0xf] %vm4003, 0
    %4005 = vst.msk [vmem:[#allocation3 + $0x54] sm:$0xf] %vm4003, 0
    %4006 = vst.msk [vmem:[#allocation3 + $0x58] sm:$0xf] %vm4003, 0
    %4007 = vst.msk [vmem:[#allocation3 + $0x5c] sm:$0xf] %vm4003, 0
    %vm4008 = vcmask 896840
    %4009 = vst.msk [vmem:[#allocation3 + $0x50] sm:$0xf] %vm4008, 0
    %4010 = vst.msk [vmem:[#allocation3 + $0x54] sm:$0xf] %vm4008, 0
    %4011 = vst.msk [vmem:[#allocation3 + $0x58] sm:$0xf] %vm4008, 0
    %4012 = vst.msk [vmem:[#allocation3 + $0x5c] sm:$0xf] %vm4008, 0
    %v4013 = vld [vmem:[#allocation2] sm:$0xff]
    %v4014 = vld [vmem:[#allocation2 + $0x8] sm:$0xff]
    %v4015 = vld [vmem:[#allocation2 + $0x10] sm:$0xff]
    %v4016 = vld [vmem:[#allocation2 + $0x18] sm:$0xff]
    %v4017 = vpack.c.bf16 %v4013, %v4013
    %v4018 = vpack.c.bf16 %v4014, %v4014
    %v4019 = vpack.c.bf16 %v4015, %v4015
    %v4020 = vpack.c.bf16 %v4016, %v4016
    %4025 = vrot.lane.b32.xlu0 %v4017, 13
    %v4026 = vpop.permute.xlu0 %4025
    %4027 = vrot.lane.b32.xlu0 %v4018, 13
    %v4028 = vpop.permute.xlu0 %4027
    %4029 = vrot.lane.b32.xlu0 %v4019, 13
    %v4030 = vpop.permute.xlu0 %4029
    %4031 = vrot.lane.b32.xlu0 %v4020, 13
    %v4032 = vpop.permute.xlu0 %4031
    %vm4037 = vcmask 855512
    %4038 = vst.msk [vmem:[#allocation3 + $0x50] sm:$0xf] %vm4037, %v4026
    %4039 = vst.msk [vmem:[#allocation3 + $0x54] sm:$0xf] %vm4037, %v4028
    %4040 = vst.msk [vmem:[#allocation3 + $0x58] sm:$0xf] %vm4037, %v4030
    %4041 = vst.msk [vmem:[#allocation3 + $0x5c] sm:$0xf] %vm4037, %v4032
    %4042 = vst.msk [vmem:[#allocation3 + $0x60] sm:$0xf] %vm2530, 0
    %4043 = vst.msk [vmem:[#allocation3 + $0x64] sm:$0xf] %vm2530, 0
    %4044 = vst.msk [vmem:[#allocation3 + $0x68] sm:$0xf] %vm2530, 0
    %4045 = vst.msk [vmem:[#allocation3 + $0x6c] sm:$0xf] %vm2530, 0
    %vm4046 = vcmask 445832
    %4047 = vst.msk [vmem:[#allocation3 + $0x60] sm:$0xf] %vm4046, 0
    %4048 = vst.msk [vmem:[#allocation3 + $0x64] sm:$0xf] %vm4046, 0
    %4049 = vst.msk [vmem:[#allocation3 + $0x68] sm:$0xf] %vm4046, 0
    %4050 = vst.msk [vmem:[#allocation3 + $0x6c] sm:$0xf] %vm4046, 0
    %v4051 = vld [vmem:[#allocation2] sm:$0xff]
    %v4052 = vld [vmem:[#allocation2 + $0x8] sm:$0xff]
    %v4053 = vld [vmem:[#allocation2 + $0x10] sm:$0xff]
    %v4054 = vld [vmem:[#allocation2 + $0x18] sm:$0xff]
    %v4055 = vpack.c.bf16 %v4051, %v4051
    %v4056 = vpack.c.bf16 %v4052, %v4052
    %v4057 = vpack.c.bf16 %v4053, %v4053
    %v4058 = vpack.c.bf16 %v4054, %v4054
    %4063 = vrot.lane.b32.xlu0 %v4055, 3
    %v4064 = vpop.permute.xlu0 %4063
    %4065 = vrot.lane.b32.xlu0 %v4056, 3
    %v4066 = vpop.permute.xlu0 %4065
    %4067 = vrot.lane.b32.xlu0 %v4057, 3
    %v4068 = vpop.permute.xlu0 %4067
    %4069 = vrot.lane.b32.xlu0 %v4058, 3
    %v4070 = vpop.permute.xlu0 %4069
    %vm4075 = vcmask 396312
    %4076 = vst.msk [vmem:[#allocation3 + $0x60] sm:$0xf] %vm4075, %v4064
    %4077 = vst.msk [vmem:[#allocation3 + $0x64] sm:$0xf] %vm4075, %v4066
    %4078 = vst.msk [vmem:[#allocation3 + $0x68] sm:$0xf] %vm4075, %v4068
    %4079 = vst.msk [vmem:[#allocation3 + $0x6c] sm:$0xf] %vm4075, %v4070
    %vm4080 = vcmask 470456
    %4081 = vst.msk [vmem:[#allocation3 + $0x60] sm:$0xf] %vm4080, 0
    %4082 = vst.msk [vmem:[#allocation3 + $0x64] sm:$0xf] %vm4080, 0
    %4083 = vst.msk [vmem:[#allocation3 + $0x68] sm:$0xf] %vm4080, 0
    %4084 = vst.msk [vmem:[#allocation3 + $0x6c] sm:$0xf] %vm4080, 0
    %vm4085 = vcmask 896832
    %4086 = vst.msk [vmem:[#allocation3 + $0x60] sm:$0xf] %vm4085, 0
    %4087 = vst.msk [vmem:[#allocation3 + $0x64] sm:$0xf] %vm4085, 0
    %4088 = vst.msk [vmem:[#allocation3 + $0x68] sm:$0xf] %vm4085, 0
    %4089 = vst.msk [vmem:[#allocation3 + $0x6c] sm:$0xf] %vm4085, 0
    %v4090 = vld [vmem:[#allocation2] sm:$0xff]
    %v4091 = vld [vmem:[#allocation2 + $0x8] sm:$0xff]
    %v4092 = vld [vmem:[#allocation2 + $0x10] sm:$0xff]
    %v4093 = vld [vmem:[#allocation2 + $0x18] sm:$0xff]
    %v4094 = vpack.c.bf16 %v4090, %v4090
    %v4095 = vpack.c.bf16 %v4091, %v4091
    %v4096 = vpack.c.bf16 %v4092, %v4092
    %v4097 = vpack.c.bf16 %v4093, %v4093
    %4102 = vrot.lane.b32.xlu0 %v4094, 12
    %v4103 = vpop.permute.xlu0 %4102
    %4104 = vrot.lane.b32.xlu0 %v4095, 12
    %v4105 = vpop.permute.xlu0 %4104
    %4106 = vrot.lane.b32.xlu0 %v4096, 12
    %v4107 = vpop.permute.xlu0 %4106
    %4108 = vrot.lane.b32.xlu0 %v4097, 12
    %v4109 = vpop.permute.xlu0 %4108
    %vm4114 = vcmask 847312
    %4115 = vst.msk [vmem:[#allocation3 + $0x60] sm:$0xf] %vm4114, %v4103
    %4116 = vst.msk [vmem:[#allocation3 + $0x64] sm:$0xf] %vm4114, %v4105
    %4117 = vst.msk [vmem:[#allocation3 + $0x68] sm:$0xf] %vm4114, %v4107
    %4118 = vst.msk [vmem:[#allocation3 + $0x6c] sm:$0xf] %vm4114, %v4109
    %4119 = vst.msk [vmem:[#allocation3 + $0x70] sm:$0xf] %vm2680, 0
    %4120 = vst.msk [vmem:[#allocation3 + $0x74] sm:$0xf] %vm2680, 0
    %4121 = vst.msk [vmem:[#allocation3 + $0x78] sm:$0xf] %vm2680, 0
    %4122 = vst.msk [vmem:[#allocation3 + $0x7c] sm:$0xf] %vm2680, 0
    %vm4123 = vcmask 445824
    %4124 = vst.msk [vmem:[#allocation3 + $0x70] sm:$0xf] %vm4123, 0
    %4125 = vst.msk [vmem:[#allocation3 + $0x74] sm:$0xf] %vm4123, 0
    %4126 = vst.msk [vmem:[#allocation3 + $0x78] sm:$0xf] %vm4123, 0
    %4127 = vst.msk [vmem:[#allocation3 + $0x7c] sm:$0xf] %vm4123, 0
    %v4128 = vld [vmem:[#allocation2] sm:$0xff]
    %v4129 = vld [vmem:[#allocation2 + $0x8] sm:$0xff]
    %v4130 = vld [vmem:[#allocation2 + $0x10] sm:$0xff]
    %v4131 = vld [vmem:[#allocation2 + $0x18] sm:$0xff]
    %v4132 = vpack.c.bf16 %v4128, %v4128
    %v4133 = vpack.c.bf16 %v4129, %v4129
    %v4134 = vpack.c.bf16 %v4130, %v4130
    %v4135 = vpack.c.bf16 %v4131, %v4131
    %4140 = vrot.lane.b32.xlu0 %v4132, 2
    %v4141 = vpop.permute.xlu0 %4140
    %4142 = vrot.lane.b32.xlu0 %v4133, 2
    %v4143 = vpop.permute.xlu0 %4142
    %4144 = vrot.lane.b32.xlu0 %v4134, 2
    %v4145 = vpop.permute.xlu0 %4144
    %4146 = vrot.lane.b32.xlu0 %v4135, 2
    %v4147 = vpop.permute.xlu0 %4146
    %vm4152 = vcmask 388112
    %4153 = vst.msk [vmem:[#allocation3 + $0x70] sm:$0xf] %vm4152, %v4141
    %4154 = vst.msk [vmem:[#allocation3 + $0x74] sm:$0xf] %vm4152, %v4143
    %4155 = vst.msk [vmem:[#allocation3 + $0x78] sm:$0xf] %vm4152, %v4145
    %4156 = vst.msk [vmem:[#allocation3 + $0x7c] sm:$0xf] %vm4152, %v4147
    %vm4157 = vcmask 462264
    %4158 = vst.msk [vmem:[#allocation3 + $0x70] sm:$0xf] %vm4157, 0
    %4159 = vst.msk [vmem:[#allocation3 + $0x74] sm:$0xf] %vm4157, 0
    %4160 = vst.msk [vmem:[#allocation3 + $0x78] sm:$0xf] %vm4157, 0
    %4161 = vst.msk [vmem:[#allocation3 + $0x7c] sm:$0xf] %vm4157, 0
    %vm4162 = vcmask 896824
    %4163 = vst.msk [vmem:[#allocation3 + $0x70] sm:$0xf] %vm4162, 0
    %4164 = vst.msk [vmem:[#allocation3 + $0x74] sm:$0xf] %vm4162, 0
    %4165 = vst.msk [vmem:[#allocation3 + $0x78] sm:$0xf] %vm4162, 0
    %4166 = vst.msk [vmem:[#allocation3 + $0x7c] sm:$0xf] %vm4162, 0
    %v4167 = vld [vmem:[#allocation2] sm:$0xff]
    %v4168 = vld [vmem:[#allocation2 + $0x8] sm:$0xff]
    %v4169 = vld [vmem:[#allocation2 + $0x10] sm:$0xff]
    %v4170 = vld [vmem:[#allocation2 + $0x18] sm:$0xff]
    %v4171 = vpack.c.bf16 %v4167, %v4167
    %v4172 = vpack.c.bf16 %v4168, %v4168
    %v4173 = vpack.c.bf16 %v4169, %v4169
    %v4174 = vpack.c.bf16 %v4170, %v4170
    %4179 = vrot.lane.b32.xlu0 %v4171, 11
    %v4180 = vpop.permute.xlu0 %4179
    %4181 = vrot.lane.b32.xlu0 %v4172, 11
    %v4182 = vpop.permute.xlu0 %4181
    %4183 = vrot.lane.b32.xlu0 %v4173, 11
    %v4184 = vpop.permute.xlu0 %4183
    %4185 = vrot.lane.b32.xlu0 %v4174, 11
    %v4186 = vpop.permute.xlu0 %4185
    %vm4191 = vcmask 839112
    %4192 = vst.msk [vmem:[#allocation3 + $0x70] sm:$0xf] %vm4191, %v4180
    %4193 = vst.msk [vmem:[#allocation3 + $0x74] sm:$0xf] %vm4191, %v4182
    %4194 = vst.msk [vmem:[#allocation3 + $0x78] sm:$0xf] %vm4191, %v4184
    %4195 = vst.msk [vmem:[#allocation3 + $0x7c] sm:$0xf] %vm4191, %v4186
    %4196 = vst.msk [vmem:[#allocation3 + $0x80] sm:$0xf] %vm2830, 0
    %4197 = vst.msk [vmem:[#allocation3 + $0x84] sm:$0xf] %vm2830, 0
    %4198 = vst.msk [vmem:[#allocation3 + $0x88] sm:$0xf] %vm2830, 0
    %4199 = vst.msk [vmem:[#allocation3 + $0x8c] sm:$0xf] %vm2830, 0
    %vm4200 = vcmask 445816
    %4201 = vst.msk [vmem:[#allocation3 + $0x80] sm:$0xf] %vm4200, 0
    %4202 = vst.msk [vmem:[#allocation3 + $0x84] sm:$0xf] %vm4200, 0
    %4203 = vst.msk [vmem:[#allocation3 + $0x88] sm:$0xf] %vm4200, 0
    %4204 = vst.msk [vmem:[#allocation3 + $0x8c] sm:$0xf] %vm4200, 0
    %v4205 = vld [vmem:[#allocation2] sm:$0xff]
    %v4206 = vld [vmem:[#allocation2 + $0x8] sm:$0xff]
    %v4207 = vld [vmem:[#allocation2 + $0x10] sm:$0xff]
    %v4208 = vld [vmem:[#allocation2 + $0x18] sm:$0xff]
    %v4209 = vpack.c.bf16 %v4205, %v4205
    %v4210 = vpack.c.bf16 %v4206, %v4206
    %v4211 = vpack.c.bf16 %v4207, %v4207
    %v4212 = vpack.c.bf16 %v4208, %v4208
    %4217 = vrot.lane.b32.xlu0 %v4209, 1
    %v4218 = vpop.permute.xlu0 %4217
    %4219 = vrot.lane.b32.xlu0 %v4210, 1
    %v4220 = vpop.permute.xlu0 %4219
    %4221 = vrot.lane.b32.xlu0 %v4211, 1
    %v4222 = vpop.permute.xlu0 %4221
    %4223 = vrot.lane.b32.xlu0 %v4212, 1
    %v4224 = vpop.permute.xlu0 %4223
    %vm4229 = vcmask 379912
    %4230 = vst.msk [vmem:[#allocation3 + $0x80] sm:$0xf] %vm4229, %v4218
    %4231 = vst.msk [vmem:[#allocation3 + $0x84] sm:$0xf] %vm4229, %v4220
    %4232 = vst.msk [vmem:[#allocation3 + $0x88] sm:$0xf] %vm4229, %v4222
    %4233 = vst.msk [vmem:[#allocation3 + $0x8c] sm:$0xf] %vm4229, %v4224
    %vm4234 = vcmask 454072
    %4235 = vst.msk [vmem:[#allocation3 + $0x80] sm:$0xf] %vm4234, 0
    %4236 = vst.msk [vmem:[#allocation3 + $0x84] sm:$0xf] %vm4234, 0
    %4237 = vst.msk [vmem:[#allocation3 + $0x88] sm:$0xf] %vm4234, 0
    %4238 = vst.msk [vmem:[#allocation3 + $0x8c] sm:$0xf] %vm4234, 0
    %vm4239 = vcmask 896816
    %4240 = vst.msk [vmem:[#allocation3 + $0x80] sm:$0xf] %vm4239, 0
    %4241 = vst.msk [vmem:[#allocation3 + $0x84] sm:$0xf] %vm4239, 0
    %4242 = vst.msk [vmem:[#allocation3 + $0x88] sm:$0xf] %vm4239, 0
    %4243 = vst.msk [vmem:[#allocation3 + $0x8c] sm:$0xf] %vm4239, 0
    %v4244 = vld [vmem:[#allocation2] sm:$0xff]
    %v4245 = vld [vmem:[#allocation2 + $0x8] sm:$0xff]
    %v4246 = vld [vmem:[#allocation2 + $0x10] sm:$0xff]
    %v4247 = vld [vmem:[#allocation2 + $0x18] sm:$0xff]
    %v4248 = vpack.c.bf16 %v4244, %v4244
    %v4249 = vpack.c.bf16 %v4245, %v4245
    %v4250 = vpack.c.bf16 %v4246, %v4246
    %v4251 = vpack.c.bf16 %v4247, %v4247
    %4256 = vrot.lane.b32.xlu0 %v4248, 10
    %v4257 = vpop.permute.xlu0 %4256
    %4258 = vrot.lane.b32.xlu0 %v4249, 10
    %v4259 = vpop.permute.xlu0 %4258
    %4260 = vrot.lane.b32.xlu0 %v4250, 10
    %v4261 = vpop.permute.xlu0 %4260
    %4262 = vrot.lane.b32.xlu0 %v4251, 10
    %v4263 = vpop.permute.xlu0 %4262
    %vm4268 = vcmask 830912
    %4269 = vst.msk [vmem:[#allocation3 + $0x80] sm:$0xf] %vm4268, %v4257
    %4270 = vst.msk [vmem:[#allocation3 + $0x84] sm:$0xf] %vm4268, %v4259
    %4271 = vst.msk [vmem:[#allocation3 + $0x88] sm:$0xf] %vm4268, %v4261
    %4272 = vst.msk [vmem:[#allocation3 + $0x8c] sm:$0xf] %vm4268, %v4263
    %4273 = vst.msk [vmem:[#allocation3 + $0x90] sm:$0xf] %vm1714, 0
    %4274 = vst.msk [vmem:[#allocation3 + $0x94] sm:$0xf] %vm1714, 0
    %4275 = vst.msk [vmem:[#allocation3 + $0x98] sm:$0xf] %vm1714, 0
    %4276 = vst.msk [vmem:[#allocation3 + $0x9c] sm:$0xf] %vm1714, 0
    %v4277 = vld [vmem:[#allocation2] sm:$0xff]
    %v4278 = vld [vmem:[#allocation2 + $0x8] sm:$0xff]
    %v4279 = vld [vmem:[#allocation2 + $0x10] sm:$0xff]
    %v4280 = vld [vmem:[#allocation2 + $0x18] sm:$0xff]
    %v4281 = vpack.c.bf16 %v4277, %v4277
    %v4282 = vpack.c.bf16 %v4278, %v4278
    %v4283 = vpack.c.bf16 %v4279, %v4279
    %v4284 = vpack.c.bf16 %v4280, %v4280
    %4285 = vst.msk [vmem:[#allocation3 + $0x90] sm:$0xf] %vm254, %v4281
    %4286 = vst.msk [vmem:[#allocation3 + $0x94] sm:$0xf] %vm254, %v4282
    %4287 = vst.msk [vmem:[#allocation3 + $0x98] sm:$0xf] %vm254, %v4283
    %4288 = vst.msk [vmem:[#allocation3 + $0x9c] sm:$0xf] %vm254, %v4284
    %vm4289 = vcmask 896808
    %4290 = vst.msk [vmem:[#allocation3 + $0x90] sm:$0xf] %vm4289, 0
    %4291 = vst.msk [vmem:[#allocation3 + $0x94] sm:$0xf] %vm4289, 0
    %4292 = vst.msk [vmem:[#allocation3 + $0x98] sm:$0xf] %vm4289, 0
    %4293 = vst.msk [vmem:[#allocation3 + $0x9c] sm:$0xf] %vm4289, 0
    %v4294 = vld [vmem:[#allocation2] sm:$0xff]
    %v4295 = vld [vmem:[#allocation2 + $0x8] sm:$0xff]
    %v4296 = vld [vmem:[#allocation2 + $0x10] sm:$0xff]
    %v4297 = vld [vmem:[#allocation2 + $0x18] sm:$0xff]
    %v4298 = vpack.c.bf16 %v4294, %v4294
    %v4299 = vpack.c.bf16 %v4295, %v4295
    %v4300 = vpack.c.bf16 %v4296, %v4296
    %v4301 = vpack.c.bf16 %v4297, %v4297
    %4306 = vrot.lane.b32.xlu0 %v4298, 9
    %v4307 = vpop.permute.xlu0 %4306
    %4308 = vrot.lane.b32.xlu0 %v4299, 9
    %v4309 = vpop.permute.xlu0 %4308
    %4310 = vrot.lane.b32.xlu0 %v4300, 9
    %v4311 = vpop.permute.xlu0 %4310
    %4312 = vrot.lane.b32.xlu0 %v4301, 9
    %v4313 = vpop.permute.xlu0 %4312
    %vm4318 = vcmask 822712
    %4319 = vst.msk [vmem:[#allocation3 + $0x90] sm:$0xf] %vm4318, %v4307
    %4320 = vst.msk [vmem:[#allocation3 + $0x94] sm:$0xf] %vm4318, %v4309
    %4321 = vst.msk [vmem:[#allocation3 + $0x98] sm:$0xf] %vm4318, %v4311
    %4322 = vst.msk [vmem:[#allocation3 + $0x9c] sm:$0xf] %vm4318, %v4313
    %v4323 = vld [vmem:[#allocation4 + $0x168] sm:$0xff]
    %v4324 = vld [vmem:[#allocation4 + $0x170] sm:$0xf]
    %v4325 = vld [vmem:[#allocation4 + $0x17c] sm:$0xff]
    %v4326 = vld [vmem:[#allocation4 + $0x184] sm:$0xf]
    %v4327 = vld [vmem:[#allocation3] sm:$0xf]
    %v4328 = vld [vmem:[#allocation3 + $0x4] sm:$0xf]
    %v4329 = vld [vmem:[#allocation3 + $0x8] sm:$0xf]
    %v4330 = vld [vmem:[#allocation3 + $0xc] sm:$0xf]
    %v4331 = vld [vmem:[#allocation3 + $0x10] sm:$0xf]
    %v4332 = vld [vmem:[#allocation3 + $0x14] sm:$0xf]
    %v4333 = vld [vmem:[#allocation3 + $0x18] sm:$0xf]
    %v4334 = vld [vmem:[#allocation3 + $0x1c] sm:$0xf]
    %v4335 = vld [vmem:[#allocation3 + $0x20] sm:$0xf]
    %v4336 = vld [vmem:[#allocation3 + $0x24] sm:$0xf]
    %v4337 = vld [vmem:[#allocation3 + $0x28] sm:$0xf]
    %v4338 = vld [vmem:[#allocation3 + $0x2c] sm:$0xf]
    %v4339 = vld [vmem:[#allocation3 + $0x30] sm:$0xf]
    %v4340 = vld [vmem:[#allocation3 + $0x34] sm:$0xf]
    %v4341 = vld [vmem:[#allocation3 + $0x38] sm:$0xf]
    %v4342 = vld [vmem:[#allocation3 + $0x3c] sm:$0xf]
    %v4343 = vld [vmem:[#allocation3 + $0x40] sm:$0xf]
    %v4344 = vld [vmem:[#allocation3 + $0x44] sm:$0xf]
    %v4345 = vld [vmem:[#allocation3 + $0x48] sm:$0xf]
    %v4346 = vld [vmem:[#allocation3 + $0x4c] sm:$0xf]
    %v4347 = vld [vmem:[#allocation3 + $0x50] sm:$0xf]
    %v4348 = vld [vmem:[#allocation3 + $0x54] sm:$0xf]
    %v4349 = vld [vmem:[#allocation3 + $0x58] sm:$0xf]
    %v4350 = vld [vmem:[#allocation3 + $0x5c] sm:$0xf]
    %v4351 = vld [vmem:[#allocation3 + $0x60] sm:$0xf]
    %v4352 = vld [vmem:[#allocation3 + $0x64] sm:$0xf]
    %v4353 = vld [vmem:[#allocation3 + $0x68] sm:$0xf]
    %v4354 = vld [vmem:[#allocation3 + $0x6c] sm:$0xf]
    %v4355 = vld [vmem:[#allocation3 + $0x70] sm:$0xf]
    %v4356 = vld [vmem:[#allocation3 + $0x74] sm:$0xf]
    %v4357 = vld [vmem:[#allocation3 + $0x78] sm:$0xf]
    %v4358 = vld [vmem:[#allocation3 + $0x7c] sm:$0xf]
    %v4359 = vld [vmem:[#allocation3 + $0x80] sm:$0xf]
    %v4360 = vld [vmem:[#allocation3 + $0x84] sm:$0xf]
    %v4361 = vld [vmem:[#allocation3 + $0x88] sm:$0xf]
    %v4362 = vld [vmem:[#allocation3 + $0x8c] sm:$0xf]
    %v4363 = vld [vmem:[#allocation3 + $0x90] sm:$0xf]
    %v4364 = vld [vmem:[#allocation3 + $0x94] sm:$0xf]
    %v4365 = vld [vmem:[#allocation3 + $0x98] sm:$0xf]
    %v4366 = vld [vmem:[#allocation3 + $0x9c] sm:$0xf]
    %v4367 = vld [vmem:[%s2] sm:$0xff]
    %v4368 = vld [vmem:[%s2 + $0x8] sm:$0xff]
    %4370 = vset.pattern.permute.xlu0 4
    %4371 = vperm.xlu0 %4370, %v4367
    %v4372 = vpop.permute.xlu0 %4371
    %4375 = vset.pattern.permute.xlu0 4
    %4376 = vperm.xlu0 %4375, %v4368
    %v4377 = vpop.permute.xlu0 %4376
    %v4383 = vunpack.c.l.b16 %v4323
    %v4384 = vunpack.c.h.b16 %v4323
    %v4385 = vunpack.c.l.b16 %v4324
    %v4386 = vunpack.c.l.b16 %v4325
    %v4387 = vunpack.c.h.b16 %v4325
    %v4388 = vunpack.c.l.b16 %v4326
    %v4389 = vpack.c.b16 %v4386, %v4383
    %v4390 = vpack.c.b16 %v4387, %v4384
    %v4391 = vpack.c.b16 %v4388, %v4385
    %v4434 = vunpack.c.l.b16 %v4327
    %v4435 = vunpack.c.l.b16 %v4328
    %v4436 = vunpack.c.l.b16 %v4329
    %v4437 = vunpack.c.l.b16 %v4330
    %v4438 = vunpack.c.l.b16 %v4331
    %v4439 = vunpack.c.l.b16 %v4332
    %v4440 = vunpack.c.l.b16 %v4333
    %v4441 = vunpack.c.l.b16 %v4334
    %v4442 = vunpack.c.l.b16 %v4335
    %v4443 = vunpack.c.l.b16 %v4336
    %v4444 = vunpack.c.l.b16 %v4337
    %v4445 = vunpack.c.l.b16 %v4338
    %v4446 = vunpack.c.l.b16 %v4339
    %v4447 = vunpack.c.l.b16 %v4340
    %v4448 = vunpack.c.l.b16 %v4341
    %v4449 = vunpack.c.l.b16 %v4342
    %v4450 = vunpack.c.l.b16 %v4343
    %v4451 = vunpack.c.l.b16 %v4344
    %v4452 = vunpack.c.l.b16 %v4345
    %v4453 = vunpack.c.l.b16 %v4346
    %v4454 = vunpack.c.l.b16 %v4347
    %v4455 = vunpack.c.l.b16 %v4348
    %v4456 = vunpack.c.l.b16 %v4349
    %v4457 = vunpack.c.l.b16 %v4350
    %v4458 = vunpack.c.l.b16 %v4351
    %v4459 = vunpack.c.l.b16 %v4352
    %v4460 = vunpack.c.l.b16 %v4353
    %v4461 = vunpack.c.l.b16 %v4354
    %v4462 = vunpack.c.l.b16 %v4355
    %v4463 = vunpack.c.l.b16 %v4356
    %v4464 = vunpack.c.l.b16 %v4357
    %v4465 = vunpack.c.l.b16 %v4358
    %v4466 = vunpack.c.l.b16 %v4359
    %v4467 = vunpack.c.l.b16 %v4360
    %v4468 = vunpack.c.l.b16 %v4361
    %v4469 = vunpack.c.l.b16 %v4362
    %v4470 = vunpack.c.l.b16 %v4363
    %v4471 = vunpack.c.l.b16 %v4364
    %v4472 = vunpack.c.l.b16 %v4365
    %v4473 = vunpack.c.l.b16 %v4366
    %v4474 = vpack.c.b16 %v4435, %v4434
    %v4475 = vpack.c.b16 %v4437, %v4436
    %v4476 = vpack.c.b16 %v4439, %v4438
    %v4477 = vpack.c.b16 %v4441, %v4440
    %v4478 = vpack.c.b16 %v4443, %v4442
    %v4479 = vpack.c.b16 %v4445, %v4444
    %v4480 = vpack.c.b16 %v4447, %v4446
    %v4481 = vpack.c.b16 %v4449, %v4448
    %v4482 = vpack.c.b16 %v4451, %v4450
    %v4483 = vpack.c.b16 %v4453, %v4452
    %v4484 = vpack.c.b16 %v4455, %v4454
    %v4485 = vpack.c.b16 %v4457, %v4456
    %v4486 = vpack.c.b16 %v4459, %v4458
    %v4487 = vpack.c.b16 %v4461, %v4460
    %v4488 = vpack.c.b16 %v4463, %v4462
    %v4489 = vpack.c.b16 %v4465, %v4464
    %v4490 = vpack.c.b16 %v4467, %v4466
    %v4491 = vpack.c.b16 %v4469, %v4468
    %v4492 = vpack.c.b16 %v4471, %v4470
    %v4493 = vpack.c.b16 %v4473, %v4472
    %v4515 = vsel %vm1532, %v4391, 0
    %4517 = vmatpush.bf16.msra.mxu0 %v4481
    %4518 = vmatpush.bf16.msra.mxu0 %v4480
    %4519 = vmatpush.bf16.msra.mxu0 %v4479
    %4520 = vmatpush.bf16.msra.mxu0 %v4478
    %4521 = vmatpush.bf16.msra.mxu0 %v4477
    %4522 = vmatpush.bf16.msra.mxu0 %v4476
    %4523 = vmatpush.bf16.msra.mxu0 %v4475
    %4524 = vmatpush.bf16.msra.mxu0 %v4474
    %4525 = vmatmul.bf16.gmra.mxu0 %v4389
    %v4526 = vpop.f32.mrf.mxu0
    %v4527 = vadd.f32 %v4372, %v4526
    %v4528 = vpop.f32.mrf.mxu0
    %v4529 = vadd.f32 %v4377, %v4528
    %4530 = vdwg.mxu0
    %4531 = vmatpush.bf16.msra.mxu0 %v4489
    %4532 = vmatpush.bf16.msra.mxu0 %v4488
    %4533 = vmatpush.bf16.msra.mxu0 %v4487
    %4534 = vmatpush.bf16.msra.mxu0 %v4486
    %4535 = vmatpush.bf16.msra.mxu0 %v4485
    %4536 = vmatpush.bf16.msra.mxu0 %v4484
    %4537 = vmatpush.bf16.msra.mxu0 %v4483
    %4538 = vmatpush.bf16.msra.mxu0 %v4482
    %4539 = vmatmul.bf16.gmra.mxu0 %v4390
    %v4540 = vpop.f32.mrf.mxu0
    %v4541 = vadd.f32 %v4527, %v4540
    %v4542 = vpop.f32.mrf.mxu0
    %v4543 = vadd.f32 %v4529, %v4542
    %4544 = vdwg.mxu0
    %4545 = vmatpush.bf16.msra.mxu0 0
    %4546 = vmatpush.bf16.msra.mxu0 0
    %4547 = vmatpush.bf16.msra.mxu0 0
    %4548 = vmatpush.bf16.msra.mxu0 0
    %4549 = vmatpush.bf16.msra.mxu0 %v4493
    %4550 = vmatpush.bf16.msra.mxu0 %v4492
    %4551 = vmatpush.bf16.msra.mxu0 %v4491
    %4552 = vmatpush.bf16.msra.mxu0 %v4490
    %4553 = vmatmul.bf16.gmra.mxu0 %v4515
    %v4554 = vpop.f32.mrf.mxu0
    %v4555 = vadd.f32 %v4541, %v4554
    %v4556 = vpop.f32.mrf.mxu0
    %v4557 = vadd.f32 %v4543, %v4556
    %4558 = vdwg.mxu0
    %v4559 = vmax.f32 %v4555, 0.0
    %v4560 = vmax.f32 %v4557, 0.0
    %4561 = vst [vmem:[#allocation2] sm:$0xff] %v4559
    %4562 = vst [vmem:[#allocation2 + $0x8] sm:$0xff] %v4560
    %4563 = vst.msk [vmem:[#allocation3] sm:$0xf] %vm1648, 0
    %4564 = vst.msk [vmem:[#allocation3 + $0x4] sm:$0xf] %vm1648, 0
    %v4565 = vld [vmem:[#allocation2] sm:$0xff]
    %v4566 = vld [vmem:[#allocation2 + $0x8] sm:$0xff]
    %v4567 = vpack.c.bf16 %v4565, %v4565
    %v4568 = vpack.c.bf16 %v4566, %v4566
    %4571 = vrot.lane.b32.xlu0 %v4567, 9
    %v4572 = vpop.permute.xlu0 %4571
    %4573 = vrot.lane.b32.xlu0 %v4568, 9
    %v4574 = vpop.permute.xlu0 %4573
    %vm4577 = vcmask 519240
    %4578 = vst.msk [vmem:[#allocation3] sm:$0xf] %vm4577, %v4572
    %4579 = vst.msk [vmem:[#allocation3 + $0x4] sm:$0xf] %vm4577, %v4574
    %vm4580 = vcmask 593408
    %4581 = vst.msk [vmem:[#allocation3] sm:$0xf] %vm4580, 0
    %4582 = vst.msk [vmem:[#allocation3 + $0x4] sm:$0xf] %vm4580, 0
    %v4583 = vld [vmem:[#allocation2] sm:$0xff]
    %v4584 = vld [vmem:[#allocation2 + $0x8] sm:$0xff]
    %v4585 = vpack.c.bf16 %v4583, %v4583
    %v4586 = vpack.c.bf16 %v4584, %v4584
    %4589 = vrot.lane.b32.xlu0 %v4585, 18
    %v4590 = vpop.permute.xlu0 %4589
    %4591 = vrot.lane.b32.xlu0 %v4586, 18
    %v4592 = vpop.permute.xlu0 %4591
    %vm4595 = vcmask 1044040
    %4596 = vst.msk [vmem:[#allocation3] sm:$0xf] %vm4595, %v4590
    %4597 = vst.msk [vmem:[#allocation3 + $0x4] sm:$0xf] %vm4595, %v4592
    %4598 = vst.msk [vmem:[#allocation3 + $0x8] sm:$0xf] %vm1780, 0
    %4599 = vst.msk [vmem:[#allocation3 + $0xc] sm:$0xf] %vm1780, 0
    %vm4600 = vcmask 519672
    %4601 = vst.msk [vmem:[#allocation3 + $0x8] sm:$0xf] %vm4600, 0
    %4602 = vst.msk [vmem:[#allocation3 + $0xc] sm:$0xf] %vm4600, 0
    %v4603 = vld [vmem:[#allocation2] sm:$0xff]
    %v4604 = vld [vmem:[#allocation2 + $0x8] sm:$0xff]
    %v4605 = vpack.c.bf16 %v4603, %v4603
    %v4606 = vpack.c.bf16 %v4604, %v4604
    %4609 = vrot.lane.b32.xlu0 %v4605, 8
    %v4610 = vpop.permute.xlu0 %4609
    %4611 = vrot.lane.b32.xlu0 %v4606, 8
    %v4612 = vpop.permute.xlu0 %4611
    %vm4615 = vcmask 511040
    %4616 = vst.msk [vmem:[#allocation3 + $0x8] sm:$0xf] %vm4615, %v4610
    %4617 = vst.msk [vmem:[#allocation3 + $0xc] sm:$0xf] %vm4615, %v4612
    %vm4618 = vcmask 585216
    %4619 = vst.msk [vmem:[#allocation3 + $0x8] sm:$0xf] %vm4618, 0
    %4620 = vst.msk [vmem:[#allocation3 + $0xc] sm:$0xf] %vm4618, 0
    %vm4621 = vcmask 1044472
    %4622 = vst.msk [vmem:[#allocation3 + $0x8] sm:$0xf] %vm4621, 0
    %4623 = vst.msk [vmem:[#allocation3 + $0xc] sm:$0xf] %vm4621, 0
    %v4624 = vld [vmem:[#allocation2] sm:$0xff]
    %v4625 = vld [vmem:[#allocation2 + $0x8] sm:$0xff]
    %v4626 = vpack.c.bf16 %v4624, %v4624
    %v4627 = vpack.c.bf16 %v4625, %v4625
    %4630 = vrot.lane.b32.xlu0 %v4626, 17
    %v4631 = vpop.permute.xlu0 %4630
    %4632 = vrot.lane.b32.xlu0 %v4627, 17
    %v4633 = vpop.permute.xlu0 %4632
    %vm4636 = vcmask 1035840
    %4637 = vst.msk [vmem:[#allocation3 + $0x8] sm:$0xf] %vm4636, %v4631
    %4638 = vst.msk [vmem:[#allocation3 + $0xc] sm:$0xf] %vm4636, %v4633
    %4639 = vst.msk [vmem:[#allocation3 + $0x10] sm:$0xf] %vm1930, 0
    %4640 = vst.msk [vmem:[#allocation3 + $0x14] sm:$0xf] %vm1930, 0
    %vm4641 = vcmask 519664
    %4642 = vst.msk [vmem:[#allocation3 + $0x10] sm:$0xf] %vm4641, 0
    %4643 = vst.msk [vmem:[#allocation3 + $0x14] sm:$0xf] %vm4641, 0
    %v4644 = vld [vmem:[#allocation2] sm:$0xff]
    %v4645 = vld [vmem:[#allocation2 + $0x8] sm:$0xff]
    %v4646 = vpack.c.bf16 %v4644, %v4644
    %v4647 = vpack.c.bf16 %v4645, %v4645
    %4650 = vrot.lane.b32.xlu0 %v4646, 7
    %v4651 = vpop.permute.xlu0 %4650
    %4652 = vrot.lane.b32.xlu0 %v4647, 7
    %v4653 = vpop.permute.xlu0 %4652
    %vm4656 = vcmask 502840
    %4657 = vst.msk [vmem:[#allocation3 + $0x10] sm:$0xf] %vm4656, %v4651
    %4658 = vst.msk [vmem:[#allocation3 + $0x14] sm:$0xf] %vm4656, %v4653
    %vm4659 = vcmask 577024
    %4660 = vst.msk [vmem:[#allocation3 + $0x10] sm:$0xf] %vm4659, 0
    %4661 = vst.msk [vmem:[#allocation3 + $0x14] sm:$0xf] %vm4659, 0
    %vm4662 = vcmask 1044464
    %4663 = vst.msk [vmem:[#allocation3 + $0x10] sm:$0xf] %vm4662, 0
    %4664 = vst.msk [vmem:[#allocation3 + $0x14] sm:$0xf] %vm4662, 0
    %v4665 = vld [vmem:[#allocation2] sm:$0xff]
    %v4666 = vld [vmem:[#allocation2 + $0x8] sm:$0xff]
    %v4667 = vpack.c.bf16 %v4665, %v4665
    %v4668 = vpack.c.bf16 %v4666, %v4666
    %4671 = vrot.lane.b32.xlu0 %v4667, 16
    %v4672 = vpop.permute.xlu0 %4671
    %4673 = vrot.lane.b32.xlu0 %v4668, 16
    %v4674 = vpop.permute.xlu0 %4673
    %vm4677 = vcmask 1027640
    %4678 = vst.msk [vmem:[#allocation3 + $0x10] sm:$0xf] %vm4677, %v4672
    %4679 = vst.msk [vmem:[#allocation3 + $0x14] sm:$0xf] %vm4677, %v4674
    %4680 = vst.msk [vmem:[#allocation3 + $0x18] sm:$0xf] %vm2080, 0
    %4681 = vst.msk [vmem:[#allocation3 + $0x1c] sm:$0xf] %vm2080, 0
    %vm4682 = vcmask 519656
    %4683 = vst.msk [vmem:[#allocation3 + $0x18] sm:$0xf] %vm4682, 0
    %4684 = vst.msk [vmem:[#allocation3 + $0x1c] sm:$0xf] %vm4682, 0
    %v4685 = vld [vmem:[#allocation2] sm:$0xff]
    %v4686 = vld [vmem:[#allocation2 + $0x8] sm:$0xff]
    %v4687 = vpack.c.bf16 %v4685, %v4685
    %v4688 = vpack.c.bf16 %v4686, %v4686
    %4691 = vrot.lane.b32.xlu0 %v4687, 6
    %v4692 = vpop.permute.xlu0 %4691
    %4693 = vrot.lane.b32.xlu0 %v4688, 6
    %v4694 = vpop.permute.xlu0 %4693
    %vm4697 = vcmask 494640
    %4698 = vst.msk [vmem:[#allocation3 + $0x18] sm:$0xf] %vm4697, %v4692
    %4699 = vst.msk [vmem:[#allocation3 + $0x1c] sm:$0xf] %vm4697, %v4694
    %vm4700 = vcmask 568832
    %4701 = vst.msk [vmem:[#allocation3 + $0x18] sm:$0xf] %vm4700, 0
    %4702 = vst.msk [vmem:[#allocation3 + $0x1c] sm:$0xf] %vm4700, 0
    %vm4703 = vcmask 1044456
    %4704 = vst.msk [vmem:[#allocation3 + $0x18] sm:$0xf] %vm4703, 0
    %4705 = vst.msk [vmem:[#allocation3 + $0x1c] sm:$0xf] %vm4703, 0
    %v4706 = vld [vmem:[#allocation2] sm:$0xff]
    %v4707 = vld [vmem:[#allocation2 + $0x8] sm:$0xff]
    %v4708 = vpack.c.bf16 %v4706, %v4706
    %v4709 = vpack.c.bf16 %v4707, %v4707
    %4712 = vrot.lane.b32.xlu0 %v4708, 15
    %v4713 = vpop.permute.xlu0 %4712
    %4714 = vrot.lane.b32.xlu0 %v4709, 15
    %v4715 = vpop.permute.xlu0 %4714
    %vm4718 = vcmask 1019440
    %4719 = vst.msk [vmem:[#allocation3 + $0x18] sm:$0xf] %vm4718, %v4713
    %4720 = vst.msk [vmem:[#allocation3 + $0x1c] sm:$0xf] %vm4718, %v4715
    %4721 = vst.msk [vmem:[#allocation3 + $0x20] sm:$0xf] %vm2230, 0
    %4722 = vst.msk [vmem:[#allocation3 + $0x24] sm:$0xf] %vm2230, 0
    %vm4723 = vcmask 519648
    %4724 = vst.msk [vmem:[#allocation3 + $0x20] sm:$0xf] %vm4723, 0
    %4725 = vst.msk [vmem:[#allocation3 + $0x24] sm:$0xf] %vm4723, 0
    %v4726 = vld [vmem:[#allocation2] sm:$0xff]
    %v4727 = vld [vmem:[#allocation2 + $0x8] sm:$0xff]
    %v4728 = vpack.c.bf16 %v4726, %v4726
    %v4729 = vpack.c.bf16 %v4727, %v4727
    %4732 = vrot.lane.b32.xlu0 %v4728, 5
    %v4733 = vpop.permute.xlu0 %4732
    %4734 = vrot.lane.b32.xlu0 %v4729, 5
    %v4735 = vpop.permute.xlu0 %4734
    %vm4738 = vcmask 486440
    %4739 = vst.msk [vmem:[#allocation3 + $0x20] sm:$0xf] %vm4738, %v4733
    %4740 = vst.msk [vmem:[#allocation3 + $0x24] sm:$0xf] %vm4738, %v4735
    %vm4741 = vcmask 560640
    %4742 = vst.msk [vmem:[#allocation3 + $0x20] sm:$0xf] %vm4741, 0
    %4743 = vst.msk [vmem:[#allocation3 + $0x24] sm:$0xf] %vm4741, 0
    %vm4744 = vcmask 1044448
    %4745 = vst.msk [vmem:[#allocation3 + $0x20] sm:$0xf] %vm4744, 0
    %4746 = vst.msk [vmem:[#allocation3 + $0x24] sm:$0xf] %vm4744, 0
    %v4747 = vld [vmem:[#allocation2] sm:$0xff]
    %v4748 = vld [vmem:[#allocation2 + $0x8] sm:$0xff]
    %v4749 = vpack.c.bf16 %v4747, %v4747
    %v4750 = vpack.c.bf16 %v4748, %v4748
    %4753 = vrot.lane.b32.xlu0 %v4749, 14
    %v4754 = vpop.permute.xlu0 %4753
    %4755 = vrot.lane.b32.xlu0 %v4750, 14
    %v4756 = vpop.permute.xlu0 %4755
    %vm4759 = vcmask 1011240
    %4760 = vst.msk [vmem:[#allocation3 + $0x20] sm:$0xf] %vm4759, %v4754
    %4761 = vst.msk [vmem:[#allocation3 + $0x24] sm:$0xf] %vm4759, %v4756
    %4762 = vst.msk [vmem:[#allocation3 + $0x28] sm:$0xf] %vm2380, 0
    %4763 = vst.msk [vmem:[#allocation3 + $0x2c] sm:$0xf] %vm2380, 0
    %vm4764 = vcmask 519640
    %4765 = vst.msk [vmem:[#allocation3 + $0x28] sm:$0xf] %vm4764, 0
    %4766 = vst.msk [vmem:[#allocation3 + $0x2c] sm:$0xf] %vm4764, 0
    %v4767 = vld [vmem:[#allocation2] sm:$0xff]
    %v4768 = vld [vmem:[#allocation2 + $0x8] sm:$0xff]
    %v4769 = vpack.c.bf16 %v4767, %v4767
    %v4770 = vpack.c.bf16 %v4768, %v4768
    %4773 = vrot.lane.b32.xlu0 %v4769, 4
    %v4774 = vpop.permute.xlu0 %4773
    %4775 = vrot.lane.b32.xlu0 %v4770, 4
    %v4776 = vpop.permute.xlu0 %4775
    %vm4779 = vcmask 478240
    %4780 = vst.msk [vmem:[#allocation3 + $0x28] sm:$0xf] %vm4779, %v4774
    %4781 = vst.msk [vmem:[#allocation3 + $0x2c] sm:$0xf] %vm4779, %v4776
    %vm4782 = vcmask 552448
    %4783 = vst.msk [vmem:[#allocation3 + $0x28] sm:$0xf] %vm4782, 0
    %4784 = vst.msk [vmem:[#allocation3 + $0x2c] sm:$0xf] %vm4782, 0
    %vm4785 = vcmask 1044440
    %4786 = vst.msk [vmem:[#allocation3 + $0x28] sm:$0xf] %vm4785, 0
    %4787 = vst.msk [vmem:[#allocation3 + $0x2c] sm:$0xf] %vm4785, 0
    %v4788 = vld [vmem:[#allocation2] sm:$0xff]
    %v4789 = vld [vmem:[#allocation2 + $0x8] sm:$0xff]
    %v4790 = vpack.c.bf16 %v4788, %v4788
    %v4791 = vpack.c.bf16 %v4789, %v4789
    %4794 = vrot.lane.b32.xlu0 %v4790, 13
    %v4795 = vpop.permute.xlu0 %4794
    %4796 = vrot.lane.b32.xlu0 %v4791, 13
    %v4797 = vpop.permute.xlu0 %4796
    %vm4800 = vcmask 1003040
    %4801 = vst.msk [vmem:[#allocation3 + $0x28] sm:$0xf] %vm4800, %v4795
    %4802 = vst.msk [vmem:[#allocation3 + $0x2c] sm:$0xf] %vm4800, %v4797
    %4803 = vst.msk [vmem:[#allocation3 + $0x30] sm:$0xf] %vm2530, 0
    %4804 = vst.msk [vmem:[#allocation3 + $0x34] sm:$0xf] %vm2530, 0
    %vm4805 = vcmask 519632
    %4806 = vst.msk [vmem:[#allocation3 + $0x30] sm:$0xf] %vm4805, 0
    %4807 = vst.msk [vmem:[#allocation3 + $0x34] sm:$0xf] %vm4805, 0
    %v4808 = vld [vmem:[#allocation2] sm:$0xff]
    %v4809 = vld [vmem:[#allocation2 + $0x8] sm:$0xff]
    %v4810 = vpack.c.bf16 %v4808, %v4808
    %v4811 = vpack.c.bf16 %v4809, %v4809
    %4814 = vrot.lane.b32.xlu0 %v4810, 3
    %v4815 = vpop.permute.xlu0 %4814
    %4816 = vrot.lane.b32.xlu0 %v4811, 3
    %v4817 = vpop.permute.xlu0 %4816
    %vm4820 = vcmask 470040
    %4821 = vst.msk [vmem:[#allocation3 + $0x30] sm:$0xf] %vm4820, %v4815
    %4822 = vst.msk [vmem:[#allocation3 + $0x34] sm:$0xf] %vm4820, %v4817
    %vm4823 = vcmask 544256
    %4824 = vst.msk [vmem:[#allocation3 + $0x30] sm:$0xf] %vm4823, 0
    %4825 = vst.msk [vmem:[#allocation3 + $0x34] sm:$0xf] %vm4823, 0
    %vm4826 = vcmask 1044432
    %4827 = vst.msk [vmem:[#allocation3 + $0x30] sm:$0xf] %vm4826, 0
    %4828 = vst.msk [vmem:[#allocation3 + $0x34] sm:$0xf] %vm4826, 0
    %v4829 = vld [vmem:[#allocation2] sm:$0xff]
    %v4830 = vld [vmem:[#allocation2 + $0x8] sm:$0xff]
    %v4831 = vpack.c.bf16 %v4829, %v4829
    %v4832 = vpack.c.bf16 %v4830, %v4830
    %4835 = vrot.lane.b32.xlu0 %v4831, 12
    %v4836 = vpop.permute.xlu0 %4835
    %4837 = vrot.lane.b32.xlu0 %v4832, 12
    %v4838 = vpop.permute.xlu0 %4837
    %vm4841 = vcmask 994840
    %4842 = vst.msk [vmem:[#allocation3 + $0x30] sm:$0xf] %vm4841, %v4836
    %4843 = vst.msk [vmem:[#allocation3 + $0x34] sm:$0xf] %vm4841, %v4838
    %4844 = vst.msk [vmem:[#allocation3 + $0x38] sm:$0xf] %vm2680, 0
    %4845 = vst.msk [vmem:[#allocation3 + $0x3c] sm:$0xf] %vm2680, 0
    %vm4846 = vcmask 519624
    %4847 = vst.msk [vmem:[#allocation3 + $0x38] sm:$0xf] %vm4846, 0
    %4848 = vst.msk [vmem:[#allocation3 + $0x3c] sm:$0xf] %vm4846, 0
    %v4849 = vld [vmem:[#allocation2] sm:$0xff]
    %v4850 = vld [vmem:[#allocation2 + $0x8] sm:$0xff]
    %v4851 = vpack.c.bf16 %v4849, %v4849
    %v4852 = vpack.c.bf16 %v4850, %v4850
    %4855 = vrot.lane.b32.xlu0 %v4851, 2
    %v4856 = vpop.permute.xlu0 %4855
    %4857 = vrot.lane.b32.xlu0 %v4852, 2
    %v4858 = vpop.permute.xlu0 %4857
    %vm4861 = vcmask 461840
    %4862 = vst.msk [vmem:[#allocation3 + $0x38] sm:$0xf] %vm4861, %v4856
    %4863 = vst.msk [vmem:[#allocation3 + $0x3c] sm:$0xf] %vm4861, %v4858
    %vm4864 = vcmask 536064
    %4865 = vst.msk [vmem:[#allocation3 + $0x38] sm:$0xf] %vm4864, 0
    %4866 = vst.msk [vmem:[#allocation3 + $0x3c] sm:$0xf] %vm4864, 0
    %vm4867 = vcmask 1044424
    %4868 = vst.msk [vmem:[#allocation3 + $0x38] sm:$0xf] %vm4867, 0
    %4869 = vst.msk [vmem:[#allocation3 + $0x3c] sm:$0xf] %vm4867, 0
    %v4870 = vld [vmem:[#allocation2] sm:$0xff]
    %v4871 = vld [vmem:[#allocation2 + $0x8] sm:$0xff]
    %v4872 = vpack.c.bf16 %v4870, %v4870
    %v4873 = vpack.c.bf16 %v4871, %v4871
    %4876 = vrot.lane.b32.xlu0 %v4872, 11
    %v4877 = vpop.permute.xlu0 %4876
    %4878 = vrot.lane.b32.xlu0 %v4873, 11
    %v4879 = vpop.permute.xlu0 %4878
    %vm4882 = vcmask 986640
    %4883 = vst.msk [vmem:[#allocation3 + $0x38] sm:$0xf] %vm4882, %v4877
    %4884 = vst.msk [vmem:[#allocation3 + $0x3c] sm:$0xf] %vm4882, %v4879
    %4885 = vst.msk [vmem:[#allocation3 + $0x40] sm:$0xf] %vm2830, 0
    %4886 = vst.msk [vmem:[#allocation3 + $0x44] sm:$0xf] %vm2830, 0
    %vm4887 = vcmask 519616
    %4888 = vst.msk [vmem:[#allocation3 + $0x40] sm:$0xf] %vm4887, 0
    %4889 = vst.msk [vmem:[#allocation3 + $0x44] sm:$0xf] %vm4887, 0
    %v4890 = vld [vmem:[#allocation2] sm:$0xff]
    %v4891 = vld [vmem:[#allocation2 + $0x8] sm:$0xff]
    %v4892 = vpack.c.bf16 %v4890, %v4890
    %v4893 = vpack.c.bf16 %v4891, %v4891
    %4896 = vrot.lane.b32.xlu0 %v4892, 1
    %v4897 = vpop.permute.xlu0 %4896
    %4898 = vrot.lane.b32.xlu0 %v4893, 1
    %v4899 = vpop.permute.xlu0 %4898
    %vm4902 = vcmask 453640
    %4903 = vst.msk [vmem:[#allocation3 + $0x40] sm:$0xf] %vm4902, %v4897
    %4904 = vst.msk [vmem:[#allocation3 + $0x44] sm:$0xf] %vm4902, %v4899
    %vm4905 = vcmask 527872
    %4906 = vst.msk [vmem:[#allocation3 + $0x40] sm:$0xf] %vm4905, 0
    %4907 = vst.msk [vmem:[#allocation3 + $0x44] sm:$0xf] %vm4905, 0
    %vm4908 = vcmask 1044416
    %4909 = vst.msk [vmem:[#allocation3 + $0x40] sm:$0xf] %vm4908, 0
    %4910 = vst.msk [vmem:[#allocation3 + $0x44] sm:$0xf] %vm4908, 0
    %v4911 = vld [vmem:[#allocation2] sm:$0xff]
    %v4912 = vld [vmem:[#allocation2 + $0x8] sm:$0xff]
    %v4913 = vpack.c.bf16 %v4911, %v4911
    %v4914 = vpack.c.bf16 %v4912, %v4912
    %4917 = vrot.lane.b32.xlu0 %v4913, 10
    %v4918 = vpop.permute.xlu0 %4917
    %4919 = vrot.lane.b32.xlu0 %v4914, 10
    %v4920 = vpop.permute.xlu0 %4919
    %vm4923 = vcmask 978440
    %4924 = vst.msk [vmem:[#allocation3 + $0x40] sm:$0xf] %vm4923, %v4918
    %4925 = vst.msk [vmem:[#allocation3 + $0x44] sm:$0xf] %vm4923, %v4920
    %4926 = vst.msk [vmem:[#allocation3 + $0x48] sm:$0xf] %vm3623, 0
    %4927 = vst.msk [vmem:[#allocation3 + $0x4c] sm:$0xf] %vm3623, 0
    %v4928 = vld [vmem:[#allocation2] sm:$0xff]
    %v4929 = vld [vmem:[#allocation2 + $0x8] sm:$0xff]
    %v4930 = vpack.c.bf16 %v4928, %v4928
    %v4931 = vpack.c.bf16 %v4929, %v4929
    %vm4932 = vcmask 445440
    %4933 = vst.msk [vmem:[#allocation3 + $0x48] sm:$0xf] %vm4932, %v4930
    %4934 = vst.msk [vmem:[#allocation3 + $0x4c] sm:$0xf] %vm4932, %v4931
    %vm4935 = vcmask 1044408
    %4936 = vst.msk [vmem:[#allocation3 + $0x48] sm:$0xf] %vm4935, 0
    %4937 = vst.msk [vmem:[#allocation3 + $0x4c] sm:$0xf] %vm4935, 0
    %v4938 = vld [vmem:[#allocation2] sm:$0xff]
    %v4939 = vld [vmem:[#allocation2 + $0x8] sm:$0xff]
    %v4940 = vpack.c.bf16 %v4938, %v4938
    %v4941 = vpack.c.bf16 %v4939, %v4939
    %4944 = vrot.lane.b32.xlu0 %v4940, 9
    %v4945 = vpop.permute.xlu0 %4944
    %4946 = vrot.lane.b32.xlu0 %v4941, 9
    %v4947 = vpop.permute.xlu0 %4946
    %vm4950 = vcmask 970240
    %4951 = vst.msk [vmem:[#allocation3 + $0x48] sm:$0xf] %vm4950, %v4945
    %4952 = vst.msk [vmem:[#allocation3 + $0x4c] sm:$0xf] %vm4950, %v4947
    %v4953 = vld [vmem:[#allocation4 + $0x190] sm:$0xff]
    %v4954 = vld [vmem:[#allocation4 + $0x1a4] sm:$0xff]
    %v4955 = vld [vmem:[#allocation3] sm:$0xf]
    %v4956 = vld [vmem:[#allocation3 + $0x4] sm:$0xf]
    %v4957 = vld [vmem:[#allocation3 + $0x8] sm:$0xf]
    %v4958 = vld [vmem:[#allocation3 + $0xc] sm:$0xf]
    %v4959 = vld [vmem:[#allocation3 + $0x10] sm:$0xf]
    %v4960 = vld [vmem:[#allocation3 + $0x14] sm:$0xf]
    %v4961 = vld [vmem:[#allocation3 + $0x18] sm:$0xf]
    %v4962 = vld [vmem:[#allocation3 + $0x1c] sm:$0xf]
    %v4963 = vld [vmem:[#allocation3 + $0x20] sm:$0xf]
    %v4964 = vld [vmem:[#allocation3 + $0x24] sm:$0xf]
    %v4965 = vld [vmem:[#allocation3 + $0x28] sm:$0xf]
    %v4966 = vld [vmem:[#allocation3 + $0x2c] sm:$0xf]
    %v4967 = vld [vmem:[#allocation3 + $0x30] sm:$0xf]
    %v4968 = vld [vmem:[#allocation3 + $0x34] sm:$0xf]
    %v4969 = vld [vmem:[#allocation3 + $0x38] sm:$0xf]
    %v4970 = vld [vmem:[#allocation3 + $0x3c] sm:$0xf]
    %v4971 = vld [vmem:[#allocation3 + $0x40] sm:$0xf]
    %v4972 = vld [vmem:[#allocation3 + $0x44] sm:$0xf]
    %v4973 = vld [vmem:[#allocation3 + $0x48] sm:$0xf]
    %v4974 = vld [vmem:[#allocation3 + $0x4c] sm:$0xf]
    %v4977 = vunpack.c.l.b16 %v4953
    %v4978 = vunpack.c.h.b16 %v4953
    %v4979 = vunpack.c.l.b16 %v4954
    %v4980 = vunpack.c.h.b16 %v4954
    %v4981 = vpack.c.b16 %v4979, %v4977
    %v4982 = vpack.c.b16 %v4980, %v4978
    %v5004 = vunpack.c.l.b16 %v4955
    %v5005 = vunpack.c.l.b16 %v4956
    %v5006 = vunpack.c.l.b16 %v4957
    %v5007 = vunpack.c.l.b16 %v4958
    %v5008 = vunpack.c.l.b16 %v4959
    %v5009 = vunpack.c.l.b16 %v4960
    %v5010 = vunpack.c.l.b16 %v4961
    %v5011 = vunpack.c.l.b16 %v4962
    %v5012 = vunpack.c.l.b16 %v4963
    %v5013 = vunpack.c.l.b16 %v4964
    %v5014 = vunpack.c.l.b16 %v4965
    %v5015 = vunpack.c.l.b16 %v4966
    %v5016 = vunpack.c.l.b16 %v4967
    %v5017 = vunpack.c.l.b16 %v4968
    %v5018 = vunpack.c.l.b16 %v4969
    %v5019 = vunpack.c.l.b16 %v4970
    %v5020 = vunpack.c.l.b16 %v4971
    %v5021 = vunpack.c.l.b16 %v4972
    %v5022 = vunpack.c.l.b16 %v4973
    %v5023 = vunpack.c.l.b16 %v4974
    %v5024 = vpack.c.b16 %v5005, %v5004
    %v5025 = vpack.c.b16 %v5007, %v5006
    %v5026 = vpack.c.b16 %v5009, %v5008
    %v5027 = vpack.c.b16 %v5011, %v5010
    %v5028 = vpack.c.b16 %v5013, %v5012
    %v5029 = vpack.c.b16 %v5015, %v5014
    %v5030 = vpack.c.b16 %v5017, %v5016
    %v5031 = vpack.c.b16 %v5019, %v5018
    %v5032 = vpack.c.b16 %v5021, %v5020
    %v5033 = vpack.c.b16 %v5023, %v5022
    %v5045 = vsel %vm228, %v4982, 0
    %5047 = vmatpush.bf16.msra.mxu0 %v5031
    %5048 = vmatpush.bf16.msra.mxu0 %v5030
    %5049 = vmatpush.bf16.msra.mxu0 %v5029
    %5050 = vmatpush.bf16.msra.mxu0 %v5028
    %5051 = vmatpush.bf16.msra.mxu0 %v5027
    %5052 = vmatpush.bf16.msra.mxu0 %v5026
    %5053 = vmatpush.bf16.msra.mxu0 %v5025
    %5054 = vmatpush.bf16.msra.mxu0 %v5024
    %5055 = vmatmul.bf16.gmra.mxu0 %v4981
    %v5056 = vpop.f32.mrf.mxu0
    %v5057 = vadd.f32 0.0, %v5056
    %v5058 = vpop.f32.mrf.mxu0
    %5059 = vdwg.mxu0
    %5060 = vmatpush.bf16.msra.mxu0 0
    %5061 = vmatpush.bf16.msra.mxu0 0
    %5062 = vmatpush.bf16.msra.mxu0 0
    %5063 = vmatpush.bf16.msra.mxu0 0
    %5064 = vmatpush.bf16.msra.mxu0 0
    %5065 = vmatpush.bf16.msra.mxu0 0
    %5066 = vmatpush.bf16.msra.mxu0 %v5033
    %5067 = vmatpush.bf16.msra.mxu0 %v5032
    %5068 = vmatmul.bf16.gmra.mxu0 %v5045
    %v5069 = vpop.f32.mrf.mxu0
    %v5070 = vadd.f32 %v5057, %v5069
    %v5071 = vpop.f32.mrf.mxu0
    %5072 = vdwg.mxu0
    %v5073 = vld [vmem:[%s2] sm:$0x1]
    %5075 = vset.pattern.permute.xlu0 5
    %5076 = vperm.xlu0 %5075, %v5073
    %v5077 = vpop.permute.xlu0 %5076
    %v5079 = vadd.f32 %v5070, %v5077
    %5080 = vst [vmem:[%s3] sm:$0x1] %v5079
    // Predicated region
    $region18: #{conv_autoencoder_forward.1} parent=1 // pred_check
      _
    $region19: #{conv_autoencoder_forward.1} parent=1 // pred_check_branch
      %5082 = sbr.rel (0) target = $region21
    $region20: #{conv_autoencoder_forward.1} parent=1 // pred_region
      _
    $region21: #{conv_autoencoder_forward.1} parent=1 // pred_fallthru
      _
    // Predicated region
    $region22: #{conv_autoencoder_forward.1} parent=1 // pred_check
      _
    $region23: #{conv_autoencoder_forward.1} parent=1 // pred_check_branch
      %5084 = sbr.rel (0) target = $region25
    $region24: #{conv_autoencoder_forward.1} parent=1 // pred_region
      _
    $region25: #{conv_autoencoder_forward.1} parent=1 // pred_fallthru
      _
    %5085 = vsyncpa [#allocation5], 1

</llo_original>
